<compile_context>
chip_gen: v6e
topology: v6e:2x2x1
jax: 0.10.0
libtpu: 0.0.40
codegen_flags: <defaults>
</compile_context>

<pallas_src>
import functools

import jax
import jax.numpy as jnp
from jax.experimental import pallas as pl
from jax.experimental.pallas import tpu as pltpu

EPS = 1e-5
C = 128  # fixed by the module: BatchNorm2d(128), Conv2d(128, 128, 1, 1)


def _round_up(x, m):
    return ((x + m - 1) // m) * m


# --------------------------------------------------------------------------
# Pass 1: per-channel sum and sum-of-squares of x16 (BN1 batch statistics).
# --------------------------------------------------------------------------
def _bn1_stats_kernel(x_ref, sum_ref, ssq_ref, *, hw, thw):
    n = pl.program_id(0)
    t = pl.program_id(1)

    @pl.when((n == 0) & (t == 0))
    def _init():
        sum_ref[...] = jnp.zeros_like(sum_ref)
        ssq_ref[...] = jnp.zeros_like(ssq_ref)

    x = x_ref[0]  # (C, THW)
    if hw % thw != 0:
        col = t * thw + jax.lax.broadcasted_iota(jnp.int32, x.shape, 1)
        x = jnp.where(col < hw, x, 0.0)
    sum_ref[...] += jnp.sum(x, axis=1, keepdims=True)
    ssq_ref[...] += jnp.sum(x * x, axis=1, keepdims=True)


# --------------------------------------------------------------------------
# Pass 2: accumulate sum(x27) and Gram = x27 @ x27^T  (for analytic BN2 stats)
# --------------------------------------------------------------------------
def _x27_stats_kernel(x16_ref, x25_ref, s1_ref, t1_ref, s27_ref, gram_ref,
                      *, hw, thw):
    n = pl.program_id(0)
    t = pl.program_id(1)

    @pl.when((n == 0) & (t == 0))
    def _init():
        s27_ref[...] = jnp.zeros_like(s27_ref)
        gram_ref[...] = jnp.zeros_like(gram_ref)

    # x27 = relu(BN1(x16) + x25)  with BN1 folded to x*s1 + t1
    x27 = jnp.maximum(x16_ref[0] * s1_ref[...] + t1_ref[...] + x25_ref[0], 0.0)
    if hw % thw != 0:
        col = t * thw + jax.lax.broadcasted_iota(jnp.int32, x27.shape, 1)
        x27 = jnp.where(col < hw, x27, 0.0)

    s27_ref[...] += jnp.sum(x27, axis=1, keepdims=True)
    # Gram[i, j] = sum_m x27[i, m] * x27[j, m]   (contraction over lanes, MXU)
    gram_ref[...] += jax.lax.dot_general(
        x27, x27, (((1,), (1,)), ((), ())),
        preferred_element_type=jnp.float32)


# --------------------------------------------------------------------------
# Pass 3: recompute x27 per tile, fused conv + BN2 as  W' @ x27 + b'
# --------------------------------------------------------------------------
def _apply_kernel(x16_ref, x25_ref, s1_ref, t1_ref, w_ref, b_ref, o_ref):
    x27 = jnp.maximum(x16_ref[0] * s1_ref[...] + t1_ref[...] + x25_ref[0], 0.0)
    x29 = jnp.dot(w_ref[...], x27, preferred_element_type=jnp.float32) + b_ref[...]
    o_ref[0] = x29.astype(o_ref.dtype)


# --------------------------------------------------------------------------
# Wrapper
# --------------------------------------------------------------------------
def fused_bn_add_relu_conv_bn(x16, x25, conv_w, g1, b1, g2, b2, *, thw_max=512):
    """x16, x25: NCHW float32 arrays of shape (N, 128, H, W).
    conv_w: (C_out, C_in) from the PyTorch (C_out, C_in, 1, 1) weight.
    Returns NCHW output (N, 128, H, W)."""
    N, Cin, H, W = x16.shape
    assert Cin == C and x25.shape == x16.shape

    HW = H * W
    M = N * HW

    # Free reshapes — no data movement, NCHW preserved.
    x16v = x16.reshape(N, C, HW)
    x25v = x25.reshape(N, C, HW)

    THW = min(thw_max, _round_up(HW, 128))   # lane-tile, multiple of 128
    T = pl.cdiv(HW, THW)
    grid = (N, T)

    act_spec = pl.BlockSpec((1, C, THW), lambda n, t: (n, 0, t))
    vec_spec = pl.BlockSpec((C, 1), lambda n, t: (0, 0))     # resident params
    mat_spec = pl.BlockSpec((C, C), lambda n, t: (0, 0))     # resident weight

    # ---------------- pass 1: BN1 statistics ----------------
    sum1, ssq1 = pl.pallas_call(
        functools.partial(_bn1_stats_kernel, hw=HW, thw=THW),
        out_shape=(jax.ShapeDtypeStruct((C, 1), jnp.float32),
                   jax.ShapeDtypeStruct((C, 1), jnp.float32)),
        grid=grid,
        in_specs=[act_spec],
        out_specs=(vec_spec, vec_spec),
        compiler_params=pltpu.CompilerParams(
            dimension_semantics=("arbitrary", "arbitrary")),
        cost_estimate=pl.CostEstimate(
            flops=3 * M * C, transcendentals=0, bytes_accessed=M * C * 4),
    )(x16v)

    mean1 = sum1 / M
    var1 = ssq1 / M - mean1 * mean1
    inv1 = jax.lax.rsqrt(var1 + EPS)
    s1 = g1.reshape(C, 1) * inv1              # BN1 folded scale
    t1 = b1.reshape(C, 1) - mean1 * s1        # BN1 folded shift

    # ---------------- pass 2: x27 sum + Gram (BN2 stats via linearity) -------
    s27, gram = pl.pallas_call(
        functools.partial(_x27_stats_kernel, hw=HW, thw=THW),
        out_shape=(jax.ShapeDtypeStruct((C, 1), jnp.float32),
                   jax.ShapeDtypeStruct((C, C), jnp.float32)),
        grid=grid,
        in_specs=[act_spec, act_spec, vec_spec, vec_spec],
        out_specs=(vec_spec, mat_spec),
        compiler_params=pltpu.CompilerParams(
            dimension_semantics=("arbitrary", "arbitrary")),
        cost_estimate=pl.CostEstimate(
            flops=2 * M * C * C + 6 * M * C, transcendentals=0,
            bytes_accessed=2 * M * C * 4),
    )(x16v, x25v, s1, t1)

    mean27 = s27 / M                                        # (C_in, 1)
    mean2 = conv_w @ mean27                                 # (C_out, 1)
    ex28_sq = jnp.sum((conv_w @ gram) * conv_w, axis=1, keepdims=True) / M
    var2 = ex28_sq - mean2 * mean2
    inv2 = jax.lax.rsqrt(var2 + EPS)
    s2 = g2.reshape(C, 1) * inv2
    w_f = s2 * conv_w                                       # BN2 folded weight
    b_f = b2.reshape(C, 1) - s2 * mean2                     # BN2 folded bias

    # ---------------- pass 3: normalize + add + relu + conv + BN2 -----------
    out = pl.pallas_call(
        _apply_kernel,
        out_shape=jax.ShapeDtypeStruct((N, C, HW), jnp.float32),
        grid=grid,
        in_specs=[act_spec, act_spec, vec_spec, vec_spec, mat_spec, vec_spec],
        out_specs=act_spec,
        compiler_params=pltpu.CompilerParams(
            dimension_semantics=("parallel", "parallel")),
        cost_estimate=pl.CostEstimate(
            flops=2 * M * C * C + 5 * M * C, transcendentals=0,
            bytes_accessed=3 * M * C * 4),
    )(x16v, x25v, s1, t1, w_f, b_f)

    return out.reshape(N, C, H, W)


# --------------------------------------------------------------------------
# Pure-JAX reference (PyTorch training-mode forward)
# --------------------------------------------------------------------------
def _reference(x16, x25, conv_w, g1, b1, g2, b2):
    def bn(x, g, b):
        mean = jnp.mean(x, axis=(0, 2, 3), keepdims=True)
        var = jnp.mean((x - mean) ** 2, axis=(0, 2, 3), keepdims=True)
        return ((x - mean) / jnp.sqrt(var + EPS) * g.reshape(1, -1, 1, 1)
                + b.reshape(1, -1, 1, 1))

    x17 = bn(x16, g1, b1)
    x27 = jnp.maximum(x17 + x25, 0.0)
    x28 = jnp.einsum("nchw,oc->nohw", x27, conv_w)
    return bn(x28, g2, b2)


if __name__ == "__main__":
    key = jax.random.PRNGKey(0)
    k1, k2, k3, k4, k5, k6, k7 = jax.random.split(key, 7)

    # Shapes from the module spec: x16, x25 = (1, 128, 28, 28).
    N, H, W = 1, 28, 28
    x16 = jax.random.normal(k1, (N, C, H, W), dtype=jnp.float32)
    x25 = jax.random.normal(k2, (N, C, H, W), dtype=jnp.float32)

    conv_w = jax.random.normal(k3, (C, C), dtype=jnp.float32) * (1.0 / jnp.sqrt(C))
    g1 = 1.0 + 0.1 * jax.random.normal(k4, (C,), dtype=jnp.float32)
    b1 = 0.1 * jax.random.normal(k5, (C,), dtype=jnp.float32)
    g2 = 1.0 + 0.1 * jax.random.normal(k6, (C,), dtype=jnp.float32)
    b2 = 0.1 * jax.random.normal(k7, (C,), dtype=jnp.float32)

    fused = jax.jit(fused_bn_add_relu_conv_bn)
    out = jax.block_until_ready(fused(x16, x25, conv_w, g1, b1, g2, b2))

    ref = _reference(x16, x25, conv_w, g1, b1, g2, b2)
    assert out.shape == (N, C, H, W)
    assert jnp.allclose(out, ref, atol=1e-4, rtol=1e-4), float(
        jnp.max(jnp.abs(out - ref)))

    print("KERNEL_OK")
</pallas_src>

<mosaic_0001>
module attributes {stable_mosaic.version = 11 : i64} {
  func.func @_bn1_stats_kernel(%arg0: i32, %arg1: i32, %arg2: memref<1x128x512xf32, #tpu.memory_space<vmem>>, %arg3: memref<128x1xf32, #tpu.memory_space<vmem>>, %arg4: memref<128x1xf32, #tpu.memory_space<vmem>>) attributes {dimension_semantics = [#tpu.dimension_semantics<arbitrary>, #tpu.dimension_semantics<arbitrary>], iteration_bounds = array<i64: 1, 2>, scalar_prefetch = 0 : i64, scratch_operands = 0 : i64, tpu.core_type = #tpu.core_type<tc>, window_params = [{transform_indices = @transform_0, window_bounds = array<i64: 1, 128, 512>}, {pipeline_mode = #tpu.pipeline_mode<synchronous>, transform_indices = @transform_1, window_bounds = array<i64: 128, 1>}, {pipeline_mode = #tpu.pipeline_mode<synchronous>, transform_indices = @transform_2, window_bounds = array<i64: 128, 1>}]} {
    %c0_i32 = arith.constant 0 : i32
    %0 = arith.cmpi eq, %arg0, %c0_i32 : i32
    %c0_i32_0 = arith.constant 0 : i32
    %1 = arith.cmpi eq, %arg1, %c0_i32_0 : i32
    %2 = arith.andi %0, %1 : i1
    %3 = arith.extui %2 : i1 to i32
    %c0_i32_1 = arith.constant 0 : i32
    %4 = arith.cmpi ne, %3, %c0_i32_1 : i32
    scf.if %4 {
      %cst_14 = arith.constant 0.000000e+00 : f32
      %26 = vector.broadcast %cst_14 : f32 to vector<128x1xf32>
      %c0_15 = arith.constant 0 : index
      %c0_16 = arith.constant 0 : index
      %27 = vector.load %arg3[%c0_15, %c0_16] : memref<128x1xf32, #tpu.memory_space<vmem>>, vector<128x1xf32>
      tpu.vector_store %arg3[%c0_15, %c0_16], %26 {strides = array<i32>} : memref<128x1xf32, #tpu.memory_space<vmem>>, vector<128x1xf32>,
      %cst_17 = arith.constant 0.000000e+00 : f32
      %28 = vector.broadcast %cst_17 : f32 to vector<128x1xf32>
      %c0_18 = arith.constant 0 : index
      %c0_19 = arith.constant 0 : index
      %29 = vector.load %arg4[%c0_18, %c0_19] : memref<128x1xf32, #tpu.memory_space<vmem>>, vector<128x1xf32>
      tpu.vector_store %arg4[%c0_18, %c0_19], %28 {strides = array<i32>} : memref<128x1xf32, #tpu.memory_space<vmem>>, vector<128x1xf32>,
    } else {
    }
    %c0 = arith.constant 0 : index
    %c0_2 = arith.constant 0 : index
    %c0_3 = arith.constant 0 : index
    %5 = vector.load %arg2[%c0, %c0_2, %c0_3] : memref<1x128x512xf32, #tpu.memory_space<vmem>>, vector<1x128x512xf32>
    %6 = vector.shape_cast %5 : vector<1x128x512xf32> to vector<128x512xf32>
    %c512_i32 = arith.constant 512 : i32
    %7 = arith.muli %arg1, %c512_i32 : i32
    %8 = tpu.iota {dimensions = array<i32: 1>} : vector<128x512xi32>
    %9 = vector.broadcast %7 : i32 to vector<128x512xi32>
    %10 = arith.addi %9, %8 : vector<128x512xi32>
    %c784_i32 = arith.constant 784 : i32
    %11 = vector.broadcast %c784_i32 : i32 to vector<128x512xi32>
    %12 = arith.cmpi slt, %10, %11 : vector<128x512xi32>
    %cst = arith.constant 0.000000e+00 : f32
    %13 = vector.broadcast %cst : f32 to vector<128x512xf32>
    %14 = arith.select %12, %6, %13 : vector<128x512xi1>, vector<128x512xf32>
    %c0_4 = arith.constant 0 : index
    %c0_5 = arith.constant 0 : index
    %15 = vector.load %arg3[%c0_4, %c0_5] : memref<128x1xf32, #tpu.memory_space<vmem>>, vector<128x1xf32>
    %cst_6 = arith.constant dense<0.000000e+00> : vector<128xf32>
    %16 = vector.multi_reduction <add>, %14, %cst_6 [1] : vector<128x512xf32> to vector<128xf32>
    %17 = vector.shape_cast %16 : vector<128xf32> to vector<128x1xf32>
    %18 = arith.addf %15, %17 : vector<128x1xf32>
    %c0_7 = arith.constant 0 : index
    %c0_8 = arith.constant 0 : index
    %19 = vector.load %arg3[%c0_7, %c0_8] : memref<128x1xf32, #tpu.memory_space<vmem>>, vector<128x1xf32>
    tpu.vector_store %arg3[%c0_7, %c0_8], %18 {strides = array<i32>} : memref<128x1xf32, #tpu.memory_space<vmem>>, vector<128x1xf32>,
    %c0_9 = arith.constant 0 : index
    %c0_10 = arith.constant 0 : index
    %20 = vector.load %arg4[%c0_9, %c0_10] : memref<128x1xf32, #tpu.memory_space<vmem>>, vector<128x1xf32>
    %21 = arith.mulf %14, %14 : vector<128x512xf32>
    %cst_11 = arith.constant dense<0.000000e+00> : vector<128xf32>
    %22 = vector.multi_reduction <add>, %21, %cst_11 [1] : vector<128x512xf32> to vector<128xf32>
    %23 = vector.shape_cast %22 : vector<128xf32> to vector<128x1xf32>
    %24 = arith.addf %20, %23 : vector<128x1xf32>
    %c0_12 = arith.constant 0 : index
    %c0_13 = arith.constant 0 : index
    %25 = vector.load %arg4[%c0_12, %c0_13] : memref<128x1xf32, #tpu.memory_space<vmem>>, vector<128x1xf32>
    tpu.vector_store %arg4[%c0_12, %c0_13], %24 {strides = array<i32>} : memref<128x1xf32, #tpu.memory_space<vmem>>, vector<128x1xf32>,
    return
  }
  func.func @transform_0(%arg0: i32, %arg1: i32) -> (i32, i32, i32) {
    %c0_i32 = arith.constant 0 : i32
    %c0_i32_0 = arith.constant 0 : i32
    return %arg0, %c0_i32, %arg1 : i32, i32, i32
  }
  func.func @transform_1(%arg0: i32, %arg1: i32) -> (i32, i32) {
    %c0_i32 = arith.constant 0 : i32
    %c0_i32_0 = arith.constant 0 : i32
    %c0_i32_1 = arith.constant 0 : i32
    return %c0_i32, %c0_i32_0 : i32, i32
  }
  func.func @transform_2(%arg0: i32, %arg1: i32) -> (i32, i32) {
    %c0_i32 = arith.constant 0 : i32
    %c0_i32_0 = arith.constant 0 : i32
    %c0_i32_1 = arith.constant 0 : i32
    return %c0_i32, %c0_i32_0 : i32, i32
  }
}

module attributes {stable_mosaic.version = 11 : i64} {
  func.func @_x27_stats_kernel(%arg0: i32, %arg1: i32, %arg2: memref<1x128x512xf32, #tpu.memory_space<vmem>>, %arg3: memref<1x128x512xf32, #tpu.memory_space<vmem>>, %arg4: memref<128x1xf32, #tpu.memory_space<vmem>>, %arg5: memref<128x1xf32, #tpu.memory_space<vmem>>, %arg6: memref<128x1xf32, #tpu.memory_space<vmem>>, %arg7: memref<128x128xf32, #tpu.memory_space<vmem>>) attributes {dimension_semantics = [#tpu.dimension_semantics<arbitrary>, #tpu.dimension_semantics<arbitrary>], iteration_bounds = array<i64: 1, 2>, scalar_prefetch = 0 : i64, scratch_operands = 0 : i64, tpu.core_type = #tpu.core_type<tc>, window_params = [{transform_indices = @transform_0, window_bounds = array<i64: 1, 128, 512>}, {transform_indices = @transform_1, window_bounds = array<i64: 1, 128, 512>}, {pipeline_mode = #tpu.pipeline_mode<synchronous>, transform_indices = @transform_2, window_bounds = array<i64: 128, 1>}, {pipeline_mode = #tpu.pipeline_mode<synchronous>, transform_indices = @transform_3, window_bounds = array<i64: 128, 1>}, {pipeline_mode = #tpu.pipeline_mode<synchronous>, transform_indices = @transform_4, window_bounds = array<i64: 128, 1>}, {pipeline_mode = #tpu.pipeline_mode<synchronous>, transform_indices = @transform_5, window_bounds = array<i64: 128, 128>}]} {
    %c0_i32 = arith.constant 0 : i32
    %0 = arith.cmpi eq, %arg0, %c0_i32 : i32
    %c0_i32_0 = arith.constant 0 : i32
    %1 = arith.cmpi eq, %arg1, %c0_i32_0 : i32
    %2 = arith.andi %0, %1 : i1
    %3 = arith.extui %2 : i1 to i32
    %c0_i32_1 = arith.constant 0 : i32
    %4 = arith.cmpi ne, %3, %c0_i32_1 : i32
    scf.if %4 {
      %cst_22 = arith.constant 0.000000e+00 : f32
      %35 = vector.broadcast %cst_22 : f32 to vector<128x1xf32>
      %c0_23 = arith.constant 0 : index
      %c0_24 = arith.constant 0 : index
      %36 = vector.load %arg6[%c0_23, %c0_24] : memref<128x1xf32, #tpu.memory_space<vmem>>, vector<128x1xf32>
      tpu.vector_store %arg6[%c0_23, %c0_24], %35 {strides = array<i32>} : memref<128x1xf32, #tpu.memory_space<vmem>>, vector<128x1xf32>,
      %cst_25 = arith.constant 0.000000e+00 : f32
      %37 = vector.broadcast %cst_25 : f32 to vector<128x128xf32>
      %c0_26 = arith.constant 0 : index
      %c0_27 = arith.constant 0 : index
      %38 = vector.load %arg7[%c0_26, %c0_27] : memref<128x128xf32, #tpu.memory_space<vmem>>, vector<128x128xf32>
      tpu.vector_store %arg7[%c0_26, %c0_27], %37 {strides = array<i32>} : memref<128x128xf32, #tpu.memory_space<vmem>>, vector<128x128xf32>,
    } else {
    }
    %c0 = arith.constant 0 : index
    %c0_2 = arith.constant 0 : index
    %c0_3 = arith.constant 0 : index
    %5 = vector.load %arg2[%c0, %c0_2, %c0_3] : memref<1x128x512xf32, #tpu.memory_space<vmem>>, vector<1x128x512xf32>
    %6 = vector.shape_cast %5 : vector<1x128x512xf32> to vector<128x512xf32>
    %c0_4 = arith.constant 0 : index
    %c0_5 = arith.constant 0 : index
    %7 = vector.load %arg4[%c0_4, %c0_5] : memref<128x1xf32, #tpu.memory_space<vmem>>, vector<128x1xf32>
    %8 = vector.broadcast %7 : vector<128x1xf32> to vector<128x512xf32>
    %9 = arith.mulf %6, %8 : vector<128x512xf32>
    %c0_6 = arith.constant 0 : index
    %c0_7 = arith.constant 0 : index
    %10 = vector.load %arg5[%c0_6, %c0_7] : memref<128x1xf32, #tpu.memory_space<vmem>>, vector<128x1xf32>
    %11 = vector.broadcast %10 : vector<128x1xf32> to vector<128x512xf32>
    %12 = arith.addf %9, %11 : vector<128x512xf32>
    %c0_8 = arith.constant 0 : index
    %c0_9 = arith.constant 0 : index
    %c0_10 = arith.constant 0 : index
    %13 = vector.load %arg3[%c0_8, %c0_9, %c0_10] : memref<1x128x512xf32, #tpu.memory_space<vmem>>, vector<1x128x512xf32>
    %14 = vector.shape_cast %13 : vector<1x128x512xf32> to vector<128x512xf32>
    %15 = arith.addf %12, %14 : vector<128x512xf32>
    %cst = arith.constant 0.000000e+00 : f32
    %16 = vector.broadcast %cst : f32 to vector<128x512xf32>
    %17 = arith.maximumf %15, %16 : vector<128x512xf32>
    %c512_i32 = arith.constant 512 : i32
    %18 = arith.muli %arg1, %c512_i32 : i32
    %19 = tpu.iota {dimensions = array<i32: 1>} : vector<128x512xi32>
    %20 = vector.broadcast %18 : i32 to vector<128x512xi32>
    %21 = arith.addi %20, %19 : vector<128x512xi32>
    %c784_i32 = arith.constant 784 : i32
    %22 = vector.broadcast %c784_i32 : i32 to vector<128x512xi32>
    %23 = arith.cmpi slt, %21, %22 : vector<128x512xi32>
    %cst_11 = arith.constant 0.000000e+00 : f32
    %24 = vector.broadcast %cst_11 : f32 to vector<128x512xf32>
    %25 = arith.select %23, %17, %24 : vector<128x512xi1>, vector<128x512xf32>
    %c0_12 = arith.constant 0 : index
    %c0_13 = arith.constant 0 : index
    %26 = vector.load %arg6[%c0_12, %c0_13] : memref<128x1xf32, #tpu.memory_space<vmem>>, vector<128x1xf32>
    %cst_14 = arith.constant dense<0.000000e+00> : vector<128xf32>
    %27 = vector.multi_reduction <add>, %25, %cst_14 [1] : vector<128x512xf32> to vector<128xf32>
    %28 = vector.shape_cast %27 : vector<128xf32> to vector<128x1xf32>
    %29 = arith.addf %26, %28 : vector<128x1xf32>
    %c0_15 = arith.constant 0 : index
    %c0_16 = arith.constant 0 : index
    %30 = vector.load %arg6[%c0_15, %c0_16] : memref<128x1xf32, #tpu.memory_space<vmem>>, vector<128x1xf32>
    tpu.vector_store %arg6[%c0_15, %c0_16], %29 {strides = array<i32>} : memref<128x1xf32, #tpu.memory_space<vmem>>, vector<128x1xf32>,
    %c0_17 = arith.constant 0 : index
    %c0_18 = arith.constant 0 : index
    %31 = vector.load %arg7[%c0_17, %c0_18] : memref<128x128xf32, #tpu.memory_space<vmem>>, vector<128x128xf32>
    %cst_19 = arith.constant dense<0.000000e+00> : vector<128x128xf32>
    %32 = tpu.matmul %25, %25, %cst_19 {dimension_numbers = #tpu.dot_dimension_numbers<[1], [1], [0], [0], [0, 0, 1, 0], [], []>} : vector<128x512xf32>, vector<128x512xf32>, vector<128x128xf32> -> vector<128x128xf32>
    %33 = arith.addf %31, %32 : vector<128x128xf32>
    %c0_20 = arith.constant 0 : index
    %c0_21 = arith.constant 0 : index
    %34 = vector.load %arg7[%c0_20, %c0_21] : memref<128x128xf32, #tpu.memory_space<vmem>>, vector<128x128xf32>
    tpu.vector_store %arg7[%c0_20, %c0_21], %33 {strides = array<i32>} : memref<128x128xf32, #tpu.memory_space<vmem>>, vector<128x128xf32>,
    return
  }
  func.func @transform_0(%arg0: i32, %arg1: i32) -> (i32, i32, i32) {
    %c0_i32 = arith.constant 0 : i32
    %c0_i32_0 = arith.constant 0 : i32
    return %arg0, %c0_i32, %arg1 : i32, i32, i32
  }
  func.func @transform_1(%arg0: i32, %arg1: i32) -> (i32, i32, i32) {
    %c0_i32 = arith.constant 0 : i32
    %c0_i32_0 = arith.constant 0 : i32
    return %arg0, %c0_i32, %arg1 : i32, i32, i32
  }
  func.func @transform_2(%arg0: i32, %arg1: i32) -> (i32, i32) {
    %c0_i32 = arith.constant 0 : i32
    %c0_i32_0 = arith.constant 0 : i32
    %c0_i32_1 = arith.constant 0 : i32
    return %c0_i32, %c0_i32_0 : i32, i32
  }
  func.func @transform_3(%arg0: i32, %arg1: i32) -> (i32, i32) {
    %c0_i32 = arith.constant 0 : i32
    %c0_i32_0 = arith.constant 0 : i32
    %c0_i32_1 = arith.constant 0 : i32
    return %c0_i32, %c0_i32_0 : i32, i32
  }
  func.func @transform_4(%arg0: i32, %arg1: i32) -> (i32, i32) {
    %c0_i32 = arith.constant 0 : i32
    %c0_i32_0 = arith.constant 0 : i32
    %c0_i32_1 = arith.constant 0 : i32
    return %c0_i32, %c0_i32_0 : i32, i32
  }
  func.func @transform_5(%arg0: i32, %arg1: i32) -> (i32, i32) {
    %c0_i32 = arith.constant 0 : i32
    %c0_i32_0 = arith.constant 0 : i32
    %c0_i32_1 = arith.constant 0 : i32
    return %c0_i32, %c0_i32_0 : i32, i32
  }
}

module attributes {stable_mosaic.version = 11 : i64} {
  func.func @_apply_kernel(%arg0: i32, %arg1: i32, %arg2: memref<1x128x512xf32, #tpu.memory_space<vmem>>, %arg3: memref<1x128x512xf32, #tpu.memory_space<vmem>>, %arg4: memref<128x1xf32, #tpu.memory_space<vmem>>, %arg5: memref<128x1xf32, #tpu.memory_space<vmem>>, %arg6: memref<128x128xf32, #tpu.memory_space<vmem>>, %arg7: memref<128x1xf32, #tpu.memory_space<vmem>>, %arg8: memref<1x128x512xf32, #tpu.memory_space<vmem>>) attributes {dimension_semantics = [#tpu.dimension_semantics<parallel>, #tpu.dimension_semantics<parallel>], iteration_bounds = array<i64: 1, 2>, scalar_prefetch = 0 : i64, scratch_operands = 0 : i64, tpu.core_type = #tpu.core_type<tc>, window_params = [{transform_indices = @transform_0, window_bounds = array<i64: 1, 128, 512>}, {transform_indices = @transform_1, window_bounds = array<i64: 1, 128, 512>}, {pipeline_mode = #tpu.pipeline_mode<synchronous>, transform_indices = @transform_2, window_bounds = array<i64: 128, 1>}, {pipeline_mode = #tpu.pipeline_mode<synchronous>, transform_indices = @transform_3, window_bounds = array<i64: 128, 1>}, {pipeline_mode = #tpu.pipeline_mode<synchronous>, transform_indices = @transform_4, window_bounds = array<i64: 128, 128>}, {pipeline_mode = #tpu.pipeline_mode<synchronous>, transform_indices = @transform_5, window_bounds = array<i64: 128, 1>}, {transform_indices = @transform_6, window_bounds = array<i64: 1, 128, 512>}]} {
    %c0 = arith.constant 0 : index
    %c0_0 = arith.constant 0 : index
    %c0_1 = arith.constant 0 : index
    %0 = vector.load %arg2[%c0, %c0_0, %c0_1] : memref<1x128x512xf32, #tpu.memory_space<vmem>>, vector<1x128x512xf32>
    %1 = vector.shape_cast %0 : vector<1x128x512xf32> to vector<128x512xf32>
    %c0_2 = arith.constant 0 : index
    %c0_3 = arith.constant 0 : index
    %2 = vector.load %arg4[%c0_2, %c0_3] : memref<128x1xf32, #tpu.memory_space<vmem>>, vector<128x1xf32>
    %3 = vector.broadcast %2 : vector<128x1xf32> to vector<128x512xf32>
    %4 = arith.mulf %1, %3 : vector<128x512xf32>
    %c0_4 = arith.constant 0 : index
    %c0_5 = arith.constant 0 : index
    %5 = vector.load %arg5[%c0_4, %c0_5] : memref<128x1xf32, #tpu.memory_space<vmem>>, vector<128x1xf32>
    %6 = vector.broadcast %5 : vector<128x1xf32> to vector<128x512xf32>
    %7 = arith.addf %4, %6 : vector<128x512xf32>
    %c0_6 = arith.constant 0 : index
    %c0_7 = arith.constant 0 : index
    %c0_8 = arith.constant 0 : index
    %8 = vector.load %arg3[%c0_6, %c0_7, %c0_8] : memref<1x128x512xf32, #tpu.memory_space<vmem>>, vector<1x128x512xf32>
    %9 = vector.shape_cast %8 : vector<1x128x512xf32> to vector<128x512xf32>
    %10 = arith.addf %7, %9 : vector<128x512xf32>
    %cst = arith.constant 0.000000e+00 : f32
    %11 = vector.broadcast %cst : f32 to vector<128x512xf32>
    %12 = arith.maximumf %10, %11 : vector<128x512xf32>
    %c0_9 = arith.constant 0 : index
    %c0_10 = arith.constant 0 : index
    %13 = vector.load %arg6[%c0_9, %c0_10] : memref<128x128xf32, #tpu.memory_space<vmem>>, vector<128x128xf32>
    %cst_11 = arith.constant dense<0.000000e+00> : vector<128x512xf32>
    %14 = tpu.matmul %13, %12, %cst_11 {dimension_numbers = #tpu.dot_dimension_numbers<[1], [0], [0], [1], [0, 0, 1, 1], [], []>} : vector<128x128xf32>, vector<128x512xf32>, vector<128x512xf32> -> vector<128x512xf32>
    %c0_12 = arith.constant 0 : index
    %c0_13 = arith.constant 0 : index
    %15 = vector.load %arg7[%c0_12, %c0_13] : memref<128x1xf32, #tpu.memory_space<vmem>>, vector<128x1xf32>
    %16 = vector.broadcast %15 : vector<128x1xf32> to vector<128x512xf32>
    %17 = arith.addf %14, %16 : vector<128x512xf32>
    %c0_14 = arith.constant 0 : index
    %c0_15 = arith.constant 0 : index
    %c0_16 = arith.constant 0 : index
    %18 = vector.load %arg8[%c0_14, %c0_15, %c0_16] : memref<1x128x512xf32, #tpu.memory_space<vmem>>, vector<1x128x512xf32>
    %19 = vector.shape_cast %18 : vector<1x128x512xf32> to vector<128x512xf32>
    %20 = vector.shape_cast %17 : vector<128x512xf32> to vector<1x128x512xf32>
    tpu.vector_store %arg8[%c0_14, %c0_15, %c0_16], %20 {strides = array<i32>} : memref<1x128x512xf32, #tpu.memory_space<vmem>>, vector<1x128x512xf32>,
    return
  }
  func.func @transform_0(%arg0: i32, %arg1: i32) -> (i32, i32, i32) {
    %c0_i32 = arith.constant 0 : i32
    %c0_i32_0 = arith.constant 0 : i32
    return %arg0, %c0_i32, %arg1 : i32, i32, i32
  }
  func.func @transform_1(%arg0: i32, %arg1: i32) -> (i32, i32, i32) {
    %c0_i32 = arith.constant 0 : i32
    %c0_i32_0 = arith.constant 0 : i32
    return %arg0, %c0_i32, %arg1 : i32, i32, i32
  }
  func.func @transform_2(%arg0: i32, %arg1: i32) -> (i32, i32) {
    %c0_i32 = arith.constant 0 : i32
    %c0_i32_0 = arith.constant 0 : i32
    %c0_i32_1 = arith.constant 0 : i32
    return %c0_i32, %c0_i32_0 : i32, i32
  }
  func.func @transform_3(%arg0: i32, %arg1: i32) -> (i32, i32) {
    %c0_i32 = arith.constant 0 : i32
    %c0_i32_0 = arith.constant 0 : i32
    %c0_i32_1 = arith.constant 0 : i32
    return %c0_i32, %c0_i32_0 : i32, i32
  }
  func.func @transform_4(%arg0: i32, %arg1: i32) -> (i32, i32) {
    %c0_i32 = arith.constant 0 : i32
    %c0_i32_0 = arith.constant 0 : i32
    %c0_i32_1 = arith.constant 0 : i32
    return %c0_i32, %c0_i32_0 : i32, i32
  }
  func.func @transform_5(%arg0: i32, %arg1: i32) -> (i32, i32) {
    %c0_i32 = arith.constant 0 : i32
    %c0_i32_0 = arith.constant 0 : i32
    %c0_i32_1 = arith.constant 0 : i32
    return %c0_i32, %c0_i32_0 : i32, i32
  }
  func.func @transform_6(%arg0: i32, %arg1: i32) -> (i32, i32, i32) {
    %c0_i32 = arith.constant 0 : i32
    %c0_i32_0 = arith.constant 0 : i32
    return %arg0, %c0_i32, %arg1 : i32, i32, i32
  }
}

</mosaic_0001>

<llo_original>
// kernel: fused_bn_add_relu_conv_bn.3
$region0: #{fused_bn_add_relu_conv_bn.3}
  #allocation0 [shape = 'u32[]', space=smem, size = 0x4, offset = 0x4, fixed_abs, tag = 'smem constant byte address 0x4 - core index']
  #allocation1 [shape = 'u32[144,128]{1,0:T(1,128)}', space=vmem, size = 0x12000, scoped, tag = 'internal scratch']
  %s0 = inlined_call_operand.vmem [shape: f32[1,128,784], index: 0, kind: input, shape index: {}]
  %s1 = inlined_call_operand.vmem [shape: f32[128,1], index: 1, kind: output, shape index: {0}]
  %s2 = inlined_call_operand.vmem [shape: f32[128,1], index: 2, kind: output, shape index: {1}]
  %3 = xla_tuple %s1, %s2
  %s4 = sld [smem:[#allocation0]]
  $region115: #{fused_bn_add_relu_conv_bn.3} parent=0
    _
  %s6 = ssub.s32 1, %s4
  %s7 = scalar_select 0, %s6, %s4
  $region1: #{fused_bn_add_relu_conv_bn.3} parent=0
    #allocation2 [shape = 'u8[524288]{0}', space=vmem, size = 0x80000, scoped, tag = 'input window, operand 0']
    loop: start=0, step=1, limit=4
    $region2: #{fused_bn_add_relu_conv_bn.3} parent=1 // loop_pre_header
      _
    $region3: #{fused_bn_add_relu_conv_bn.3} parent=1 // loop_header
      %s9 = sphi 0, %s13
      %p10 = scmp.ge.s32.totalorder %s9, 4
      %s16 = sphi 0, %s28
      %s17 = sphi 0, %s24
      %s18 = sphi 0, %s16
      %s19 = sphi 0, %s17
      %s20 = sphi 0, %s18
      %s21 = sphi 0, %s19
      %s33 = sphi 0, %s35
      %s36 = sphi 0, %s33
      %s37 = sphi 0, %s36
      %s53 = sphi 0, %s37
      %s57 = sphi 0, %s57
      %s59 = sphi 0, %s57
      %s60 = sphi 0, %s59
      %s74 = sphi 0, %s60
      %s78 = sphi 0, %s78
      %s80 = sphi 0, %s78
      %s81 = sphi 0, %s80
      %s95 = sphi 0, %s81
    $region4: #{fused_bn_add_relu_conv_bn.3} parent=1 // loop_header_branch
      %12 = sbr.rel (%p10) target = $region8
    $region5: #{fused_bn_add_relu_conv_bn.3} parent=1 // loop_body
      %s14 = ssub.s32 %s9, 1
      %s15 = ssub.s32 %s9, 2
      %s22 = sadd.s32 1, %s17
      %p23 = scmp.ge.s32.totalorder %s22, 2
      %s24 = scalar_select %p23, 0, %s22
      %s25 = sadd.s32 1, %s16
      %s26 = scalar_select %p23, %s25, %s16
      %p27 = scmp.ge.s32.totalorder %s26, 1
      %s28 = scalar_select %p27, 0, %s26
      %s29 = ssub.s32 %s16, %s28
      %s30 = ssub.s32 %s17, %s24
      %s31 = sor.u32 %s29, %s30
      %p32 = scmp.eq.s32.totalorder %s31, 0
      %s34 = sadd.s32 %s33, 1
      %s35 = scalar_select %p32, %s33, %s34
      %p38 = pneg %p32
      %p39 = scmp.eq.s32.totalorder %s9, 1
      %p40 = por %p38, %p39
      %p41 = scmp.ne.s32.totalorder %s33, %s36
      %p42 = scmp.eq.s32.totalorder %s9, 0
      %p43 = por %p41, %p42
      %p44 = scmp.ne.s32.totalorder %s33, %s36
      %p45 = scmp.eq.s32.totalorder %s14, 1
      %p46 = por %p44, %p45
      %p47 = scmp.ne.s32.totalorder %s36, %s37
      %p48 = scmp.eq.s32.totalorder %s14, 0
      %p49 = por %p47, %p48
      %p50 = scmp.ne.s32.totalorder %s36, %s37
      %p51 = scmp.eq.s32.totalorder %s15, 1
      %p52 = por %p50, %p51
      %p54 = scmp.ne.s32.totalorder %s37, %s53
      %p55 = scmp.eq.s32.totalorder %s15, 0
      %p56 = por %p54, %p55
      %s58 = sadd.s32 %s57, 1
      %p61 = scmp.eq.s32.totalorder %s9, 1
      %p62 = scmp.ne.s32.totalorder %s57, %s59
      %p63 = scmp.eq.s32.totalorder %s9, 0
      %p64 = por %p62, %p63
      %p65 = scmp.ne.s32.totalorder %s57, %s59
      %p66 = scmp.eq.s32.totalorder %s14, 1
      %p67 = por %p65, %p66
      %p68 = scmp.ne.s32.totalorder %s59, %s60
      %p69 = scmp.eq.s32.totalorder %s14, 0
      %p70 = por %p68, %p69
      %p71 = scmp.ne.s32.totalorder %s59, %s60
      %p72 = scmp.eq.s32.totalorder %s15, 1
      %p73 = por %p71, %p72
      %p75 = scmp.ne.s32.totalorder %s60, %s74
      %p76 = scmp.eq.s32.totalorder %s15, 0
      %p77 = por %p75, %p76
      %s79 = sadd.s32 %s78, 1
      %p82 = scmp.eq.s32.totalorder %s9, 1
      %p83 = scmp.ne.s32.totalorder %s78, %s80
      %p84 = scmp.eq.s32.totalorder %s9, 0
      %p85 = por %p83, %p84
      %p86 = scmp.ne.s32.totalorder %s78, %s80
      %p87 = scmp.eq.s32.totalorder %s14, 1
      %p88 = por %p86, %p87
      %p89 = scmp.ne.s32.totalorder %s80, %s81
      %p90 = scmp.eq.s32.totalorder %s14, 0
      %p91 = por %p89, %p90
      %p92 = scmp.ne.s32.totalorder %s80, %s81
      %p93 = scmp.eq.s32.totalorder %s15, 1
      %p94 = por %p92, %p93
      %p96 = scmp.ne.s32.totalorder %s81, %s95
      %p97 = scmp.eq.s32.totalorder %s15, 0
      %p98 = por %p96, %p97
      %p99 = scmp.le.s32.totalorder 1, %s9
      %p100 = scmp.lt.s32.totalorder %s9, 3
      %p101 = pnand %p99, %p100
      %p102 = pneg %p101
      // Predicated region
      $region9: #{fused_bn_add_relu_conv_bn.3} parent=5 // pred_check
        _
      $region10: #{fused_bn_add_relu_conv_bn.3} parent=5 // pred_check_branch
        %104 = sbr.rel (%p101) target = $region12
      $region11: #{fused_bn_add_relu_conv_bn.3} parent=5 // pred_region
        %s105 = ssub.s32 %s9, 1
      $region12: #{fused_bn_add_relu_conv_bn.3} parent=5 // pred_fallthru
        _
      %p106 = scmp.lt.s32.totalorder %s9, 2
      // Predicated region
      $region13: #{fused_bn_add_relu_conv_bn.3} parent=5 // pred_check
        %p107 = pneg %p106
      $region14: #{fused_bn_add_relu_conv_bn.3} parent=5 // pred_check_branch
        %109 = sbr.rel (%p107) target = $region16
      $region15: #{fused_bn_add_relu_conv_bn.3} parent=5 // pred_region
        // Predicated region
        $region17: #{fused_bn_add_relu_conv_bn.3} parent=15 // pred_check
          %p110 = pneg %p43
        $region18: #{fused_bn_add_relu_conv_bn.3} parent=15 // pred_check_branch
          %112 = sbr.rel (%p110) target = $region20
        $region19: #{fused_bn_add_relu_conv_bn.3} parent=15 // pred_region
          %s113 = sand.u32 %s33, 1
          %s114 = sand.u32 %s33, 1
          %s115 = smul.addr %s114, 512
          %s116 = scalar_lea.vmem [#allocation2], %s115
          %s117 = smul.u32 4, %s17
          %s118 = ssub.s32 7, %s117
          %p119 = scmp.lt.s32.totalorder %s118, 4
          %s120 = scalar_select %p119, %s118, 4
          %s121 = smul.u32 2048, %s120
          %p122 = scmp.ne.s32.totalorder 0, %s121
          %s123 = smul.addr %s16, 112
          %s124 = sadd.s32 %s117, %s123
          %s125 = smul.addr %s124, 8
          %s126 = scalar_lea.vmem %s0, %s125
          %s127 = smul.u32 %s120, 8
          // Predicated region
          $region21: #{fused_bn_add_relu_conv_bn.3} parent=19 // pred_check
            %p128 = pneg %p122
          $region22: #{fused_bn_add_relu_conv_bn.3} parent=19 // pred_check_branch
            %130 = sbr.rel (%p128) target = $region24
          $region23: #{fused_bn_add_relu_conv_bn.3} parent=19 // pred_region
            %p131 = scmp.lt.u32.totalorder %s127, 8
            %p132 = pneg %p131
            // Predicated region
            $region25: #{fused_bn_add_relu_conv_bn.3} parent=23 // pred_check
              _
            $region26: #{fused_bn_add_relu_conv_bn.3} parent=23 // pred_check_branch
              %134 = sbr.rel (%p131) target = $region28
            $region27: #{fused_bn_add_relu_conv_bn.3} parent=23 // pred_region
              %s180 = sand.u32 %s127, 7
              %p181 = scmp.eq.s32.totalorder %s180, 0
              // Predicated region
              $region40: #{fused_bn_add_relu_conv_bn.3} parent=27 // pred_check
                %p182 = pneg %p181
              $region41: #{fused_bn_add_relu_conv_bn.3} parent=27 // pred_check_branch
                %184 = sbr.rel (%p182) target = $region43
              $region42: #{fused_bn_add_relu_conv_bn.3} parent=27 // pred_region
                %s185 = sshrl.u32 %s127, 3
                %s186 = sshrl.u32 %s185, 2
                // While loop
                $region44: #{fused_bn_add_relu_conv_bn.3} parent=42 // loop_pre_header
                  _
                $region45: #{fused_bn_add_relu_conv_bn.3} parent=42 // loop_header
                  %s190 = sphi 0, %s192
                  %p191 = scmp.ge.s32.totalorder %s190, %s186
                  %s195 = sphi 0, %s328
                  %s196 = sphi %s126, %s331
                  %s197 = sphi %s116, %s332
                $region46: #{fused_bn_add_relu_conv_bn.3} parent=42 // loop_header_branch
                  %194 = sbr.rel (%p191) target = $region50
                $region47: #{fused_bn_add_relu_conv_bn.3} parent=42 // loop_body
                  %v198 = vld [vmem:[%s196] sm:$0xff]
                  %199 = vst [vmem:[%s197] sm:$0xff] %v198
                  %v200 = vld [vmem:[%s196 + $0x8] sm:$0xff]
                  %201 = vst [vmem:[%s197 + $0x8] sm:$0xff] %v200
                  %v202 = vld [vmem:[%s196 + $0x10] sm:$0xff]
                  %203 = vst [vmem:[%s197 + $0x10] sm:$0xff] %v202
                  %v204 = vld [vmem:[%s196 + $0x18] sm:$0xff]
                  %205 = vst [vmem:[%s197 + $0x18] sm:$0xff] %v204
                  %v206 = vld [vmem:[%s196 + $0x38] sm:$0xff]
                  %207 = vst [vmem:[%s197 + $0x20] sm:$0xff] %v206
                  %v208 = vld [vmem:[%s196 + $0x40] sm:$0xff]
                  %209 = vst [vmem:[%s197 + $0x28] sm:$0xff] %v208
                  %v210 = vld [vmem:[%s196 + $0x48] sm:$0xff]
                  %211 = vst [vmem:[%s197 + $0x30] sm:$0xff] %v210
                  %v212 = vld [vmem:[%s196 + $0x50] sm:$0xff]
                  %213 = vst [vmem:[%s197 + $0x38] sm:$0xff] %v212
                  %v214 = vld [vmem:[%s196 + $0x70] sm:$0xff]
                  %215 = vst [vmem:[%s197 + $0x40] sm:$0xff] %v214
                  %v216 = vld [vmem:[%s196 + $0x78] sm:$0xff]
                  %217 = vst [vmem:[%s197 + $0x48] sm:$0xff] %v216
                  %v218 = vld [vmem:[%s196 + $0x80] sm:$0xff]
                  %219 = vst [vmem:[%s197 + $0x50] sm:$0xff] %v218
                  %v220 = vld [vmem:[%s196 + $0x88] sm:$0xff]
                  %221 = vst [vmem:[%s197 + $0x58] sm:$0xff] %v220
                  %v222 = vld [vmem:[%s196 + $0xa8] sm:$0xff]
                  %223 = vst [vmem:[%s197 + $0x60] sm:$0xff] %v222
                  %v224 = vld [vmem:[%s196 + $0xb0] sm:$0xff]
                  %225 = vst [vmem:[%s197 + $0x68] sm:$0xff] %v224
                  %v226 = vld [vmem:[%s196 + $0xb8] sm:$0xff]
                  %227 = vst [vmem:[%s197 + $0x70] sm:$0xff] %v226
                  %v228 = vld [vmem:[%s196 + $0xc0] sm:$0xff]
                  %229 = vst [vmem:[%s197 + $0x78] sm:$0xff] %v228
                  %v230 = vld [vmem:[%s196 + $0xe0] sm:$0xff]
                  %231 = vst [vmem:[%s197 + $0x80] sm:$0xff] %v230
                  %v232 = vld [vmem:[%s196 + $0xe8] sm:$0xff]
                  %233 = vst [vmem:[%s197 + $0x88] sm:$0xff] %v232
                  %v234 = vld [vmem:[%s196 + $0xf0] sm:$0xff]
                  %235 = vst [vmem:[%s197 + $0x90] sm:$0xff] %v234
                  %v236 = vld [vmem:[%s196 + $0xf8] sm:$0xff]
                  %237 = vst [vmem:[%s197 + $0x98] sm:$0xff] %v236
                  %v238 = vld [vmem:[%s196 + $0x118] sm:$0xff]
                  %239 = vst [vmem:[%s197 + $0xa0] sm:$0xff] %v238
                  %v240 = vld [vmem:[%s196 + $0x120] sm:$0xff]
                  %241 = vst [vmem:[%s197 + $0xa8] sm:$0xff] %v240
                  %v242 = vld [vmem:[%s196 + $0x128] sm:$0xff]
                  %243 = vst [vmem:[%s197 + $0xb0] sm:$0xff] %v242
                  %v244 = vld [vmem:[%s196 + $0x130] sm:$0xff]
                  %245 = vst [vmem:[%s197 + $0xb8] sm:$0xff] %v244
                  %v246 = vld [vmem:[%s196 + $0x150] sm:$0xff]
                  %247 = vst [vmem:[%s197 + $0xc0] sm:$0xff] %v246
                  %v248 = vld [vmem:[%s196 + $0x158] sm:$0xff]
                  %249 = vst [vmem:[%s197 + $0xc8] sm:$0xff] %v248
                  %v250 = vld [vmem:[%s196 + $0x160] sm:$0xff]
                  %251 = vst [vmem:[%s197 + $0xd0] sm:$0xff] %v250
                  %v252 = vld [vmem:[%s196 + $0x168] sm:$0xff]
                  %253 = vst [vmem:[%s197 + $0xd8] sm:$0xff] %v252
                  %v254 = vld [vmem:[%s196 + $0x188] sm:$0xff]
                  %255 = vst [vmem:[%s197 + $0xe0] sm:$0xff] %v254
                  %v256 = vld [vmem:[%s196 + $0x190] sm:$0xff]
                  %257 = vst [vmem:[%s197 + $0xe8] sm:$0xff] %v256
                  %v258 = vld [vmem:[%s196 + $0x198] sm:$0xff]
                  %259 = vst [vmem:[%s197 + $0xf0] sm:$0xff] %v258
                  %v260 = vld [vmem:[%s196 + $0x1a0] sm:$0xff]
                  %261 = vst [vmem:[%s197 + $0xf8] sm:$0xff] %v260
                  %v262 = vld [vmem:[%s196 + $0x1c0] sm:$0xff]
                  %263 = vst [vmem:[%s197 + $0x100] sm:$0xff] %v262
                  %v264 = vld [vmem:[%s196 + $0x1c8] sm:$0xff]
                  %265 = vst [vmem:[%s197 + $0x108] sm:$0xff] %v264
                  %v266 = vld [vmem:[%s196 + $0x1d0] sm:$0xff]
                  %267 = vst [vmem:[%s197 + $0x110] sm:$0xff] %v266
                  %v268 = vld [vmem:[%s196 + $0x1d8] sm:$0xff]
                  %269 = vst [vmem:[%s197 + $0x118] sm:$0xff] %v268
                  %v270 = vld [vmem:[%s196 + $0x1f8] sm:$0xff]
                  %271 = vst [vmem:[%s197 + $0x120] sm:$0xff] %v270
                  %v272 = vld [vmem:[%s196 + $0x200] sm:$0xff]
                  %273 = vst [vmem:[%s197 + $0x128] sm:$0xff] %v272
                  %v274 = vld [vmem:[%s196 + $0x208] sm:$0xff]
                  %275 = vst [vmem:[%s197 + $0x130] sm:$0xff] %v274
                  %v276 = vld [vmem:[%s196 + $0x210] sm:$0xff]
                  %277 = vst [vmem:[%s197 + $0x138] sm:$0xff] %v276
                  %v278 = vld [vmem:[%s196 + $0x230] sm:$0xff]
                  %279 = vst [vmem:[%s197 + $0x140] sm:$0xff] %v278
                  %v280 = vld [vmem:[%s196 + $0x238] sm:$0xff]
                  %281 = vst [vmem:[%s197 + $0x148] sm:$0xff] %v280
                  %v282 = vld [vmem:[%s196 + $0x240] sm:$0xff]
                  %283 = vst [vmem:[%s197 + $0x150] sm:$0xff] %v282
                  %v284 = vld [vmem:[%s196 + $0x248] sm:$0xff]
                  %285 = vst [vmem:[%s197 + $0x158] sm:$0xff] %v284
                  %v286 = vld [vmem:[%s196 + $0x268] sm:$0xff]
                  %287 = vst [vmem:[%s197 + $0x160] sm:$0xff] %v286
                  %v288 = vld [vmem:[%s196 + $0x270] sm:$0xff]
                  %289 = vst [vmem:[%s197 + $0x168] sm:$0xff] %v288
                  %v290 = vld [vmem:[%s196 + $0x278] sm:$0xff]
                  %291 = vst [vmem:[%s197 + $0x170] sm:$0xff] %v290
                  %v292 = vld [vmem:[%s196 + $0x280] sm:$0xff]
                  %293 = vst [vmem:[%s197 + $0x178] sm:$0xff] %v292
                  %v294 = vld [vmem:[%s196 + $0x2a0] sm:$0xff]
                  %295 = vst [vmem:[%s197 + $0x180] sm:$0xff] %v294
                  %v296 = vld [vmem:[%s196 + $0x2a8] sm:$0xff]
                  %297 = vst [vmem:[%s197 + $0x188] sm:$0xff] %v296
                  %v298 = vld [vmem:[%s196 + $0x2b0] sm:$0xff]
                  %299 = vst [vmem:[%s197 + $0x190] sm:$0xff] %v298
                  %v300 = vld [vmem:[%s196 + $0x2b8] sm:$0xff]
                  %301 = vst [vmem:[%s197 + $0x198] sm:$0xff] %v300
                  %v302 = vld [vmem:[%s196 + $0x2d8] sm:$0xff]
                  %303 = vst [vmem:[%s197 + $0x1a0] sm:$0xff] %v302
                  %v304 = vld [vmem:[%s196 + $0x2e0] sm:$0xff]
                  %305 = vst [vmem:[%s197 + $0x1a8] sm:$0xff] %v304
                  %v306 = vld [vmem:[%s196 + $0x2e8] sm:$0xff]
                  %307 = vst [vmem:[%s197 + $0x1b0] sm:$0xff] %v306
                  %v308 = vld [vmem:[%s196 + $0x2f0] sm:$0xff]
                  %309 = vst [vmem:[%s197 + $0x1b8] sm:$0xff] %v308
                  %v310 = vld [vmem:[%s196 + $0x310] sm:$0xff]
                  %311 = vst [vmem:[%s197 + $0x1c0] sm:$0xff] %v310
                  %v312 = vld [vmem:[%s196 + $0x318] sm:$0xff]
                  %313 = vst [vmem:[%s197 + $0x1c8] sm:$0xff] %v312
                  %v314 = vld [vmem:[%s196 + $0x320] sm:$0xff]
                  %315 = vst [vmem:[%s197 + $0x1d0] sm:$0xff] %v314
                  %v316 = vld [vmem:[%s196 + $0x328] sm:$0xff]
                  %317 = vst [vmem:[%s197 + $0x1d8] sm:$0xff] %v316
                  %v318 = vld [vmem:[%s196 + $0x348] sm:$0xff]
                  %319 = vst [vmem:[%s197 + $0x1e0] sm:$0xff] %v318
                  %v320 = vld [vmem:[%s196 + $0x350] sm:$0xff]
                  %321 = vst [vmem:[%s197 + $0x1e8] sm:$0xff] %v320
                  %v322 = vld [vmem:[%s196 + $0x358] sm:$0xff]
                  %323 = vst [vmem:[%s197 + $0x1f0] sm:$0xff] %v322
                  %v324 = vld [vmem:[%s196 + $0x360] sm:$0xff]
                  %325 = vst [vmem:[%s197 + $0x1f8] sm:$0xff] %v324
                  %s326 = sadd.s32 1, %s195
                  %p327 = scmp.ge.s32.totalorder %s326, %s186
                  %s328 = scalar_select %p327, 0, %s326
                  %s329 = smul.u32 %s328, 32
                  %s330 = smul.u32 %s328, 32
                  %s331 = scalar_lea.vmem %s126, %s329
                  %s332 = scalar_lea.vmem %s116, %s330 [#allocation2]
                $region48: #{fused_bn_add_relu_conv_bn.3} parent=42 // loop_footer
                  %s192 = sadd.s32 %s190, 1
                $region49: #{fused_bn_add_relu_conv_bn.3} parent=42 // loop_footer_branch
                  %189 = sbr.rel target = $region45
                $region50: #{fused_bn_add_relu_conv_bn.3} parent=42 // loop_exit
                  _
                %s333 = sshrl.u32 %s185, 2
                %s334 = sand.u32 %s185, 3
                %s335 = smul.u32 %s333, 4
                %s336 = smul.u32 128, %s335
                %s337 = sshra.s32 %s336, 4
                %s338 = scalar_lea.vmem %s126, %s337
                %s339 = smul.u32 128, %s335
                %s340 = sshra.s32 %s339, 4
                %s341 = scalar_lea.vmem %s116, %s340 [#allocation2]
                // While loop
                $region51: #{fused_bn_add_relu_conv_bn.3} parent=42 // loop_pre_header
                  _
                $region52: #{fused_bn_add_relu_conv_bn.3} parent=42 // loop_header
                  %s345 = sphi 0, %s347
                  %p346 = scmp.ge.s32.totalorder %s345, %s334
                  %s350 = sphi 0, %s387
                  %s351 = sphi %s338, %s390
                  %s352 = sphi %s341, %s391
                $region53: #{fused_bn_add_relu_conv_bn.3} parent=42 // loop_header_branch
                  %349 = sbr.rel (%p346) target = $region57
                $region54: #{fused_bn_add_relu_conv_bn.3} parent=42 // loop_body
                  %v353 = vld [vmem:[%s351] sm:$0xff]
                  %354 = vst [vmem:[%s352] sm:$0xff] %v353
                  %v355 = vld [vmem:[%s351 + $0x38] sm:$0xff]
                  %356 = vst [vmem:[%s352 + $0x20] sm:$0xff] %v355
                  %v357 = vld [vmem:[%s351 + $0x70] sm:$0xff]
                  %358 = vst [vmem:[%s352 + $0x40] sm:$0xff] %v357
                  %v359 = vld [vmem:[%s351 + $0xa8] sm:$0xff]
                  %360 = vst [vmem:[%s352 + $0x60] sm:$0xff] %v359
                  %v361 = vld [vmem:[%s351 + $0xe0] sm:$0xff]
                  %362 = vst [vmem:[%s352 + $0x80] sm:$0xff] %v361
                  %v363 = vld [vmem:[%s351 + $0x118] sm:$0xff]
                  %364 = vst [vmem:[%s352 + $0xa0] sm:$0xff] %v363
                  %v365 = vld [vmem:[%s351 + $0x150] sm:$0xff]
                  %366 = vst [vmem:[%s352 + $0xc0] sm:$0xff] %v365
                  %v367 = vld [vmem:[%s351 + $0x188] sm:$0xff]
                  %368 = vst [vmem:[%s352 + $0xe0] sm:$0xff] %v367
                  %v369 = vld [vmem:[%s351 + $0x1c0] sm:$0xff]
                  %370 = vst [vmem:[%s352 + $0x100] sm:$0xff] %v369
                  %v371 = vld [vmem:[%s351 + $0x1f8] sm:$0xff]
                  %372 = vst [vmem:[%s352 + $0x120] sm:$0xff] %v371
                  %v373 = vld [vmem:[%s351 + $0x230] sm:$0xff]
                  %374 = vst [vmem:[%s352 + $0x140] sm:$0xff] %v373
                  %v375 = vld [vmem:[%s351 + $0x268] sm:$0xff]
                  %376 = vst [vmem:[%s352 + $0x160] sm:$0xff] %v375
                  %v377 = vld [vmem:[%s351 + $0x2a0] sm:$0xff]
                  %378 = vst [vmem:[%s352 + $0x180] sm:$0xff] %v377
                  %v379 = vld [vmem:[%s351 + $0x2d8] sm:$0xff]
                  %380 = vst [vmem:[%s352 + $0x1a0] sm:$0xff] %v379
                  %v381 = vld [vmem:[%s351 + $0x310] sm:$0xff]
                  %382 = vst [vmem:[%s352 + $0x1c0] sm:$0xff] %v381
                  %v383 = vld [vmem:[%s351 + $0x348] sm:$0xff]
                  %384 = vst [vmem:[%s352 + $0x1e0] sm:$0xff] %v383
                  %s385 = sadd.s32 1, %s350
                  %p386 = scmp.ge.s32.totalorder %s385, %s334
                  %s387 = scalar_select %p386, 0, %s385
                  %s388 = smul.u32 %s387, 8
                  %s389 = smul.u32 %s387, 8
                  %s390 = scalar_lea.vmem %s338, %s388
                  %s391 = scalar_lea.vmem %s341, %s389 [#allocation2]
                $region55: #{fused_bn_add_relu_conv_bn.3} parent=42 // loop_footer
                  %s347 = sadd.s32 %s345, 1
                $region56: #{fused_bn_add_relu_conv_bn.3} parent=42 // loop_footer_branch
                  %344 = sbr.rel target = $region52
                $region57: #{fused_bn_add_relu_conv_bn.3} parent=42 // loop_exit
                  _
              $region43: #{fused_bn_add_relu_conv_bn.3} parent=27 // pred_fallthru
                _
              %p392 = pneg %p181
              // Predicated region
              $region58: #{fused_bn_add_relu_conv_bn.3} parent=27 // pred_check
                _
              $region59: #{fused_bn_add_relu_conv_bn.3} parent=27 // pred_check_branch
                %394 = sbr.rel (%p181) target = $region61
              $region60: #{fused_bn_add_relu_conv_bn.3} parent=27 // pred_region
                %s395 = sand.u32 %s127, 7
                %s396 = ssub.s32 %s127, %s395
                %s397 = scalar_lea.vmem %s126, %s396
                %s398 = ssub.s32 %s127, %s395
                %s399 = scalar_lea.vmem %s116, %s398 [#allocation2]
                %s400 = sshrl.u32 %s127, 3
                %s401 = sshrl.u32 %s400, 2
                // While loop
                $region62: #{fused_bn_add_relu_conv_bn.3} parent=60 // loop_pre_header
                  _
                $region63: #{fused_bn_add_relu_conv_bn.3} parent=60 // loop_header
                  %s405 = sphi 0, %s407
                  %p406 = scmp.ge.s32.totalorder %s405, %s401
                  %s410 = sphi 0, %s543
                  %s411 = sphi %s126, %s546
                  %s412 = sphi %s116, %s547
                $region64: #{fused_bn_add_relu_conv_bn.3} parent=60 // loop_header_branch
                  %409 = sbr.rel (%p406) target = $region68
                $region65: #{fused_bn_add_relu_conv_bn.3} parent=60 // loop_body
                  %v413 = vld [vmem:[%s411] sm:$0xff]
                  %414 = vst [vmem:[%s412] sm:$0xff] %v413
                  %v415 = vld [vmem:[%s411 + $0x8] sm:$0xff]
                  %416 = vst [vmem:[%s412 + $0x8] sm:$0xff] %v415
                  %v417 = vld [vmem:[%s411 + $0x10] sm:$0xff]
                  %418 = vst [vmem:[%s412 + $0x10] sm:$0xff] %v417
                  %v419 = vld [vmem:[%s411 + $0x18] sm:$0xff]
                  %420 = vst [vmem:[%s412 + $0x18] sm:$0xff] %v419
                  %v421 = vld [vmem:[%s411 + $0x38] sm:$0xff]
                  %422 = vst [vmem:[%s412 + $0x20] sm:$0xff] %v421
                  %v423 = vld [vmem:[%s411 + $0x40] sm:$0xff]
                  %424 = vst [vmem:[%s412 + $0x28] sm:$0xff] %v423
                  %v425 = vld [vmem:[%s411 + $0x48] sm:$0xff]
                  %426 = vst [vmem:[%s412 + $0x30] sm:$0xff] %v425
                  %v427 = vld [vmem:[%s411 + $0x50] sm:$0xff]
                  %428 = vst [vmem:[%s412 + $0x38] sm:$0xff] %v427
                  %v429 = vld [vmem:[%s411 + $0x70] sm:$0xff]
                  %430 = vst [vmem:[%s412 + $0x40] sm:$0xff] %v429
                  %v431 = vld [vmem:[%s411 + $0x78] sm:$0xff]
                  %432 = vst [vmem:[%s412 + $0x48] sm:$0xff] %v431
                  %v433 = vld [vmem:[%s411 + $0x80] sm:$0xff]
                  %434 = vst [vmem:[%s412 + $0x50] sm:$0xff] %v433
                  %v435 = vld [vmem:[%s411 + $0x88] sm:$0xff]
                  %436 = vst [vmem:[%s412 + $0x58] sm:$0xff] %v435
                  %v437 = vld [vmem:[%s411 + $0xa8] sm:$0xff]
                  %438 = vst [vmem:[%s412 + $0x60] sm:$0xff] %v437
                  %v439 = vld [vmem:[%s411 + $0xb0] sm:$0xff]
                  %440 = vst [vmem:[%s412 + $0x68] sm:$0xff] %v439
                  %v441 = vld [vmem:[%s411 + $0xb8] sm:$0xff]
                  %442 = vst [vmem:[%s412 + $0x70] sm:$0xff] %v441
                  %v443 = vld [vmem:[%s411 + $0xc0] sm:$0xff]
                  %444 = vst [vmem:[%s412 + $0x78] sm:$0xff] %v443
                  %v445 = vld [vmem:[%s411 + $0xe0] sm:$0xff]
                  %446 = vst [vmem:[%s412 + $0x80] sm:$0xff] %v445
                  %v447 = vld [vmem:[%s411 + $0xe8] sm:$0xff]
                  %448 = vst [vmem:[%s412 + $0x88] sm:$0xff] %v447
                  %v449 = vld [vmem:[%s411 + $0xf0] sm:$0xff]
                  %450 = vst [vmem:[%s412 + $0x90] sm:$0xff] %v449
                  %v451 = vld [vmem:[%s411 + $0xf8] sm:$0xff]
                  %452 = vst [vmem:[%s412 + $0x98] sm:$0xff] %v451
                  %v453 = vld [vmem:[%s411 + $0x118] sm:$0xff]
                  %454 = vst [vmem:[%s412 + $0xa0] sm:$0xff] %v453
                  %v455 = vld [vmem:[%s411 + $0x120] sm:$0xff]
                  %456 = vst [vmem:[%s412 + $0xa8] sm:$0xff] %v455
                  %v457 = vld [vmem:[%s411 + $0x128] sm:$0xff]
                  %458 = vst [vmem:[%s412 + $0xb0] sm:$0xff] %v457
                  %v459 = vld [vmem:[%s411 + $0x130] sm:$0xff]
                  %460 = vst [vmem:[%s412 + $0xb8] sm:$0xff] %v459
                  %v461 = vld [vmem:[%s411 + $0x150] sm:$0xff]
                  %462 = vst [vmem:[%s412 + $0xc0] sm:$0xff] %v461
                  %v463 = vld [vmem:[%s411 + $0x158] sm:$0xff]
                  %464 = vst [vmem:[%s412 + $0xc8] sm:$0xff] %v463
                  %v465 = vld [vmem:[%s411 + $0x160] sm:$0xff]
                  %466 = vst [vmem:[%s412 + $0xd0] sm:$0xff] %v465
                  %v467 = vld [vmem:[%s411 + $0x168] sm:$0xff]
                  %468 = vst [vmem:[%s412 + $0xd8] sm:$0xff] %v467
                  %v469 = vld [vmem:[%s411 + $0x188] sm:$0xff]
                  %470 = vst [vmem:[%s412 + $0xe0] sm:$0xff] %v469
                  %v471 = vld [vmem:[%s411 + $0x190] sm:$0xff]
                  %472 = vst [vmem:[%s412 + $0xe8] sm:$0xff] %v471
                  %v473 = vld [vmem:[%s411 + $0x198] sm:$0xff]
                  %474 = vst [vmem:[%s412 + $0xf0] sm:$0xff] %v473
                  %v475 = vld [vmem:[%s411 + $0x1a0] sm:$0xff]
                  %476 = vst [vmem:[%s412 + $0xf8] sm:$0xff] %v475
                  %v477 = vld [vmem:[%s411 + $0x1c0] sm:$0xff]
                  %478 = vst [vmem:[%s412 + $0x100] sm:$0xff] %v477
                  %v479 = vld [vmem:[%s411 + $0x1c8] sm:$0xff]
                  %480 = vst [vmem:[%s412 + $0x108] sm:$0xff] %v479
                  %v481 = vld [vmem:[%s411 + $0x1d0] sm:$0xff]
                  %482 = vst [vmem:[%s412 + $0x110] sm:$0xff] %v481
                  %v483 = vld [vmem:[%s411 + $0x1d8] sm:$0xff]
                  %484 = vst [vmem:[%s412 + $0x118] sm:$0xff] %v483
                  %v485 = vld [vmem:[%s411 + $0x1f8] sm:$0xff]
                  %486 = vst [vmem:[%s412 + $0x120] sm:$0xff] %v485
                  %v487 = vld [vmem:[%s411 + $0x200] sm:$0xff]
                  %488 = vst [vmem:[%s412 + $0x128] sm:$0xff] %v487
                  %v489 = vld [vmem:[%s411 + $0x208] sm:$0xff]
                  %490 = vst [vmem:[%s412 + $0x130] sm:$0xff] %v489
                  %v491 = vld [vmem:[%s411 + $0x210] sm:$0xff]
                  %492 = vst [vmem:[%s412 + $0x138] sm:$0xff] %v491
                  %v493 = vld [vmem:[%s411 + $0x230] sm:$0xff]
                  %494 = vst [vmem:[%s412 + $0x140] sm:$0xff] %v493
                  %v495 = vld [vmem:[%s411 + $0x238] sm:$0xff]
                  %496 = vst [vmem:[%s412 + $0x148] sm:$0xff] %v495
                  %v497 = vld [vmem:[%s411 + $0x240] sm:$0xff]
                  %498 = vst [vmem:[%s412 + $0x150] sm:$0xff] %v497
                  %v499 = vld [vmem:[%s411 + $0x248] sm:$0xff]
                  %500 = vst [vmem:[%s412 + $0x158] sm:$0xff] %v499
                  %v501 = vld [vmem:[%s411 + $0x268] sm:$0xff]
                  %502 = vst [vmem:[%s412 + $0x160] sm:$0xff] %v501
                  %v503 = vld [vmem:[%s411 + $0x270] sm:$0xff]
                  %504 = vst [vmem:[%s412 + $0x168] sm:$0xff] %v503
                  %v505 = vld [vmem:[%s411 + $0x278] sm:$0xff]
                  %506 = vst [vmem:[%s412 + $0x170] sm:$0xff] %v505
                  %v507 = vld [vmem:[%s411 + $0x280] sm:$0xff]
                  %508 = vst [vmem:[%s412 + $0x178] sm:$0xff] %v507
                  %v509 = vld [vmem:[%s411 + $0x2a0] sm:$0xff]
                  %510 = vst [vmem:[%s412 + $0x180] sm:$0xff] %v509
                  %v511 = vld [vmem:[%s411 + $0x2a8] sm:$0xff]
                  %512 = vst [vmem:[%s412 + $0x188] sm:$0xff] %v511
                  %v513 = vld [vmem:[%s411 + $0x2b0] sm:$0xff]
                  %514 = vst [vmem:[%s412 + $0x190] sm:$0xff] %v513
                  %v515 = vld [vmem:[%s411 + $0x2b8] sm:$0xff]
                  %516 = vst [vmem:[%s412 + $0x198] sm:$0xff] %v515
                  %v517 = vld [vmem:[%s411 + $0x2d8] sm:$0xff]
                  %518 = vst [vmem:[%s412 + $0x1a0] sm:$0xff] %v517
                  %v519 = vld [vmem:[%s411 + $0x2e0] sm:$0xff]
                  %520 = vst [vmem:[%s412 + $0x1a8] sm:$0xff] %v519
                  %v521 = vld [vmem:[%s411 + $0x2e8] sm:$0xff]
                  %522 = vst [vmem:[%s412 + $0x1b0] sm:$0xff] %v521
                  %v523 = vld [vmem:[%s411 + $0x2f0] sm:$0xff]
                  %524 = vst [vmem:[%s412 + $0x1b8] sm:$0xff] %v523
                  %v525 = vld [vmem:[%s411 + $0x310] sm:$0xff]
                  %526 = vst [vmem:[%s412 + $0x1c0] sm:$0xff] %v525
                  %v527 = vld [vmem:[%s411 + $0x318] sm:$0xff]
                  %528 = vst [vmem:[%s412 + $0x1c8] sm:$0xff] %v527
                  %v529 = vld [vmem:[%s411 + $0x320] sm:$0xff]
                  %530 = vst [vmem:[%s412 + $0x1d0] sm:$0xff] %v529
                  %v531 = vld [vmem:[%s411 + $0x328] sm:$0xff]
                  %532 = vst [vmem:[%s412 + $0x1d8] sm:$0xff] %v531
                  %v533 = vld [vmem:[%s411 + $0x348] sm:$0xff]
                  %534 = vst [vmem:[%s412 + $0x1e0] sm:$0xff] %v533
                  %v535 = vld [vmem:[%s411 + $0x350] sm:$0xff]
                  %536 = vst [vmem:[%s412 + $0x1e8] sm:$0xff] %v535
                  %v537 = vld [vmem:[%s411 + $0x358] sm:$0xff]
                  %538 = vst [vmem:[%s412 + $0x1f0] sm:$0xff] %v537
                  %v539 = vld [vmem:[%s411 + $0x360] sm:$0xff]
                  %540 = vst [vmem:[%s412 + $0x1f8] sm:$0xff] %v539
                  %s541 = sadd.s32 1, %s410
                  %p542 = scmp.ge.s32.totalorder %s541, %s401
                  %s543 = scalar_select %p542, 0, %s541
                  %s544 = smul.u32 %s543, 32
                  %s545 = smul.u32 %s543, 32
                  %s546 = scalar_lea.vmem %s126, %s544
                  %s547 = scalar_lea.vmem %s116, %s545 [#allocation2]
                $region66: #{fused_bn_add_relu_conv_bn.3} parent=60 // loop_footer
                  %s407 = sadd.s32 %s405, 1
                $region67: #{fused_bn_add_relu_conv_bn.3} parent=60 // loop_footer_branch
                  %404 = sbr.rel target = $region63
                $region68: #{fused_bn_add_relu_conv_bn.3} parent=60 // loop_exit
                  _
                %s548 = sshrl.u32 %s400, 2
                %s549 = sand.u32 %s400, 3
                %s550 = smul.u32 %s548, 4
                %s551 = smul.u32 128, %s550
                %s552 = sshra.s32 %s551, 4
                %s553 = scalar_lea.vmem %s126, %s552
                %s554 = smul.u32 128, %s550
                %s555 = sshra.s32 %s554, 4
                %s556 = scalar_lea.vmem %s116, %s555 [#allocation2]
                // While loop
                $region69: #{fused_bn_add_relu_conv_bn.3} parent=60 // loop_pre_header
                  _
                $region70: #{fused_bn_add_relu_conv_bn.3} parent=60 // loop_header
                  %s560 = sphi 0, %s562
                  %p561 = scmp.ge.s32.totalorder %s560, %s549
                  %s565 = sphi 0, %s602
                  %s566 = sphi %s553, %s605
                  %s567 = sphi %s556, %s606
                $region71: #{fused_bn_add_relu_conv_bn.3} parent=60 // loop_header_branch
                  %564 = sbr.rel (%p561) target = $region75
                $region72: #{fused_bn_add_relu_conv_bn.3} parent=60 // loop_body
                  %v568 = vld [vmem:[%s566] sm:$0xff]
                  %569 = vst [vmem:[%s567] sm:$0xff] %v568
                  %v570 = vld [vmem:[%s566 + $0x38] sm:$0xff]
                  %571 = vst [vmem:[%s567 + $0x20] sm:$0xff] %v570
                  %v572 = vld [vmem:[%s566 + $0x70] sm:$0xff]
                  %573 = vst [vmem:[%s567 + $0x40] sm:$0xff] %v572
                  %v574 = vld [vmem:[%s566 + $0xa8] sm:$0xff]
                  %575 = vst [vmem:[%s567 + $0x60] sm:$0xff] %v574
                  %v576 = vld [vmem:[%s566 + $0xe0] sm:$0xff]
                  %577 = vst [vmem:[%s567 + $0x80] sm:$0xff] %v576
                  %v578 = vld [vmem:[%s566 + $0x118] sm:$0xff]
                  %579 = vst [vmem:[%s567 + $0xa0] sm:$0xff] %v578
                  %v580 = vld [vmem:[%s566 + $0x150] sm:$0xff]
                  %581 = vst [vmem:[%s567 + $0xc0] sm:$0xff] %v580
                  %v582 = vld [vmem:[%s566 + $0x188] sm:$0xff]
                  %583 = vst [vmem:[%s567 + $0xe0] sm:$0xff] %v582
                  %v584 = vld [vmem:[%s566 + $0x1c0] sm:$0xff]
                  %585 = vst [vmem:[%s567 + $0x100] sm:$0xff] %v584
                  %v586 = vld [vmem:[%s566 + $0x1f8] sm:$0xff]
                  %587 = vst [vmem:[%s567 + $0x120] sm:$0xff] %v586
                  %v588 = vld [vmem:[%s566 + $0x230] sm:$0xff]
                  %589 = vst [vmem:[%s567 + $0x140] sm:$0xff] %v588
                  %v590 = vld [vmem:[%s566 + $0x268] sm:$0xff]
                  %591 = vst [vmem:[%s567 + $0x160] sm:$0xff] %v590
                  %v592 = vld [vmem:[%s566 + $0x2a0] sm:$0xff]
                  %593 = vst [vmem:[%s567 + $0x180] sm:$0xff] %v592
                  %v594 = vld [vmem:[%s566 + $0x2d8] sm:$0xff]
                  %595 = vst [vmem:[%s567 + $0x1a0] sm:$0xff] %v594
                  %v596 = vld [vmem:[%s566 + $0x310] sm:$0xff]
                  %597 = vst [vmem:[%s567 + $0x1c0] sm:$0xff] %v596
                  %v598 = vld [vmem:[%s566 + $0x348] sm:$0xff]
                  %599 = vst [vmem:[%s567 + $0x1e0] sm:$0xff] %v598
                  %s600 = sadd.s32 1, %s565
                  %p601 = scmp.ge.s32.totalorder %s600, %s549
                  %s602 = scalar_select %p601, 0, %s600
                  %s603 = smul.u32 %s602, 8
                  %s604 = smul.u32 %s602, 8
                  %s605 = scalar_lea.vmem %s553, %s603
                  %s606 = scalar_lea.vmem %s556, %s604 [#allocation2]
                $region73: #{fused_bn_add_relu_conv_bn.3} parent=60 // loop_footer
                  %s562 = sadd.s32 %s560, 1
                $region74: #{fused_bn_add_relu_conv_bn.3} parent=60 // loop_footer_branch
                  %559 = sbr.rel target = $region70
                $region75: #{fused_bn_add_relu_conv_bn.3} parent=60 // loop_exit
                  _
                %s607 = sshll.u32 1, %s395
                %s608 = ssub.s32 %s607, 1
                loop: start=0, step=1, limit=1
                $region76: #{fused_bn_add_relu_conv_bn.3} parent=60 // loop_pre_header
                  _
                $region77: #{fused_bn_add_relu_conv_bn.3} parent=60 // loop_header
                  %s610 = sphi 0, %s614
                  %p611 = scmp.ge.s32.totalorder %s610, 1
                  %s615 = sphi %s397, %s397
                  %s616 = sphi %s399, %s399
                $region78: #{fused_bn_add_relu_conv_bn.3} parent=60 // loop_header_branch
                  %613 = sbr.rel (%p611) target = $region82
                $region79: #{fused_bn_add_relu_conv_bn.3} parent=60 // loop_body
                  %v617 = vld [vmem:[%s615] sm:%s608]
                  %618 = vst [vmem:[%s616] sm:%s608] %v617
                  %v619 = vld [vmem:[%s615 + $0x38] sm:%s608]
                  %620 = vst [vmem:[%s616 + $0x20] sm:%s608] %v619
                  %v621 = vld [vmem:[%s615 + $0x70] sm:%s608]
                  %622 = vst [vmem:[%s616 + $0x40] sm:%s608] %v621
                  %v623 = vld [vmem:[%s615 + $0xa8] sm:%s608]
                  %624 = vst [vmem:[%s616 + $0x60] sm:%s608] %v623
                  %v625 = vld [vmem:[%s615 + $0xe0] sm:%s608]
                  %626 = vst [vmem:[%s616 + $0x80] sm:%s608] %v625
                  %v627 = vld [vmem:[%s615 + $0x118] sm:%s608]
                  %628 = vst [vmem:[%s616 + $0xa0] sm:%s608] %v627
                  %v629 = vld [vmem:[%s615 + $0x150] sm:%s608]
                  %630 = vst [vmem:[%s616 + $0xc0] sm:%s608] %v629
                  %v631 = vld [vmem:[%s615 + $0x188] sm:%s608]
                  %632 = vst [vmem:[%s616 + $0xe0] sm:%s608] %v631
                  %v633 = vld [vmem:[%s615 + $0x1c0] sm:%s608]
                  %634 = vst [vmem:[%s616 + $0x100] sm:%s608] %v633
                  %v635 = vld [vmem:[%s615 + $0x1f8] sm:%s608]
                  %636 = vst [vmem:[%s616 + $0x120] sm:%s608] %v635
                  %v637 = vld [vmem:[%s615 + $0x230] sm:%s608]
                  %638 = vst [vmem:[%s616 + $0x140] sm:%s608] %v637
                  %v639 = vld [vmem:[%s615 + $0x268] sm:%s608]
                  %640 = vst [vmem:[%s616 + $0x160] sm:%s608] %v639
                  %v641 = vld [vmem:[%s615 + $0x2a0] sm:%s608]
                  %642 = vst [vmem:[%s616 + $0x180] sm:%s608] %v641
                  %v643 = vld [vmem:[%s615 + $0x2d8] sm:%s608]
                  %644 = vst [vmem:[%s616 + $0x1a0] sm:%s608] %v643
                  %v645 = vld [vmem:[%s615 + $0x310] sm:%s608]
                  %646 = vst [vmem:[%s616 + $0x1c0] sm:%s608] %v645
                  %v647 = vld [vmem:[%s615 + $0x348] sm:%s608]
                  %648 = vst [vmem:[%s616 + $0x1e0] sm:%s608] %v647
                $region80: #{fused_bn_add_relu_conv_bn.3} parent=60 // loop_footer
                  %s614 = sadd.s32 1, %s610
                $region81: #{fused_bn_add_relu_conv_bn.3} parent=60 // loop_footer_branch
                  %609 = sbr.rel target = $region77
                $region82: #{fused_bn_add_relu_conv_bn.3} parent=60 // loop_exit
                  _
              $region61: #{fused_bn_add_relu_conv_bn.3} parent=27 // pred_fallthru
                _
            $region28: #{fused_bn_add_relu_conv_bn.3} parent=23 // pred_fallthru
              _
            // Predicated region
            $region29: #{fused_bn_add_relu_conv_bn.3} parent=23 // pred_check
              %p135 = pneg %p131
            $region30: #{fused_bn_add_relu_conv_bn.3} parent=23 // pred_check_branch
              %137 = sbr.rel (%p135) target = $region32
            $region31: #{fused_bn_add_relu_conv_bn.3} parent=23 // pred_region
              %s138 = sshll.u32 1, %s127
              %s139 = ssub.s32 %s138, 1
              loop: start=0, step=1, limit=1
              $region33: #{fused_bn_add_relu_conv_bn.3} parent=31 // loop_pre_header
                _
              $region34: #{fused_bn_add_relu_conv_bn.3} parent=31 // loop_header
                %s141 = sphi 0, %s145
                %p142 = scmp.ge.s32.totalorder %s141, 1
                %s146 = sphi %s126, %s126
                %s147 = sphi %s116, %s116
              $region35: #{fused_bn_add_relu_conv_bn.3} parent=31 // loop_header_branch
                %144 = sbr.rel (%p142) target = $region39
              $region36: #{fused_bn_add_relu_conv_bn.3} parent=31 // loop_body
                %v148 = vld [vmem:[%s146] sm:%s139]
                %149 = vst [vmem:[%s147] sm:%s139] %v148
                %v150 = vld [vmem:[%s146 + $0x38] sm:%s139]
                %151 = vst [vmem:[%s147 + $0x20] sm:%s139] %v150
                %v152 = vld [vmem:[%s146 + $0x70] sm:%s139]
                %153 = vst [vmem:[%s147 + $0x40] sm:%s139] %v152
                %v154 = vld [vmem:[%s146 + $0xa8] sm:%s139]
                %155 = vst [vmem:[%s147 + $0x60] sm:%s139] %v154
                %v156 = vld [vmem:[%s146 + $0xe0] sm:%s139]
                %157 = vst [vmem:[%s147 + $0x80] sm:%s139] %v156
                %v158 = vld [vmem:[%s146 + $0x118] sm:%s139]
                %159 = vst [vmem:[%s147 + $0xa0] sm:%s139] %v158
                %v160 = vld [vmem:[%s146 + $0x150] sm:%s139]
                %161 = vst [vmem:[%s147 + $0xc0] sm:%s139] %v160
                %v162 = vld [vmem:[%s146 + $0x188] sm:%s139]
                %163 = vst [vmem:[%s147 + $0xe0] sm:%s139] %v162
                %v164 = vld [vmem:[%s146 + $0x1c0] sm:%s139]
                %165 = vst [vmem:[%s147 + $0x100] sm:%s139] %v164
                %v166 = vld [vmem:[%s146 + $0x1f8] sm:%s139]
                %167 = vst [vmem:[%s147 + $0x120] sm:%s139] %v166
                %v168 = vld [vmem:[%s146 + $0x230] sm:%s139]
                %169 = vst [vmem:[%s147 + $0x140] sm:%s139] %v168
                %v170 = vld [vmem:[%s146 + $0x268] sm:%s139]
                %171 = vst [vmem:[%s147 + $0x160] sm:%s139] %v170
                %v172 = vld [vmem:[%s146 + $0x2a0] sm:%s139]
                %173 = vst [vmem:[%s147 + $0x180] sm:%s139] %v172
                %v174 = vld [vmem:[%s146 + $0x2d8] sm:%s139]
                %175 = vst [vmem:[%s147 + $0x1a0] sm:%s139] %v174
                %v176 = vld [vmem:[%s146 + $0x310] sm:%s139]
                %177 = vst [vmem:[%s147 + $0x1c0] sm:%s139] %v176
                %v178 = vld [vmem:[%s146 + $0x348] sm:%s139]
                %179 = vst [vmem:[%s147 + $0x1e0] sm:%s139] %v178
              $region37: #{fused_bn_add_relu_conv_bn.3} parent=31 // loop_footer
                %s145 = sadd.s32 1, %s141
              $region38: #{fused_bn_add_relu_conv_bn.3} parent=31 // loop_footer_branch
                %140 = sbr.rel target = $region34
              $region39: #{fused_bn_add_relu_conv_bn.3} parent=31 // loop_exit
                _
            $region32: #{fused_bn_add_relu_conv_bn.3} parent=23 // pred_fallthru
              _
          $region24: #{fused_bn_add_relu_conv_bn.3} parent=19 // pred_fallthru
            _
          %649 = vnop
        $region20: #{fused_bn_add_relu_conv_bn.3} parent=15 // pred_fallthru
          _
      $region16: #{fused_bn_add_relu_conv_bn.3} parent=5 // pred_fallthru
        _
      %p650 = scmp.le.s32.totalorder 1, %s9
      %p651 = scmp.lt.s32.totalorder %s9, 3
      %p652 = pnand %p650, %p651
      %p653 = pneg %p652
      // Predicated region
      $region83: #{fused_bn_add_relu_conv_bn.3} parent=5 // pred_check
        _
      $region84: #{fused_bn_add_relu_conv_bn.3} parent=5 // pred_check_branch
        %655 = sbr.rel (%p652) target = $region86
      $region85: #{fused_bn_add_relu_conv_bn.3} parent=5 // pred_region
        %s656 = ssub.s32 %s9, 1
        %s657 = sand.u32 %s36, 1
        %s658 = sand.u32 %s36, 1
        %s659 = smul.addr %s658, 512
        %s660 = scalar_lea.vmem [#allocation2], %s659
        // Predicated region
        $region87: #{fused_bn_add_relu_conv_bn.3} parent=85 // pred_check
          %p661 = pneg %p49
        $region88: #{fused_bn_add_relu_conv_bn.3} parent=85 // pred_check_branch
          %663 = sbr.rel (%p661) target = $region90
        $region89: #{fused_bn_add_relu_conv_bn.3} parent=85 // pred_region
          _
        $region90: #{fused_bn_add_relu_conv_bn.3} parent=85 // pred_fallthru
          _
        %s664 = sand.u32 %s36, 1
        %s665 = sand.u32 %s36, 1
        %s666 = smul.addr %s665, 512
        %s667 = scalar_lea.vmem [#allocation2], %s666
        %p668 = pneg %p49
        %p669 = pneg %p46
        %p670 = pneg %p70
        %p671 = pneg %p67
        %p672 = pneg %p91
        %p673 = pneg %p88
        %s674 = smul.u32 4, %s19
        %s675 = ssub.s32 7, %s674
        %p676 = scmp.lt.s32.totalorder %s675, 4
        %s677 = scalar_select %p676, %s675, 4
        %s678 = smul.u32 2048, %s677
        %p679 = scmp.eq.s32.totalorder %s18, 0
        %p680 = scmp.eq.s32.totalorder %s19, 0
        %p681 = pnand %p679, %p680
        %p682 = pneg %p681
        // Predicated region
        $region91: #{fused_bn_add_relu_conv_bn.3} parent=85 // pred_check
          _
        $region92: #{fused_bn_add_relu_conv_bn.3} parent=85 // pred_check_branch
          %684 = sbr.rel (%p681) target = $region94
        $region93: #{fused_bn_add_relu_conv_bn.3} parent=85 // pred_region
          %vm685 = vcmask 7168
          %686 = vst.msk [vmem:[%s1] sm:$0xff] %vm685, 0.0
          %687 = vst.msk [vmem:[%s1 + $0x8] sm:$0xff] %vm685, 0.0
          %688 = vst.msk [vmem:[%s1 + $0x10] sm:$0xff] %vm685, 0.0
          %689 = vst.msk [vmem:[%s1 + $0x18] sm:$0xff] %vm685, 0.0
          %690 = vst.msk [vmem:[%s1 + $0x20] sm:$0xff] %vm685, 0.0
          %691 = vst.msk [vmem:[%s1 + $0x28] sm:$0xff] %vm685, 0.0
          %692 = vst.msk [vmem:[%s1 + $0x30] sm:$0xff] %vm685, 0.0
          %693 = vst.msk [vmem:[%s1 + $0x38] sm:$0xff] %vm685, 0.0
          %694 = vst.msk [vmem:[%s1 + $0x40] sm:$0xff] %vm685, 0.0
          %695 = vst.msk [vmem:[%s1 + $0x48] sm:$0xff] %vm685, 0.0
          %696 = vst.msk [vmem:[%s1 + $0x50] sm:$0xff] %vm685, 0.0
          %697 = vst.msk [vmem:[%s1 + $0x58] sm:$0xff] %vm685, 0.0
          %698 = vst.msk [vmem:[%s1 + $0x60] sm:$0xff] %vm685, 0.0
          %699 = vst.msk [vmem:[%s1 + $0x68] sm:$0xff] %vm685, 0.0
          %700 = vst.msk [vmem:[%s1 + $0x70] sm:$0xff] %vm685, 0.0
          %701 = vst.msk [vmem:[%s1 + $0x78] sm:$0xff] %vm685, 0.0
          %702 = vst.msk [vmem:[%s2] sm:$0xff] %vm685, 0.0
          %703 = vst.msk [vmem:[%s2 + $0x8] sm:$0xff] %vm685, 0.0
          %704 = vst.msk [vmem:[%s2 + $0x10] sm:$0xff] %vm685, 0.0
          %705 = vst.msk [vmem:[%s2 + $0x18] sm:$0xff] %vm685, 0.0
          %706 = vst.msk [vmem:[%s2 + $0x20] sm:$0xff] %vm685, 0.0
          %707 = vst.msk [vmem:[%s2 + $0x28] sm:$0xff] %vm685, 0.0
          %708 = vst.msk [vmem:[%s2 + $0x30] sm:$0xff] %vm685, 0.0
          %709 = vst.msk [vmem:[%s2 + $0x38] sm:$0xff] %vm685, 0.0
          %710 = vst.msk [vmem:[%s2 + $0x40] sm:$0xff] %vm685, 0.0
          %711 = vst.msk [vmem:[%s2 + $0x48] sm:$0xff] %vm685, 0.0
          %712 = vst.msk [vmem:[%s2 + $0x50] sm:$0xff] %vm685, 0.0
          %713 = vst.msk [vmem:[%s2 + $0x58] sm:$0xff] %vm685, 0.0
          %714 = vst.msk [vmem:[%s2 + $0x60] sm:$0xff] %vm685, 0.0
          %715 = vst.msk [vmem:[%s2 + $0x68] sm:$0xff] %vm685, 0.0
          %716 = vst.msk [vmem:[%s2 + $0x70] sm:$0xff] %vm685, 0.0
          %717 = vst.msk [vmem:[%s2 + $0x78] sm:$0xff] %vm685, 0.0
        $region94: #{fused_bn_add_relu_conv_bn.3} parent=85 // pred_fallthru
          _
        %v718 = vld [vmem:[%s660] sm:$0xff]
        %v719 = vld [vmem:[%s660 + $0x8] sm:$0xff]
        %v720 = vld [vmem:[%s660 + $0x10] sm:$0xff]
        %v721 = vld [vmem:[%s660 + $0x18] sm:$0xff]
        %v722 = vld [vmem:[%s660 + $0x20] sm:$0xff]
        %v723 = vld [vmem:[%s660 + $0x28] sm:$0xff]
        %v724 = vld [vmem:[%s660 + $0x30] sm:$0xff]
        %v725 = vld [vmem:[%s660 + $0x38] sm:$0xff]
        %v726 = vld [vmem:[%s660 + $0x40] sm:$0xff]
        %v727 = vld [vmem:[%s660 + $0x48] sm:$0xff]
        %v728 = vld [vmem:[%s660 + $0x50] sm:$0xff]
        %v729 = vld [vmem:[%s660 + $0x58] sm:$0xff]
        %v730 = vld [vmem:[%s660 + $0x60] sm:$0xff]
        %v731 = vld [vmem:[%s660 + $0x68] sm:$0xff]
        %v732 = vld [vmem:[%s660 + $0x70] sm:$0xff]
        %v733 = vld [vmem:[%s660 + $0x78] sm:$0xff]
        %v734 = vld [vmem:[%s660 + $0x80] sm:$0xff]
        %v735 = vld [vmem:[%s660 + $0x88] sm:$0xff]
        %v736 = vld [vmem:[%s660 + $0x90] sm:$0xff]
        %v737 = vld [vmem:[%s660 + $0x98] sm:$0xff]
        %v738 = vld [vmem:[%s660 + $0xa0] sm:$0xff]
        %v739 = vld [vmem:[%s660 + $0xa8] sm:$0xff]
        %v740 = vld [vmem:[%s660 + $0xb0] sm:$0xff]
        %v741 = vld [vmem:[%s660 + $0xb8] sm:$0xff]
        %v742 = vld [vmem:[%s660 + $0xc0] sm:$0xff]
        %v743 = vld [vmem:[%s660 + $0xc8] sm:$0xff]
        %v744 = vld [vmem:[%s660 + $0xd0] sm:$0xff]
        %v745 = vld [vmem:[%s660 + $0xd8] sm:$0xff]
        %v746 = vld [vmem:[%s660 + $0xe0] sm:$0xff]
        %v747 = vld [vmem:[%s660 + $0xe8] sm:$0xff]
        %v748 = vld [vmem:[%s660 + $0xf0] sm:$0xff]
        %v749 = vld [vmem:[%s660 + $0xf8] sm:$0xff]
        %v750 = vld [vmem:[%s660 + $0x100] sm:$0xff]
        %v751 = vld [vmem:[%s660 + $0x108] sm:$0xff]
        %v752 = vld [vmem:[%s660 + $0x110] sm:$0xff]
        %v753 = vld [vmem:[%s660 + $0x118] sm:$0xff]
        %v754 = vld [vmem:[%s660 + $0x120] sm:$0xff]
        %v755 = vld [vmem:[%s660 + $0x128] sm:$0xff]
        %v756 = vld [vmem:[%s660 + $0x130] sm:$0xff]
        %v757 = vld [vmem:[%s660 + $0x138] sm:$0xff]
        %v758 = vld [vmem:[%s660 + $0x140] sm:$0xff]
        %v759 = vld [vmem:[%s660 + $0x148] sm:$0xff]
        %v760 = vld [vmem:[%s660 + $0x150] sm:$0xff]
        %v761 = vld [vmem:[%s660 + $0x158] sm:$0xff]
        %v762 = vld [vmem:[%s660 + $0x160] sm:$0xff]
        %v763 = vld [vmem:[%s660 + $0x168] sm:$0xff]
        %v764 = vld [vmem:[%s660 + $0x170] sm:$0xff]
        %v765 = vld [vmem:[%s660 + $0x178] sm:$0xff]
        %v766 = vld [vmem:[%s660 + $0x180] sm:$0xff]
        %v767 = vld [vmem:[%s660 + $0x188] sm:$0xff]
        %v768 = vld [vmem:[%s660 + $0x190] sm:$0xff]
        %v769 = vld [vmem:[%s660 + $0x198] sm:$0xff]
        %v770 = vld [vmem:[%s660 + $0x1a0] sm:$0xff]
        %v771 = vld [vmem:[%s660 + $0x1a8] sm:$0xff]
        %v772 = vld [vmem:[%s660 + $0x1b0] sm:$0xff]
        %v773 = vld [vmem:[%s660 + $0x1b8] sm:$0xff]
        %v774 = vld [vmem:[%s660 + $0x1c0] sm:$0xff]
        %v775 = vld [vmem:[%s660 + $0x1c8] sm:$0xff]
        %v776 = vld [vmem:[%s660 + $0x1d0] sm:$0xff]
        %v777 = vld [vmem:[%s660 + $0x1d8] sm:$0xff]
        %v778 = vld [vmem:[%s660 + $0x1e0] sm:$0xff]
        %v779 = vld [vmem:[%s660 + $0x1e8] sm:$0xff]
        %v780 = vld [vmem:[%s660 + $0x1f0] sm:$0xff]
        %v781 = vld [vmem:[%s660 + $0x1f8] sm:$0xff]
        %s782 = smul.u32 %s19, 512
        %v783 = vlaneseq
        %v784 = vand.u32 %v783, 127
        %v785 = vadd.s32 %v784, 128
        %v786 = vadd.s32 %v784, 256
        %v787 = vadd.s32 %v784, 384
        %v788 = vstv %s782
        %v789 = vadd.s32 %v788, %v784
        %v790 = vadd.s32 %v788, %v785
        %v791 = vadd.s32 %v788, %v786
        %v792 = vadd.s32 %v788, %v787
        %vm793 = vcmp.lt.s32.totalorder %v789, 784
        %vm794 = vcmp.lt.s32.totalorder %v790, 784
        %vm795 = vcmp.lt.s32.totalorder %v791, 784
        %vm796 = vcmp.lt.s32.totalorder %v792, 784
        %v797 = vsel %vm793, %v718, 0.0
        %v798 = vsel %vm794, %v719, 0.0
        %v799 = vsel %vm795, %v720, 0.0
        %v800 = vsel %vm796, %v721, 0.0
        %v801 = vsel %vm793, %v722, 0.0
        %v802 = vsel %vm794, %v723, 0.0
        %v803 = vsel %vm795, %v724, 0.0
        %v804 = vsel %vm796, %v725, 0.0
        %v805 = vsel %vm793, %v726, 0.0
        %v806 = vsel %vm794, %v727, 0.0
        %v807 = vsel %vm795, %v728, 0.0
        %v808 = vsel %vm796, %v729, 0.0
        %v809 = vsel %vm793, %v730, 0.0
        %v810 = vsel %vm794, %v731, 0.0
        %v811 = vsel %vm795, %v732, 0.0
        %v812 = vsel %vm796, %v733, 0.0
        %v813 = vsel %vm793, %v734, 0.0
        %v814 = vsel %vm794, %v735, 0.0
        %v815 = vsel %vm795, %v736, 0.0
        %v816 = vsel %vm796, %v737, 0.0
        %v817 = vsel %vm793, %v738, 0.0
        %v818 = vsel %vm794, %v739, 0.0
        %v819 = vsel %vm795, %v740, 0.0
        %v820 = vsel %vm796, %v741, 0.0
        %v821 = vsel %vm793, %v742, 0.0
        %v822 = vsel %vm794, %v743, 0.0
        %v823 = vsel %vm795, %v744, 0.0
        %v824 = vsel %vm796, %v745, 0.0
        %v825 = vsel %vm793, %v746, 0.0
        %v826 = vsel %vm794, %v747, 0.0
        %v827 = vsel %vm795, %v748, 0.0
        %v828 = vsel %vm796, %v749, 0.0
        %v829 = vsel %vm793, %v750, 0.0
        %v830 = vsel %vm794, %v751, 0.0
        %v831 = vsel %vm795, %v752, 0.0
        %v832 = vsel %vm796, %v753, 0.0
        %v833 = vsel %vm793, %v754, 0.0
        %v834 = vsel %vm794, %v755, 0.0
        %v835 = vsel %vm795, %v756, 0.0
        %v836 = vsel %vm796, %v757, 0.0
        %v837 = vsel %vm793, %v758, 0.0
        %v838 = vsel %vm794, %v759, 0.0
        %v839 = vsel %vm795, %v760, 0.0
        %v840 = vsel %vm796, %v761, 0.0
        %v841 = vsel %vm793, %v762, 0.0
        %v842 = vsel %vm794, %v763, 0.0
        %v843 = vsel %vm795, %v764, 0.0
        %v844 = vsel %vm796, %v765, 0.0
        %v845 = vsel %vm793, %v766, 0.0
        %v846 = vsel %vm794, %v767, 0.0
        %v847 = vsel %vm795, %v768, 0.0
        %v848 = vsel %vm796, %v769, 0.0
        %v849 = vsel %vm793, %v770, 0.0
        %v850 = vsel %vm794, %v771, 0.0
        %v851 = vsel %vm795, %v772, 0.0
        %v852 = vsel %vm796, %v773, 0.0
        %v853 = vsel %vm793, %v774, 0.0
        %v854 = vsel %vm794, %v775, 0.0
        %v855 = vsel %vm795, %v776, 0.0
        %v856 = vsel %vm796, %v777, 0.0
        %v857 = vsel %vm793, %v778, 0.0
        %v858 = vsel %vm794, %v779, 0.0
        %v859 = vsel %vm795, %v780, 0.0
        %v860 = vsel %vm796, %v781, 0.0
        %v861 = vld [vmem:[%s1] sm:$0xff]
        %v862 = vld [vmem:[%s1 + $0x8] sm:$0xff]
        %v863 = vld [vmem:[%s1 + $0x10] sm:$0xff]
        %v864 = vld [vmem:[%s1 + $0x18] sm:$0xff]
        %v865 = vld [vmem:[%s1 + $0x20] sm:$0xff]
        %v866 = vld [vmem:[%s1 + $0x28] sm:$0xff]
        %v867 = vld [vmem:[%s1 + $0x30] sm:$0xff]
        %v868 = vld [vmem:[%s1 + $0x38] sm:$0xff]
        %v869 = vld [vmem:[%s1 + $0x40] sm:$0xff]
        %v870 = vld [vmem:[%s1 + $0x48] sm:$0xff]
        %v871 = vld [vmem:[%s1 + $0x50] sm:$0xff]
        %v872 = vld [vmem:[%s1 + $0x58] sm:$0xff]
        %v873 = vld [vmem:[%s1 + $0x60] sm:$0xff]
        %v874 = vld [vmem:[%s1 + $0x68] sm:$0xff]
        %v875 = vld [vmem:[%s1 + $0x70] sm:$0xff]
        %v876 = vld [vmem:[%s1 + $0x78] sm:$0xff]
        %v877 = vadd.f32 %v797, %v798
        %v878 = vadd.f32 %v877, %v799
        %v879 = vadd.f32 %v878, %v800
        %880 = vadd.xlane.f32.xlu0 %v879
        %v881 = vpop.xlane.xlu0 %880
        %v882 = vadd.f32 %v801, %v802
        %v883 = vadd.f32 %v882, %v803
        %v884 = vadd.f32 %v883, %v804
        %885 = vadd.xlane.f32.xlu0 %v884
        %v886 = vpop.xlane.xlu0 %885
        %v887 = vadd.f32 %v805, %v806
        %v888 = vadd.f32 %v887, %v807
        %v889 = vadd.f32 %v888, %v808
        %890 = vadd.xlane.f32.xlu0 %v889
        %v891 = vpop.xlane.xlu0 %890
        %v892 = vadd.f32 %v809, %v810
        %v893 = vadd.f32 %v892, %v811
        %v894 = vadd.f32 %v893, %v812
        %895 = vadd.xlane.f32.xlu0 %v894
        %v896 = vpop.xlane.xlu0 %895
        %v897 = vadd.f32 %v813, %v814
        %v898 = vadd.f32 %v897, %v815
        %v899 = vadd.f32 %v898, %v816
        %900 = vadd.xlane.f32.xlu0 %v899
        %v901 = vpop.xlane.xlu0 %900
        %v902 = vadd.f32 %v817, %v818
        %v903 = vadd.f32 %v902, %v819
        %v904 = vadd.f32 %v903, %v820
        %905 = vadd.xlane.f32.xlu0 %v904
        %v906 = vpop.xlane.xlu0 %905
        %v907 = vadd.f32 %v821, %v822
        %v908 = vadd.f32 %v907, %v823
        %v909 = vadd.f32 %v908, %v824
        %910 = vadd.xlane.f32.xlu0 %v909
        %v911 = vpop.xlane.xlu0 %910
        %v912 = vadd.f32 %v825, %v826
        %v913 = vadd.f32 %v912, %v827
        %v914 = vadd.f32 %v913, %v828
        %915 = vadd.xlane.f32.xlu0 %v914
        %v916 = vpop.xlane.xlu0 %915
        %v917 = vadd.f32 %v829, %v830
        %v918 = vadd.f32 %v917, %v831
        %v919 = vadd.f32 %v918, %v832
        %920 = vadd.xlane.f32.xlu0 %v919
        %v921 = vpop.xlane.xlu0 %920
        %v922 = vadd.f32 %v833, %v834
        %v923 = vadd.f32 %v922, %v835
        %v924 = vadd.f32 %v923, %v836
        %925 = vadd.xlane.f32.xlu0 %v924
        %v926 = vpop.xlane.xlu0 %925
        %v927 = vadd.f32 %v837, %v838
        %v928 = vadd.f32 %v927, %v839
        %v929 = vadd.f32 %v928, %v840
        %930 = vadd.xlane.f32.xlu0 %v929
        %v931 = vpop.xlane.xlu0 %930
        %v932 = vadd.f32 %v841, %v842
        %v933 = vadd.f32 %v932, %v843
        %v934 = vadd.f32 %v933, %v844
        %935 = vadd.xlane.f32.xlu0 %v934
        %v936 = vpop.xlane.xlu0 %935
        %v937 = vadd.f32 %v845, %v846
        %v938 = vadd.f32 %v937, %v847
        %v939 = vadd.f32 %v938, %v848
        %940 = vadd.xlane.f32.xlu0 %v939
        %v941 = vpop.xlane.xlu0 %940
        %v942 = vadd.f32 %v849, %v850
        %v943 = vadd.f32 %v942, %v851
        %v944 = vadd.f32 %v943, %v852
        %945 = vadd.xlane.f32.xlu0 %v944
        %v946 = vpop.xlane.xlu0 %945
        %v947 = vadd.f32 %v853, %v854
        %v948 = vadd.f32 %v947, %v855
        %v949 = vadd.f32 %v948, %v856
        %950 = vadd.xlane.f32.xlu0 %v949
        %v951 = vpop.xlane.xlu0 %950
        %v952 = vadd.f32 %v857, %v858
        %v953 = vadd.f32 %v952, %v859
        %v954 = vadd.f32 %v953, %v860
        %955 = vadd.xlane.f32.xlu0 %v954
        %v956 = vpop.xlane.xlu0 %955
        %v957 = vadd.f32 %v861, %v881
        %v958 = vadd.f32 %v862, %v886
        %v959 = vadd.f32 %v863, %v891
        %v960 = vadd.f32 %v864, %v896
        %v961 = vadd.f32 %v865, %v901
        %v962 = vadd.f32 %v866, %v906
        %v963 = vadd.f32 %v867, %v911
        %v964 = vadd.f32 %v868, %v916
        %v965 = vadd.f32 %v869, %v921
        %v966 = vadd.f32 %v870, %v926
        %v967 = vadd.f32 %v871, %v931
        %v968 = vadd.f32 %v872, %v936
        %v969 = vadd.f32 %v873, %v941
        %v970 = vadd.f32 %v874, %v946
        %v971 = vadd.f32 %v875, %v951
        %v972 = vadd.f32 %v876, %v956
        %vm973 = vcmask 7168
        %974 = vst.msk [vmem:[%s1] sm:$0xff] %vm973, %v957
        %975 = vst.msk [vmem:[%s1 + $0x8] sm:$0xff] %vm973, %v958
        %976 = vst.msk [vmem:[%s1 + $0x10] sm:$0xff] %vm973, %v959
        %977 = vst.msk [vmem:[%s1 + $0x18] sm:$0xff] %vm973, %v960
        %978 = vst.msk [vmem:[%s1 + $0x20] sm:$0xff] %vm973, %v961
        %979 = vst.msk [vmem:[%s1 + $0x28] sm:$0xff] %vm973, %v962
        %980 = vst.msk [vmem:[%s1 + $0x30] sm:$0xff] %vm973, %v963
        %981 = vst.msk [vmem:[%s1 + $0x38] sm:$0xff] %vm973, %v964
        %982 = vst.msk [vmem:[%s1 + $0x40] sm:$0xff] %vm973, %v965
        %983 = vst.msk [vmem:[%s1 + $0x48] sm:$0xff] %vm973, %v966
        %984 = vst.msk [vmem:[%s1 + $0x50] sm:$0xff] %vm973, %v967
        %985 = vst.msk [vmem:[%s1 + $0x58] sm:$0xff] %vm973, %v968
        %986 = vst.msk [vmem:[%s1 + $0x60] sm:$0xff] %vm973, %v969
        %987 = vst.msk [vmem:[%s1 + $0x68] sm:$0xff] %vm973, %v970
        %988 = vst.msk [vmem:[%s1 + $0x70] sm:$0xff] %vm973, %v971
        %989 = vst.msk [vmem:[%s1 + $0x78] sm:$0xff] %vm973, %v972
        %v990 = vld [vmem:[%s2] sm:$0xff]
        %v991 = vld [vmem:[%s2 + $0x8] sm:$0xff]
        %v992 = vld [vmem:[%s2 + $0x10] sm:$0xff]
        %v993 = vld [vmem:[%s2 + $0x18] sm:$0xff]
        %v994 = vld [vmem:[%s2 + $0x20] sm:$0xff]
        %v995 = vld [vmem:[%s2 + $0x28] sm:$0xff]
        %v996 = vld [vmem:[%s2 + $0x30] sm:$0xff]
        %v997 = vld [vmem:[%s2 + $0x38] sm:$0xff]
        %v998 = vld [vmem:[%s2 + $0x40] sm:$0xff]
        %v999 = vld [vmem:[%s2 + $0x48] sm:$0xff]
        %v1000 = vld [vmem:[%s2 + $0x50] sm:$0xff]
        %v1001 = vld [vmem:[%s2 + $0x58] sm:$0xff]
        %v1002 = vld [vmem:[%s2 + $0x60] sm:$0xff]
        %v1003 = vld [vmem:[%s2 + $0x68] sm:$0xff]
        %v1004 = vld [vmem:[%s2 + $0x70] sm:$0xff]
        %v1005 = vld [vmem:[%s2 + $0x78] sm:$0xff]
        %v1006 = vmul.f32 %v797, %v797
        %v1007 = vmul.f32 %v798, %v798
        %v1008 = vmul.f32 %v799, %v799
        %v1009 = vmul.f32 %v800, %v800
        %v1010 = vmul.f32 %v801, %v801
        %v1011 = vmul.f32 %v802, %v802
        %v1012 = vmul.f32 %v803, %v803
        %v1013 = vmul.f32 %v804, %v804
        %v1014 = vmul.f32 %v805, %v805
        %v1015 = vmul.f32 %v806, %v806
        %v1016 = vmul.f32 %v807, %v807
        %v1017 = vmul.f32 %v808, %v808
        %v1018 = vmul.f32 %v809, %v809
        %v1019 = vmul.f32 %v810, %v810
        %v1020 = vmul.f32 %v811, %v811
        %v1021 = vmul.f32 %v812, %v812
        %v1022 = vmul.f32 %v813, %v813
        %v1023 = vmul.f32 %v814, %v814
        %v1024 = vmul.f32 %v815, %v815
        %v1025 = vmul.f32 %v816, %v816
        %v1026 = vmul.f32 %v817, %v817
        %v1027 = vmul.f32 %v818, %v818
        %v1028 = vmul.f32 %v819, %v819
        %v1029 = vmul.f32 %v820, %v820
        %v1030 = vmul.f32 %v821, %v821
        %v1031 = vmul.f32 %v822, %v822
        %v1032 = vmul.f32 %v823, %v823
        %v1033 = vmul.f32 %v824, %v824
        %v1034 = vmul.f32 %v825, %v825
        %v1035 = vmul.f32 %v826, %v826
        %v1036 = vmul.f32 %v827, %v827
        %v1037 = vmul.f32 %v828, %v828
        %v1038 = vmul.f32 %v829, %v829
        %v1039 = vmul.f32 %v830, %v830
        %v1040 = vmul.f32 %v831, %v831
        %v1041 = vmul.f32 %v832, %v832
        %v1042 = vmul.f32 %v833, %v833
        %v1043 = vmul.f32 %v834, %v834
        %v1044 = vmul.f32 %v835, %v835
        %v1045 = vmul.f32 %v836, %v836
        %v1046 = vmul.f32 %v837, %v837
        %v1047 = vmul.f32 %v838, %v838
        %v1048 = vmul.f32 %v839, %v839
        %v1049 = vmul.f32 %v840, %v840
        %v1050 = vmul.f32 %v841, %v841
        %v1051 = vmul.f32 %v842, %v842
        %v1052 = vmul.f32 %v843, %v843
        %v1053 = vmul.f32 %v844, %v844
        %v1054 = vmul.f32 %v845, %v845
        %v1055 = vmul.f32 %v846, %v846
        %v1056 = vmul.f32 %v847, %v847
        %v1057 = vmul.f32 %v848, %v848
        %v1058 = vmul.f32 %v849, %v849
        %v1059 = vmul.f32 %v850, %v850
        %v1060 = vmul.f32 %v851, %v851
        %v1061 = vmul.f32 %v852, %v852
        %v1062 = vmul.f32 %v853, %v853
        %v1063 = vmul.f32 %v854, %v854
        %v1064 = vmul.f32 %v855, %v855
        %v1065 = vmul.f32 %v856, %v856
        %v1066 = vmul.f32 %v857, %v857
        %v1067 = vmul.f32 %v858, %v858
        %v1068 = vmul.f32 %v859, %v859
        %v1069 = vmul.f32 %v860, %v860
        %v1070 = vadd.f32 %v1006, %v1007
        %v1071 = vadd.f32 %v1070, %v1008
        %v1072 = vadd.f32 %v1071, %v1009
        %1073 = vadd.xlane.f32.xlu0 %v1072
        %v1074 = vpop.xlane.xlu0 %1073
        %v1075 = vadd.f32 %v1010, %v1011
        %v1076 = vadd.f32 %v1075, %v1012
        %v1077 = vadd.f32 %v1076, %v1013
        %1078 = vadd.xlane.f32.xlu0 %v1077
        %v1079 = vpop.xlane.xlu0 %1078
        %v1080 = vadd.f32 %v1014, %v1015
        %v1081 = vadd.f32 %v1080, %v1016
        %v1082 = vadd.f32 %v1081, %v1017
        %1083 = vadd.xlane.f32.xlu0 %v1082
        %v1084 = vpop.xlane.xlu0 %1083
        %v1085 = vadd.f32 %v1018, %v1019
        %v1086 = vadd.f32 %v1085, %v1020
        %v1087 = vadd.f32 %v1086, %v1021
        %1088 = vadd.xlane.f32.xlu0 %v1087
        %v1089 = vpop.xlane.xlu0 %1088
        %v1090 = vadd.f32 %v1022, %v1023
        %v1091 = vadd.f32 %v1090, %v1024
        %v1092 = vadd.f32 %v1091, %v1025
        %1093 = vadd.xlane.f32.xlu0 %v1092
        %v1094 = vpop.xlane.xlu0 %1093
        %v1095 = vadd.f32 %v1026, %v1027
        %v1096 = vadd.f32 %v1095, %v1028
        %v1097 = vadd.f32 %v1096, %v1029
        %1098 = vadd.xlane.f32.xlu0 %v1097
        %v1099 = vpop.xlane.xlu0 %1098
        %v1100 = vadd.f32 %v1030, %v1031
        %v1101 = vadd.f32 %v1100, %v1032
        %v1102 = vadd.f32 %v1101, %v1033
        %1103 = vadd.xlane.f32.xlu0 %v1102
        %v1104 = vpop.xlane.xlu0 %1103
        %v1105 = vadd.f32 %v1034, %v1035
        %v1106 = vadd.f32 %v1105, %v1036
        %v1107 = vadd.f32 %v1106, %v1037
        %1108 = vadd.xlane.f32.xlu0 %v1107
        %v1109 = vpop.xlane.xlu0 %1108
        %v1110 = vadd.f32 %v1038, %v1039
        %v1111 = vadd.f32 %v1110, %v1040
        %v1112 = vadd.f32 %v1111, %v1041
        %1113 = vadd.xlane.f32.xlu0 %v1112
        %v1114 = vpop.xlane.xlu0 %1113
        %v1115 = vadd.f32 %v1042, %v1043
        %v1116 = vadd.f32 %v1115, %v1044
        %v1117 = vadd.f32 %v1116, %v1045
        %1118 = vadd.xlane.f32.xlu0 %v1117
        %v1119 = vpop.xlane.xlu0 %1118
        %v1120 = vadd.f32 %v1046, %v1047
        %v1121 = vadd.f32 %v1120, %v1048
        %v1122 = vadd.f32 %v1121, %v1049
        %1123 = vadd.xlane.f32.xlu0 %v1122
        %v1124 = vpop.xlane.xlu0 %1123
        %v1125 = vadd.f32 %v1050, %v1051
        %v1126 = vadd.f32 %v1125, %v1052
        %v1127 = vadd.f32 %v1126, %v1053
        %1128 = vadd.xlane.f32.xlu0 %v1127
        %v1129 = vpop.xlane.xlu0 %1128
        %v1130 = vadd.f32 %v1054, %v1055
        %v1131 = vadd.f32 %v1130, %v1056
        %v1132 = vadd.f32 %v1131, %v1057
        %1133 = vadd.xlane.f32.xlu0 %v1132
        %v1134 = vpop.xlane.xlu0 %1133
        %v1135 = vadd.f32 %v1058, %v1059
        %v1136 = vadd.f32 %v1135, %v1060
        %v1137 = vadd.f32 %v1136, %v1061
        %1138 = vadd.xlane.f32.xlu0 %v1137
        %v1139 = vpop.xlane.xlu0 %1138
        %v1140 = vadd.f32 %v1062, %v1063
        %v1141 = vadd.f32 %v1140, %v1064
        %v1142 = vadd.f32 %v1141, %v1065
        %1143 = vadd.xlane.f32.xlu0 %v1142
        %v1144 = vpop.xlane.xlu0 %1143
        %v1145 = vadd.f32 %v1066, %v1067
        %v1146 = vadd.f32 %v1145, %v1068
        %v1147 = vadd.f32 %v1146, %v1069
        %1148 = vadd.xlane.f32.xlu0 %v1147
        %v1149 = vpop.xlane.xlu0 %1148
        %v1150 = vadd.f32 %v990, %v1074
        %v1151 = vadd.f32 %v991, %v1079
        %v1152 = vadd.f32 %v992, %v1084
        %v1153 = vadd.f32 %v993, %v1089
        %v1154 = vadd.f32 %v994, %v1094
        %v1155 = vadd.f32 %v995, %v1099
        %v1156 = vadd.f32 %v996, %v1104
        %v1157 = vadd.f32 %v997, %v1109
        %v1158 = vadd.f32 %v998, %v1114
        %v1159 = vadd.f32 %v999, %v1119
        %v1160 = vadd.f32 %v1000, %v1124
        %v1161 = vadd.f32 %v1001, %v1129
        %v1162 = vadd.f32 %v1002, %v1134
        %v1163 = vadd.f32 %v1003, %v1139
        %v1164 = vadd.f32 %v1004, %v1144
        %v1165 = vadd.f32 %v1005, %v1149
        %1166 = vst.msk [vmem:[%s2] sm:$0xff] %vm973, %v1150
        %1167 = vst.msk [vmem:[%s2 + $0x8] sm:$0xff] %vm973, %v1151
        %1168 = vst.msk [vmem:[%s2 + $0x10] sm:$0xff] %vm973, %v1152
        %1169 = vst.msk [vmem:[%s2 + $0x18] sm:$0xff] %vm973, %v1153
        %1170 = vst.msk [vmem:[%s2 + $0x20] sm:$0xff] %vm973, %v1154
        %1171 = vst.msk [vmem:[%s2 + $0x28] sm:$0xff] %vm973, %v1155
        %1172 = vst.msk [vmem:[%s2 + $0x30] sm:$0xff] %vm973, %v1156
        %1173 = vst.msk [vmem:[%s2 + $0x38] sm:$0xff] %vm973, %v1157
        %1174 = vst.msk [vmem:[%s2 + $0x40] sm:$0xff] %vm973, %v1158
        %1175 = vst.msk [vmem:[%s2 + $0x48] sm:$0xff] %vm973, %v1159
        %1176 = vst.msk [vmem:[%s2 + $0x50] sm:$0xff] %vm973, %v1160
        %1177 = vst.msk [vmem:[%s2 + $0x58] sm:$0xff] %vm973, %v1161
        %1178 = vst.msk [vmem:[%s2 + $0x60] sm:$0xff] %vm973, %v1162
        %1179 = vst.msk [vmem:[%s2 + $0x68] sm:$0xff] %vm973, %v1163
        %1180 = vst.msk [vmem:[%s2 + $0x70] sm:$0xff] %vm973, %v1164
        %1181 = vst.msk [vmem:[%s2 + $0x78] sm:$0xff] %vm973, %v1165
        // Predicated region
        $region95: #{fused_bn_add_relu_conv_bn.3} parent=85 // pred_check
          %p1182 = pneg %p67
        $region96: #{fused_bn_add_relu_conv_bn.3} parent=85 // pred_check_branch
          %1184 = sbr.rel (%p1182) target = $region98
        $region97: #{fused_bn_add_relu_conv_bn.3} parent=85 // pred_region
          _
        $region98: #{fused_bn_add_relu_conv_bn.3} parent=85 // pred_fallthru
          _
        // Predicated region
        $region99: #{fused_bn_add_relu_conv_bn.3} parent=85 // pred_check
          %p1185 = pneg %p88
        $region100: #{fused_bn_add_relu_conv_bn.3} parent=85 // pred_check_branch
          %1187 = sbr.rel (%p1185) target = $region102
        $region101: #{fused_bn_add_relu_conv_bn.3} parent=85 // pred_region
          _
        $region102: #{fused_bn_add_relu_conv_bn.3} parent=85 // pred_fallthru
          _
        // Predicated region
        $region103: #{fused_bn_add_relu_conv_bn.3} parent=85 // pred_check
          %p1188 = pneg %p67
        $region104: #{fused_bn_add_relu_conv_bn.3} parent=85 // pred_check_branch
          %1190 = sbr.rel (%p1188) target = $region106
        $region105: #{fused_bn_add_relu_conv_bn.3} parent=85 // pred_region
          _
        $region106: #{fused_bn_add_relu_conv_bn.3} parent=85 // pred_fallthru
          _
        // Predicated region
        $region107: #{fused_bn_add_relu_conv_bn.3} parent=85 // pred_check
          %p1191 = pneg %p88
        $region108: #{fused_bn_add_relu_conv_bn.3} parent=85 // pred_check_branch
          %1193 = sbr.rel (%p1191) target = $region110
        $region109: #{fused_bn_add_relu_conv_bn.3} parent=85 // pred_region
          _
        $region110: #{fused_bn_add_relu_conv_bn.3} parent=85 // pred_fallthru
          _
      $region86: #{fused_bn_add_relu_conv_bn.3} parent=5 // pred_fallthru
        _
      %p1194 = scmp.le.s32.totalorder 2, %s9
      // Predicated region
      $region111: #{fused_bn_add_relu_conv_bn.3} parent=5 // pred_check
        %p1195 = pneg %p1194
      $region112: #{fused_bn_add_relu_conv_bn.3} parent=5 // pred_check_branch
        %1197 = sbr.rel (%p1195) target = $region114
      $region113: #{fused_bn_add_relu_conv_bn.3} parent=5 // pred_region
        %s1198 = ssub.s32 %s9, 2
      $region114: #{fused_bn_add_relu_conv_bn.3} parent=5 // pred_fallthru
        _
    $region6: #{fused_bn_add_relu_conv_bn.3} parent=1 // loop_footer
      %s13 = sadd.s32 1, %s9
    $region7: #{fused_bn_add_relu_conv_bn.3} parent=1 // loop_footer_branch
      %8 = sbr.rel target = $region3
    $region8: #{fused_bn_add_relu_conv_bn.3} parent=1 // loop_exit
      _

// kernel: fused_bn_add_relu_conv_bn.4
$region0: #{fused_bn_add_relu_conv_bn.4}
  #allocation0 [shape = 'u32[]', space=smem, size = 0x4, offset = 0x4, fixed_abs, tag = 'smem constant byte address 0x4 - core index']
  #allocation1 [shape = 'u32[144,128]{1,0:T(1,128)}', space=vmem, size = 0x12000, scoped, tag = 'internal scratch']
  %s0 = inlined_call_operand.vmem [shape: f32[1,128,784], index: 0, kind: input, shape index: {}]
  %s1 = inlined_call_operand.vmem [shape: f32[1,128,784], index: 1, kind: input, shape index: {}]
  %s2 = inlined_call_operand.vmem [shape: f32[128,1], index: 2, kind: input, shape index: {}]
  %s3 = inlined_call_operand.vmem [shape: f32[128,1], index: 3, kind: input, shape index: {}]
  %s4 = inlined_call_operand.vmem [shape: f32[128,1], index: 4, kind: output, shape index: {0}]
  %s5 = inlined_call_operand.vmem [shape: f32[128,128], index: 5, kind: output, shape index: {1}]
  %6 = xla_tuple %s4, %s5
  %s7 = sld [smem:[#allocation0]]
  $region193: #{fused_bn_add_relu_conv_bn.4} parent=0
    _
  %s9 = ssub.s32 1, %s7
  %s10 = scalar_select 0, %s9, %s7
  $region1: #{fused_bn_add_relu_conv_bn.4} parent=0
    #allocation2 [shape = 'u8[524288]{0}', space=vmem, size = 0x80000, scoped, tag = 'input window, operand 0']
    #allocation3 [shape = 'u8[524288]{0}', space=vmem, size = 0x80000, scoped, tag = 'input window, operand 1']
    loop: start=0, step=1, limit=4
    $region2: #{fused_bn_add_relu_conv_bn.4} parent=1 // loop_pre_header
      _
    $region3: #{fused_bn_add_relu_conv_bn.4} parent=1 // loop_header
      %s12 = sphi 0, %s16
      %p13 = scmp.ge.s32.totalorder %s12, 4
      %s19 = sphi 0, %s31
      %s20 = sphi 0, %s27
      %s21 = sphi 0, %s19
      %s22 = sphi 0, %s20
      %s23 = sphi 0, %s21
      %s24 = sphi 0, %s22
      %s36 = sphi 0, %s38
      %s39 = sphi 0, %s36
      %s40 = sphi 0, %s39
      %s56 = sphi 0, %s40
      %s64 = sphi 0, %s66
      %s67 = sphi 0, %s64
      %s68 = sphi 0, %s67
      %s84 = sphi 0, %s68
      %s88 = sphi 0, %s88
      %s90 = sphi 0, %s88
      %s91 = sphi 0, %s90
      %s105 = sphi 0, %s91
      %s109 = sphi 0, %s109
      %s111 = sphi 0, %s109
      %s112 = sphi 0, %s111
      %s126 = sphi 0, %s112
      %s130 = sphi 0, %s130
      %s132 = sphi 0, %s130
      %s133 = sphi 0, %s132
      %s147 = sphi 0, %s133
      %s151 = sphi 0, %s151
      %s153 = sphi 0, %s151
      %s154 = sphi 0, %s153
      %s168 = sphi 0, %s154
    $region4: #{fused_bn_add_relu_conv_bn.4} parent=1 // loop_header_branch
      %15 = sbr.rel (%p13) target = $region8
    $region5: #{fused_bn_add_relu_conv_bn.4} parent=1 // loop_body
      %s17 = ssub.s32 %s12, 1
      %s18 = ssub.s32 %s12, 2
      %s25 = sadd.s32 1, %s20
      %p26 = scmp.ge.s32.totalorder %s25, 2
      %s27 = scalar_select %p26, 0, %s25
      %s28 = sadd.s32 1, %s19
      %s29 = scalar_select %p26, %s28, %s19
      %p30 = scmp.ge.s32.totalorder %s29, 1
      %s31 = scalar_select %p30, 0, %s29
      %s32 = ssub.s32 %s19, %s31
      %s33 = ssub.s32 %s20, %s27
      %s34 = sor.u32 %s32, %s33
      %p35 = scmp.eq.s32.totalorder %s34, 0
      %s37 = sadd.s32 %s36, 1
      %s38 = scalar_select %p35, %s36, %s37
      %p41 = pneg %p35
      %p42 = scmp.eq.s32.totalorder %s12, 1
      %p43 = por %p41, %p42
      %p44 = scmp.ne.s32.totalorder %s36, %s39
      %p45 = scmp.eq.s32.totalorder %s12, 0
      %p46 = por %p44, %p45
      %p47 = scmp.ne.s32.totalorder %s36, %s39
      %p48 = scmp.eq.s32.totalorder %s17, 1
      %p49 = por %p47, %p48
      %p50 = scmp.ne.s32.totalorder %s39, %s40
      %p51 = scmp.eq.s32.totalorder %s17, 0
      %p52 = por %p50, %p51
      %p53 = scmp.ne.s32.totalorder %s39, %s40
      %p54 = scmp.eq.s32.totalorder %s18, 1
      %p55 = por %p53, %p54
      %p57 = scmp.ne.s32.totalorder %s40, %s56
      %p58 = scmp.eq.s32.totalorder %s18, 0
      %p59 = por %p57, %p58
      %s60 = ssub.s32 %s19, %s31
      %s61 = ssub.s32 %s20, %s27
      %s62 = sor.u32 %s60, %s61
      %p63 = scmp.eq.s32.totalorder %s62, 0
      %s65 = sadd.s32 %s64, 1
      %s66 = scalar_select %p63, %s64, %s65
      %p69 = pneg %p63
      %p70 = scmp.eq.s32.totalorder %s12, 1
      %p71 = por %p69, %p70
      %p72 = scmp.ne.s32.totalorder %s64, %s67
      %p73 = scmp.eq.s32.totalorder %s12, 0
      %p74 = por %p72, %p73
      %p75 = scmp.ne.s32.totalorder %s64, %s67
      %p76 = scmp.eq.s32.totalorder %s17, 1
      %p77 = por %p75, %p76
      %p78 = scmp.ne.s32.totalorder %s67, %s68
      %p79 = scmp.eq.s32.totalorder %s17, 0
      %p80 = por %p78, %p79
      %p81 = scmp.ne.s32.totalorder %s67, %s68
      %p82 = scmp.eq.s32.totalorder %s18, 1
      %p83 = por %p81, %p82
      %p85 = scmp.ne.s32.totalorder %s68, %s84
      %p86 = scmp.eq.s32.totalorder %s18, 0
      %p87 = por %p85, %p86
      %s89 = sadd.s32 %s88, 1
      %p92 = scmp.eq.s32.totalorder %s12, 1
      %p93 = scmp.ne.s32.totalorder %s88, %s90
      %p94 = scmp.eq.s32.totalorder %s12, 0
      %p95 = por %p93, %p94
      %p96 = scmp.ne.s32.totalorder %s88, %s90
      %p97 = scmp.eq.s32.totalorder %s17, 1
      %p98 = por %p96, %p97
      %p99 = scmp.ne.s32.totalorder %s90, %s91
      %p100 = scmp.eq.s32.totalorder %s17, 0
      %p101 = por %p99, %p100
      %p102 = scmp.ne.s32.totalorder %s90, %s91
      %p103 = scmp.eq.s32.totalorder %s18, 1
      %p104 = por %p102, %p103
      %p106 = scmp.ne.s32.totalorder %s91, %s105
      %p107 = scmp.eq.s32.totalorder %s18, 0
      %p108 = por %p106, %p107
      %s110 = sadd.s32 %s109, 1
      %p113 = scmp.eq.s32.totalorder %s12, 1
      %p114 = scmp.ne.s32.totalorder %s109, %s111
      %p115 = scmp.eq.s32.totalorder %s12, 0
      %p116 = por %p114, %p115
      %p117 = scmp.ne.s32.totalorder %s109, %s111
      %p118 = scmp.eq.s32.totalorder %s17, 1
      %p119 = por %p117, %p118
      %p120 = scmp.ne.s32.totalorder %s111, %s112
      %p121 = scmp.eq.s32.totalorder %s17, 0
      %p122 = por %p120, %p121
      %p123 = scmp.ne.s32.totalorder %s111, %s112
      %p124 = scmp.eq.s32.totalorder %s18, 1
      %p125 = por %p123, %p124
      %p127 = scmp.ne.s32.totalorder %s112, %s126
      %p128 = scmp.eq.s32.totalorder %s18, 0
      %p129 = por %p127, %p128
      %s131 = sadd.s32 %s130, 1
      %p134 = scmp.eq.s32.totalorder %s12, 1
      %p135 = scmp.ne.s32.totalorder %s130, %s132
      %p136 = scmp.eq.s32.totalorder %s12, 0
      %p137 = por %p135, %p136
      %p138 = scmp.ne.s32.totalorder %s130, %s132
      %p139 = scmp.eq.s32.totalorder %s17, 1
      %p140 = por %p138, %p139
      %p141 = scmp.ne.s32.totalorder %s132, %s133
      %p142 = scmp.eq.s32.totalorder %s17, 0
      %p143 = por %p141, %p142
      %p144 = scmp.ne.s32.totalorder %s132, %s133
      %p145 = scmp.eq.s32.totalorder %s18, 1
      %p146 = por %p144, %p145
      %p148 = scmp.ne.s32.totalorder %s133, %s147
      %p149 = scmp.eq.s32.totalorder %s18, 0
      %p150 = por %p148, %p149
      %s152 = sadd.s32 %s151, 1
      %p155 = scmp.eq.s32.totalorder %s12, 1
      %p156 = scmp.ne.s32.totalorder %s151, %s153
      %p157 = scmp.eq.s32.totalorder %s12, 0
      %p158 = por %p156, %p157
      %p159 = scmp.ne.s32.totalorder %s151, %s153
      %p160 = scmp.eq.s32.totalorder %s17, 1
      %p161 = por %p159, %p160
      %p162 = scmp.ne.s32.totalorder %s153, %s154
      %p163 = scmp.eq.s32.totalorder %s17, 0
      %p164 = por %p162, %p163
      %p165 = scmp.ne.s32.totalorder %s153, %s154
      %p166 = scmp.eq.s32.totalorder %s18, 1
      %p167 = por %p165, %p166
      %p169 = scmp.ne.s32.totalorder %s154, %s168
      %p170 = scmp.eq.s32.totalorder %s18, 0
      %p171 = por %p169, %p170
      %p172 = scmp.le.s32.totalorder 1, %s12
      %p173 = scmp.lt.s32.totalorder %s12, 3
      %p174 = pnand %p172, %p173
      %p175 = pneg %p174
      // Predicated region
      $region9: #{fused_bn_add_relu_conv_bn.4} parent=5 // pred_check
        _
      $region10: #{fused_bn_add_relu_conv_bn.4} parent=5 // pred_check_branch
        %177 = sbr.rel (%p174) target = $region12
      $region11: #{fused_bn_add_relu_conv_bn.4} parent=5 // pred_region
        %s178 = ssub.s32 %s12, 1
        // Predicated region
        $region13: #{fused_bn_add_relu_conv_bn.4} parent=11 // pred_check
          %p179 = pneg %p101
        $region14: #{fused_bn_add_relu_conv_bn.4} parent=11 // pred_check_branch
          %181 = sbr.rel (%p179) target = $region16
        $region15: #{fused_bn_add_relu_conv_bn.4} parent=11 // pred_region
          _
        $region16: #{fused_bn_add_relu_conv_bn.4} parent=11 // pred_fallthru
          _
        // Predicated region
        $region17: #{fused_bn_add_relu_conv_bn.4} parent=11 // pred_check
          %p182 = pneg %p122
        $region18: #{fused_bn_add_relu_conv_bn.4} parent=11 // pred_check_branch
          %184 = sbr.rel (%p182) target = $region20
        $region19: #{fused_bn_add_relu_conv_bn.4} parent=11 // pred_region
          _
        $region20: #{fused_bn_add_relu_conv_bn.4} parent=11 // pred_fallthru
          _
      $region12: #{fused_bn_add_relu_conv_bn.4} parent=5 // pred_fallthru
        _
      %p185 = scmp.lt.s32.totalorder %s12, 2
      // Predicated region
      $region21: #{fused_bn_add_relu_conv_bn.4} parent=5 // pred_check
        %p186 = pneg %p185
      $region22: #{fused_bn_add_relu_conv_bn.4} parent=5 // pred_check_branch
        %188 = sbr.rel (%p186) target = $region24
      $region23: #{fused_bn_add_relu_conv_bn.4} parent=5 // pred_region
        // Predicated region
        $region25: #{fused_bn_add_relu_conv_bn.4} parent=23 // pred_check
          %p189 = pneg %p46
        $region26: #{fused_bn_add_relu_conv_bn.4} parent=23 // pred_check_branch
          %191 = sbr.rel (%p189) target = $region28
        $region27: #{fused_bn_add_relu_conv_bn.4} parent=23 // pred_region
          %s192 = sand.u32 %s36, 1
          %s193 = sand.u32 %s36, 1
          %s194 = smul.addr %s193, 512
          %s195 = scalar_lea.vmem [#allocation2], %s194
          %s196 = smul.u32 4, %s20
          %s197 = ssub.s32 7, %s196
          %p198 = scmp.lt.s32.totalorder %s197, 4
          %s199 = scalar_select %p198, %s197, 4
          %s200 = smul.u32 2048, %s199
          %p201 = scmp.ne.s32.totalorder 0, %s200
          %s202 = smul.addr %s19, 112
          %s203 = sadd.s32 %s196, %s202
          %s204 = smul.addr %s203, 8
          %s205 = scalar_lea.vmem %s0, %s204
          %s206 = smul.u32 %s199, 8
          // Predicated region
          $region29: #{fused_bn_add_relu_conv_bn.4} parent=27 // pred_check
            %p207 = pneg %p201
          $region30: #{fused_bn_add_relu_conv_bn.4} parent=27 // pred_check_branch
            %209 = sbr.rel (%p207) target = $region32
          $region31: #{fused_bn_add_relu_conv_bn.4} parent=27 // pred_region
            %p210 = scmp.lt.u32.totalorder %s206, 8
            %p211 = pneg %p210
            // Predicated region
            $region33: #{fused_bn_add_relu_conv_bn.4} parent=31 // pred_check
              _
            $region34: #{fused_bn_add_relu_conv_bn.4} parent=31 // pred_check_branch
              %213 = sbr.rel (%p210) target = $region36
            $region35: #{fused_bn_add_relu_conv_bn.4} parent=31 // pred_region
              %s259 = sand.u32 %s206, 7
              %p260 = scmp.eq.s32.totalorder %s259, 0
              // Predicated region
              $region48: #{fused_bn_add_relu_conv_bn.4} parent=35 // pred_check
                %p261 = pneg %p260
              $region49: #{fused_bn_add_relu_conv_bn.4} parent=35 // pred_check_branch
                %263 = sbr.rel (%p261) target = $region51
              $region50: #{fused_bn_add_relu_conv_bn.4} parent=35 // pred_region
                %s264 = sshrl.u32 %s206, 3
                %s265 = sshrl.u32 %s264, 2
                // While loop
                $region52: #{fused_bn_add_relu_conv_bn.4} parent=50 // loop_pre_header
                  _
                $region53: #{fused_bn_add_relu_conv_bn.4} parent=50 // loop_header
                  %s269 = sphi 0, %s271
                  %p270 = scmp.ge.s32.totalorder %s269, %s265
                  %s274 = sphi 0, %s407
                  %s275 = sphi %s205, %s410
                  %s276 = sphi %s195, %s411
                $region54: #{fused_bn_add_relu_conv_bn.4} parent=50 // loop_header_branch
                  %273 = sbr.rel (%p270) target = $region58
                $region55: #{fused_bn_add_relu_conv_bn.4} parent=50 // loop_body
                  %v277 = vld [vmem:[%s275] sm:$0xff]
                  %278 = vst [vmem:[%s276] sm:$0xff] %v277
                  %v279 = vld [vmem:[%s275 + $0x8] sm:$0xff]
                  %280 = vst [vmem:[%s276 + $0x8] sm:$0xff] %v279
                  %v281 = vld [vmem:[%s275 + $0x10] sm:$0xff]
                  %282 = vst [vmem:[%s276 + $0x10] sm:$0xff] %v281
                  %v283 = vld [vmem:[%s275 + $0x18] sm:$0xff]
                  %284 = vst [vmem:[%s276 + $0x18] sm:$0xff] %v283
                  %v285 = vld [vmem:[%s275 + $0x38] sm:$0xff]
                  %286 = vst [vmem:[%s276 + $0x20] sm:$0xff] %v285
                  %v287 = vld [vmem:[%s275 + $0x40] sm:$0xff]
                  %288 = vst [vmem:[%s276 + $0x28] sm:$0xff] %v287
                  %v289 = vld [vmem:[%s275 + $0x48] sm:$0xff]
                  %290 = vst [vmem:[%s276 + $0x30] sm:$0xff] %v289
                  %v291 = vld [vmem:[%s275 + $0x50] sm:$0xff]
                  %292 = vst [vmem:[%s276 + $0x38] sm:$0xff] %v291
                  %v293 = vld [vmem:[%s275 + $0x70] sm:$0xff]
                  %294 = vst [vmem:[%s276 + $0x40] sm:$0xff] %v293
                  %v295 = vld [vmem:[%s275 + $0x78] sm:$0xff]
                  %296 = vst [vmem:[%s276 + $0x48] sm:$0xff] %v295
                  %v297 = vld [vmem:[%s275 + $0x80] sm:$0xff]
                  %298 = vst [vmem:[%s276 + $0x50] sm:$0xff] %v297
                  %v299 = vld [vmem:[%s275 + $0x88] sm:$0xff]
                  %300 = vst [vmem:[%s276 + $0x58] sm:$0xff] %v299
                  %v301 = vld [vmem:[%s275 + $0xa8] sm:$0xff]
                  %302 = vst [vmem:[%s276 + $0x60] sm:$0xff] %v301
                  %v303 = vld [vmem:[%s275 + $0xb0] sm:$0xff]
                  %304 = vst [vmem:[%s276 + $0x68] sm:$0xff] %v303
                  %v305 = vld [vmem:[%s275 + $0xb8] sm:$0xff]
                  %306 = vst [vmem:[%s276 + $0x70] sm:$0xff] %v305
                  %v307 = vld [vmem:[%s275 + $0xc0] sm:$0xff]
                  %308 = vst [vmem:[%s276 + $0x78] sm:$0xff] %v307
                  %v309 = vld [vmem:[%s275 + $0xe0] sm:$0xff]
                  %310 = vst [vmem:[%s276 + $0x80] sm:$0xff] %v309
                  %v311 = vld [vmem:[%s275 + $0xe8] sm:$0xff]
                  %312 = vst [vmem:[%s276 + $0x88] sm:$0xff] %v311
                  %v313 = vld [vmem:[%s275 + $0xf0] sm:$0xff]
                  %314 = vst [vmem:[%s276 + $0x90] sm:$0xff] %v313
                  %v315 = vld [vmem:[%s275 + $0xf8] sm:$0xff]
                  %316 = vst [vmem:[%s276 + $0x98] sm:$0xff] %v315
                  %v317 = vld [vmem:[%s275 + $0x118] sm:$0xff]
                  %318 = vst [vmem:[%s276 + $0xa0] sm:$0xff] %v317
                  %v319 = vld [vmem:[%s275 + $0x120] sm:$0xff]
                  %320 = vst [vmem:[%s276 + $0xa8] sm:$0xff] %v319
                  %v321 = vld [vmem:[%s275 + $0x128] sm:$0xff]
                  %322 = vst [vmem:[%s276 + $0xb0] sm:$0xff] %v321
                  %v323 = vld [vmem:[%s275 + $0x130] sm:$0xff]
                  %324 = vst [vmem:[%s276 + $0xb8] sm:$0xff] %v323
                  %v325 = vld [vmem:[%s275 + $0x150] sm:$0xff]
                  %326 = vst [vmem:[%s276 + $0xc0] sm:$0xff] %v325
                  %v327 = vld [vmem:[%s275 + $0x158] sm:$0xff]
                  %328 = vst [vmem:[%s276 + $0xc8] sm:$0xff] %v327
                  %v329 = vld [vmem:[%s275 + $0x160] sm:$0xff]
                  %330 = vst [vmem:[%s276 + $0xd0] sm:$0xff] %v329
                  %v331 = vld [vmem:[%s275 + $0x168] sm:$0xff]
                  %332 = vst [vmem:[%s276 + $0xd8] sm:$0xff] %v331
                  %v333 = vld [vmem:[%s275 + $0x188] sm:$0xff]
                  %334 = vst [vmem:[%s276 + $0xe0] sm:$0xff] %v333
                  %v335 = vld [vmem:[%s275 + $0x190] sm:$0xff]
                  %336 = vst [vmem:[%s276 + $0xe8] sm:$0xff] %v335
                  %v337 = vld [vmem:[%s275 + $0x198] sm:$0xff]
                  %338 = vst [vmem:[%s276 + $0xf0] sm:$0xff] %v337
                  %v339 = vld [vmem:[%s275 + $0x1a0] sm:$0xff]
                  %340 = vst [vmem:[%s276 + $0xf8] sm:$0xff] %v339
                  %v341 = vld [vmem:[%s275 + $0x1c0] sm:$0xff]
                  %342 = vst [vmem:[%s276 + $0x100] sm:$0xff] %v341
                  %v343 = vld [vmem:[%s275 + $0x1c8] sm:$0xff]
                  %344 = vst [vmem:[%s276 + $0x108] sm:$0xff] %v343
                  %v345 = vld [vmem:[%s275 + $0x1d0] sm:$0xff]
                  %346 = vst [vmem:[%s276 + $0x110] sm:$0xff] %v345
                  %v347 = vld [vmem:[%s275 + $0x1d8] sm:$0xff]
                  %348 = vst [vmem:[%s276 + $0x118] sm:$0xff] %v347
                  %v349 = vld [vmem:[%s275 + $0x1f8] sm:$0xff]
                  %350 = vst [vmem:[%s276 + $0x120] sm:$0xff] %v349
                  %v351 = vld [vmem:[%s275 + $0x200] sm:$0xff]
                  %352 = vst [vmem:[%s276 + $0x128] sm:$0xff] %v351
                  %v353 = vld [vmem:[%s275 + $0x208] sm:$0xff]
                  %354 = vst [vmem:[%s276 + $0x130] sm:$0xff] %v353
                  %v355 = vld [vmem:[%s275 + $0x210] sm:$0xff]
                  %356 = vst [vmem:[%s276 + $0x138] sm:$0xff] %v355
                  %v357 = vld [vmem:[%s275 + $0x230] sm:$0xff]
                  %358 = vst [vmem:[%s276 + $0x140] sm:$0xff] %v357
                  %v359 = vld [vmem:[%s275 + $0x238] sm:$0xff]
                  %360 = vst [vmem:[%s276 + $0x148] sm:$0xff] %v359
                  %v361 = vld [vmem:[%s275 + $0x240] sm:$0xff]
                  %362 = vst [vmem:[%s276 + $0x150] sm:$0xff] %v361
                  %v363 = vld [vmem:[%s275 + $0x248] sm:$0xff]
                  %364 = vst [vmem:[%s276 + $0x158] sm:$0xff] %v363
                  %v365 = vld [vmem:[%s275 + $0x268] sm:$0xff]
                  %366 = vst [vmem:[%s276 + $0x160] sm:$0xff] %v365
                  %v367 = vld [vmem:[%s275 + $0x270] sm:$0xff]
                  %368 = vst [vmem:[%s276 + $0x168] sm:$0xff] %v367
                  %v369 = vld [vmem:[%s275 + $0x278] sm:$0xff]
                  %370 = vst [vmem:[%s276 + $0x170] sm:$0xff] %v369
                  %v371 = vld [vmem:[%s275 + $0x280] sm:$0xff]
                  %372 = vst [vmem:[%s276 + $0x178] sm:$0xff] %v371
                  %v373 = vld [vmem:[%s275 + $0x2a0] sm:$0xff]
                  %374 = vst [vmem:[%s276 + $0x180] sm:$0xff] %v373
                  %v375 = vld [vmem:[%s275 + $0x2a8] sm:$0xff]
                  %376 = vst [vmem:[%s276 + $0x188] sm:$0xff] %v375
                  %v377 = vld [vmem:[%s275 + $0x2b0] sm:$0xff]
                  %378 = vst [vmem:[%s276 + $0x190] sm:$0xff] %v377
                  %v379 = vld [vmem:[%s275 + $0x2b8] sm:$0xff]
                  %380 = vst [vmem:[%s276 + $0x198] sm:$0xff] %v379
                  %v381 = vld [vmem:[%s275 + $0x2d8] sm:$0xff]
                  %382 = vst [vmem:[%s276 + $0x1a0] sm:$0xff] %v381
                  %v383 = vld [vmem:[%s275 + $0x2e0] sm:$0xff]
                  %384 = vst [vmem:[%s276 + $0x1a8] sm:$0xff] %v383
                  %v385 = vld [vmem:[%s275 + $0x2e8] sm:$0xff]
                  %386 = vst [vmem:[%s276 + $0x1b0] sm:$0xff] %v385
                  %v387 = vld [vmem:[%s275 + $0x2f0] sm:$0xff]
                  %388 = vst [vmem:[%s276 + $0x1b8] sm:$0xff] %v387
                  %v389 = vld [vmem:[%s275 + $0x310] sm:$0xff]
                  %390 = vst [vmem:[%s276 + $0x1c0] sm:$0xff] %v389
                  %v391 = vld [vmem:[%s275 + $0x318] sm:$0xff]
                  %392 = vst [vmem:[%s276 + $0x1c8] sm:$0xff] %v391
                  %v393 = vld [vmem:[%s275 + $0x320] sm:$0xff]
                  %394 = vst [vmem:[%s276 + $0x1d0] sm:$0xff] %v393
                  %v395 = vld [vmem:[%s275 + $0x328] sm:$0xff]
                  %396 = vst [vmem:[%s276 + $0x1d8] sm:$0xff] %v395
                  %v397 = vld [vmem:[%s275 + $0x348] sm:$0xff]
                  %398 = vst [vmem:[%s276 + $0x1e0] sm:$0xff] %v397
                  %v399 = vld [vmem:[%s275 + $0x350] sm:$0xff]
                  %400 = vst [vmem:[%s276 + $0x1e8] sm:$0xff] %v399
                  %v401 = vld [vmem:[%s275 + $0x358] sm:$0xff]
                  %402 = vst [vmem:[%s276 + $0x1f0] sm:$0xff] %v401
                  %v403 = vld [vmem:[%s275 + $0x360] sm:$0xff]
                  %404 = vst [vmem:[%s276 + $0x1f8] sm:$0xff] %v403
                  %s405 = sadd.s32 1, %s274
                  %p406 = scmp.ge.s32.totalorder %s405, %s265
                  %s407 = scalar_select %p406, 0, %s405
                  %s408 = smul.u32 %s407, 32
                  %s409 = smul.u32 %s407, 32
                  %s410 = scalar_lea.vmem %s205, %s408
                  %s411 = scalar_lea.vmem %s195, %s409 [#allocation2]
                $region56: #{fused_bn_add_relu_conv_bn.4} parent=50 // loop_footer
                  %s271 = sadd.s32 %s269, 1
                $region57: #{fused_bn_add_relu_conv_bn.4} parent=50 // loop_footer_branch
                  %268 = sbr.rel target = $region53
                $region58: #{fused_bn_add_relu_conv_bn.4} parent=50 // loop_exit
                  _
                %s412 = sshrl.u32 %s264, 2
                %s413 = sand.u32 %s264, 3
                %s414 = smul.u32 %s412, 4
                %s415 = smul.u32 128, %s414
                %s416 = sshra.s32 %s415, 4
                %s417 = scalar_lea.vmem %s205, %s416
                %s418 = smul.u32 128, %s414
                %s419 = sshra.s32 %s418, 4
                %s420 = scalar_lea.vmem %s195, %s419 [#allocation2]
                // While loop
                $region59: #{fused_bn_add_relu_conv_bn.4} parent=50 // loop_pre_header
                  _
                $region60: #{fused_bn_add_relu_conv_bn.4} parent=50 // loop_header
                  %s424 = sphi 0, %s426
                  %p425 = scmp.ge.s32.totalorder %s424, %s413
                  %s429 = sphi 0, %s466
                  %s430 = sphi %s417, %s469
                  %s431 = sphi %s420, %s470
                $region61: #{fused_bn_add_relu_conv_bn.4} parent=50 // loop_header_branch
                  %428 = sbr.rel (%p425) target = $region65
                $region62: #{fused_bn_add_relu_conv_bn.4} parent=50 // loop_body
                  %v432 = vld [vmem:[%s430] sm:$0xff]
                  %433 = vst [vmem:[%s431] sm:$0xff] %v432
                  %v434 = vld [vmem:[%s430 + $0x38] sm:$0xff]
                  %435 = vst [vmem:[%s431 + $0x20] sm:$0xff] %v434
                  %v436 = vld [vmem:[%s430 + $0x70] sm:$0xff]
                  %437 = vst [vmem:[%s431 + $0x40] sm:$0xff] %v436
                  %v438 = vld [vmem:[%s430 + $0xa8] sm:$0xff]
                  %439 = vst [vmem:[%s431 + $0x60] sm:$0xff] %v438
                  %v440 = vld [vmem:[%s430 + $0xe0] sm:$0xff]
                  %441 = vst [vmem:[%s431 + $0x80] sm:$0xff] %v440
                  %v442 = vld [vmem:[%s430 + $0x118] sm:$0xff]
                  %443 = vst [vmem:[%s431 + $0xa0] sm:$0xff] %v442
                  %v444 = vld [vmem:[%s430 + $0x150] sm:$0xff]
                  %445 = vst [vmem:[%s431 + $0xc0] sm:$0xff] %v444
                  %v446 = vld [vmem:[%s430 + $0x188] sm:$0xff]
                  %447 = vst [vmem:[%s431 + $0xe0] sm:$0xff] %v446
                  %v448 = vld [vmem:[%s430 + $0x1c0] sm:$0xff]
                  %449 = vst [vmem:[%s431 + $0x100] sm:$0xff] %v448
                  %v450 = vld [vmem:[%s430 + $0x1f8] sm:$0xff]
                  %451 = vst [vmem:[%s431 + $0x120] sm:$0xff] %v450
                  %v452 = vld [vmem:[%s430 + $0x230] sm:$0xff]
                  %453 = vst [vmem:[%s431 + $0x140] sm:$0xff] %v452
                  %v454 = vld [vmem:[%s430 + $0x268] sm:$0xff]
                  %455 = vst [vmem:[%s431 + $0x160] sm:$0xff] %v454
                  %v456 = vld [vmem:[%s430 + $0x2a0] sm:$0xff]
                  %457 = vst [vmem:[%s431 + $0x180] sm:$0xff] %v456
                  %v458 = vld [vmem:[%s430 + $0x2d8] sm:$0xff]
                  %459 = vst [vmem:[%s431 + $0x1a0] sm:$0xff] %v458
                  %v460 = vld [vmem:[%s430 + $0x310] sm:$0xff]
                  %461 = vst [vmem:[%s431 + $0x1c0] sm:$0xff] %v460
                  %v462 = vld [vmem:[%s430 + $0x348] sm:$0xff]
                  %463 = vst [vmem:[%s431 + $0x1e0] sm:$0xff] %v462
                  %s464 = sadd.s32 1, %s429
                  %p465 = scmp.ge.s32.totalorder %s464, %s413
                  %s466 = scalar_select %p465, 0, %s464
                  %s467 = smul.u32 %s466, 8
                  %s468 = smul.u32 %s466, 8
                  %s469 = scalar_lea.vmem %s417, %s467
                  %s470 = scalar_lea.vmem %s420, %s468 [#allocation2]
                $region63: #{fused_bn_add_relu_conv_bn.4} parent=50 // loop_footer
                  %s426 = sadd.s32 %s424, 1
                $region64: #{fused_bn_add_relu_conv_bn.4} parent=50 // loop_footer_branch
                  %423 = sbr.rel target = $region60
                $region65: #{fused_bn_add_relu_conv_bn.4} parent=50 // loop_exit
                  _
              $region51: #{fused_bn_add_relu_conv_bn.4} parent=35 // pred_fallthru
                _
              %p471 = pneg %p260
              // Predicated region
              $region66: #{fused_bn_add_relu_conv_bn.4} parent=35 // pred_check
                _
              $region67: #{fused_bn_add_relu_conv_bn.4} parent=35 // pred_check_branch
                %473 = sbr.rel (%p260) target = $region69
              $region68: #{fused_bn_add_relu_conv_bn.4} parent=35 // pred_region
                %s474 = sand.u32 %s206, 7
                %s475 = ssub.s32 %s206, %s474
                %s476 = scalar_lea.vmem %s205, %s475
                %s477 = ssub.s32 %s206, %s474
                %s478 = scalar_lea.vmem %s195, %s477 [#allocation2]
                %s479 = sshrl.u32 %s206, 3
                %s480 = sshrl.u32 %s479, 2
                // While loop
                $region70: #{fused_bn_add_relu_conv_bn.4} parent=68 // loop_pre_header
                  _
                $region71: #{fused_bn_add_relu_conv_bn.4} parent=68 // loop_header
                  %s484 = sphi 0, %s486
                  %p485 = scmp.ge.s32.totalorder %s484, %s480
                  %s489 = sphi 0, %s622
                  %s490 = sphi %s205, %s625
                  %s491 = sphi %s195, %s626
                $region72: #{fused_bn_add_relu_conv_bn.4} parent=68 // loop_header_branch
                  %488 = sbr.rel (%p485) target = $region76
                $region73: #{fused_bn_add_relu_conv_bn.4} parent=68 // loop_body
                  %v492 = vld [vmem:[%s490] sm:$0xff]
                  %493 = vst [vmem:[%s491] sm:$0xff] %v492
                  %v494 = vld [vmem:[%s490 + $0x8] sm:$0xff]
                  %495 = vst [vmem:[%s491 + $0x8] sm:$0xff] %v494
                  %v496 = vld [vmem:[%s490 + $0x10] sm:$0xff]
                  %497 = vst [vmem:[%s491 + $0x10] sm:$0xff] %v496
                  %v498 = vld [vmem:[%s490 + $0x18] sm:$0xff]
                  %499 = vst [vmem:[%s491 + $0x18] sm:$0xff] %v498
                  %v500 = vld [vmem:[%s490 + $0x38] sm:$0xff]
                  %501 = vst [vmem:[%s491 + $0x20] sm:$0xff] %v500
                  %v502 = vld [vmem:[%s490 + $0x40] sm:$0xff]
                  %503 = vst [vmem:[%s491 + $0x28] sm:$0xff] %v502
                  %v504 = vld [vmem:[%s490 + $0x48] sm:$0xff]
                  %505 = vst [vmem:[%s491 + $0x30] sm:$0xff] %v504
                  %v506 = vld [vmem:[%s490 + $0x50] sm:$0xff]
                  %507 = vst [vmem:[%s491 + $0x38] sm:$0xff] %v506
                  %v508 = vld [vmem:[%s490 + $0x70] sm:$0xff]
                  %509 = vst [vmem:[%s491 + $0x40] sm:$0xff] %v508
                  %v510 = vld [vmem:[%s490 + $0x78] sm:$0xff]
                  %511 = vst [vmem:[%s491 + $0x48] sm:$0xff] %v510
                  %v512 = vld [vmem:[%s490 + $0x80] sm:$0xff]
                  %513 = vst [vmem:[%s491 + $0x50] sm:$0xff] %v512
                  %v514 = vld [vmem:[%s490 + $0x88] sm:$0xff]
                  %515 = vst [vmem:[%s491 + $0x58] sm:$0xff] %v514
                  %v516 = vld [vmem:[%s490 + $0xa8] sm:$0xff]
                  %517 = vst [vmem:[%s491 + $0x60] sm:$0xff] %v516
                  %v518 = vld [vmem:[%s490 + $0xb0] sm:$0xff]
                  %519 = vst [vmem:[%s491 + $0x68] sm:$0xff] %v518
                  %v520 = vld [vmem:[%s490 + $0xb8] sm:$0xff]
                  %521 = vst [vmem:[%s491 + $0x70] sm:$0xff] %v520
                  %v522 = vld [vmem:[%s490 + $0xc0] sm:$0xff]
                  %523 = vst [vmem:[%s491 + $0x78] sm:$0xff] %v522
                  %v524 = vld [vmem:[%s490 + $0xe0] sm:$0xff]
                  %525 = vst [vmem:[%s491 + $0x80] sm:$0xff] %v524
                  %v526 = vld [vmem:[%s490 + $0xe8] sm:$0xff]
                  %527 = vst [vmem:[%s491 + $0x88] sm:$0xff] %v526
                  %v528 = vld [vmem:[%s490 + $0xf0] sm:$0xff]
                  %529 = vst [vmem:[%s491 + $0x90] sm:$0xff] %v528
                  %v530 = vld [vmem:[%s490 + $0xf8] sm:$0xff]
                  %531 = vst [vmem:[%s491 + $0x98] sm:$0xff] %v530
                  %v532 = vld [vmem:[%s490 + $0x118] sm:$0xff]
                  %533 = vst [vmem:[%s491 + $0xa0] sm:$0xff] %v532
                  %v534 = vld [vmem:[%s490 + $0x120] sm:$0xff]
                  %535 = vst [vmem:[%s491 + $0xa8] sm:$0xff] %v534
                  %v536 = vld [vmem:[%s490 + $0x128] sm:$0xff]
                  %537 = vst [vmem:[%s491 + $0xb0] sm:$0xff] %v536
                  %v538 = vld [vmem:[%s490 + $0x130] sm:$0xff]
                  %539 = vst [vmem:[%s491 + $0xb8] sm:$0xff] %v538
                  %v540 = vld [vmem:[%s490 + $0x150] sm:$0xff]
                  %541 = vst [vmem:[%s491 + $0xc0] sm:$0xff] %v540
                  %v542 = vld [vmem:[%s490 + $0x158] sm:$0xff]
                  %543 = vst [vmem:[%s491 + $0xc8] sm:$0xff] %v542
                  %v544 = vld [vmem:[%s490 + $0x160] sm:$0xff]
                  %545 = vst [vmem:[%s491 + $0xd0] sm:$0xff] %v544
                  %v546 = vld [vmem:[%s490 + $0x168] sm:$0xff]
                  %547 = vst [vmem:[%s491 + $0xd8] sm:$0xff] %v546
                  %v548 = vld [vmem:[%s490 + $0x188] sm:$0xff]
                  %549 = vst [vmem:[%s491 + $0xe0] sm:$0xff] %v548
                  %v550 = vld [vmem:[%s490 + $0x190] sm:$0xff]
                  %551 = vst [vmem:[%s491 + $0xe8] sm:$0xff] %v550
                  %v552 = vld [vmem:[%s490 + $0x198] sm:$0xff]
                  %553 = vst [vmem:[%s491 + $0xf0] sm:$0xff] %v552
                  %v554 = vld [vmem:[%s490 + $0x1a0] sm:$0xff]
                  %555 = vst [vmem:[%s491 + $0xf8] sm:$0xff] %v554
                  %v556 = vld [vmem:[%s490 + $0x1c0] sm:$0xff]
                  %557 = vst [vmem:[%s491 + $0x100] sm:$0xff] %v556
                  %v558 = vld [vmem:[%s490 + $0x1c8] sm:$0xff]
                  %559 = vst [vmem:[%s491 + $0x108] sm:$0xff] %v558
                  %v560 = vld [vmem:[%s490 + $0x1d0] sm:$0xff]
                  %561 = vst [vmem:[%s491 + $0x110] sm:$0xff] %v560
                  %v562 = vld [vmem:[%s490 + $0x1d8] sm:$0xff]
                  %563 = vst [vmem:[%s491 + $0x118] sm:$0xff] %v562
                  %v564 = vld [vmem:[%s490 + $0x1f8] sm:$0xff]
                  %565 = vst [vmem:[%s491 + $0x120] sm:$0xff] %v564
                  %v566 = vld [vmem:[%s490 + $0x200] sm:$0xff]
                  %567 = vst [vmem:[%s491 + $0x128] sm:$0xff] %v566
                  %v568 = vld [vmem:[%s490 + $0x208] sm:$0xff]
                  %569 = vst [vmem:[%s491 + $0x130] sm:$0xff] %v568
                  %v570 = vld [vmem:[%s490 + $0x210] sm:$0xff]
                  %571 = vst [vmem:[%s491 + $0x138] sm:$0xff] %v570
                  %v572 = vld [vmem:[%s490 + $0x230] sm:$0xff]
                  %573 = vst [vmem:[%s491 + $0x140] sm:$0xff] %v572
                  %v574 = vld [vmem:[%s490 + $0x238] sm:$0xff]
                  %575 = vst [vmem:[%s491 + $0x148] sm:$0xff] %v574
                  %v576 = vld [vmem:[%s490 + $0x240] sm:$0xff]
                  %577 = vst [vmem:[%s491 + $0x150] sm:$0xff] %v576
                  %v578 = vld [vmem:[%s490 + $0x248] sm:$0xff]
                  %579 = vst [vmem:[%s491 + $0x158] sm:$0xff] %v578
                  %v580 = vld [vmem:[%s490 + $0x268] sm:$0xff]
                  %581 = vst [vmem:[%s491 + $0x160] sm:$0xff] %v580
                  %v582 = vld [vmem:[%s490 + $0x270] sm:$0xff]
                  %583 = vst [vmem:[%s491 + $0x168] sm:$0xff] %v582
                  %v584 = vld [vmem:[%s490 + $0x278] sm:$0xff]
                  %585 = vst [vmem:[%s491 + $0x170] sm:$0xff] %v584
                  %v586 = vld [vmem:[%s490 + $0x280] sm:$0xff]
                  %587 = vst [vmem:[%s491 + $0x178] sm:$0xff] %v586
                  %v588 = vld [vmem:[%s490 + $0x2a0] sm:$0xff]
                  %589 = vst [vmem:[%s491 + $0x180] sm:$0xff] %v588
                  %v590 = vld [vmem:[%s490 + $0x2a8] sm:$0xff]
                  %591 = vst [vmem:[%s491 + $0x188] sm:$0xff] %v590
                  %v592 = vld [vmem:[%s490 + $0x2b0] sm:$0xff]
                  %593 = vst [vmem:[%s491 + $0x190] sm:$0xff] %v592
                  %v594 = vld [vmem:[%s490 + $0x2b8] sm:$0xff]
                  %595 = vst [vmem:[%s491 + $0x198] sm:$0xff] %v594
                  %v596 = vld [vmem:[%s490 + $0x2d8] sm:$0xff]
                  %597 = vst [vmem:[%s491 + $0x1a0] sm:$0xff] %v596
                  %v598 = vld [vmem:[%s490 + $0x2e0] sm:$0xff]
                  %599 = vst [vmem:[%s491 + $0x1a8] sm:$0xff] %v598
                  %v600 = vld [vmem:[%s490 + $0x2e8] sm:$0xff]
                  %601 = vst [vmem:[%s491 + $0x1b0] sm:$0xff] %v600
                  %v602 = vld [vmem:[%s490 + $0x2f0] sm:$0xff]
                  %603 = vst [vmem:[%s491 + $0x1b8] sm:$0xff] %v602
                  %v604 = vld [vmem:[%s490 + $0x310] sm:$0xff]
                  %605 = vst [vmem:[%s491 + $0x1c0] sm:$0xff] %v604
                  %v606 = vld [vmem:[%s490 + $0x318] sm:$0xff]
                  %607 = vst [vmem:[%s491 + $0x1c8] sm:$0xff] %v606
                  %v608 = vld [vmem:[%s490 + $0x320] sm:$0xff]
                  %609 = vst [vmem:[%s491 + $0x1d0] sm:$0xff] %v608
                  %v610 = vld [vmem:[%s490 + $0x328] sm:$0xff]
                  %611 = vst [vmem:[%s491 + $0x1d8] sm:$0xff] %v610
                  %v612 = vld [vmem:[%s490 + $0x348] sm:$0xff]
                  %613 = vst [vmem:[%s491 + $0x1e0] sm:$0xff] %v612
                  %v614 = vld [vmem:[%s490 + $0x350] sm:$0xff]
                  %615 = vst [vmem:[%s491 + $0x1e8] sm:$0xff] %v614
                  %v616 = vld [vmem:[%s490 + $0x358] sm:$0xff]
                  %617 = vst [vmem:[%s491 + $0x1f0] sm:$0xff] %v616
                  %v618 = vld [vmem:[%s490 + $0x360] sm:$0xff]
                  %619 = vst [vmem:[%s491 + $0x1f8] sm:$0xff] %v618
                  %s620 = sadd.s32 1, %s489
                  %p621 = scmp.ge.s32.totalorder %s620, %s480
                  %s622 = scalar_select %p621, 0, %s620
                  %s623 = smul.u32 %s622, 32
                  %s624 = smul.u32 %s622, 32
                  %s625 = scalar_lea.vmem %s205, %s623
                  %s626 = scalar_lea.vmem %s195, %s624 [#allocation2]
                $region74: #{fused_bn_add_relu_conv_bn.4} parent=68 // loop_footer
                  %s486 = sadd.s32 %s484, 1
                $region75: #{fused_bn_add_relu_conv_bn.4} parent=68 // loop_footer_branch
                  %483 = sbr.rel target = $region71
                $region76: #{fused_bn_add_relu_conv_bn.4} parent=68 // loop_exit
                  _
                %s627 = sshrl.u32 %s479, 2
                %s628 = sand.u32 %s479, 3
                %s629 = smul.u32 %s627, 4
                %s630 = smul.u32 128, %s629
                %s631 = sshra.s32 %s630, 4
                %s632 = scalar_lea.vmem %s205, %s631
                %s633 = smul.u32 128, %s629
                %s634 = sshra.s32 %s633, 4
                %s635 = scalar_lea.vmem %s195, %s634 [#allocation2]
                // While loop
                $region77: #{fused_bn_add_relu_conv_bn.4} parent=68 // loop_pre_header
                  _
                $region78: #{fused_bn_add_relu_conv_bn.4} parent=68 // loop_header
                  %s639 = sphi 0, %s641
                  %p640 = scmp.ge.s32.totalorder %s639, %s628
                  %s644 = sphi 0, %s681
                  %s645 = sphi %s632, %s684
                  %s646 = sphi %s635, %s685
                $region79: #{fused_bn_add_relu_conv_bn.4} parent=68 // loop_header_branch
                  %643 = sbr.rel (%p640) target = $region83
                $region80: #{fused_bn_add_relu_conv_bn.4} parent=68 // loop_body
                  %v647 = vld [vmem:[%s645] sm:$0xff]
                  %648 = vst [vmem:[%s646] sm:$0xff] %v647
                  %v649 = vld [vmem:[%s645 + $0x38] sm:$0xff]
                  %650 = vst [vmem:[%s646 + $0x20] sm:$0xff] %v649
                  %v651 = vld [vmem:[%s645 + $0x70] sm:$0xff]
                  %652 = vst [vmem:[%s646 + $0x40] sm:$0xff] %v651
                  %v653 = vld [vmem:[%s645 + $0xa8] sm:$0xff]
                  %654 = vst [vmem:[%s646 + $0x60] sm:$0xff] %v653
                  %v655 = vld [vmem:[%s645 + $0xe0] sm:$0xff]
                  %656 = vst [vmem:[%s646 + $0x80] sm:$0xff] %v655
                  %v657 = vld [vmem:[%s645 + $0x118] sm:$0xff]
                  %658 = vst [vmem:[%s646 + $0xa0] sm:$0xff] %v657
                  %v659 = vld [vmem:[%s645 + $0x150] sm:$0xff]
                  %660 = vst [vmem:[%s646 + $0xc0] sm:$0xff] %v659
                  %v661 = vld [vmem:[%s645 + $0x188] sm:$0xff]
                  %662 = vst [vmem:[%s646 + $0xe0] sm:$0xff] %v661
                  %v663 = vld [vmem:[%s645 + $0x1c0] sm:$0xff]
                  %664 = vst [vmem:[%s646 + $0x100] sm:$0xff] %v663
                  %v665 = vld [vmem:[%s645 + $0x1f8] sm:$0xff]
                  %666 = vst [vmem:[%s646 + $0x120] sm:$0xff] %v665
                  %v667 = vld [vmem:[%s645 + $0x230] sm:$0xff]
                  %668 = vst [vmem:[%s646 + $0x140] sm:$0xff] %v667
                  %v669 = vld [vmem:[%s645 + $0x268] sm:$0xff]
                  %670 = vst [vmem:[%s646 + $0x160] sm:$0xff] %v669
                  %v671 = vld [vmem:[%s645 + $0x2a0] sm:$0xff]
                  %672 = vst [vmem:[%s646 + $0x180] sm:$0xff] %v671
                  %v673 = vld [vmem:[%s645 + $0x2d8] sm:$0xff]
                  %674 = vst [vmem:[%s646 + $0x1a0] sm:$0xff] %v673
                  %v675 = vld [vmem:[%s645 + $0x310] sm:$0xff]
                  %676 = vst [vmem:[%s646 + $0x1c0] sm:$0xff] %v675
                  %v677 = vld [vmem:[%s645 + $0x348] sm:$0xff]
                  %678 = vst [vmem:[%s646 + $0x1e0] sm:$0xff] %v677
                  %s679 = sadd.s32 1, %s644
                  %p680 = scmp.ge.s32.totalorder %s679, %s628
                  %s681 = scalar_select %p680, 0, %s679
                  %s682 = smul.u32 %s681, 8
                  %s683 = smul.u32 %s681, 8
                  %s684 = scalar_lea.vmem %s632, %s682
                  %s685 = scalar_lea.vmem %s635, %s683 [#allocation2]
                $region81: #{fused_bn_add_relu_conv_bn.4} parent=68 // loop_footer
                  %s641 = sadd.s32 %s639, 1
                $region82: #{fused_bn_add_relu_conv_bn.4} parent=68 // loop_footer_branch
                  %638 = sbr.rel target = $region78
                $region83: #{fused_bn_add_relu_conv_bn.4} parent=68 // loop_exit
                  _
                %s686 = sshll.u32 1, %s474
                %s687 = ssub.s32 %s686, 1
                loop: start=0, step=1, limit=1
                $region84: #{fused_bn_add_relu_conv_bn.4} parent=68 // loop_pre_header
                  _
                $region85: #{fused_bn_add_relu_conv_bn.4} parent=68 // loop_header
                  %s689 = sphi 0, %s693
                  %p690 = scmp.ge.s32.totalorder %s689, 1
                  %s694 = sphi %s476, %s476
                  %s695 = sphi %s478, %s478
                $region86: #{fused_bn_add_relu_conv_bn.4} parent=68 // loop_header_branch
                  %692 = sbr.rel (%p690) target = $region90
                $region87: #{fused_bn_add_relu_conv_bn.4} parent=68 // loop_body
                  %v696 = vld [vmem:[%s694] sm:%s687]
                  %697 = vst [vmem:[%s695] sm:%s687] %v696
                  %v698 = vld [vmem:[%s694 + $0x38] sm:%s687]
                  %699 = vst [vmem:[%s695 + $0x20] sm:%s687] %v698
                  %v700 = vld [vmem:[%s694 + $0x70] sm:%s687]
                  %701 = vst [vmem:[%s695 + $0x40] sm:%s687] %v700
                  %v702 = vld [vmem:[%s694 + $0xa8] sm:%s687]
                  %703 = vst [vmem:[%s695 + $0x60] sm:%s687] %v702
                  %v704 = vld [vmem:[%s694 + $0xe0] sm:%s687]
                  %705 = vst [vmem:[%s695 + $0x80] sm:%s687] %v704
                  %v706 = vld [vmem:[%s694 + $0x118] sm:%s687]
                  %707 = vst [vmem:[%s695 + $0xa0] sm:%s687] %v706
                  %v708 = vld [vmem:[%s694 + $0x150] sm:%s687]
                  %709 = vst [vmem:[%s695 + $0xc0] sm:%s687] %v708
                  %v710 = vld [vmem:[%s694 + $0x188] sm:%s687]
                  %711 = vst [vmem:[%s695 + $0xe0] sm:%s687] %v710
                  %v712 = vld [vmem:[%s694 + $0x1c0] sm:%s687]
                  %713 = vst [vmem:[%s695 + $0x100] sm:%s687] %v712
                  %v714 = vld [vmem:[%s694 + $0x1f8] sm:%s687]
                  %715 = vst [vmem:[%s695 + $0x120] sm:%s687] %v714
                  %v716 = vld [vmem:[%s694 + $0x230] sm:%s687]
                  %717 = vst [vmem:[%s695 + $0x140] sm:%s687] %v716
                  %v718 = vld [vmem:[%s694 + $0x268] sm:%s687]
                  %719 = vst [vmem:[%s695 + $0x160] sm:%s687] %v718
                  %v720 = vld [vmem:[%s694 + $0x2a0] sm:%s687]
                  %721 = vst [vmem:[%s695 + $0x180] sm:%s687] %v720
                  %v722 = vld [vmem:[%s694 + $0x2d8] sm:%s687]
                  %723 = vst [vmem:[%s695 + $0x1a0] sm:%s687] %v722
                  %v724 = vld [vmem:[%s694 + $0x310] sm:%s687]
                  %725 = vst [vmem:[%s695 + $0x1c0] sm:%s687] %v724
                  %v726 = vld [vmem:[%s694 + $0x348] sm:%s687]
                  %727 = vst [vmem:[%s695 + $0x1e0] sm:%s687] %v726
                $region88: #{fused_bn_add_relu_conv_bn.4} parent=68 // loop_footer
                  %s693 = sadd.s32 1, %s689
                $region89: #{fused_bn_add_relu_conv_bn.4} parent=68 // loop_footer_branch
                  %688 = sbr.rel target = $region85
                $region90: #{fused_bn_add_relu_conv_bn.4} parent=68 // loop_exit
                  _
              $region69: #{fused_bn_add_relu_conv_bn.4} parent=35 // pred_fallthru
                _
            $region36: #{fused_bn_add_relu_conv_bn.4} parent=31 // pred_fallthru
              _
            // Predicated region
            $region37: #{fused_bn_add_relu_conv_bn.4} parent=31 // pred_check
              %p214 = pneg %p210
            $region38: #{fused_bn_add_relu_conv_bn.4} parent=31 // pred_check_branch
              %216 = sbr.rel (%p214) target = $region40
            $region39: #{fused_bn_add_relu_conv_bn.4} parent=31 // pred_region
              %s217 = sshll.u32 1, %s206
              %s218 = ssub.s32 %s217, 1
              loop: start=0, step=1, limit=1
              $region41: #{fused_bn_add_relu_conv_bn.4} parent=39 // loop_pre_header
                _
              $region42: #{fused_bn_add_relu_conv_bn.4} parent=39 // loop_header
                %s220 = sphi 0, %s224
                %p221 = scmp.ge.s32.totalorder %s220, 1
                %s225 = sphi %s205, %s205
                %s226 = sphi %s195, %s195
              $region43: #{fused_bn_add_relu_conv_bn.4} parent=39 // loop_header_branch
                %223 = sbr.rel (%p221) target = $region47
              $region44: #{fused_bn_add_relu_conv_bn.4} parent=39 // loop_body
                %v227 = vld [vmem:[%s225] sm:%s218]
                %228 = vst [vmem:[%s226] sm:%s218] %v227
                %v229 = vld [vmem:[%s225 + $0x38] sm:%s218]
                %230 = vst [vmem:[%s226 + $0x20] sm:%s218] %v229
                %v231 = vld [vmem:[%s225 + $0x70] sm:%s218]
                %232 = vst [vmem:[%s226 + $0x40] sm:%s218] %v231
                %v233 = vld [vmem:[%s225 + $0xa8] sm:%s218]
                %234 = vst [vmem:[%s226 + $0x60] sm:%s218] %v233
                %v235 = vld [vmem:[%s225 + $0xe0] sm:%s218]
                %236 = vst [vmem:[%s226 + $0x80] sm:%s218] %v235
                %v237 = vld [vmem:[%s225 + $0x118] sm:%s218]
                %238 = vst [vmem:[%s226 + $0xa0] sm:%s218] %v237
                %v239 = vld [vmem:[%s225 + $0x150] sm:%s218]
                %240 = vst [vmem:[%s226 + $0xc0] sm:%s218] %v239
                %v241 = vld [vmem:[%s225 + $0x188] sm:%s218]
                %242 = vst [vmem:[%s226 + $0xe0] sm:%s218] %v241
                %v243 = vld [vmem:[%s225 + $0x1c0] sm:%s218]
                %244 = vst [vmem:[%s226 + $0x100] sm:%s218] %v243
                %v245 = vld [vmem:[%s225 + $0x1f8] sm:%s218]
                %246 = vst [vmem:[%s226 + $0x120] sm:%s218] %v245
                %v247 = vld [vmem:[%s225 + $0x230] sm:%s218]
                %248 = vst [vmem:[%s226 + $0x140] sm:%s218] %v247
                %v249 = vld [vmem:[%s225 + $0x268] sm:%s218]
                %250 = vst [vmem:[%s226 + $0x160] sm:%s218] %v249
                %v251 = vld [vmem:[%s225 + $0x2a0] sm:%s218]
                %252 = vst [vmem:[%s226 + $0x180] sm:%s218] %v251
                %v253 = vld [vmem:[%s225 + $0x2d8] sm:%s218]
                %254 = vst [vmem:[%s226 + $0x1a0] sm:%s218] %v253
                %v255 = vld [vmem:[%s225 + $0x310] sm:%s218]
                %256 = vst [vmem:[%s226 + $0x1c0] sm:%s218] %v255
                %v257 = vld [vmem:[%s225 + $0x348] sm:%s218]
                %258 = vst [vmem:[%s226 + $0x1e0] sm:%s218] %v257
              $region45: #{fused_bn_add_relu_conv_bn.4} parent=39 // loop_footer
                %s224 = sadd.s32 1, %s220
              $region46: #{fused_bn_add_relu_conv_bn.4} parent=39 // loop_footer_branch
                %219 = sbr.rel target = $region42
              $region47: #{fused_bn_add_relu_conv_bn.4} parent=39 // loop_exit
                _
            $region40: #{fused_bn_add_relu_conv_bn.4} parent=31 // pred_fallthru
              _
          $region32: #{fused_bn_add_relu_conv_bn.4} parent=27 // pred_fallthru
            _
          %728 = vnop
        $region28: #{fused_bn_add_relu_conv_bn.4} parent=23 // pred_fallthru
          _
        // Predicated region
        $region91: #{fused_bn_add_relu_conv_bn.4} parent=23 // pred_check
          %p729 = pneg %p74
        $region92: #{fused_bn_add_relu_conv_bn.4} parent=23 // pred_check_branch
          %731 = sbr.rel (%p729) target = $region94
        $region93: #{fused_bn_add_relu_conv_bn.4} parent=23 // pred_region
          %s732 = sand.u32 %s64, 1
          %s733 = sand.u32 %s64, 1
          %s734 = smul.addr %s733, 512
          %s735 = scalar_lea.vmem [#allocation3], %s734
          %s736 = smul.u32 4, %s20
          %s737 = ssub.s32 7, %s736
          %p738 = scmp.lt.s32.totalorder %s737, 4
          %s739 = scalar_select %p738, %s737, 4
          %s740 = smul.u32 2048, %s739
          %p741 = scmp.ne.s32.totalorder 0, %s740
          %s742 = smul.addr %s19, 112
          %s743 = sadd.s32 %s736, %s742
          %s744 = smul.addr %s743, 8
          %s745 = scalar_lea.vmem %s1, %s744
          %s746 = smul.u32 %s739, 8
          // Predicated region
          $region95: #{fused_bn_add_relu_conv_bn.4} parent=93 // pred_check
            %p747 = pneg %p741
          $region96: #{fused_bn_add_relu_conv_bn.4} parent=93 // pred_check_branch
            %749 = sbr.rel (%p747) target = $region98
          $region97: #{fused_bn_add_relu_conv_bn.4} parent=93 // pred_region
            %p750 = scmp.lt.u32.totalorder %s746, 8
            %p751 = pneg %p750
            // Predicated region
            $region99: #{fused_bn_add_relu_conv_bn.4} parent=97 // pred_check
              _
            $region100: #{fused_bn_add_relu_conv_bn.4} parent=97 // pred_check_branch
              %753 = sbr.rel (%p750) target = $region102
            $region101: #{fused_bn_add_relu_conv_bn.4} parent=97 // pred_region
              %s799 = sand.u32 %s746, 7
              %p800 = scmp.eq.s32.totalorder %s799, 0
              // Predicated region
              $region114: #{fused_bn_add_relu_conv_bn.4} parent=101 // pred_check
                %p801 = pneg %p800
              $region115: #{fused_bn_add_relu_conv_bn.4} parent=101 // pred_check_branch
                %803 = sbr.rel (%p801) target = $region117
              $region116: #{fused_bn_add_relu_conv_bn.4} parent=101 // pred_region
                %s804 = sshrl.u32 %s746, 3
                %s805 = sshrl.u32 %s804, 2
                // While loop
                $region118: #{fused_bn_add_relu_conv_bn.4} parent=116 // loop_pre_header
                  _
                $region119: #{fused_bn_add_relu_conv_bn.4} parent=116 // loop_header
                  %s809 = sphi 0, %s811
                  %p810 = scmp.ge.s32.totalorder %s809, %s805
                  %s814 = sphi 0, %s947
                  %s815 = sphi %s745, %s950
                  %s816 = sphi %s735, %s951
                $region120: #{fused_bn_add_relu_conv_bn.4} parent=116 // loop_header_branch
                  %813 = sbr.rel (%p810) target = $region124
                $region121: #{fused_bn_add_relu_conv_bn.4} parent=116 // loop_body
                  %v817 = vld [vmem:[%s815] sm:$0xff]
                  %818 = vst [vmem:[%s816] sm:$0xff] %v817
                  %v819 = vld [vmem:[%s815 + $0x8] sm:$0xff]
                  %820 = vst [vmem:[%s816 + $0x8] sm:$0xff] %v819
                  %v821 = vld [vmem:[%s815 + $0x10] sm:$0xff]
                  %822 = vst [vmem:[%s816 + $0x10] sm:$0xff] %v821
                  %v823 = vld [vmem:[%s815 + $0x18] sm:$0xff]
                  %824 = vst [vmem:[%s816 + $0x18] sm:$0xff] %v823
                  %v825 = vld [vmem:[%s815 + $0x38] sm:$0xff]
                  %826 = vst [vmem:[%s816 + $0x20] sm:$0xff] %v825
                  %v827 = vld [vmem:[%s815 + $0x40] sm:$0xff]
                  %828 = vst [vmem:[%s816 + $0x28] sm:$0xff] %v827
                  %v829 = vld [vmem:[%s815 + $0x48] sm:$0xff]
                  %830 = vst [vmem:[%s816 + $0x30] sm:$0xff] %v829
                  %v831 = vld [vmem:[%s815 + $0x50] sm:$0xff]
                  %832 = vst [vmem:[%s816 + $0x38] sm:$0xff] %v831
                  %v833 = vld [vmem:[%s815 + $0x70] sm:$0xff]
                  %834 = vst [vmem:[%s816 + $0x40] sm:$0xff] %v833
                  %v835 = vld [vmem:[%s815 + $0x78] sm:$0xff]
                  %836 = vst [vmem:[%s816 + $0x48] sm:$0xff] %v835
                  %v837 = vld [vmem:[%s815 + $0x80] sm:$0xff]
                  %838 = vst [vmem:[%s816 + $0x50] sm:$0xff] %v837
                  %v839 = vld [vmem:[%s815 + $0x88] sm:$0xff]
                  %840 = vst [vmem:[%s816 + $0x58] sm:$0xff] %v839
                  %v841 = vld [vmem:[%s815 + $0xa8] sm:$0xff]
                  %842 = vst [vmem:[%s816 + $0x60] sm:$0xff] %v841
                  %v843 = vld [vmem:[%s815 + $0xb0] sm:$0xff]
                  %844 = vst [vmem:[%s816 + $0x68] sm:$0xff] %v843
                  %v845 = vld [vmem:[%s815 + $0xb8] sm:$0xff]
                  %846 = vst [vmem:[%s816 + $0x70] sm:$0xff] %v845
                  %v847 = vld [vmem:[%s815 + $0xc0] sm:$0xff]
                  %848 = vst [vmem:[%s816 + $0x78] sm:$0xff] %v847
                  %v849 = vld [vmem:[%s815 + $0xe0] sm:$0xff]
                  %850 = vst [vmem:[%s816 + $0x80] sm:$0xff] %v849
                  %v851 = vld [vmem:[%s815 + $0xe8] sm:$0xff]
                  %852 = vst [vmem:[%s816 + $0x88] sm:$0xff] %v851
                  %v853 = vld [vmem:[%s815 + $0xf0] sm:$0xff]
                  %854 = vst [vmem:[%s816 + $0x90] sm:$0xff] %v853
                  %v855 = vld [vmem:[%s815 + $0xf8] sm:$0xff]
                  %856 = vst [vmem:[%s816 + $0x98] sm:$0xff] %v855
                  %v857 = vld [vmem:[%s815 + $0x118] sm:$0xff]
                  %858 = vst [vmem:[%s816 + $0xa0] sm:$0xff] %v857
                  %v859 = vld [vmem:[%s815 + $0x120] sm:$0xff]
                  %860 = vst [vmem:[%s816 + $0xa8] sm:$0xff] %v859
                  %v861 = vld [vmem:[%s815 + $0x128] sm:$0xff]
                  %862 = vst [vmem:[%s816 + $0xb0] sm:$0xff] %v861
                  %v863 = vld [vmem:[%s815 + $0x130] sm:$0xff]
                  %864 = vst [vmem:[%s816 + $0xb8] sm:$0xff] %v863
                  %v865 = vld [vmem:[%s815 + $0x150] sm:$0xff]
                  %866 = vst [vmem:[%s816 + $0xc0] sm:$0xff] %v865
                  %v867 = vld [vmem:[%s815 + $0x158] sm:$0xff]
                  %868 = vst [vmem:[%s816 + $0xc8] sm:$0xff] %v867
                  %v869 = vld [vmem:[%s815 + $0x160] sm:$0xff]
                  %870 = vst [vmem:[%s816 + $0xd0] sm:$0xff] %v869
                  %v871 = vld [vmem:[%s815 + $0x168] sm:$0xff]
                  %872 = vst [vmem:[%s816 + $0xd8] sm:$0xff] %v871
                  %v873 = vld [vmem:[%s815 + $0x188] sm:$0xff]
                  %874 = vst [vmem:[%s816 + $0xe0] sm:$0xff] %v873
                  %v875 = vld [vmem:[%s815 + $0x190] sm:$0xff]
                  %876 = vst [vmem:[%s816 + $0xe8] sm:$0xff] %v875
                  %v877 = vld [vmem:[%s815 + $0x198] sm:$0xff]
                  %878 = vst [vmem:[%s816 + $0xf0] sm:$0xff] %v877
                  %v879 = vld [vmem:[%s815 + $0x1a0] sm:$0xff]
                  %880 = vst [vmem:[%s816 + $0xf8] sm:$0xff] %v879
                  %v881 = vld [vmem:[%s815 + $0x1c0] sm:$0xff]
                  %882 = vst [vmem:[%s816 + $0x100] sm:$0xff] %v881
                  %v883 = vld [vmem:[%s815 + $0x1c8] sm:$0xff]
                  %884 = vst [vmem:[%s816 + $0x108] sm:$0xff] %v883
                  %v885 = vld [vmem:[%s815 + $0x1d0] sm:$0xff]
                  %886 = vst [vmem:[%s816 + $0x110] sm:$0xff] %v885
                  %v887 = vld [vmem:[%s815 + $0x1d8] sm:$0xff]
                  %888 = vst [vmem:[%s816 + $0x118] sm:$0xff] %v887
                  %v889 = vld [vmem:[%s815 + $0x1f8] sm:$0xff]
                  %890 = vst [vmem:[%s816 + $0x120] sm:$0xff] %v889
                  %v891 = vld [vmem:[%s815 + $0x200] sm:$0xff]
                  %892 = vst [vmem:[%s816 + $0x128] sm:$0xff] %v891
                  %v893 = vld [vmem:[%s815 + $0x208] sm:$0xff]
                  %894 = vst [vmem:[%s816 + $0x130] sm:$0xff] %v893
                  %v895 = vld [vmem:[%s815 + $0x210] sm:$0xff]
                  %896 = vst [vmem:[%s816 + $0x138] sm:$0xff] %v895
                  %v897 = vld [vmem:[%s815 + $0x230] sm:$0xff]
                  %898 = vst [vmem:[%s816 + $0x140] sm:$0xff] %v897
                  %v899 = vld [vmem:[%s815 + $0x238] sm:$0xff]
                  %900 = vst [vmem:[%s816 + $0x148] sm:$0xff] %v899
                  %v901 = vld [vmem:[%s815 + $0x240] sm:$0xff]
                  %902 = vst [vmem:[%s816 + $0x150] sm:$0xff] %v901
                  %v903 = vld [vmem:[%s815 + $0x248] sm:$0xff]
                  %904 = vst [vmem:[%s816 + $0x158] sm:$0xff] %v903
                  %v905 = vld [vmem:[%s815 + $0x268] sm:$0xff]
                  %906 = vst [vmem:[%s816 + $0x160] sm:$0xff] %v905
                  %v907 = vld [vmem:[%s815 + $0x270] sm:$0xff]
                  %908 = vst [vmem:[%s816 + $0x168] sm:$0xff] %v907
                  %v909 = vld [vmem:[%s815 + $0x278] sm:$0xff]
                  %910 = vst [vmem:[%s816 + $0x170] sm:$0xff] %v909
                  %v911 = vld [vmem:[%s815 + $0x280] sm:$0xff]
                  %912 = vst [vmem:[%s816 + $0x178] sm:$0xff] %v911
                  %v913 = vld [vmem:[%s815 + $0x2a0] sm:$0xff]
                  %914 = vst [vmem:[%s816 + $0x180] sm:$0xff] %v913
                  %v915 = vld [vmem:[%s815 + $0x2a8] sm:$0xff]
                  %916 = vst [vmem:[%s816 + $0x188] sm:$0xff] %v915
                  %v917 = vld [vmem:[%s815 + $0x2b0] sm:$0xff]
                  %918 = vst [vmem:[%s816 + $0x190] sm:$0xff] %v917
                  %v919 = vld [vmem:[%s815 + $0x2b8] sm:$0xff]
                  %920 = vst [vmem:[%s816 + $0x198] sm:$0xff] %v919
                  %v921 = vld [vmem:[%s815 + $0x2d8] sm:$0xff]
                  %922 = vst [vmem:[%s816 + $0x1a0] sm:$0xff] %v921
                  %v923 = vld [vmem:[%s815 + $0x2e0] sm:$0xff]
                  %924 = vst [vmem:[%s816 + $0x1a8] sm:$0xff] %v923
                  %v925 = vld [vmem:[%s815 + $0x2e8] sm:$0xff]
                  %926 = vst [vmem:[%s816 + $0x1b0] sm:$0xff] %v925
                  %v927 = vld [vmem:[%s815 + $0x2f0] sm:$0xff]
                  %928 = vst [vmem:[%s816 + $0x1b8] sm:$0xff] %v927
                  %v929 = vld [vmem:[%s815 + $0x310] sm:$0xff]
                  %930 = vst [vmem:[%s816 + $0x1c0] sm:$0xff] %v929
                  %v931 = vld [vmem:[%s815 + $0x318] sm:$0xff]
                  %932 = vst [vmem:[%s816 + $0x1c8] sm:$0xff] %v931
                  %v933 = vld [vmem:[%s815 + $0x320] sm:$0xff]
                  %934 = vst [vmem:[%s816 + $0x1d0] sm:$0xff] %v933
                  %v935 = vld [vmem:[%s815 + $0x328] sm:$0xff]
                  %936 = vst [vmem:[%s816 + $0x1d8] sm:$0xff] %v935
                  %v937 = vld [vmem:[%s815 + $0x348] sm:$0xff]
                  %938 = vst [vmem:[%s816 + $0x1e0] sm:$0xff] %v937
                  %v939 = vld [vmem:[%s815 + $0x350] sm:$0xff]
                  %940 = vst [vmem:[%s816 + $0x1e8] sm:$0xff] %v939
                  %v941 = vld [vmem:[%s815 + $0x358] sm:$0xff]
                  %942 = vst [vmem:[%s816 + $0x1f0] sm:$0xff] %v941
                  %v943 = vld [vmem:[%s815 + $0x360] sm:$0xff]
                  %944 = vst [vmem:[%s816 + $0x1f8] sm:$0xff] %v943
                  %s945 = sadd.s32 1, %s814
                  %p946 = scmp.ge.s32.totalorder %s945, %s805
                  %s947 = scalar_select %p946, 0, %s945
                  %s948 = smul.u32 %s947, 32
                  %s949 = smul.u32 %s947, 32
                  %s950 = scalar_lea.vmem %s745, %s948
                  %s951 = scalar_lea.vmem %s735, %s949 [#allocation3]
                $region122: #{fused_bn_add_relu_conv_bn.4} parent=116 // loop_footer
                  %s811 = sadd.s32 %s809, 1
                $region123: #{fused_bn_add_relu_conv_bn.4} parent=116 // loop_footer_branch
                  %808 = sbr.rel target = $region119
                $region124: #{fused_bn_add_relu_conv_bn.4} parent=116 // loop_exit
                  _
                %s952 = sshrl.u32 %s804, 2
                %s953 = sand.u32 %s804, 3
                %s954 = smul.u32 %s952, 4
                %s955 = smul.u32 128, %s954
                %s956 = sshra.s32 %s955, 4
                %s957 = scalar_lea.vmem %s745, %s956
                %s958 = smul.u32 128, %s954
                %s959 = sshra.s32 %s958, 4
                %s960 = scalar_lea.vmem %s735, %s959 [#allocation3]
                // While loop
                $region125: #{fused_bn_add_relu_conv_bn.4} parent=116 // loop_pre_header
                  _
                $region126: #{fused_bn_add_relu_conv_bn.4} parent=116 // loop_header
                  %s964 = sphi 0, %s966
                  %p965 = scmp.ge.s32.totalorder %s964, %s953
                  %s969 = sphi 0, %s1006
                  %s970 = sphi %s957, %s1009
                  %s971 = sphi %s960, %s1010
                $region127: #{fused_bn_add_relu_conv_bn.4} parent=116 // loop_header_branch
                  %968 = sbr.rel (%p965) target = $region131
                $region128: #{fused_bn_add_relu_conv_bn.4} parent=116 // loop_body
                  %v972 = vld [vmem:[%s970] sm:$0xff]
                  %973 = vst [vmem:[%s971] sm:$0xff] %v972
                  %v974 = vld [vmem:[%s970 + $0x38] sm:$0xff]
                  %975 = vst [vmem:[%s971 + $0x20] sm:$0xff] %v974
                  %v976 = vld [vmem:[%s970 + $0x70] sm:$0xff]
                  %977 = vst [vmem:[%s971 + $0x40] sm:$0xff] %v976
                  %v978 = vld [vmem:[%s970 + $0xa8] sm:$0xff]
                  %979 = vst [vmem:[%s971 + $0x60] sm:$0xff] %v978
                  %v980 = vld [vmem:[%s970 + $0xe0] sm:$0xff]
                  %981 = vst [vmem:[%s971 + $0x80] sm:$0xff] %v980
                  %v982 = vld [vmem:[%s970 + $0x118] sm:$0xff]
                  %983 = vst [vmem:[%s971 + $0xa0] sm:$0xff] %v982
                  %v984 = vld [vmem:[%s970 + $0x150] sm:$0xff]
                  %985 = vst [vmem:[%s971 + $0xc0] sm:$0xff] %v984
                  %v986 = vld [vmem:[%s970 + $0x188] sm:$0xff]
                  %987 = vst [vmem:[%s971 + $0xe0] sm:$0xff] %v986
                  %v988 = vld [vmem:[%s970 + $0x1c0] sm:$0xff]
                  %989 = vst [vmem:[%s971 + $0x100] sm:$0xff] %v988
                  %v990 = vld [vmem:[%s970 + $0x1f8] sm:$0xff]
                  %991 = vst [vmem:[%s971 + $0x120] sm:$0xff] %v990
                  %v992 = vld [vmem:[%s970 + $0x230] sm:$0xff]
                  %993 = vst [vmem:[%s971 + $0x140] sm:$0xff] %v992
                  %v994 = vld [vmem:[%s970 + $0x268] sm:$0xff]
                  %995 = vst [vmem:[%s971 + $0x160] sm:$0xff] %v994
                  %v996 = vld [vmem:[%s970 + $0x2a0] sm:$0xff]
                  %997 = vst [vmem:[%s971 + $0x180] sm:$0xff] %v996
                  %v998 = vld [vmem:[%s970 + $0x2d8] sm:$0xff]
                  %999 = vst [vmem:[%s971 + $0x1a0] sm:$0xff] %v998
                  %v1000 = vld [vmem:[%s970 + $0x310] sm:$0xff]
                  %1001 = vst [vmem:[%s971 + $0x1c0] sm:$0xff] %v1000
                  %v1002 = vld [vmem:[%s970 + $0x348] sm:$0xff]
                  %1003 = vst [vmem:[%s971 + $0x1e0] sm:$0xff] %v1002
                  %s1004 = sadd.s32 1, %s969
                  %p1005 = scmp.ge.s32.totalorder %s1004, %s953
                  %s1006 = scalar_select %p1005, 0, %s1004
                  %s1007 = smul.u32 %s1006, 8
                  %s1008 = smul.u32 %s1006, 8
                  %s1009 = scalar_lea.vmem %s957, %s1007
                  %s1010 = scalar_lea.vmem %s960, %s1008 [#allocation3]
                $region129: #{fused_bn_add_relu_conv_bn.4} parent=116 // loop_footer
                  %s966 = sadd.s32 %s964, 1
                $region130: #{fused_bn_add_relu_conv_bn.4} parent=116 // loop_footer_branch
                  %963 = sbr.rel target = $region126
                $region131: #{fused_bn_add_relu_conv_bn.4} parent=116 // loop_exit
                  _
              $region117: #{fused_bn_add_relu_conv_bn.4} parent=101 // pred_fallthru
                _
              %p1011 = pneg %p800
              // Predicated region
              $region132: #{fused_bn_add_relu_conv_bn.4} parent=101 // pred_check
                _
              $region133: #{fused_bn_add_relu_conv_bn.4} parent=101 // pred_check_branch
                %1013 = sbr.rel (%p800) target = $region135
              $region134: #{fused_bn_add_relu_conv_bn.4} parent=101 // pred_region
                %s1014 = sand.u32 %s746, 7
                %s1015 = ssub.s32 %s746, %s1014
                %s1016 = scalar_lea.vmem %s745, %s1015
                %s1017 = ssub.s32 %s746, %s1014
                %s1018 = scalar_lea.vmem %s735, %s1017 [#allocation3]
                %s1019 = sshrl.u32 %s746, 3
                %s1020 = sshrl.u32 %s1019, 2
                // While loop
                $region136: #{fused_bn_add_relu_conv_bn.4} parent=134 // loop_pre_header
                  _
                $region137: #{fused_bn_add_relu_conv_bn.4} parent=134 // loop_header
                  %s1024 = sphi 0, %s1026
                  %p1025 = scmp.ge.s32.totalorder %s1024, %s1020
                  %s1029 = sphi 0, %s1162
                  %s1030 = sphi %s745, %s1165
                  %s1031 = sphi %s735, %s1166
                $region138: #{fused_bn_add_relu_conv_bn.4} parent=134 // loop_header_branch
                  %1028 = sbr.rel (%p1025) target = $region142
                $region139: #{fused_bn_add_relu_conv_bn.4} parent=134 // loop_body
                  %v1032 = vld [vmem:[%s1030] sm:$0xff]
                  %1033 = vst [vmem:[%s1031] sm:$0xff] %v1032
                  %v1034 = vld [vmem:[%s1030 + $0x8] sm:$0xff]
                  %1035 = vst [vmem:[%s1031 + $0x8] sm:$0xff] %v1034
                  %v1036 = vld [vmem:[%s1030 + $0x10] sm:$0xff]
                  %1037 = vst [vmem:[%s1031 + $0x10] sm:$0xff] %v1036
                  %v1038 = vld [vmem:[%s1030 + $0x18] sm:$0xff]
                  %1039 = vst [vmem:[%s1031 + $0x18] sm:$0xff] %v1038
                  %v1040 = vld [vmem:[%s1030 + $0x38] sm:$0xff]
                  %1041 = vst [vmem:[%s1031 + $0x20] sm:$0xff] %v1040
                  %v1042 = vld [vmem:[%s1030 + $0x40] sm:$0xff]
                  %1043 = vst [vmem:[%s1031 + $0x28] sm:$0xff] %v1042
                  %v1044 = vld [vmem:[%s1030 + $0x48] sm:$0xff]
                  %1045 = vst [vmem:[%s1031 + $0x30] sm:$0xff] %v1044
                  %v1046 = vld [vmem:[%s1030 + $0x50] sm:$0xff]
                  %1047 = vst [vmem:[%s1031 + $0x38] sm:$0xff] %v1046
                  %v1048 = vld [vmem:[%s1030 + $0x70] sm:$0xff]
                  %1049 = vst [vmem:[%s1031 + $0x40] sm:$0xff] %v1048
                  %v1050 = vld [vmem:[%s1030 + $0x78] sm:$0xff]
                  %1051 = vst [vmem:[%s1031 + $0x48] sm:$0xff] %v1050
                  %v1052 = vld [vmem:[%s1030 + $0x80] sm:$0xff]
                  %1053 = vst [vmem:[%s1031 + $0x50] sm:$0xff] %v1052
                  %v1054 = vld [vmem:[%s1030 + $0x88] sm:$0xff]
                  %1055 = vst [vmem:[%s1031 + $0x58] sm:$0xff] %v1054
                  %v1056 = vld [vmem:[%s1030 + $0xa8] sm:$0xff]
                  %1057 = vst [vmem:[%s1031 + $0x60] sm:$0xff] %v1056
                  %v1058 = vld [vmem:[%s1030 + $0xb0] sm:$0xff]
                  %1059 = vst [vmem:[%s1031 + $0x68] sm:$0xff] %v1058
                  %v1060 = vld [vmem:[%s1030 + $0xb8] sm:$0xff]
                  %1061 = vst [vmem:[%s1031 + $0x70] sm:$0xff] %v1060
                  %v1062 = vld [vmem:[%s1030 + $0xc0] sm:$0xff]
                  %1063 = vst [vmem:[%s1031 + $0x78] sm:$0xff] %v1062
                  %v1064 = vld [vmem:[%s1030 + $0xe0] sm:$0xff]
                  %1065 = vst [vmem:[%s1031 + $0x80] sm:$0xff] %v1064
                  %v1066 = vld [vmem:[%s1030 + $0xe8] sm:$0xff]
                  %1067 = vst [vmem:[%s1031 + $0x88] sm:$0xff] %v1066
                  %v1068 = vld [vmem:[%s1030 + $0xf0] sm:$0xff]
                  %1069 = vst [vmem:[%s1031 + $0x90] sm:$0xff] %v1068
                  %v1070 = vld [vmem:[%s1030 + $0xf8] sm:$0xff]
                  %1071 = vst [vmem:[%s1031 + $0x98] sm:$0xff] %v1070
                  %v1072 = vld [vmem:[%s1030 + $0x118] sm:$0xff]
                  %1073 = vst [vmem:[%s1031 + $0xa0] sm:$0xff] %v1072
                  %v1074 = vld [vmem:[%s1030 + $0x120] sm:$0xff]
                  %1075 = vst [vmem:[%s1031 + $0xa8] sm:$0xff] %v1074
                  %v1076 = vld [vmem:[%s1030 + $0x128] sm:$0xff]
                  %1077 = vst [vmem:[%s1031 + $0xb0] sm:$0xff] %v1076
                  %v1078 = vld [vmem:[%s1030 + $0x130] sm:$0xff]
                  %1079 = vst [vmem:[%s1031 + $0xb8] sm:$0xff] %v1078
                  %v1080 = vld [vmem:[%s1030 + $0x150] sm:$0xff]
                  %1081 = vst [vmem:[%s1031 + $0xc0] sm:$0xff] %v1080
                  %v1082 = vld [vmem:[%s1030 + $0x158] sm:$0xff]
                  %1083 = vst [vmem:[%s1031 + $0xc8] sm:$0xff] %v1082
                  %v1084 = vld [vmem:[%s1030 + $0x160] sm:$0xff]
                  %1085 = vst [vmem:[%s1031 + $0xd0] sm:$0xff] %v1084
                  %v1086 = vld [vmem:[%s1030 + $0x168] sm:$0xff]
                  %1087 = vst [vmem:[%s1031 + $0xd8] sm:$0xff] %v1086
                  %v1088 = vld [vmem:[%s1030 + $0x188] sm:$0xff]
                  %1089 = vst [vmem:[%s1031 + $0xe0] sm:$0xff] %v1088
                  %v1090 = vld [vmem:[%s1030 + $0x190] sm:$0xff]
                  %1091 = vst [vmem:[%s1031 + $0xe8] sm:$0xff] %v1090
                  %v1092 = vld [vmem:[%s1030 + $0x198] sm:$0xff]
                  %1093 = vst [vmem:[%s1031 + $0xf0] sm:$0xff] %v1092
                  %v1094 = vld [vmem:[%s1030 + $0x1a0] sm:$0xff]
                  %1095 = vst [vmem:[%s1031 + $0xf8] sm:$0xff] %v1094
                  %v1096 = vld [vmem:[%s1030 + $0x1c0] sm:$0xff]
                  %1097 = vst [vmem:[%s1031 + $0x100] sm:$0xff] %v1096
                  %v1098 = vld [vmem:[%s1030 + $0x1c8] sm:$0xff]
                  %1099 = vst [vmem:[%s1031 + $0x108] sm:$0xff] %v1098
                  %v1100 = vld [vmem:[%s1030 + $0x1d0] sm:$0xff]
                  %1101 = vst [vmem:[%s1031 + $0x110] sm:$0xff] %v1100
                  %v1102 = vld [vmem:[%s1030 + $0x1d8] sm:$0xff]
                  %1103 = vst [vmem:[%s1031 + $0x118] sm:$0xff] %v1102
                  %v1104 = vld [vmem:[%s1030 + $0x1f8] sm:$0xff]
                  %1105 = vst [vmem:[%s1031 + $0x120] sm:$0xff] %v1104
                  %v1106 = vld [vmem:[%s1030 + $0x200] sm:$0xff]
                  %1107 = vst [vmem:[%s1031 + $0x128] sm:$0xff] %v1106
                  %v1108 = vld [vmem:[%s1030 + $0x208] sm:$0xff]
                  %1109 = vst [vmem:[%s1031 + $0x130] sm:$0xff] %v1108
                  %v1110 = vld [vmem:[%s1030 + $0x210] sm:$0xff]
                  %1111 = vst [vmem:[%s1031 + $0x138] sm:$0xff] %v1110
                  %v1112 = vld [vmem:[%s1030 + $0x230] sm:$0xff]
                  %1113 = vst [vmem:[%s1031 + $0x140] sm:$0xff] %v1112
                  %v1114 = vld [vmem:[%s1030 + $0x238] sm:$0xff]
                  %1115 = vst [vmem:[%s1031 + $0x148] sm:$0xff] %v1114
                  %v1116 = vld [vmem:[%s1030 + $0x240] sm:$0xff]
                  %1117 = vst [vmem:[%s1031 + $0x150] sm:$0xff] %v1116
                  %v1118 = vld [vmem:[%s1030 + $0x248] sm:$0xff]
                  %1119 = vst [vmem:[%s1031 + $0x158] sm:$0xff] %v1118
                  %v1120 = vld [vmem:[%s1030 + $0x268] sm:$0xff]
                  %1121 = vst [vmem:[%s1031 + $0x160] sm:$0xff] %v1120
                  %v1122 = vld [vmem:[%s1030 + $0x270] sm:$0xff]
                  %1123 = vst [vmem:[%s1031 + $0x168] sm:$0xff] %v1122
                  %v1124 = vld [vmem:[%s1030 + $0x278] sm:$0xff]
                  %1125 = vst [vmem:[%s1031 + $0x170] sm:$0xff] %v1124
                  %v1126 = vld [vmem:[%s1030 + $0x280] sm:$0xff]
                  %1127 = vst [vmem:[%s1031 + $0x178] sm:$0xff] %v1126
                  %v1128 = vld [vmem:[%s1030 + $0x2a0] sm:$0xff]
                  %1129 = vst [vmem:[%s1031 + $0x180] sm:$0xff] %v1128
                  %v1130 = vld [vmem:[%s1030 + $0x2a8] sm:$0xff]
                  %1131 = vst [vmem:[%s1031 + $0x188] sm:$0xff] %v1130
                  %v1132 = vld [vmem:[%s1030 + $0x2b0] sm:$0xff]
                  %1133 = vst [vmem:[%s1031 + $0x190] sm:$0xff] %v1132
                  %v1134 = vld [vmem:[%s1030 + $0x2b8] sm:$0xff]
                  %1135 = vst [vmem:[%s1031 + $0x198] sm:$0xff] %v1134
                  %v1136 = vld [vmem:[%s1030 + $0x2d8] sm:$0xff]
                  %1137 = vst [vmem:[%s1031 + $0x1a0] sm:$0xff] %v1136
                  %v1138 = vld [vmem:[%s1030 + $0x2e0] sm:$0xff]
                  %1139 = vst [vmem:[%s1031 + $0x1a8] sm:$0xff] %v1138
                  %v1140 = vld [vmem:[%s1030 + $0x2e8] sm:$0xff]
                  %1141 = vst [vmem:[%s1031 + $0x1b0] sm:$0xff] %v1140
                  %v1142 = vld [vmem:[%s1030 + $0x2f0] sm:$0xff]
                  %1143 = vst [vmem:[%s1031 + $0x1b8] sm:$0xff] %v1142
                  %v1144 = vld [vmem:[%s1030 + $0x310] sm:$0xff]
                  %1145 = vst [vmem:[%s1031 + $0x1c0] sm:$0xff] %v1144
                  %v1146 = vld [vmem:[%s1030 + $0x318] sm:$0xff]
                  %1147 = vst [vmem:[%s1031 + $0x1c8] sm:$0xff] %v1146
                  %v1148 = vld [vmem:[%s1030 + $0x320] sm:$0xff]
                  %1149 = vst [vmem:[%s1031 + $0x1d0] sm:$0xff] %v1148
                  %v1150 = vld [vmem:[%s1030 + $0x328] sm:$0xff]
                  %1151 = vst [vmem:[%s1031 + $0x1d8] sm:$0xff] %v1150
                  %v1152 = vld [vmem:[%s1030 + $0x348] sm:$0xff]
                  %1153 = vst [vmem:[%s1031 + $0x1e0] sm:$0xff] %v1152
                  %v1154 = vld [vmem:[%s1030 + $0x350] sm:$0xff]
                  %1155 = vst [vmem:[%s1031 + $0x1e8] sm:$0xff] %v1154
                  %v1156 = vld [vmem:[%s1030 + $0x358] sm:$0xff]
                  %1157 = vst [vmem:[%s1031 + $0x1f0] sm:$0xff] %v1156
                  %v1158 = vld [vmem:[%s1030 + $0x360] sm:$0xff]
                  %1159 = vst [vmem:[%s1031 + $0x1f8] sm:$0xff] %v1158
                  %s1160 = sadd.s32 1, %s1029
                  %p1161 = scmp.ge.s32.totalorder %s1160, %s1020
                  %s1162 = scalar_select %p1161, 0, %s1160
                  %s1163 = smul.u32 %s1162, 32
                  %s1164 = smul.u32 %s1162, 32
                  %s1165 = scalar_lea.vmem %s745, %s1163
                  %s1166 = scalar_lea.vmem %s735, %s1164 [#allocation3]
                $region140: #{fused_bn_add_relu_conv_bn.4} parent=134 // loop_footer
                  %s1026 = sadd.s32 %s1024, 1
                $region141: #{fused_bn_add_relu_conv_bn.4} parent=134 // loop_footer_branch
                  %1023 = sbr.rel target = $region137
                $region142: #{fused_bn_add_relu_conv_bn.4} parent=134 // loop_exit
                  _
                %s1167 = sshrl.u32 %s1019, 2
                %s1168 = sand.u32 %s1019, 3
                %s1169 = smul.u32 %s1167, 4
                %s1170 = smul.u32 128, %s1169
                %s1171 = sshra.s32 %s1170, 4
                %s1172 = scalar_lea.vmem %s745, %s1171
                %s1173 = smul.u32 128, %s1169
                %s1174 = sshra.s32 %s1173, 4
                %s1175 = scalar_lea.vmem %s735, %s1174 [#allocation3]
                // While loop
                $region143: #{fused_bn_add_relu_conv_bn.4} parent=134 // loop_pre_header
                  _
                $region144: #{fused_bn_add_relu_conv_bn.4} parent=134 // loop_header
                  %s1179 = sphi 0, %s1181
                  %p1180 = scmp.ge.s32.totalorder %s1179, %s1168
                  %s1184 = sphi 0, %s1221
                  %s1185 = sphi %s1172, %s1224
                  %s1186 = sphi %s1175, %s1225
                $region145: #{fused_bn_add_relu_conv_bn.4} parent=134 // loop_header_branch
                  %1183 = sbr.rel (%p1180) target = $region149
                $region146: #{fused_bn_add_relu_conv_bn.4} parent=134 // loop_body
                  %v1187 = vld [vmem:[%s1185] sm:$0xff]
                  %1188 = vst [vmem:[%s1186] sm:$0xff] %v1187
                  %v1189 = vld [vmem:[%s1185 + $0x38] sm:$0xff]
                  %1190 = vst [vmem:[%s1186 + $0x20] sm:$0xff] %v1189
                  %v1191 = vld [vmem:[%s1185 + $0x70] sm:$0xff]
                  %1192 = vst [vmem:[%s1186 + $0x40] sm:$0xff] %v1191
                  %v1193 = vld [vmem:[%s1185 + $0xa8] sm:$0xff]
                  %1194 = vst [vmem:[%s1186 + $0x60] sm:$0xff] %v1193
                  %v1195 = vld [vmem:[%s1185 + $0xe0] sm:$0xff]
                  %1196 = vst [vmem:[%s1186 + $0x80] sm:$0xff] %v1195
                  %v1197 = vld [vmem:[%s1185 + $0x118] sm:$0xff]
                  %1198 = vst [vmem:[%s1186 + $0xa0] sm:$0xff] %v1197
                  %v1199 = vld [vmem:[%s1185 + $0x150] sm:$0xff]
                  %1200 = vst [vmem:[%s1186 + $0xc0] sm:$0xff] %v1199
                  %v1201 = vld [vmem:[%s1185 + $0x188] sm:$0xff]
                  %1202 = vst [vmem:[%s1186 + $0xe0] sm:$0xff] %v1201
                  %v1203 = vld [vmem:[%s1185 + $0x1c0] sm:$0xff]
                  %1204 = vst [vmem:[%s1186 + $0x100] sm:$0xff] %v1203
                  %v1205 = vld [vmem:[%s1185 + $0x1f8] sm:$0xff]
                  %1206 = vst [vmem:[%s1186 + $0x120] sm:$0xff] %v1205
                  %v1207 = vld [vmem:[%s1185 + $0x230] sm:$0xff]
                  %1208 = vst [vmem:[%s1186 + $0x140] sm:$0xff] %v1207
                  %v1209 = vld [vmem:[%s1185 + $0x268] sm:$0xff]
                  %1210 = vst [vmem:[%s1186 + $0x160] sm:$0xff] %v1209
                  %v1211 = vld [vmem:[%s1185 + $0x2a0] sm:$0xff]
                  %1212 = vst [vmem:[%s1186 + $0x180] sm:$0xff] %v1211
                  %v1213 = vld [vmem:[%s1185 + $0x2d8] sm:$0xff]
                  %1214 = vst [vmem:[%s1186 + $0x1a0] sm:$0xff] %v1213
                  %v1215 = vld [vmem:[%s1185 + $0x310] sm:$0xff]
                  %1216 = vst [vmem:[%s1186 + $0x1c0] sm:$0xff] %v1215
                  %v1217 = vld [vmem:[%s1185 + $0x348] sm:$0xff]
                  %1218 = vst [vmem:[%s1186 + $0x1e0] sm:$0xff] %v1217
                  %s1219 = sadd.s32 1, %s1184
                  %p1220 = scmp.ge.s32.totalorder %s1219, %s1168
                  %s1221 = scalar_select %p1220, 0, %s1219
                  %s1222 = smul.u32 %s1221, 8
                  %s1223 = smul.u32 %s1221, 8
                  %s1224 = scalar_lea.vmem %s1172, %s1222
                  %s1225 = scalar_lea.vmem %s1175, %s1223 [#allocation3]
                $region147: #{fused_bn_add_relu_conv_bn.4} parent=134 // loop_footer
                  %s1181 = sadd.s32 %s1179, 1
                $region148: #{fused_bn_add_relu_conv_bn.4} parent=134 // loop_footer_branch
                  %1178 = sbr.rel target = $region144
                $region149: #{fused_bn_add_relu_conv_bn.4} parent=134 // loop_exit
                  _
                %s1226 = sshll.u32 1, %s1014
                %s1227 = ssub.s32 %s1226, 1
                loop: start=0, step=1, limit=1
                $region150: #{fused_bn_add_relu_conv_bn.4} parent=134 // loop_pre_header
                  _
                $region151: #{fused_bn_add_relu_conv_bn.4} parent=134 // loop_header
                  %s1229 = sphi 0, %s1233
                  %p1230 = scmp.ge.s32.totalorder %s1229, 1
                  %s1234 = sphi %s1016, %s1016
                  %s1235 = sphi %s1018, %s1018
                $region152: #{fused_bn_add_relu_conv_bn.4} parent=134 // loop_header_branch
                  %1232 = sbr.rel (%p1230) target = $region156
                $region153: #{fused_bn_add_relu_conv_bn.4} parent=134 // loop_body
                  %v1236 = vld [vmem:[%s1234] sm:%s1227]
                  %1237 = vst [vmem:[%s1235] sm:%s1227] %v1236
                  %v1238 = vld [vmem:[%s1234 + $0x38] sm:%s1227]
                  %1239 = vst [vmem:[%s1235 + $0x20] sm:%s1227] %v1238
                  %v1240 = vld [vmem:[%s1234 + $0x70] sm:%s1227]
                  %1241 = vst [vmem:[%s1235 + $0x40] sm:%s1227] %v1240
                  %v1242 = vld [vmem:[%s1234 + $0xa8] sm:%s1227]
                  %1243 = vst [vmem:[%s1235 + $0x60] sm:%s1227] %v1242
                  %v1244 = vld [vmem:[%s1234 + $0xe0] sm:%s1227]
                  %1245 = vst [vmem:[%s1235 + $0x80] sm:%s1227] %v1244
                  %v1246 = vld [vmem:[%s1234 + $0x118] sm:%s1227]
                  %1247 = vst [vmem:[%s1235 + $0xa0] sm:%s1227] %v1246
                  %v1248 = vld [vmem:[%s1234 + $0x150] sm:%s1227]
                  %1249 = vst [vmem:[%s1235 + $0xc0] sm:%s1227] %v1248
                  %v1250 = vld [vmem:[%s1234 + $0x188] sm:%s1227]
                  %1251 = vst [vmem:[%s1235 + $0xe0] sm:%s1227] %v1250
                  %v1252 = vld [vmem:[%s1234 + $0x1c0] sm:%s1227]
                  %1253 = vst [vmem:[%s1235 + $0x100] sm:%s1227] %v1252
                  %v1254 = vld [vmem:[%s1234 + $0x1f8] sm:%s1227]
                  %1255 = vst [vmem:[%s1235 + $0x120] sm:%s1227] %v1254
                  %v1256 = vld [vmem:[%s1234 + $0x230] sm:%s1227]
                  %1257 = vst [vmem:[%s1235 + $0x140] sm:%s1227] %v1256
                  %v1258 = vld [vmem:[%s1234 + $0x268] sm:%s1227]
                  %1259 = vst [vmem:[%s1235 + $0x160] sm:%s1227] %v1258
                  %v1260 = vld [vmem:[%s1234 + $0x2a0] sm:%s1227]
                  %1261 = vst [vmem:[%s1235 + $0x180] sm:%s1227] %v1260
                  %v1262 = vld [vmem:[%s1234 + $0x2d8] sm:%s1227]
                  %1263 = vst [vmem:[%s1235 + $0x1a0] sm:%s1227] %v1262
                  %v1264 = vld [vmem:[%s1234 + $0x310] sm:%s1227]
                  %1265 = vst [vmem:[%s1235 + $0x1c0] sm:%s1227] %v1264
                  %v1266 = vld [vmem:[%s1234 + $0x348] sm:%s1227]
                  %1267 = vst [vmem:[%s1235 + $0x1e0] sm:%s1227] %v1266
                $region154: #{fused_bn_add_relu_conv_bn.4} parent=134 // loop_footer
                  %s1233 = sadd.s32 1, %s1229
                $region155: #{fused_bn_add_relu_conv_bn.4} parent=134 // loop_footer_branch
                  %1228 = sbr.rel target = $region151
                $region156: #{fused_bn_add_relu_conv_bn.4} parent=134 // loop_exit
                  _
              $region135: #{fused_bn_add_relu_conv_bn.4} parent=101 // pred_fallthru
                _
            $region102: #{fused_bn_add_relu_conv_bn.4} parent=97 // pred_fallthru
              _
            // Predicated region
            $region103: #{fused_bn_add_relu_conv_bn.4} parent=97 // pred_check
              %p754 = pneg %p750
            $region104: #{fused_bn_add_relu_conv_bn.4} parent=97 // pred_check_branch
              %756 = sbr.rel (%p754) target = $region106
            $region105: #{fused_bn_add_relu_conv_bn.4} parent=97 // pred_region
              %s757 = sshll.u32 1, %s746
              %s758 = ssub.s32 %s757, 1
              loop: start=0, step=1, limit=1
              $region107: #{fused_bn_add_relu_conv_bn.4} parent=105 // loop_pre_header
                _
              $region108: #{fused_bn_add_relu_conv_bn.4} parent=105 // loop_header
                %s760 = sphi 0, %s764
                %p761 = scmp.ge.s32.totalorder %s760, 1
                %s765 = sphi %s745, %s745
                %s766 = sphi %s735, %s735
              $region109: #{fused_bn_add_relu_conv_bn.4} parent=105 // loop_header_branch
                %763 = sbr.rel (%p761) target = $region113
              $region110: #{fused_bn_add_relu_conv_bn.4} parent=105 // loop_body
                %v767 = vld [vmem:[%s765] sm:%s758]
                %768 = vst [vmem:[%s766] sm:%s758] %v767
                %v769 = vld [vmem:[%s765 + $0x38] sm:%s758]
                %770 = vst [vmem:[%s766 + $0x20] sm:%s758] %v769
                %v771 = vld [vmem:[%s765 + $0x70] sm:%s758]
                %772 = vst [vmem:[%s766 + $0x40] sm:%s758] %v771
                %v773 = vld [vmem:[%s765 + $0xa8] sm:%s758]
                %774 = vst [vmem:[%s766 + $0x60] sm:%s758] %v773
                %v775 = vld [vmem:[%s765 + $0xe0] sm:%s758]
                %776 = vst [vmem:[%s766 + $0x80] sm:%s758] %v775
                %v777 = vld [vmem:[%s765 + $0x118] sm:%s758]
                %778 = vst [vmem:[%s766 + $0xa0] sm:%s758] %v777
                %v779 = vld [vmem:[%s765 + $0x150] sm:%s758]
                %780 = vst [vmem:[%s766 + $0xc0] sm:%s758] %v779
                %v781 = vld [vmem:[%s765 + $0x188] sm:%s758]
                %782 = vst [vmem:[%s766 + $0xe0] sm:%s758] %v781
                %v783 = vld [vmem:[%s765 + $0x1c0] sm:%s758]
                %784 = vst [vmem:[%s766 + $0x100] sm:%s758] %v783
                %v785 = vld [vmem:[%s765 + $0x1f8] sm:%s758]
                %786 = vst [vmem:[%s766 + $0x120] sm:%s758] %v785
                %v787 = vld [vmem:[%s765 + $0x230] sm:%s758]
                %788 = vst [vmem:[%s766 + $0x140] sm:%s758] %v787
                %v789 = vld [vmem:[%s765 + $0x268] sm:%s758]
                %790 = vst [vmem:[%s766 + $0x160] sm:%s758] %v789
                %v791 = vld [vmem:[%s765 + $0x2a0] sm:%s758]
                %792 = vst [vmem:[%s766 + $0x180] sm:%s758] %v791
                %v793 = vld [vmem:[%s765 + $0x2d8] sm:%s758]
                %794 = vst [vmem:[%s766 + $0x1a0] sm:%s758] %v793
                %v795 = vld [vmem:[%s765 + $0x310] sm:%s758]
                %796 = vst [vmem:[%s766 + $0x1c0] sm:%s758] %v795
                %v797 = vld [vmem:[%s765 + $0x348] sm:%s758]
                %798 = vst [vmem:[%s766 + $0x1e0] sm:%s758] %v797
              $region111: #{fused_bn_add_relu_conv_bn.4} parent=105 // loop_footer
                %s764 = sadd.s32 1, %s760
              $region112: #{fused_bn_add_relu_conv_bn.4} parent=105 // loop_footer_branch
                %759 = sbr.rel target = $region108
              $region113: #{fused_bn_add_relu_conv_bn.4} parent=105 // loop_exit
                _
            $region106: #{fused_bn_add_relu_conv_bn.4} parent=97 // pred_fallthru
              _
          $region98: #{fused_bn_add_relu_conv_bn.4} parent=93 // pred_fallthru
            _
          %1268 = vnop
        $region94: #{fused_bn_add_relu_conv_bn.4} parent=23 // pred_fallthru
          _
      $region24: #{fused_bn_add_relu_conv_bn.4} parent=5 // pred_fallthru
        _
      %p1269 = scmp.le.s32.totalorder 1, %s12
      %p1270 = scmp.lt.s32.totalorder %s12, 3
      %p1271 = pnand %p1269, %p1270
      %p1272 = pneg %p1271
      // Predicated region
      $region157: #{fused_bn_add_relu_conv_bn.4} parent=5 // pred_check
        _
      $region158: #{fused_bn_add_relu_conv_bn.4} parent=5 // pred_check_branch
        %1274 = sbr.rel (%p1271) target = $region160
      $region159: #{fused_bn_add_relu_conv_bn.4} parent=5 // pred_region
        %s1275 = ssub.s32 %s12, 1
        %s1276 = sand.u32 %s39, 1
        %s1277 = sand.u32 %s39, 1
        %s1278 = smul.addr %s1277, 512
        %s1279 = scalar_lea.vmem [#allocation2], %s1278
        // Predicated region
        $region161: #{fused_bn_add_relu_conv_bn.4} parent=159 // pred_check
          %p1280 = pneg %p52
        $region162: #{fused_bn_add_relu_conv_bn.4} parent=159 // pred_check_branch
          %1282 = sbr.rel (%p1280) target = $region164
        $region163: #{fused_bn_add_relu_conv_bn.4} parent=159 // pred_region
          _
        $region164: #{fused_bn_add_relu_conv_bn.4} parent=159 // pred_fallthru
          _
        %s1283 = sand.u32 %s67, 1
        %s1284 = sand.u32 %s67, 1
        %s1285 = smul.addr %s1284, 512
        %s1286 = scalar_lea.vmem [#allocation3], %s1285
        // Predicated region
        $region165: #{fused_bn_add_relu_conv_bn.4} parent=159 // pred_check
          %p1287 = pneg %p80
        $region166: #{fused_bn_add_relu_conv_bn.4} parent=159 // pred_check_branch
          %1289 = sbr.rel (%p1287) target = $region168
        $region167: #{fused_bn_add_relu_conv_bn.4} parent=159 // pred_region
          _
        $region168: #{fused_bn_add_relu_conv_bn.4} parent=159 // pred_fallthru
          _
        %s1290 = sand.u32 %s39, 1
        %s1291 = sand.u32 %s39, 1
        %s1292 = smul.addr %s1291, 512
        %s1293 = scalar_lea.vmem [#allocation2], %s1292
        %p1294 = pneg %p52
        %p1295 = pneg %p49
        %s1296 = sand.u32 %s67, 1
        %s1297 = sand.u32 %s67, 1
        %s1298 = smul.addr %s1297, 512
        %s1299 = scalar_lea.vmem [#allocation3], %s1298
        %p1300 = pneg %p80
        %p1301 = pneg %p77
        %p1302 = pneg %p101
        %p1303 = pneg %p98
        %p1304 = pneg %p122
        %p1305 = pneg %p119
        %p1306 = pneg %p143
        %p1307 = pneg %p140
        %p1308 = pneg %p164
        %p1309 = pneg %p161
        %s1310 = smul.u32 4, %s22
        %s1311 = ssub.s32 7, %s1310
        %p1312 = scmp.lt.s32.totalorder %s1311, 4
        %s1313 = scalar_select %p1312, %s1311, 4
        %s1314 = smul.u32 2048, %s1313
        %s1315 = smul.u32 4, %s22
        %s1316 = ssub.s32 7, %s1315
        %p1317 = scmp.lt.s32.totalorder %s1316, 4
        %s1318 = scalar_select %p1317, %s1316, 4
        %s1319 = smul.u32 2048, %s1318
        %p1320 = scmp.eq.s32.totalorder %s21, 0
        %p1321 = scmp.eq.s32.totalorder %s22, 0
        %p1322 = pnand %p1320, %p1321
        %p1323 = pneg %p1322
        // Predicated region
        $region169: #{fused_bn_add_relu_conv_bn.4} parent=159 // pred_check
          _
        $region170: #{fused_bn_add_relu_conv_bn.4} parent=159 // pred_check_branch
          %1325 = sbr.rel (%p1322) target = $region172
        $region171: #{fused_bn_add_relu_conv_bn.4} parent=159 // pred_region
          %vm1326 = vcmask 7168
          %1327 = vst.msk [vmem:[%s4] sm:$0xff] %vm1326, 0.0
          %1328 = vst.msk [vmem:[%s4 + $0x8] sm:$0xff] %vm1326, 0.0
          %1329 = vst.msk [vmem:[%s4 + $0x10] sm:$0xff] %vm1326, 0.0
          %1330 = vst.msk [vmem:[%s4 + $0x18] sm:$0xff] %vm1326, 0.0
          %1331 = vst.msk [vmem:[%s4 + $0x20] sm:$0xff] %vm1326, 0.0
          %1332 = vst.msk [vmem:[%s4 + $0x28] sm:$0xff] %vm1326, 0.0
          %1333 = vst.msk [vmem:[%s4 + $0x30] sm:$0xff] %vm1326, 0.0
          %1334 = vst.msk [vmem:[%s4 + $0x38] sm:$0xff] %vm1326, 0.0
          %1335 = vst.msk [vmem:[%s4 + $0x40] sm:$0xff] %vm1326, 0.0
          %1336 = vst.msk [vmem:[%s4 + $0x48] sm:$0xff] %vm1326, 0.0
          %1337 = vst.msk [vmem:[%s4 + $0x50] sm:$0xff] %vm1326, 0.0
          %1338 = vst.msk [vmem:[%s4 + $0x58] sm:$0xff] %vm1326, 0.0
          %1339 = vst.msk [vmem:[%s4 + $0x60] sm:$0xff] %vm1326, 0.0
          %1340 = vst.msk [vmem:[%s4 + $0x68] sm:$0xff] %vm1326, 0.0
          %1341 = vst.msk [vmem:[%s4 + $0x70] sm:$0xff] %vm1326, 0.0
          %1342 = vst.msk [vmem:[%s4 + $0x78] sm:$0xff] %vm1326, 0.0
          %1343 = vst [vmem:[%s5] sm:$0xff] 0.0
          %1344 = vst [vmem:[%s5 + $0x8] sm:$0xff] 0.0
          %1345 = vst [vmem:[%s5 + $0x10] sm:$0xff] 0.0
          %1346 = vst [vmem:[%s5 + $0x18] sm:$0xff] 0.0
          %1347 = vst [vmem:[%s5 + $0x20] sm:$0xff] 0.0
          %1348 = vst [vmem:[%s5 + $0x28] sm:$0xff] 0.0
          %1349 = vst [vmem:[%s5 + $0x30] sm:$0xff] 0.0
          %1350 = vst [vmem:[%s5 + $0x38] sm:$0xff] 0.0
          %1351 = vst [vmem:[%s5 + $0x40] sm:$0xff] 0.0
          %1352 = vst [vmem:[%s5 + $0x48] sm:$0xff] 0.0
          %1353 = vst [vmem:[%s5 + $0x50] sm:$0xff] 0.0
          %1354 = vst [vmem:[%s5 + $0x58] sm:$0xff] 0.0
          %1355 = vst [vmem:[%s5 + $0x60] sm:$0xff] 0.0
          %1356 = vst [vmem:[%s5 + $0x68] sm:$0xff] 0.0
          %1357 = vst [vmem:[%s5 + $0x70] sm:$0xff] 0.0
          %1358 = vst [vmem:[%s5 + $0x78] sm:$0xff] 0.0
        $region172: #{fused_bn_add_relu_conv_bn.4} parent=159 // pred_fallthru
          _
        %v1359 = vld [vmem:[%s1279] sm:$0xff]
        %v1360 = vld [vmem:[%s1279 + $0x8] sm:$0xff]
        %v1361 = vld [vmem:[%s1279 + $0x10] sm:$0xff]
        %v1362 = vld [vmem:[%s1279 + $0x18] sm:$0xff]
        %v1363 = vld [vmem:[%s1279 + $0x20] sm:$0xff]
        %v1364 = vld [vmem:[%s1279 + $0x28] sm:$0xff]
        %v1365 = vld [vmem:[%s1279 + $0x30] sm:$0xff]
        %v1366 = vld [vmem:[%s1279 + $0x38] sm:$0xff]
        %v1367 = vld [vmem:[%s1279 + $0x40] sm:$0xff]
        %v1368 = vld [vmem:[%s1279 + $0x48] sm:$0xff]
        %v1369 = vld [vmem:[%s1279 + $0x50] sm:$0xff]
        %v1370 = vld [vmem:[%s1279 + $0x58] sm:$0xff]
        %v1371 = vld [vmem:[%s1279 + $0x60] sm:$0xff]
        %v1372 = vld [vmem:[%s1279 + $0x68] sm:$0xff]
        %v1373 = vld [vmem:[%s1279 + $0x70] sm:$0xff]
        %v1374 = vld [vmem:[%s1279 + $0x78] sm:$0xff]
        %v1375 = vld [vmem:[%s1279 + $0x80] sm:$0xff]
        %v1376 = vld [vmem:[%s1279 + $0x88] sm:$0xff]
        %v1377 = vld [vmem:[%s1279 + $0x90] sm:$0xff]
        %v1378 = vld [vmem:[%s1279 + $0x98] sm:$0xff]
        %v1379 = vld [vmem:[%s1279 + $0xa0] sm:$0xff]
        %v1380 = vld [vmem:[%s1279 + $0xa8] sm:$0xff]
        %v1381 = vld [vmem:[%s1279 + $0xb0] sm:$0xff]
        %v1382 = vld [vmem:[%s1279 + $0xb8] sm:$0xff]
        %v1383 = vld [vmem:[%s1279 + $0xc0] sm:$0xff]
        %v1384 = vld [vmem:[%s1279 + $0xc8] sm:$0xff]
        %v1385 = vld [vmem:[%s1279 + $0xd0] sm:$0xff]
        %v1386 = vld [vmem:[%s1279 + $0xd8] sm:$0xff]
        %v1387 = vld [vmem:[%s1279 + $0xe0] sm:$0xff]
        %v1388 = vld [vmem:[%s1279 + $0xe8] sm:$0xff]
        %v1389 = vld [vmem:[%s1279 + $0xf0] sm:$0xff]
        %v1390 = vld [vmem:[%s1279 + $0xf8] sm:$0xff]
        %v1391 = vld [vmem:[%s1279 + $0x100] sm:$0xff]
        %v1392 = vld [vmem:[%s1279 + $0x108] sm:$0xff]
        %v1393 = vld [vmem:[%s1279 + $0x110] sm:$0xff]
        %v1394 = vld [vmem:[%s1279 + $0x118] sm:$0xff]
        %v1395 = vld [vmem:[%s1279 + $0x120] sm:$0xff]
        %v1396 = vld [vmem:[%s1279 + $0x128] sm:$0xff]
        %v1397 = vld [vmem:[%s1279 + $0x130] sm:$0xff]
        %v1398 = vld [vmem:[%s1279 + $0x138] sm:$0xff]
        %v1399 = vld [vmem:[%s1279 + $0x140] sm:$0xff]
        %v1400 = vld [vmem:[%s1279 + $0x148] sm:$0xff]
        %v1401 = vld [vmem:[%s1279 + $0x150] sm:$0xff]
        %v1402 = vld [vmem:[%s1279 + $0x158] sm:$0xff]
        %v1403 = vld [vmem:[%s1279 + $0x160] sm:$0xff]
        %v1404 = vld [vmem:[%s1279 + $0x168] sm:$0xff]
        %v1405 = vld [vmem:[%s1279 + $0x170] sm:$0xff]
        %v1406 = vld [vmem:[%s1279 + $0x178] sm:$0xff]
        %v1407 = vld [vmem:[%s1279 + $0x180] sm:$0xff]
        %v1408 = vld [vmem:[%s1279 + $0x188] sm:$0xff]
        %v1409 = vld [vmem:[%s1279 + $0x190] sm:$0xff]
        %v1410 = vld [vmem:[%s1279 + $0x198] sm:$0xff]
        %v1411 = vld [vmem:[%s1279 + $0x1a0] sm:$0xff]
        %v1412 = vld [vmem:[%s1279 + $0x1a8] sm:$0xff]
        %v1413 = vld [vmem:[%s1279 + $0x1b0] sm:$0xff]
        %v1414 = vld [vmem:[%s1279 + $0x1b8] sm:$0xff]
        %v1415 = vld [vmem:[%s1279 + $0x1c0] sm:$0xff]
        %v1416 = vld [vmem:[%s1279 + $0x1c8] sm:$0xff]
        %v1417 = vld [vmem:[%s1279 + $0x1d0] sm:$0xff]
        %v1418 = vld [vmem:[%s1279 + $0x1d8] sm:$0xff]
        %v1419 = vld [vmem:[%s1279 + $0x1e0] sm:$0xff]
        %v1420 = vld [vmem:[%s1279 + $0x1e8] sm:$0xff]
        %v1421 = vld [vmem:[%s1279 + $0x1f0] sm:$0xff]
        %v1422 = vld [vmem:[%s1279 + $0x1f8] sm:$0xff]
        %v1423 = vld [vmem:[%s2] sm:$0xff]
        %v1424 = vld [vmem:[%s2 + $0x8] sm:$0xff]
        %v1425 = vld [vmem:[%s2 + $0x10] sm:$0xff]
        %v1426 = vld [vmem:[%s2 + $0x18] sm:$0xff]
        %v1427 = vld [vmem:[%s2 + $0x20] sm:$0xff]
        %v1428 = vld [vmem:[%s2 + $0x28] sm:$0xff]
        %v1429 = vld [vmem:[%s2 + $0x30] sm:$0xff]
        %v1430 = vld [vmem:[%s2 + $0x38] sm:$0xff]
        %v1431 = vld [vmem:[%s2 + $0x40] sm:$0xff]
        %v1432 = vld [vmem:[%s2 + $0x48] sm:$0xff]
        %v1433 = vld [vmem:[%s2 + $0x50] sm:$0xff]
        %v1434 = vld [vmem:[%s2 + $0x58] sm:$0xff]
        %v1435 = vld [vmem:[%s2 + $0x60] sm:$0xff]
        %v1436 = vld [vmem:[%s2 + $0x68] sm:$0xff]
        %v1437 = vld [vmem:[%s2 + $0x70] sm:$0xff]
        %v1438 = vld [vmem:[%s2 + $0x78] sm:$0xff]
        %1440 = vset.pattern.permute.xlu0 0
        %1441 = vperm.xlu0 %1440, %v1423
        %v1442 = vpop.permute.xlu0 %1441
        %1445 = vset.pattern.permute.xlu0 0
        %1446 = vperm.xlu0 %1445, %v1424
        %v1447 = vpop.permute.xlu0 %1446
        %1450 = vset.pattern.permute.xlu0 0
        %1451 = vperm.xlu0 %1450, %v1425
        %v1452 = vpop.permute.xlu0 %1451
        %1455 = vset.pattern.permute.xlu0 0
        %1456 = vperm.xlu0 %1455, %v1426
        %v1457 = vpop.permute.xlu0 %1456
        %1460 = vset.pattern.permute.xlu0 0
        %1461 = vperm.xlu0 %1460, %v1427
        %v1462 = vpop.permute.xlu0 %1461
        %1465 = vset.pattern.permute.xlu0 0
        %1466 = vperm.xlu0 %1465, %v1428
        %v1467 = vpop.permute.xlu0 %1466
        %1470 = vset.pattern.permute.xlu0 0
        %1471 = vperm.xlu0 %1470, %v1429
        %v1472 = vpop.permute.xlu0 %1471
        %1475 = vset.pattern.permute.xlu0 0
        %1476 = vperm.xlu0 %1475, %v1430
        %v1477 = vpop.permute.xlu0 %1476
        %1480 = vset.pattern.permute.xlu0 0
        %1481 = vperm.xlu0 %1480, %v1431
        %v1482 = vpop.permute.xlu0 %1481
        %1485 = vset.pattern.permute.xlu0 0
        %1486 = vperm.xlu0 %1485, %v1432
        %v1487 = vpop.permute.xlu0 %1486
        %1490 = vset.pattern.permute.xlu0 0
        %1491 = vperm.xlu0 %1490, %v1433
        %v1492 = vpop.permute.xlu0 %1491
        %1495 = vset.pattern.permute.xlu0 0
        %1496 = vperm.xlu0 %1495, %v1434
        %v1497 = vpop.permute.xlu0 %1496
        %1500 = vset.pattern.permute.xlu0 0
        %1501 = vperm.xlu0 %1500, %v1435
        %v1502 = vpop.permute.xlu0 %1501
        %1505 = vset.pattern.permute.xlu0 0
        %1506 = vperm.xlu0 %1505, %v1436
        %v1507 = vpop.permute.xlu0 %1506
        %1510 = vset.pattern.permute.xlu0 0
        %1511 = vperm.xlu0 %1510, %v1437
        %v1512 = vpop.permute.xlu0 %1511
        %1515 = vset.pattern.permute.xlu0 0
        %1516 = vperm.xlu0 %1515, %v1438
        %v1517 = vpop.permute.xlu0 %1516
        %v1519 = vmul.f32 %v1359, %v1442
        %v1520 = vmul.f32 %v1360, %v1442
        %v1521 = vmul.f32 %v1361, %v1442
        %v1522 = vmul.f32 %v1362, %v1442
        %v1523 = vmul.f32 %v1363, %v1447
        %v1524 = vmul.f32 %v1364, %v1447
        %v1525 = vmul.f32 %v1365, %v1447
        %v1526 = vmul.f32 %v1366, %v1447
        %v1527 = vmul.f32 %v1367, %v1452
        %v1528 = vmul.f32 %v1368, %v1452
        %v1529 = vmul.f32 %v1369, %v1452
        %v1530 = vmul.f32 %v1370, %v1452
        %v1531 = vmul.f32 %v1371, %v1457
        %v1532 = vmul.f32 %v1372, %v1457
        %v1533 = vmul.f32 %v1373, %v1457
        %v1534 = vmul.f32 %v1374, %v1457
        %v1535 = vmul.f32 %v1375, %v1462
        %v1536 = vmul.f32 %v1376, %v1462
        %v1537 = vmul.f32 %v1377, %v1462
        %v1538 = vmul.f32 %v1378, %v1462
        %v1539 = vmul.f32 %v1379, %v1467
        %v1540 = vmul.f32 %v1380, %v1467
        %v1541 = vmul.f32 %v1381, %v1467
        %v1542 = vmul.f32 %v1382, %v1467
        %v1543 = vmul.f32 %v1383, %v1472
        %v1544 = vmul.f32 %v1384, %v1472
        %v1545 = vmul.f32 %v1385, %v1472
        %v1546 = vmul.f32 %v1386, %v1472
        %v1547 = vmul.f32 %v1387, %v1477
        %v1548 = vmul.f32 %v1388, %v1477
        %v1549 = vmul.f32 %v1389, %v1477
        %v1550 = vmul.f32 %v1390, %v1477
        %v1551 = vmul.f32 %v1391, %v1482
        %v1552 = vmul.f32 %v1392, %v1482
        %v1553 = vmul.f32 %v1393, %v1482
        %v1554 = vmul.f32 %v1394, %v1482
        %v1555 = vmul.f32 %v1395, %v1487
        %v1556 = vmul.f32 %v1396, %v1487
        %v1557 = vmul.f32 %v1397, %v1487
        %v1558 = vmul.f32 %v1398, %v1487
        %v1559 = vmul.f32 %v1399, %v1492
        %v1560 = vmul.f32 %v1400, %v1492
        %v1561 = vmul.f32 %v1401, %v1492
        %v1562 = vmul.f32 %v1402, %v1492
        %v1563 = vmul.f32 %v1403, %v1497
        %v1564 = vmul.f32 %v1404, %v1497
        %v1565 = vmul.f32 %v1405, %v1497
        %v1566 = vmul.f32 %v1406, %v1497
        %v1567 = vmul.f32 %v1407, %v1502
        %v1568 = vmul.f32 %v1408, %v1502
        %v1569 = vmul.f32 %v1409, %v1502
        %v1570 = vmul.f32 %v1410, %v1502
        %v1571 = vmul.f32 %v1411, %v1507
        %v1572 = vmul.f32 %v1412, %v1507
        %v1573 = vmul.f32 %v1413, %v1507
        %v1574 = vmul.f32 %v1414, %v1507
        %v1575 = vmul.f32 %v1415, %v1512
        %v1576 = vmul.f32 %v1416, %v1512
        %v1577 = vmul.f32 %v1417, %v1512
        %v1578 = vmul.f32 %v1418, %v1512
        %v1579 = vmul.f32 %v1419, %v1517
        %v1580 = vmul.f32 %v1420, %v1517
        %v1581 = vmul.f32 %v1421, %v1517
        %v1582 = vmul.f32 %v1422, %v1517
        %v1583 = vld [vmem:[%s3] sm:$0xff]
        %v1584 = vld [vmem:[%s3 + $0x8] sm:$0xff]
        %v1585 = vld [vmem:[%s3 + $0x10] sm:$0xff]
        %v1586 = vld [vmem:[%s3 + $0x18] sm:$0xff]
        %v1587 = vld [vmem:[%s3 + $0x20] sm:$0xff]
        %v1588 = vld [vmem:[%s3 + $0x28] sm:$0xff]
        %v1589 = vld [vmem:[%s3 + $0x30] sm:$0xff]
        %v1590 = vld [vmem:[%s3 + $0x38] sm:$0xff]
        %v1591 = vld [vmem:[%s3 + $0x40] sm:$0xff]
        %v1592 = vld [vmem:[%s3 + $0x48] sm:$0xff]
        %v1593 = vld [vmem:[%s3 + $0x50] sm:$0xff]
        %v1594 = vld [vmem:[%s3 + $0x58] sm:$0xff]
        %v1595 = vld [vmem:[%s3 + $0x60] sm:$0xff]
        %v1596 = vld [vmem:[%s3 + $0x68] sm:$0xff]
        %v1597 = vld [vmem:[%s3 + $0x70] sm:$0xff]
        %v1598 = vld [vmem:[%s3 + $0x78] sm:$0xff]
        %1600 = vset.pattern.permute.xlu0 0
        %1601 = vperm.xlu0 %1600, %v1583
        %v1602 = vpop.permute.xlu0 %1601
        %1605 = vset.pattern.permute.xlu0 0
        %1606 = vperm.xlu0 %1605, %v1584
        %v1607 = vpop.permute.xlu0 %1606
        %1610 = vset.pattern.permute.xlu0 0
        %1611 = vperm.xlu0 %1610, %v1585
        %v1612 = vpop.permute.xlu0 %1611
        %1615 = vset.pattern.permute.xlu0 0
        %1616 = vperm.xlu0 %1615, %v1586
        %v1617 = vpop.permute.xlu0 %1616
        %1620 = vset.pattern.permute.xlu0 0
        %1621 = vperm.xlu0 %1620, %v1587
        %v1622 = vpop.permute.xlu0 %1621
        %1625 = vset.pattern.permute.xlu0 0
        %1626 = vperm.xlu0 %1625, %v1588
        %v1627 = vpop.permute.xlu0 %1626
        %1630 = vset.pattern.permute.xlu0 0
        %1631 = vperm.xlu0 %1630, %v1589
        %v1632 = vpop.permute.xlu0 %1631
        %1635 = vset.pattern.permute.xlu0 0
        %1636 = vperm.xlu0 %1635, %v1590
        %v1637 = vpop.permute.xlu0 %1636
        %1640 = vset.pattern.permute.xlu0 0
        %1641 = vperm.xlu0 %1640, %v1591
        %v1642 = vpop.permute.xlu0 %1641
        %1645 = vset.pattern.permute.xlu0 0
        %1646 = vperm.xlu0 %1645, %v1592
        %v1647 = vpop.permute.xlu0 %1646
        %1650 = vset.pattern.permute.xlu0 0
        %1651 = vperm.xlu0 %1650, %v1593
        %v1652 = vpop.permute.xlu0 %1651
        %1655 = vset.pattern.permute.xlu0 0
        %1656 = vperm.xlu0 %1655, %v1594
        %v1657 = vpop.permute.xlu0 %1656
        %1660 = vset.pattern.permute.xlu0 0
        %1661 = vperm.xlu0 %1660, %v1595
        %v1662 = vpop.permute.xlu0 %1661
        %1665 = vset.pattern.permute.xlu0 0
        %1666 = vperm.xlu0 %1665, %v1596
        %v1667 = vpop.permute.xlu0 %1666
        %1670 = vset.pattern.permute.xlu0 0
        %1671 = vperm.xlu0 %1670, %v1597
        %v1672 = vpop.permute.xlu0 %1671
        %1675 = vset.pattern.permute.xlu0 0
        %1676 = vperm.xlu0 %1675, %v1598
        %v1677 = vpop.permute.xlu0 %1676
        %v1679 = vadd.f32 %v1519, %v1602
        %v1680 = vadd.f32 %v1520, %v1602
        %v1681 = vadd.f32 %v1521, %v1602
        %v1682 = vadd.f32 %v1522, %v1602
        %v1683 = vadd.f32 %v1523, %v1607
        %v1684 = vadd.f32 %v1524, %v1607
        %v1685 = vadd.f32 %v1525, %v1607
        %v1686 = vadd.f32 %v1526, %v1607
        %v1687 = vadd.f32 %v1527, %v1612
        %v1688 = vadd.f32 %v1528, %v1612
        %v1689 = vadd.f32 %v1529, %v1612
        %v1690 = vadd.f32 %v1530, %v1612
        %v1691 = vadd.f32 %v1531, %v1617
        %v1692 = vadd.f32 %v1532, %v1617
        %v1693 = vadd.f32 %v1533, %v1617
        %v1694 = vadd.f32 %v1534, %v1617
        %v1695 = vadd.f32 %v1535, %v1622
        %v1696 = vadd.f32 %v1536, %v1622
        %v1697 = vadd.f32 %v1537, %v1622
        %v1698 = vadd.f32 %v1538, %v1622
        %v1699 = vadd.f32 %v1539, %v1627
        %v1700 = vadd.f32 %v1540, %v1627
        %v1701 = vadd.f32 %v1541, %v1627
        %v1702 = vadd.f32 %v1542, %v1627
        %v1703 = vadd.f32 %v1543, %v1632
        %v1704 = vadd.f32 %v1544, %v1632
        %v1705 = vadd.f32 %v1545, %v1632
        %v1706 = vadd.f32 %v1546, %v1632
        %v1707 = vadd.f32 %v1547, %v1637
        %v1708 = vadd.f32 %v1548, %v1637
        %v1709 = vadd.f32 %v1549, %v1637
        %v1710 = vadd.f32 %v1550, %v1637
        %v1711 = vadd.f32 %v1551, %v1642
        %v1712 = vadd.f32 %v1552, %v1642
        %v1713 = vadd.f32 %v1553, %v1642
        %v1714 = vadd.f32 %v1554, %v1642
        %v1715 = vadd.f32 %v1555, %v1647
        %v1716 = vadd.f32 %v1556, %v1647
        %v1717 = vadd.f32 %v1557, %v1647
        %v1718 = vadd.f32 %v1558, %v1647
        %v1719 = vadd.f32 %v1559, %v1652
        %v1720 = vadd.f32 %v1560, %v1652
        %v1721 = vadd.f32 %v1561, %v1652
        %v1722 = vadd.f32 %v1562, %v1652
        %v1723 = vadd.f32 %v1563, %v1657
        %v1724 = vadd.f32 %v1564, %v1657
        %v1725 = vadd.f32 %v1565, %v1657
        %v1726 = vadd.f32 %v1566, %v1657
        %v1727 = vadd.f32 %v1567, %v1662
        %v1728 = vadd.f32 %v1568, %v1662
        %v1729 = vadd.f32 %v1569, %v1662
        %v1730 = vadd.f32 %v1570, %v1662
        %v1731 = vadd.f32 %v1571, %v1667
        %v1732 = vadd.f32 %v1572, %v1667
        %v1733 = vadd.f32 %v1573, %v1667
        %v1734 = vadd.f32 %v1574, %v1667
        %v1735 = vadd.f32 %v1575, %v1672
        %v1736 = vadd.f32 %v1576, %v1672
        %v1737 = vadd.f32 %v1577, %v1672
        %v1738 = vadd.f32 %v1578, %v1672
        %v1739 = vadd.f32 %v1579, %v1677
        %v1740 = vadd.f32 %v1580, %v1677
        %v1741 = vadd.f32 %v1581, %v1677
        %v1742 = vadd.f32 %v1582, %v1677
        %v1743 = vld [vmem:[%s1286] sm:$0xff]
        %v1744 = vld [vmem:[%s1286 + $0x8] sm:$0xff]
        %v1745 = vld [vmem:[%s1286 + $0x10] sm:$0xff]
        %v1746 = vld [vmem:[%s1286 + $0x18] sm:$0xff]
        %v1747 = vld [vmem:[%s1286 + $0x20] sm:$0xff]
        %v1748 = vld [vmem:[%s1286 + $0x28] sm:$0xff]
        %v1749 = vld [vmem:[%s1286 + $0x30] sm:$0xff]
        %v1750 = vld [vmem:[%s1286 + $0x38] sm:$0xff]
        %v1751 = vld [vmem:[%s1286 + $0x40] sm:$0xff]
        %v1752 = vld [vmem:[%s1286 + $0x48] sm:$0xff]
        %v1753 = vld [vmem:[%s1286 + $0x50] sm:$0xff]
        %v1754 = vld [vmem:[%s1286 + $0x58] sm:$0xff]
        %v1755 = vld [vmem:[%s1286 + $0x60] sm:$0xff]
        %v1756 = vld [vmem:[%s1286 + $0x68] sm:$0xff]
        %v1757 = vld [vmem:[%s1286 + $0x70] sm:$0xff]
        %v1758 = vld [vmem:[%s1286 + $0x78] sm:$0xff]
        %v1759 = vld [vmem:[%s1286 + $0x80] sm:$0xff]
        %v1760 = vld [vmem:[%s1286 + $0x88] sm:$0xff]
        %v1761 = vld [vmem:[%s1286 + $0x90] sm:$0xff]
        %v1762 = vld [vmem:[%s1286 + $0x98] sm:$0xff]
        %v1763 = vld [vmem:[%s1286 + $0xa0] sm:$0xff]
        %v1764 = vld [vmem:[%s1286 + $0xa8] sm:$0xff]
        %v1765 = vld [vmem:[%s1286 + $0xb0] sm:$0xff]
        %v1766 = vld [vmem:[%s1286 + $0xb8] sm:$0xff]
        %v1767 = vld [vmem:[%s1286 + $0xc0] sm:$0xff]
        %v1768 = vld [vmem:[%s1286 + $0xc8] sm:$0xff]
        %v1769 = vld [vmem:[%s1286 + $0xd0] sm:$0xff]
        %v1770 = vld [vmem:[%s1286 + $0xd8] sm:$0xff]
        %v1771 = vld [vmem:[%s1286 + $0xe0] sm:$0xff]
        %v1772 = vld [vmem:[%s1286 + $0xe8] sm:$0xff]
        %v1773 = vld [vmem:[%s1286 + $0xf0] sm:$0xff]
        %v1774 = vld [vmem:[%s1286 + $0xf8] sm:$0xff]
        %v1775 = vld [vmem:[%s1286 + $0x100] sm:$0xff]
        %v1776 = vld [vmem:[%s1286 + $0x108] sm:$0xff]
        %v1777 = vld [vmem:[%s1286 + $0x110] sm:$0xff]
        %v1778 = vld [vmem:[%s1286 + $0x118] sm:$0xff]
        %v1779 = vld [vmem:[%s1286 + $0x120] sm:$0xff]
        %v1780 = vld [vmem:[%s1286 + $0x128] sm:$0xff]
        %v1781 = vld [vmem:[%s1286 + $0x130] sm:$0xff]
        %v1782 = vld [vmem:[%s1286 + $0x138] sm:$0xff]
        %v1783 = vld [vmem:[%s1286 + $0x140] sm:$0xff]
        %v1784 = vld [vmem:[%s1286 + $0x148] sm:$0xff]
        %v1785 = vld [vmem:[%s1286 + $0x150] sm:$0xff]
        %v1786 = vld [vmem:[%s1286 + $0x158] sm:$0xff]
        %v1787 = vld [vmem:[%s1286 + $0x160] sm:$0xff]
        %v1788 = vld [vmem:[%s1286 + $0x168] sm:$0xff]
        %v1789 = vld [vmem:[%s1286 + $0x170] sm:$0xff]
        %v1790 = vld [vmem:[%s1286 + $0x178] sm:$0xff]
        %v1791 = vld [vmem:[%s1286 + $0x180] sm:$0xff]
        %v1792 = vld [vmem:[%s1286 + $0x188] sm:$0xff]
        %v1793 = vld [vmem:[%s1286 + $0x190] sm:$0xff]
        %v1794 = vld [vmem:[%s1286 + $0x198] sm:$0xff]
        %v1795 = vld [vmem:[%s1286 + $0x1a0] sm:$0xff]
        %v1796 = vld [vmem:[%s1286 + $0x1a8] sm:$0xff]
        %v1797 = vld [vmem:[%s1286 + $0x1b0] sm:$0xff]
        %v1798 = vld [vmem:[%s1286 + $0x1b8] sm:$0xff]
        %v1799 = vld [vmem:[%s1286 + $0x1c0] sm:$0xff]
        %v1800 = vld [vmem:[%s1286 + $0x1c8] sm:$0xff]
        %v1801 = vld [vmem:[%s1286 + $0x1d0] sm:$0xff]
        %v1802 = vld [vmem:[%s1286 + $0x1d8] sm:$0xff]
        %v1803 = vld [vmem:[%s1286 + $0x1e0] sm:$0xff]
        %v1804 = vld [vmem:[%s1286 + $0x1e8] sm:$0xff]
        %v1805 = vld [vmem:[%s1286 + $0x1f0] sm:$0xff]
        %v1806 = vld [vmem:[%s1286 + $0x1f8] sm:$0xff]
        %v1807 = vadd.f32 %v1679, %v1743
        %v1808 = vadd.f32 %v1680, %v1744
        %v1809 = vadd.f32 %v1681, %v1745
        %v1810 = vadd.f32 %v1682, %v1746
        %v1811 = vadd.f32 %v1683, %v1747
        %v1812 = vadd.f32 %v1684, %v1748
        %v1813 = vadd.f32 %v1685, %v1749
        %v1814 = vadd.f32 %v1686, %v1750
        %v1815 = vadd.f32 %v1687, %v1751
        %v1816 = vadd.f32 %v1688, %v1752
        %v1817 = vadd.f32 %v1689, %v1753
        %v1818 = vadd.f32 %v1690, %v1754
        %v1819 = vadd.f32 %v1691, %v1755
        %v1820 = vadd.f32 %v1692, %v1756
        %v1821 = vadd.f32 %v1693, %v1757
        %v1822 = vadd.f32 %v1694, %v1758
        %v1823 = vadd.f32 %v1695, %v1759
        %v1824 = vadd.f32 %v1696, %v1760
        %v1825 = vadd.f32 %v1697, %v1761
        %v1826 = vadd.f32 %v1698, %v1762
        %v1827 = vadd.f32 %v1699, %v1763
        %v1828 = vadd.f32 %v1700, %v1764
        %v1829 = vadd.f32 %v1701, %v1765
        %v1830 = vadd.f32 %v1702, %v1766
        %v1831 = vadd.f32 %v1703, %v1767
        %v1832 = vadd.f32 %v1704, %v1768
        %v1833 = vadd.f32 %v1705, %v1769
        %v1834 = vadd.f32 %v1706, %v1770
        %v1835 = vadd.f32 %v1707, %v1771
        %v1836 = vadd.f32 %v1708, %v1772
        %v1837 = vadd.f32 %v1709, %v1773
        %v1838 = vadd.f32 %v1710, %v1774
        %v1839 = vadd.f32 %v1711, %v1775
        %v1840 = vadd.f32 %v1712, %v1776
        %v1841 = vadd.f32 %v1713, %v1777
        %v1842 = vadd.f32 %v1714, %v1778
        %v1843 = vadd.f32 %v1715, %v1779
        %v1844 = vadd.f32 %v1716, %v1780
        %v1845 = vadd.f32 %v1717, %v1781
        %v1846 = vadd.f32 %v1718, %v1782
        %v1847 = vadd.f32 %v1719, %v1783
        %v1848 = vadd.f32 %v1720, %v1784
        %v1849 = vadd.f32 %v1721, %v1785
        %v1850 = vadd.f32 %v1722, %v1786
        %v1851 = vadd.f32 %v1723, %v1787
        %v1852 = vadd.f32 %v1724, %v1788
        %v1853 = vadd.f32 %v1725, %v1789
        %v1854 = vadd.f32 %v1726, %v1790
        %v1855 = vadd.f32 %v1727, %v1791
        %v1856 = vadd.f32 %v1728, %v1792
        %v1857 = vadd.f32 %v1729, %v1793
        %v1858 = vadd.f32 %v1730, %v1794
        %v1859 = vadd.f32 %v1731, %v1795
        %v1860 = vadd.f32 %v1732, %v1796
        %v1861 = vadd.f32 %v1733, %v1797
        %v1862 = vadd.f32 %v1734, %v1798
        %v1863 = vadd.f32 %v1735, %v1799
        %v1864 = vadd.f32 %v1736, %v1800
        %v1865 = vadd.f32 %v1737, %v1801
        %v1866 = vadd.f32 %v1738, %v1802
        %v1867 = vadd.f32 %v1739, %v1803
        %v1868 = vadd.f32 %v1740, %v1804
        %v1869 = vadd.f32 %v1741, %v1805
        %v1870 = vadd.f32 %v1742, %v1806
        %v1871 = vmax.f32 %v1807, 0.0
        %v1872 = vmax.f32 %v1808, 0.0
        %v1873 = vmax.f32 %v1809, 0.0
        %v1874 = vmax.f32 %v1810, 0.0
        %v1875 = vmax.f32 %v1811, 0.0
        %v1876 = vmax.f32 %v1812, 0.0
        %v1877 = vmax.f32 %v1813, 0.0
        %v1878 = vmax.f32 %v1814, 0.0
        %v1879 = vmax.f32 %v1815, 0.0
        %v1880 = vmax.f32 %v1816, 0.0
        %v1881 = vmax.f32 %v1817, 0.0
        %v1882 = vmax.f32 %v1818, 0.0
        %v1883 = vmax.f32 %v1819, 0.0
        %v1884 = vmax.f32 %v1820, 0.0
        %v1885 = vmax.f32 %v1821, 0.0
        %v1886 = vmax.f32 %v1822, 0.0
        %v1887 = vmax.f32 %v1823, 0.0
        %v1888 = vmax.f32 %v1824, 0.0
        %v1889 = vmax.f32 %v1825, 0.0
        %v1890 = vmax.f32 %v1826, 0.0
        %v1891 = vmax.f32 %v1827, 0.0
        %v1892 = vmax.f32 %v1828, 0.0
        %v1893 = vmax.f32 %v1829, 0.0
        %v1894 = vmax.f32 %v1830, 0.0
        %v1895 = vmax.f32 %v1831, 0.0
        %v1896 = vmax.f32 %v1832, 0.0
        %v1897 = vmax.f32 %v1833, 0.0
        %v1898 = vmax.f32 %v1834, 0.0
        %v1899 = vmax.f32 %v1835, 0.0
        %v1900 = vmax.f32 %v1836, 0.0
        %v1901 = vmax.f32 %v1837, 0.0
        %v1902 = vmax.f32 %v1838, 0.0
        %v1903 = vmax.f32 %v1839, 0.0
        %v1904 = vmax.f32 %v1840, 0.0
        %v1905 = vmax.f32 %v1841, 0.0
        %v1906 = vmax.f32 %v1842, 0.0
        %v1907 = vmax.f32 %v1843, 0.0
        %v1908 = vmax.f32 %v1844, 0.0
        %v1909 = vmax.f32 %v1845, 0.0
        %v1910 = vmax.f32 %v1846, 0.0
        %v1911 = vmax.f32 %v1847, 0.0
        %v1912 = vmax.f32 %v1848, 0.0
        %v1913 = vmax.f32 %v1849, 0.0
        %v1914 = vmax.f32 %v1850, 0.0
        %v1915 = vmax.f32 %v1851, 0.0
        %v1916 = vmax.f32 %v1852, 0.0
        %v1917 = vmax.f32 %v1853, 0.0
        %v1918 = vmax.f32 %v1854, 0.0
        %v1919 = vmax.f32 %v1855, 0.0
        %v1920 = vmax.f32 %v1856, 0.0
        %v1921 = vmax.f32 %v1857, 0.0
        %v1922 = vmax.f32 %v1858, 0.0
        %v1923 = vmax.f32 %v1859, 0.0
        %v1924 = vmax.f32 %v1860, 0.0
        %v1925 = vmax.f32 %v1861, 0.0
        %v1926 = vmax.f32 %v1862, 0.0
        %v1927 = vmax.f32 %v1863, 0.0
        %v1928 = vmax.f32 %v1864, 0.0
        %v1929 = vmax.f32 %v1865, 0.0
        %v1930 = vmax.f32 %v1866, 0.0
        %v1931 = vmax.f32 %v1867, 0.0
        %v1932 = vmax.f32 %v1868, 0.0
        %v1933 = vmax.f32 %v1869, 0.0
        %v1934 = vmax.f32 %v1870, 0.0
        %s1935 = smul.u32 %s22, 512
        %v1936 = vlaneseq
        %v1937 = vand.u32 %v1936, 127
        %v1938 = vadd.s32 %v1937, 128
        %v1939 = vadd.s32 %v1937, 256
        %v1940 = vadd.s32 %v1937, 384
        %v1941 = vstv %s1935
        %v1942 = vadd.s32 %v1941, %v1937
        %v1943 = vadd.s32 %v1941, %v1938
        %v1944 = vadd.s32 %v1941, %v1939
        %v1945 = vadd.s32 %v1941, %v1940
        %vm1946 = vcmp.lt.s32.totalorder %v1942, 784
        %vm1947 = vcmp.lt.s32.totalorder %v1943, 784
        %vm1948 = vcmp.lt.s32.totalorder %v1944, 784
        %vm1949 = vcmp.lt.s32.totalorder %v1945, 784
        %v1950 = vsel %vm1946, %v1871, 0.0
        %v1951 = vsel %vm1947, %v1872, 0.0
        %v1952 = vsel %vm1948, %v1873, 0.0
        %v1953 = vsel %vm1949, %v1874, 0.0
        %v1954 = vsel %vm1946, %v1875, 0.0
        %v1955 = vsel %vm1947, %v1876, 0.0
        %v1956 = vsel %vm1948, %v1877, 0.0
        %v1957 = vsel %vm1949, %v1878, 0.0
        %v1958 = vsel %vm1946, %v1879, 0.0
        %v1959 = vsel %vm1947, %v1880, 0.0
        %v1960 = vsel %vm1948, %v1881, 0.0
        %v1961 = vsel %vm1949, %v1882, 0.0
        %v1962 = vsel %vm1946, %v1883, 0.0
        %v1963 = vsel %vm1947, %v1884, 0.0
        %v1964 = vsel %vm1948, %v1885, 0.0
        %v1965 = vsel %vm1949, %v1886, 0.0
        %v1966 = vsel %vm1946, %v1887, 0.0
        %v1967 = vsel %vm1947, %v1888, 0.0
        %v1968 = vsel %vm1948, %v1889, 0.0
        %v1969 = vsel %vm1949, %v1890, 0.0
        %v1970 = vsel %vm1946, %v1891, 0.0
        %v1971 = vsel %vm1947, %v1892, 0.0
        %v1972 = vsel %vm1948, %v1893, 0.0
        %v1973 = vsel %vm1949, %v1894, 0.0
        %v1974 = vsel %vm1946, %v1895, 0.0
        %v1975 = vsel %vm1947, %v1896, 0.0
        %v1976 = vsel %vm1948, %v1897, 0.0
        %v1977 = vsel %vm1949, %v1898, 0.0
        %v1978 = vsel %vm1946, %v1899, 0.0
        %v1979 = vsel %vm1947, %v1900, 0.0
        %v1980 = vsel %vm1948, %v1901, 0.0
        %v1981 = vsel %vm1949, %v1902, 0.0
        %v1982 = vsel %vm1946, %v1903, 0.0
        %v1983 = vsel %vm1947, %v1904, 0.0
        %v1984 = vsel %vm1948, %v1905, 0.0
        %v1985 = vsel %vm1949, %v1906, 0.0
        %v1986 = vsel %vm1946, %v1907, 0.0
        %v1987 = vsel %vm1947, %v1908, 0.0
        %v1988 = vsel %vm1948, %v1909, 0.0
        %v1989 = vsel %vm1949, %v1910, 0.0
        %v1990 = vsel %vm1946, %v1911, 0.0
        %v1991 = vsel %vm1947, %v1912, 0.0
        %v1992 = vsel %vm1948, %v1913, 0.0
        %v1993 = vsel %vm1949, %v1914, 0.0
        %v1994 = vsel %vm1946, %v1915, 0.0
        %v1995 = vsel %vm1947, %v1916, 0.0
        %v1996 = vsel %vm1948, %v1917, 0.0
        %v1997 = vsel %vm1949, %v1918, 0.0
        %v1998 = vsel %vm1946, %v1919, 0.0
        %v1999 = vsel %vm1947, %v1920, 0.0
        %v2000 = vsel %vm1948, %v1921, 0.0
        %v2001 = vsel %vm1949, %v1922, 0.0
        %v2002 = vsel %vm1946, %v1923, 0.0
        %v2003 = vsel %vm1947, %v1924, 0.0
        %v2004 = vsel %vm1948, %v1925, 0.0
        %v2005 = vsel %vm1949, %v1926, 0.0
        %v2006 = vsel %vm1946, %v1927, 0.0
        %v2007 = vsel %vm1947, %v1928, 0.0
        %v2008 = vsel %vm1948, %v1929, 0.0
        %v2009 = vsel %vm1949, %v1930, 0.0
        %v2010 = vsel %vm1946, %v1931, 0.0
        %v2011 = vsel %vm1947, %v1932, 0.0
        %v2012 = vsel %vm1948, %v1933, 0.0
        %v2013 = vsel %vm1949, %v1934, 0.0
        %v2014 = vld [vmem:[%s4] sm:$0xff]
        %v2015 = vld [vmem:[%s4 + $0x8] sm:$0xff]
        %v2016 = vld [vmem:[%s4 + $0x10] sm:$0xff]
        %v2017 = vld [vmem:[%s4 + $0x18] sm:$0xff]
        %v2018 = vld [vmem:[%s4 + $0x20] sm:$0xff]
        %v2019 = vld [vmem:[%s4 + $0x28] sm:$0xff]
        %v2020 = vld [vmem:[%s4 + $0x30] sm:$0xff]
        %v2021 = vld [vmem:[%s4 + $0x38] sm:$0xff]
        %v2022 = vld [vmem:[%s4 + $0x40] sm:$0xff]
        %v2023 = vld [vmem:[%s4 + $0x48] sm:$0xff]
        %v2024 = vld [vmem:[%s4 + $0x50] sm:$0xff]
        %v2025 = vld [vmem:[%s4 + $0x58] sm:$0xff]
        %v2026 = vld [vmem:[%s4 + $0x60] sm:$0xff]
        %v2027 = vld [vmem:[%s4 + $0x68] sm:$0xff]
        %v2028 = vld [vmem:[%s4 + $0x70] sm:$0xff]
        %v2029 = vld [vmem:[%s4 + $0x78] sm:$0xff]
        %v2030 = vadd.f32 %v1950, %v1951
        %v2031 = vadd.f32 %v2030, %v1952
        %v2032 = vadd.f32 %v2031, %v1953
        %2033 = vadd.xlane.f32.xlu0 %v2032
        %v2034 = vpop.xlane.xlu0 %2033
        %v2035 = vadd.f32 %v1954, %v1955
        %v2036 = vadd.f32 %v2035, %v1956
        %v2037 = vadd.f32 %v2036, %v1957
        %2038 = vadd.xlane.f32.xlu0 %v2037
        %v2039 = vpop.xlane.xlu0 %2038
        %v2040 = vadd.f32 %v1958, %v1959
        %v2041 = vadd.f32 %v2040, %v1960
        %v2042 = vadd.f32 %v2041, %v1961
        %2043 = vadd.xlane.f32.xlu0 %v2042
        %v2044 = vpop.xlane.xlu0 %2043
        %v2045 = vadd.f32 %v1962, %v1963
        %v2046 = vadd.f32 %v2045, %v1964
        %v2047 = vadd.f32 %v2046, %v1965
        %2048 = vadd.xlane.f32.xlu0 %v2047
        %v2049 = vpop.xlane.xlu0 %2048
        %v2050 = vadd.f32 %v1966, %v1967
        %v2051 = vadd.f32 %v2050, %v1968
        %v2052 = vadd.f32 %v2051, %v1969
        %2053 = vadd.xlane.f32.xlu0 %v2052
        %v2054 = vpop.xlane.xlu0 %2053
        %v2055 = vadd.f32 %v1970, %v1971
        %v2056 = vadd.f32 %v2055, %v1972
        %v2057 = vadd.f32 %v2056, %v1973
        %2058 = vadd.xlane.f32.xlu0 %v2057
        %v2059 = vpop.xlane.xlu0 %2058
        %v2060 = vadd.f32 %v1974, %v1975
        %v2061 = vadd.f32 %v2060, %v1976
        %v2062 = vadd.f32 %v2061, %v1977
        %2063 = vadd.xlane.f32.xlu0 %v2062
        %v2064 = vpop.xlane.xlu0 %2063
        %v2065 = vadd.f32 %v1978, %v1979
        %v2066 = vadd.f32 %v2065, %v1980
        %v2067 = vadd.f32 %v2066, %v1981
        %2068 = vadd.xlane.f32.xlu0 %v2067
        %v2069 = vpop.xlane.xlu0 %2068
        %v2070 = vadd.f32 %v1982, %v1983
        %v2071 = vadd.f32 %v2070, %v1984
        %v2072 = vadd.f32 %v2071, %v1985
        %2073 = vadd.xlane.f32.xlu0 %v2072
        %v2074 = vpop.xlane.xlu0 %2073
        %v2075 = vadd.f32 %v1986, %v1987
        %v2076 = vadd.f32 %v2075, %v1988
        %v2077 = vadd.f32 %v2076, %v1989
        %2078 = vadd.xlane.f32.xlu0 %v2077
        %v2079 = vpop.xlane.xlu0 %2078
        %v2080 = vadd.f32 %v1990, %v1991
        %v2081 = vadd.f32 %v2080, %v1992
        %v2082 = vadd.f32 %v2081, %v1993
        %2083 = vadd.xlane.f32.xlu0 %v2082
        %v2084 = vpop.xlane.xlu0 %2083
        %v2085 = vadd.f32 %v1994, %v1995
        %v2086 = vadd.f32 %v2085, %v1996
        %v2087 = vadd.f32 %v2086, %v1997
        %2088 = vadd.xlane.f32.xlu0 %v2087
        %v2089 = vpop.xlane.xlu0 %2088
        %v2090 = vadd.f32 %v1998, %v1999
        %v2091 = vadd.f32 %v2090, %v2000
        %v2092 = vadd.f32 %v2091, %v2001
        %2093 = vadd.xlane.f32.xlu0 %v2092
        %v2094 = vpop.xlane.xlu0 %2093
        %v2095 = vadd.f32 %v2002, %v2003
        %v2096 = vadd.f32 %v2095, %v2004
        %v2097 = vadd.f32 %v2096, %v2005
        %2098 = vadd.xlane.f32.xlu0 %v2097
        %v2099 = vpop.xlane.xlu0 %2098
        %v2100 = vadd.f32 %v2006, %v2007
        %v2101 = vadd.f32 %v2100, %v2008
        %v2102 = vadd.f32 %v2101, %v2009
        %2103 = vadd.xlane.f32.xlu0 %v2102
        %v2104 = vpop.xlane.xlu0 %2103
        %v2105 = vadd.f32 %v2010, %v2011
        %v2106 = vadd.f32 %v2105, %v2012
        %v2107 = vadd.f32 %v2106, %v2013
        %2108 = vadd.xlane.f32.xlu0 %v2107
        %v2109 = vpop.xlane.xlu0 %2108
        %v2110 = vadd.f32 %v2014, %v2034
        %v2111 = vadd.f32 %v2015, %v2039
        %v2112 = vadd.f32 %v2016, %v2044
        %v2113 = vadd.f32 %v2017, %v2049
        %v2114 = vadd.f32 %v2018, %v2054
        %v2115 = vadd.f32 %v2019, %v2059
        %v2116 = vadd.f32 %v2020, %v2064
        %v2117 = vadd.f32 %v2021, %v2069
        %v2118 = vadd.f32 %v2022, %v2074
        %v2119 = vadd.f32 %v2023, %v2079
        %v2120 = vadd.f32 %v2024, %v2084
        %v2121 = vadd.f32 %v2025, %v2089
        %v2122 = vadd.f32 %v2026, %v2094
        %v2123 = vadd.f32 %v2027, %v2099
        %v2124 = vadd.f32 %v2028, %v2104
        %v2125 = vadd.f32 %v2029, %v2109
        %vm2126 = vcmask 7168
        %2127 = vst.msk [vmem:[%s4] sm:$0xff] %vm2126, %v2110
        %2128 = vst.msk [vmem:[%s4 + $0x8] sm:$0xff] %vm2126, %v2111
        %2129 = vst.msk [vmem:[%s4 + $0x10] sm:$0xff] %vm2126, %v2112
        %2130 = vst.msk [vmem:[%s4 + $0x18] sm:$0xff] %vm2126, %v2113
        %2131 = vst.msk [vmem:[%s4 + $0x20] sm:$0xff] %vm2126, %v2114
        %2132 = vst.msk [vmem:[%s4 + $0x28] sm:$0xff] %vm2126, %v2115
        %2133 = vst.msk [vmem:[%s4 + $0x30] sm:$0xff] %vm2126, %v2116
        %2134 = vst.msk [vmem:[%s4 + $0x38] sm:$0xff] %vm2126, %v2117
        %2135 = vst.msk [vmem:[%s4 + $0x40] sm:$0xff] %vm2126, %v2118
        %2136 = vst.msk [vmem:[%s4 + $0x48] sm:$0xff] %vm2126, %v2119
        %2137 = vst.msk [vmem:[%s4 + $0x50] sm:$0xff] %vm2126, %v2120
        %2138 = vst.msk [vmem:[%s4 + $0x58] sm:$0xff] %vm2126, %v2121
        %2139 = vst.msk [vmem:[%s4 + $0x60] sm:$0xff] %vm2126, %v2122
        %2140 = vst.msk [vmem:[%s4 + $0x68] sm:$0xff] %vm2126, %v2123
        %2141 = vst.msk [vmem:[%s4 + $0x70] sm:$0xff] %vm2126, %v2124
        %2142 = vst.msk [vmem:[%s4 + $0x78] sm:$0xff] %vm2126, %v2125
        %v2143 = vld [vmem:[%s5] sm:$0xff]
        %v2144 = vld [vmem:[%s5 + $0x8] sm:$0xff]
        %v2145 = vld [vmem:[%s5 + $0x10] sm:$0xff]
        %v2146 = vld [vmem:[%s5 + $0x18] sm:$0xff]
        %v2147 = vld [vmem:[%s5 + $0x20] sm:$0xff]
        %v2148 = vld [vmem:[%s5 + $0x28] sm:$0xff]
        %v2149 = vld [vmem:[%s5 + $0x30] sm:$0xff]
        %v2150 = vld [vmem:[%s5 + $0x38] sm:$0xff]
        %v2151 = vld [vmem:[%s5 + $0x40] sm:$0xff]
        %v2152 = vld [vmem:[%s5 + $0x48] sm:$0xff]
        %v2153 = vld [vmem:[%s5 + $0x50] sm:$0xff]
        %v2154 = vld [vmem:[%s5 + $0x58] sm:$0xff]
        %v2155 = vld [vmem:[%s5 + $0x60] sm:$0xff]
        %v2156 = vld [vmem:[%s5 + $0x68] sm:$0xff]
        %v2157 = vld [vmem:[%s5 + $0x70] sm:$0xff]
        %v2158 = vld [vmem:[%s5 + $0x78] sm:$0xff]
        %2159 = vmatprep.subr.mxu0 %v2011
        %2160 = vmatpush1.xpose.msra.mxu0 %v2010
        %2161 = vmatprep.subr.mxu0 %v2007
        %2162 = vmatpush1.xpose.msra.mxu0 %v2006
        %2163 = vmatprep.subr.mxu0 %v2003
        %2164 = vmatpush1.xpose.msra.mxu0 %v2002
        %2165 = vmatprep.subr.mxu0 %v1999
        %2166 = vmatpush1.xpose.msra.mxu0 %v1998
        %2167 = vmatprep.subr.mxu0 %v1995
        %2168 = vmatpush1.xpose.msra.mxu0 %v1994
        %2169 = vmatprep.subr.mxu0 %v1991
        %2170 = vmatpush1.xpose.msra.mxu0 %v1990
        %2171 = vmatprep.subr.mxu0 %v1987
        %2172 = vmatpush1.xpose.msra.mxu0 %v1986
        %2173 = vmatprep.subr.mxu0 %v1983
        %2174 = vmatpush1.xpose.msra.mxu0 %v1982
        %2175 = vmatprep.subr.mxu0 %v1979
        %2176 = vmatpush1.xpose.msra.mxu0 %v1978
        %2177 = vmatprep.subr.mxu0 %v1975
        %2178 = vmatpush1.xpose.msra.mxu0 %v1974
        %2179 = vmatprep.subr.mxu0 %v1971
        %2180 = vmatpush1.xpose.msra.mxu0 %v1970
        %2181 = vmatprep.subr.mxu0 %v1967
        %2182 = vmatpush1.xpose.msra.mxu0 %v1966
        %2183 = vmatprep.subr.mxu0 %v1963
        %2184 = vmatpush1.xpose.msra.mxu0 %v1962
        %2185 = vmatprep.subr.mxu0 %v1959
        %2186 = vmatpush1.xpose.msra.mxu0 %v1958
        %2187 = vmatprep.subr.mxu0 %v1955
        %2188 = vmatpush1.xpose.msra.mxu0 %v1954
        %2189 = vmatprep.subr.mxu0 %v1951
        %2190 = vmatpush1.xpose.msra.mxu0 %v1950
        %2191 = vmatprep.subr.mxu0 0.0
        %2192 = vmatpush2.xpose.msra.mxu0 0.0
        %2193 = vmatprep.subr.mxu0 0.0
        %2194 = vmatpush2.xpose.msra.mxu0 0.0
        %2195 = vmatprep.subr.mxu0 0.0
        %2196 = vmatpush2.xpose.msra.mxu0 0.0
        %2197 = vmatprep.subr.mxu0 0.0
        %2198 = vmatpush2.xpose.msra.mxu0 0.0
        %2199 = vmatprep.subr.mxu0 0.0
        %2200 = vmatpush2.xpose.msra.mxu0 0.0
        %2201 = vmatprep.subr.mxu0 0.0
        %2202 = vmatpush2.xpose.msra.mxu0 0.0
        %2203 = vmatprep.subr.mxu0 0.0
        %2204 = vmatpush2.xpose.msra.mxu0 0.0
        %2205 = vmatprep.subr.mxu0 0.0
        %2206 = vmatpush2.xpose.msra.mxu0 0.0
        %2207 = vmatprep.subr.mxu0 0.0
        %2208 = vmatpush2.xpose.msra.mxu0 0.0
        %2209 = vmatprep.subr.mxu0 0.0
        %2210 = vmatpush2.xpose.msra.mxu0 0.0
        %2211 = vmatprep.subr.mxu0 0.0
        %2212 = vmatpush2.xpose.msra.mxu0 0.0
        %2213 = vmatprep.subr.mxu0 0.0
        %2214 = vmatpush2.xpose.msra.mxu0 0.0
        %2215 = vmatprep.subr.mxu0 0.0
        %2216 = vmatpush2.xpose.msra.mxu0 0.0
        %2217 = vmatprep.subr.mxu0 0.0
        %2218 = vmatpush2.xpose.msra.mxu0 0.0
        %2219 = vmatprep.subr.mxu0 0.0
        %2220 = vmatpush2.xpose.msra.mxu0 0.0
        %2221 = vmatprep.subr.mxu0 0.0
        %2222 = vmatpush2.xpose.msra.mxu0 0.0
        %2223 = vmatprep.mubr.f32.mxu0 %v1951
        %2224 = vmatmul.mubr.f32.gmra.mxu0 %v1950
        %v2225 = vpop.f32.mrf.mxu0
        %v2226 = vadd.f32 0.0, %v2225
        %v2227 = vpop.f32.mrf.mxu0
        %2228 = vmatprep.mubr.f32.mxu0 %v1955
        %2229 = vmatmul.mubr.f32.gmra.mxu0 %v1954
        %v2230 = vpop.f32.mrf.mxu0
        %v2231 = vadd.f32 0.0, %v2230
        %v2232 = vpop.f32.mrf.mxu0
        %2233 = vmatprep.mubr.f32.mxu0 %v1959
        %2234 = vmatmul.mubr.f32.gmra.mxu0 %v1958
        %v2235 = vpop.f32.mrf.mxu0
        %v2236 = vadd.f32 0.0, %v2235
        %v2237 = vpop.f32.mrf.mxu0
        %2238 = vmatprep.mubr.f32.mxu0 %v1963
        %2239 = vmatmul.mubr.f32.gmra.mxu0 %v1962
        %v2240 = vpop.f32.mrf.mxu0
        %v2241 = vadd.f32 0.0, %v2240
        %v2242 = vpop.f32.mrf.mxu0
        %2243 = vmatprep.mubr.f32.mxu0 %v1967
        %2244 = vmatmul.mubr.f32.gmra.mxu0 %v1966
        %v2245 = vpop.f32.mrf.mxu0
        %v2246 = vadd.f32 0.0, %v2245
        %v2247 = vpop.f32.mrf.mxu0
        %2248 = vmatprep.mubr.f32.mxu0 %v1971
        %2249 = vmatmul.mubr.f32.gmra.mxu0 %v1970
        %v2250 = vpop.f32.mrf.mxu0
        %v2251 = vadd.f32 0.0, %v2250
        %v2252 = vpop.f32.mrf.mxu0
        %2253 = vmatprep.mubr.f32.mxu0 %v1975
        %2254 = vmatmul.mubr.f32.gmra.mxu0 %v1974
        %v2255 = vpop.f32.mrf.mxu0
        %v2256 = vadd.f32 0.0, %v2255
        %v2257 = vpop.f32.mrf.mxu0
        %2258 = vmatprep.mubr.f32.mxu0 %v1979
        %2259 = vmatmul.mubr.f32.gmra.mxu0 %v1978
        %v2260 = vpop.f32.mrf.mxu0
        %v2261 = vadd.f32 0.0, %v2260
        %v2262 = vpop.f32.mrf.mxu0
        %2263 = vmatprep.mubr.f32.mxu0 %v1983
        %2264 = vmatmul.mubr.f32.gmra.mxu0 %v1982
        %v2265 = vpop.f32.mrf.mxu0
        %v2266 = vadd.f32 0.0, %v2265
        %v2267 = vpop.f32.mrf.mxu0
        %2268 = vmatprep.mubr.f32.mxu0 %v1987
        %2269 = vmatmul.mubr.f32.gmra.mxu0 %v1986
        %v2270 = vpop.f32.mrf.mxu0
        %v2271 = vadd.f32 0.0, %v2270
        %v2272 = vpop.f32.mrf.mxu0
        %2273 = vmatprep.mubr.f32.mxu0 %v1991
        %2274 = vmatmul.mubr.f32.gmra.mxu0 %v1990
        %v2275 = vpop.f32.mrf.mxu0
        %v2276 = vadd.f32 0.0, %v2275
        %v2277 = vpop.f32.mrf.mxu0
        %2278 = vmatprep.mubr.f32.mxu0 %v1995
        %2279 = vmatmul.mubr.f32.gmra.mxu0 %v1994
        %v2280 = vpop.f32.mrf.mxu0
        %v2281 = vadd.f32 0.0, %v2280
        %v2282 = vpop.f32.mrf.mxu0
        %2283 = vmatprep.mubr.f32.mxu0 %v1999
        %2284 = vmatmul.mubr.f32.gmra.mxu0 %v1998
        %v2285 = vpop.f32.mrf.mxu0
        %v2286 = vadd.f32 0.0, %v2285
        %v2287 = vpop.f32.mrf.mxu0
        %2288 = vmatprep.mubr.f32.mxu0 %v2003
        %2289 = vmatmul.mubr.f32.gmra.mxu0 %v2002
        %v2290 = vpop.f32.mrf.mxu0
        %v2291 = vadd.f32 0.0, %v2290
        %v2292 = vpop.f32.mrf.mxu0
        %2293 = vmatprep.mubr.f32.mxu0 %v2007
        %2294 = vmatmul.mubr.f32.gmra.mxu0 %v2006
        %v2295 = vpop.f32.mrf.mxu0
        %v2296 = vadd.f32 0.0, %v2295
        %v2297 = vpop.f32.mrf.mxu0
        %2298 = vmatprep.mubr.f32.mxu0 %v2011
        %2299 = vmatmul.mubr.f32.gmra.mxu0 %v2010
        %v2300 = vpop.f32.mrf.mxu0
        %v2301 = vadd.f32 0.0, %v2300
        %v2302 = vpop.f32.mrf.mxu0
        %2303 = vdwg.mxu0
        %2304 = vmatprep.subr.mxu0 %v2013
        %2305 = vmatpush1.xpose.msra.mxu0 %v2012
        %2306 = vmatprep.subr.mxu0 %v2009
        %2307 = vmatpush1.xpose.msra.mxu0 %v2008
        %2308 = vmatprep.subr.mxu0 %v2005
        %2309 = vmatpush1.xpose.msra.mxu0 %v2004
        %2310 = vmatprep.subr.mxu0 %v2001
        %2311 = vmatpush1.xpose.msra.mxu0 %v2000
        %2312 = vmatprep.subr.mxu0 %v1997
        %2313 = vmatpush1.xpose.msra.mxu0 %v1996
        %2314 = vmatprep.subr.mxu0 %v1993
        %2315 = vmatpush1.xpose.msra.mxu0 %v1992
        %2316 = vmatprep.subr.mxu0 %v1989
        %2317 = vmatpush1.xpose.msra.mxu0 %v1988
        %2318 = vmatprep.subr.mxu0 %v1985
        %2319 = vmatpush1.xpose.msra.mxu0 %v1984
        %2320 = vmatprep.subr.mxu0 %v1981
        %2321 = vmatpush1.xpose.msra.mxu0 %v1980
        %2322 = vmatprep.subr.mxu0 %v1977
        %2323 = vmatpush1.xpose.msra.mxu0 %v1976
        %2324 = vmatprep.subr.mxu0 %v1973
        %2325 = vmatpush1.xpose.msra.mxu0 %v1972
        %2326 = vmatprep.subr.mxu0 %v1969
        %2327 = vmatpush1.xpose.msra.mxu0 %v1968
        %2328 = vmatprep.subr.mxu0 %v1965
        %2329 = vmatpush1.xpose.msra.mxu0 %v1964
        %2330 = vmatprep.subr.mxu0 %v1961
        %2331 = vmatpush1.xpose.msra.mxu0 %v1960
        %2332 = vmatprep.subr.mxu0 %v1957
        %2333 = vmatpush1.xpose.msra.mxu0 %v1956
        %2334 = vmatprep.subr.mxu0 %v1953
        %2335 = vmatpush1.xpose.msra.mxu0 %v1952
        %2336 = vmatprep.subr.mxu0 0.0
        %2337 = vmatpush2.xpose.msra.mxu0 0.0
        %2338 = vmatprep.subr.mxu0 0.0
        %2339 = vmatpush2.xpose.msra.mxu0 0.0
        %2340 = vmatprep.subr.mxu0 0.0
        %2341 = vmatpush2.xpose.msra.mxu0 0.0
        %2342 = vmatprep.subr.mxu0 0.0
        %2343 = vmatpush2.xpose.msra.mxu0 0.0
        %2344 = vmatprep.subr.mxu0 0.0
        %2345 = vmatpush2.xpose.msra.mxu0 0.0
        %2346 = vmatprep.subr.mxu0 0.0
        %2347 = vmatpush2.xpose.msra.mxu0 0.0
        %2348 = vmatprep.subr.mxu0 0.0
        %2349 = vmatpush2.xpose.msra.mxu0 0.0
        %2350 = vmatprep.subr.mxu0 0.0
        %2351 = vmatpush2.xpose.msra.mxu0 0.0
        %2352 = vmatprep.subr.mxu0 0.0
        %2353 = vmatpush2.xpose.msra.mxu0 0.0
        %2354 = vmatprep.subr.mxu0 0.0
        %2355 = vmatpush2.xpose.msra.mxu0 0.0
        %2356 = vmatprep.subr.mxu0 0.0
        %2357 = vmatpush2.xpose.msra.mxu0 0.0
        %2358 = vmatprep.subr.mxu0 0.0
        %2359 = vmatpush2.xpose.msra.mxu0 0.0
        %2360 = vmatprep.subr.mxu0 0.0
        %2361 = vmatpush2.xpose.msra.mxu0 0.0
        %2362 = vmatprep.subr.mxu0 0.0
        %2363 = vmatpush2.xpose.msra.mxu0 0.0
        %2364 = vmatprep.subr.mxu0 0.0
        %2365 = vmatpush2.xpose.msra.mxu0 0.0
        %2366 = vmatprep.subr.mxu0 0.0
        %2367 = vmatpush2.xpose.msra.mxu0 0.0
        %2368 = vmatprep.mubr.f32.mxu0 %v1953
        %2369 = vmatmul.mubr.f32.gmra.mxu0 %v1952
        %v2370 = vpop.f32.mrf.mxu0
        %v2371 = vadd.f32 %v2226, %v2370
        %v2372 = vpop.f32.mrf.mxu0
        %2373 = vmatprep.mubr.f32.mxu0 %v1957
        %2374 = vmatmul.mubr.f32.gmra.mxu0 %v1956
        %v2375 = vpop.f32.mrf.mxu0
        %v2376 = vadd.f32 %v2231, %v2375
        %v2377 = vpop.f32.mrf.mxu0
        %2378 = vmatprep.mubr.f32.mxu0 %v1961
        %2379 = vmatmul.mubr.f32.gmra.mxu0 %v1960
        %v2380 = vpop.f32.mrf.mxu0
        %v2381 = vadd.f32 %v2236, %v2380
        %v2382 = vpop.f32.mrf.mxu0
        %2383 = vmatprep.mubr.f32.mxu0 %v1965
        %2384 = vmatmul.mubr.f32.gmra.mxu0 %v1964
        %v2385 = vpop.f32.mrf.mxu0
        %v2386 = vadd.f32 %v2241, %v2385
        %v2387 = vpop.f32.mrf.mxu0
        %2388 = vmatprep.mubr.f32.mxu0 %v1969
        %2389 = vmatmul.mubr.f32.gmra.mxu0 %v1968
        %v2390 = vpop.f32.mrf.mxu0
        %v2391 = vadd.f32 %v2246, %v2390
        %v2392 = vpop.f32.mrf.mxu0
        %2393 = vmatprep.mubr.f32.mxu0 %v1973
        %2394 = vmatmul.mubr.f32.gmra.mxu0 %v1972
        %v2395 = vpop.f32.mrf.mxu0
        %v2396 = vadd.f32 %v2251, %v2395
        %v2397 = vpop.f32.mrf.mxu0
        %2398 = vmatprep.mubr.f32.mxu0 %v1977
        %2399 = vmatmul.mubr.f32.gmra.mxu0 %v1976
        %v2400 = vpop.f32.mrf.mxu0
        %v2401 = vadd.f32 %v2256, %v2400
        %v2402 = vpop.f32.mrf.mxu0
        %2403 = vmatprep.mubr.f32.mxu0 %v1981
        %2404 = vmatmul.mubr.f32.gmra.mxu0 %v1980
        %v2405 = vpop.f32.mrf.mxu0
        %v2406 = vadd.f32 %v2261, %v2405
        %v2407 = vpop.f32.mrf.mxu0
        %2408 = vmatprep.mubr.f32.mxu0 %v1985
        %2409 = vmatmul.mubr.f32.gmra.mxu0 %v1984
        %v2410 = vpop.f32.mrf.mxu0
        %v2411 = vadd.f32 %v2266, %v2410
        %v2412 = vpop.f32.mrf.mxu0
        %2413 = vmatprep.mubr.f32.mxu0 %v1989
        %2414 = vmatmul.mubr.f32.gmra.mxu0 %v1988
        %v2415 = vpop.f32.mrf.mxu0
        %v2416 = vadd.f32 %v2271, %v2415
        %v2417 = vpop.f32.mrf.mxu0
        %2418 = vmatprep.mubr.f32.mxu0 %v1993
        %2419 = vmatmul.mubr.f32.gmra.mxu0 %v1992
        %v2420 = vpop.f32.mrf.mxu0
        %v2421 = vadd.f32 %v2276, %v2420
        %v2422 = vpop.f32.mrf.mxu0
        %2423 = vmatprep.mubr.f32.mxu0 %v1997
        %2424 = vmatmul.mubr.f32.gmra.mxu0 %v1996
        %v2425 = vpop.f32.mrf.mxu0
        %v2426 = vadd.f32 %v2281, %v2425
        %v2427 = vpop.f32.mrf.mxu0
        %2428 = vmatprep.mubr.f32.mxu0 %v2001
        %2429 = vmatmul.mubr.f32.gmra.mxu0 %v2000
        %v2430 = vpop.f32.mrf.mxu0
        %v2431 = vadd.f32 %v2286, %v2430
        %v2432 = vpop.f32.mrf.mxu0
        %2433 = vmatprep.mubr.f32.mxu0 %v2005
        %2434 = vmatmul.mubr.f32.gmra.mxu0 %v2004
        %v2435 = vpop.f32.mrf.mxu0
        %v2436 = vadd.f32 %v2291, %v2435
        %v2437 = vpop.f32.mrf.mxu0
        %2438 = vmatprep.mubr.f32.mxu0 %v2009
        %2439 = vmatmul.mubr.f32.gmra.mxu0 %v2008
        %v2440 = vpop.f32.mrf.mxu0
        %v2441 = vadd.f32 %v2296, %v2440
        %v2442 = vpop.f32.mrf.mxu0
        %2443 = vmatprep.mubr.f32.mxu0 %v2013
        %2444 = vmatmul.mubr.f32.gmra.mxu0 %v2012
        %v2445 = vpop.f32.mrf.mxu0
        %v2446 = vadd.f32 %v2301, %v2445
        %v2447 = vpop.f32.mrf.mxu0
        %2448 = vdwg.mxu0
        %v2449 = vadd.f32 %v2143, %v2371
        %v2450 = vadd.f32 %v2144, %v2376
        %v2451 = vadd.f32 %v2145, %v2381
        %v2452 = vadd.f32 %v2146, %v2386
        %v2453 = vadd.f32 %v2147, %v2391
        %v2454 = vadd.f32 %v2148, %v2396
        %v2455 = vadd.f32 %v2149, %v2401
        %v2456 = vadd.f32 %v2150, %v2406
        %v2457 = vadd.f32 %v2151, %v2411
        %v2458 = vadd.f32 %v2152, %v2416
        %v2459 = vadd.f32 %v2153, %v2421
        %v2460 = vadd.f32 %v2154, %v2426
        %v2461 = vadd.f32 %v2155, %v2431
        %v2462 = vadd.f32 %v2156, %v2436
        %v2463 = vadd.f32 %v2157, %v2441
        %v2464 = vadd.f32 %v2158, %v2446
        %2465 = vst [vmem:[%s5] sm:$0xff] %v2449
        %2466 = vst [vmem:[%s5 + $0x8] sm:$0xff] %v2450
        %2467 = vst [vmem:[%s5 + $0x10] sm:$0xff] %v2451
        %2468 = vst [vmem:[%s5 + $0x18] sm:$0xff] %v2452
        %2469 = vst [vmem:[%s5 + $0x20] sm:$0xff] %v2453
        %2470 = vst [vmem:[%s5 + $0x28] sm:$0xff] %v2454
        %2471 = vst [vmem:[%s5 + $0x30] sm:$0xff] %v2455
        %2472 = vst [vmem:[%s5 + $0x38] sm:$0xff] %v2456
        %2473 = vst [vmem:[%s5 + $0x40] sm:$0xff] %v2457
        %2474 = vst [vmem:[%s5 + $0x48] sm:$0xff] %v2458
        %2475 = vst [vmem:[%s5 + $0x50] sm:$0xff] %v2459
        %2476 = vst [vmem:[%s5 + $0x58] sm:$0xff] %v2460
        %2477 = vst [vmem:[%s5 + $0x60] sm:$0xff] %v2461
        %2478 = vst [vmem:[%s5 + $0x68] sm:$0xff] %v2462
        %2479 = vst [vmem:[%s5 + $0x70] sm:$0xff] %v2463
        %2480 = vst [vmem:[%s5 + $0x78] sm:$0xff] %v2464
        // Predicated region
        $region173: #{fused_bn_add_relu_conv_bn.4} parent=159 // pred_check
          %p2481 = pneg %p140
        $region174: #{fused_bn_add_relu_conv_bn.4} parent=159 // pred_check_branch
          %2483 = sbr.rel (%p2481) target = $region176
        $region175: #{fused_bn_add_relu_conv_bn.4} parent=159 // pred_region
          _
        $region176: #{fused_bn_add_relu_conv_bn.4} parent=159 // pred_fallthru
          _
        // Predicated region
        $region177: #{fused_bn_add_relu_conv_bn.4} parent=159 // pred_check
          %p2484 = pneg %p161
        $region178: #{fused_bn_add_relu_conv_bn.4} parent=159 // pred_check_branch
          %2486 = sbr.rel (%p2484) target = $region180
        $region179: #{fused_bn_add_relu_conv_bn.4} parent=159 // pred_region
          _
        $region180: #{fused_bn_add_relu_conv_bn.4} parent=159 // pred_fallthru
          _
        // Predicated region
        $region181: #{fused_bn_add_relu_conv_bn.4} parent=159 // pred_check
          %p2487 = pneg %p140
        $region182: #{fused_bn_add_relu_conv_bn.4} parent=159 // pred_check_branch
          %2489 = sbr.rel (%p2487) target = $region184
        $region183: #{fused_bn_add_relu_conv_bn.4} parent=159 // pred_region
          _
        $region184: #{fused_bn_add_relu_conv_bn.4} parent=159 // pred_fallthru
          _
        // Predicated region
        $region185: #{fused_bn_add_relu_conv_bn.4} parent=159 // pred_check
          %p2490 = pneg %p161
        $region186: #{fused_bn_add_relu_conv_bn.4} parent=159 // pred_check_branch
          %2492 = sbr.rel (%p2490) target = $region188
        $region187: #{fused_bn_add_relu_conv_bn.4} parent=159 // pred_region
          _
        $region188: #{fused_bn_add_relu_conv_bn.4} parent=159 // pred_fallthru
          _
      $region160: #{fused_bn_add_relu_conv_bn.4} parent=5 // pred_fallthru
        _
      %p2493 = scmp.le.s32.totalorder 2, %s12
      // Predicated region
      $region189: #{fused_bn_add_relu_conv_bn.4} parent=5 // pred_check
        %p2494 = pneg %p2493
      $region190: #{fused_bn_add_relu_conv_bn.4} parent=5 // pred_check_branch
        %2496 = sbr.rel (%p2494) target = $region192
      $region191: #{fused_bn_add_relu_conv_bn.4} parent=5 // pred_region
        %s2497 = ssub.s32 %s12, 2
      $region192: #{fused_bn_add_relu_conv_bn.4} parent=5 // pred_fallthru
        _
    $region6: #{fused_bn_add_relu_conv_bn.4} parent=1 // loop_footer
      %s16 = sadd.s32 1, %s12
    $region7: #{fused_bn_add_relu_conv_bn.4} parent=1 // loop_footer_branch
      %11 = sbr.rel target = $region3
    $region8: #{fused_bn_add_relu_conv_bn.4} parent=1 // loop_exit
      _

// kernel: fused_bn_add_relu_conv_bn.5
$region0: #{fused_bn_add_relu_conv_bn.5}
  #allocation0 [shape = 'u32[]', space=smem, size = 0x4, offset = 0x4, fixed_abs, tag = 'smem constant byte address 0x4 - core index']
  #allocation1 [shape = 'u32[144,128]{1,0:T(1,128)}', space=vmem, size = 0x12000, scoped, tag = 'internal scratch']
  %s0 = inlined_call_operand.vmem [shape: f32[1,128,784], index: 0, kind: input, shape index: {}]
  %s1 = inlined_call_operand.vmem [shape: f32[1,128,784], index: 1, kind: input, shape index: {}]
  %s2 = inlined_call_operand.vmem [shape: f32[128,1], index: 2, kind: input, shape index: {}]
  %s3 = inlined_call_operand.vmem [shape: f32[128,1], index: 3, kind: input, shape index: {}]
  %s4 = inlined_call_operand.vmem [shape: f32[128,128], index: 4, kind: input, shape index: {}]
  %s5 = inlined_call_operand.vmem [shape: f32[128,1], index: 5, kind: input, shape index: {}]
  %s6 = inlined_call_operand.vmem [shape: f32[1,128,784], index: 6, kind: output, shape index: {}]
  %s7 = sld [smem:[#allocation0]]
  $region251: #{fused_bn_add_relu_conv_bn.5} parent=0
    _
  %s9 = ssub.s32 1, %s7
  %s10 = scalar_select 0, %s9, %s7
  $region1: #{fused_bn_add_relu_conv_bn.5} parent=0
    #allocation2 [shape = 'u8[524288]{0}', space=vmem, size = 0x80000, scoped, tag = 'input window, operand 0']
    #allocation3 [shape = 'u8[524288]{0}', space=vmem, size = 0x80000, scoped, tag = 'input window, operand 1']
    #allocation4 [shape = 'u8[524288]{0}', space=vmem, size = 0x80000, scoped, tag = 'output window, operand 0']
    loop: start=0, step=1, limit=4
    $region2: #{fused_bn_add_relu_conv_bn.5} parent=1 // loop_pre_header
      _
    $region3: #{fused_bn_add_relu_conv_bn.5} parent=1 // loop_header
      %s12 = sphi 0, %s16
      %p13 = scmp.ge.s32.totalorder %s12, 4
      %s19 = sphi 0, %s31
      %s20 = sphi 0, %s27
      %s21 = sphi 0, %s19
      %s22 = sphi 0, %s20
      %s23 = sphi 0, %s21
      %s24 = sphi 0, %s22
      %s36 = sphi 0, %s38
      %s39 = sphi 0, %s36
      %s40 = sphi 0, %s39
      %s56 = sphi 0, %s40
      %s64 = sphi 0, %s66
      %s67 = sphi 0, %s64
      %s68 = sphi 0, %s67
      %s84 = sphi 0, %s68
      %s88 = sphi 0, %s88
      %s90 = sphi 0, %s88
      %s91 = sphi 0, %s90
      %s105 = sphi 0, %s91
      %s109 = sphi 0, %s109
      %s111 = sphi 0, %s109
      %s112 = sphi 0, %s111
      %s126 = sphi 0, %s112
      %s130 = sphi 0, %s130
      %s132 = sphi 0, %s130
      %s133 = sphi 0, %s132
      %s147 = sphi 0, %s133
      %s151 = sphi 0, %s151
      %s153 = sphi 0, %s151
      %s154 = sphi 0, %s153
      %s168 = sphi 0, %s154
      %s176 = sphi 0, %s178
      %s179 = sphi 0, %s176
      %s180 = sphi 0, %s179
      %s196 = sphi 0, %s180
    $region4: #{fused_bn_add_relu_conv_bn.5} parent=1 // loop_header_branch
      %15 = sbr.rel (%p13) target = $region8
    $region5: #{fused_bn_add_relu_conv_bn.5} parent=1 // loop_body
      %s17 = ssub.s32 %s12, 1
      %s18 = ssub.s32 %s12, 2
      %s25 = sadd.s32 1, %s20
      %p26 = scmp.ge.s32.totalorder %s25, 2
      %s27 = scalar_select %p26, 0, %s25
      %s28 = sadd.s32 1, %s19
      %s29 = scalar_select %p26, %s28, %s19
      %p30 = scmp.ge.s32.totalorder %s29, 1
      %s31 = scalar_select %p30, 0, %s29
      %s32 = ssub.s32 %s19, %s31
      %s33 = ssub.s32 %s20, %s27
      %s34 = sor.u32 %s32, %s33
      %p35 = scmp.eq.s32.totalorder %s34, 0
      %s37 = sadd.s32 %s36, 1
      %s38 = scalar_select %p35, %s36, %s37
      %p41 = pneg %p35
      %p42 = scmp.eq.s32.totalorder %s12, 1
      %p43 = por %p41, %p42
      %p44 = scmp.ne.s32.totalorder %s36, %s39
      %p45 = scmp.eq.s32.totalorder %s12, 0
      %p46 = por %p44, %p45
      %p47 = scmp.ne.s32.totalorder %s36, %s39
      %p48 = scmp.eq.s32.totalorder %s17, 1
      %p49 = por %p47, %p48
      %p50 = scmp.ne.s32.totalorder %s39, %s40
      %p51 = scmp.eq.s32.totalorder %s17, 0
      %p52 = por %p50, %p51
      %p53 = scmp.ne.s32.totalorder %s39, %s40
      %p54 = scmp.eq.s32.totalorder %s18, 1
      %p55 = por %p53, %p54
      %p57 = scmp.ne.s32.totalorder %s40, %s56
      %p58 = scmp.eq.s32.totalorder %s18, 0
      %p59 = por %p57, %p58
      %s60 = ssub.s32 %s19, %s31
      %s61 = ssub.s32 %s20, %s27
      %s62 = sor.u32 %s60, %s61
      %p63 = scmp.eq.s32.totalorder %s62, 0
      %s65 = sadd.s32 %s64, 1
      %s66 = scalar_select %p63, %s64, %s65
      %p69 = pneg %p63
      %p70 = scmp.eq.s32.totalorder %s12, 1
      %p71 = por %p69, %p70
      %p72 = scmp.ne.s32.totalorder %s64, %s67
      %p73 = scmp.eq.s32.totalorder %s12, 0
      %p74 = por %p72, %p73
      %p75 = scmp.ne.s32.totalorder %s64, %s67
      %p76 = scmp.eq.s32.totalorder %s17, 1
      %p77 = por %p75, %p76
      %p78 = scmp.ne.s32.totalorder %s67, %s68
      %p79 = scmp.eq.s32.totalorder %s17, 0
      %p80 = por %p78, %p79
      %p81 = scmp.ne.s32.totalorder %s67, %s68
      %p82 = scmp.eq.s32.totalorder %s18, 1
      %p83 = por %p81, %p82
      %p85 = scmp.ne.s32.totalorder %s68, %s84
      %p86 = scmp.eq.s32.totalorder %s18, 0
      %p87 = por %p85, %p86
      %s89 = sadd.s32 %s88, 1
      %p92 = scmp.eq.s32.totalorder %s12, 1
      %p93 = scmp.ne.s32.totalorder %s88, %s90
      %p94 = scmp.eq.s32.totalorder %s12, 0
      %p95 = por %p93, %p94
      %p96 = scmp.ne.s32.totalorder %s88, %s90
      %p97 = scmp.eq.s32.totalorder %s17, 1
      %p98 = por %p96, %p97
      %p99 = scmp.ne.s32.totalorder %s90, %s91
      %p100 = scmp.eq.s32.totalorder %s17, 0
      %p101 = por %p99, %p100
      %p102 = scmp.ne.s32.totalorder %s90, %s91
      %p103 = scmp.eq.s32.totalorder %s18, 1
      %p104 = por %p102, %p103
      %p106 = scmp.ne.s32.totalorder %s91, %s105
      %p107 = scmp.eq.s32.totalorder %s18, 0
      %p108 = por %p106, %p107
      %s110 = sadd.s32 %s109, 1
      %p113 = scmp.eq.s32.totalorder %s12, 1
      %p114 = scmp.ne.s32.totalorder %s109, %s111
      %p115 = scmp.eq.s32.totalorder %s12, 0
      %p116 = por %p114, %p115
      %p117 = scmp.ne.s32.totalorder %s109, %s111
      %p118 = scmp.eq.s32.totalorder %s17, 1
      %p119 = por %p117, %p118
      %p120 = scmp.ne.s32.totalorder %s111, %s112
      %p121 = scmp.eq.s32.totalorder %s17, 0
      %p122 = por %p120, %p121
      %p123 = scmp.ne.s32.totalorder %s111, %s112
      %p124 = scmp.eq.s32.totalorder %s18, 1
      %p125 = por %p123, %p124
      %p127 = scmp.ne.s32.totalorder %s112, %s126
      %p128 = scmp.eq.s32.totalorder %s18, 0
      %p129 = por %p127, %p128
      %s131 = sadd.s32 %s130, 1
      %p134 = scmp.eq.s32.totalorder %s12, 1
      %p135 = scmp.ne.s32.totalorder %s130, %s132
      %p136 = scmp.eq.s32.totalorder %s12, 0
      %p137 = por %p135, %p136
      %p138 = scmp.ne.s32.totalorder %s130, %s132
      %p139 = scmp.eq.s32.totalorder %s17, 1
      %p140 = por %p138, %p139
      %p141 = scmp.ne.s32.totalorder %s132, %s133
      %p142 = scmp.eq.s32.totalorder %s17, 0
      %p143 = por %p141, %p142
      %p144 = scmp.ne.s32.totalorder %s132, %s133
      %p145 = scmp.eq.s32.totalorder %s18, 1
      %p146 = por %p144, %p145
      %p148 = scmp.ne.s32.totalorder %s133, %s147
      %p149 = scmp.eq.s32.totalorder %s18, 0
      %p150 = por %p148, %p149
      %s152 = sadd.s32 %s151, 1
      %p155 = scmp.eq.s32.totalorder %s12, 1
      %p156 = scmp.ne.s32.totalorder %s151, %s153
      %p157 = scmp.eq.s32.totalorder %s12, 0
      %p158 = por %p156, %p157
      %p159 = scmp.ne.s32.totalorder %s151, %s153
      %p160 = scmp.eq.s32.totalorder %s17, 1
      %p161 = por %p159, %p160
      %p162 = scmp.ne.s32.totalorder %s153, %s154
      %p163 = scmp.eq.s32.totalorder %s17, 0
      %p164 = por %p162, %p163
      %p165 = scmp.ne.s32.totalorder %s153, %s154
      %p166 = scmp.eq.s32.totalorder %s18, 1
      %p167 = por %p165, %p166
      %p169 = scmp.ne.s32.totalorder %s154, %s168
      %p170 = scmp.eq.s32.totalorder %s18, 0
      %p171 = por %p169, %p170
      %s172 = ssub.s32 %s19, %s31
      %s173 = ssub.s32 %s20, %s27
      %s174 = sor.u32 %s172, %s173
      %p175 = scmp.eq.s32.totalorder %s174, 0
      %s177 = sadd.s32 %s176, 1
      %s178 = scalar_select %p175, %s176, %s177
      %p181 = pneg %p175
      %p182 = scmp.eq.s32.totalorder %s12, 1
      %p183 = por %p181, %p182
      %p184 = scmp.ne.s32.totalorder %s176, %s179
      %p185 = scmp.eq.s32.totalorder %s12, 0
      %p186 = por %p184, %p185
      %p187 = scmp.ne.s32.totalorder %s176, %s179
      %p188 = scmp.eq.s32.totalorder %s17, 1
      %p189 = por %p187, %p188
      %p190 = scmp.ne.s32.totalorder %s179, %s180
      %p191 = scmp.eq.s32.totalorder %s17, 0
      %p192 = por %p190, %p191
      %p193 = scmp.ne.s32.totalorder %s179, %s180
      %p194 = scmp.eq.s32.totalorder %s18, 1
      %p195 = por %p193, %p194
      %p197 = scmp.ne.s32.totalorder %s180, %s196
      %p198 = scmp.eq.s32.totalorder %s18, 0
      %p199 = por %p197, %p198
      %p200 = scmp.le.s32.totalorder 1, %s12
      %p201 = scmp.lt.s32.totalorder %s12, 3
      %p202 = pnand %p200, %p201
      %p203 = pneg %p202
      // Predicated region
      $region9: #{fused_bn_add_relu_conv_bn.5} parent=5 // pred_check
        _
      $region10: #{fused_bn_add_relu_conv_bn.5} parent=5 // pred_check_branch
        %205 = sbr.rel (%p202) target = $region12
      $region11: #{fused_bn_add_relu_conv_bn.5} parent=5 // pred_region
        %s206 = ssub.s32 %s12, 1
        // Predicated region
        $region13: #{fused_bn_add_relu_conv_bn.5} parent=11 // pred_check
          %p207 = pneg %p101
        $region14: #{fused_bn_add_relu_conv_bn.5} parent=11 // pred_check_branch
          %209 = sbr.rel (%p207) target = $region16
        $region15: #{fused_bn_add_relu_conv_bn.5} parent=11 // pred_region
          _
        $region16: #{fused_bn_add_relu_conv_bn.5} parent=11 // pred_fallthru
          _
        // Predicated region
        $region17: #{fused_bn_add_relu_conv_bn.5} parent=11 // pred_check
          %p210 = pneg %p122
        $region18: #{fused_bn_add_relu_conv_bn.5} parent=11 // pred_check_branch
          %212 = sbr.rel (%p210) target = $region20
        $region19: #{fused_bn_add_relu_conv_bn.5} parent=11 // pred_region
          _
        $region20: #{fused_bn_add_relu_conv_bn.5} parent=11 // pred_fallthru
          _
        // Predicated region
        $region21: #{fused_bn_add_relu_conv_bn.5} parent=11 // pred_check
          %p213 = pneg %p143
        $region22: #{fused_bn_add_relu_conv_bn.5} parent=11 // pred_check_branch
          %215 = sbr.rel (%p213) target = $region24
        $region23: #{fused_bn_add_relu_conv_bn.5} parent=11 // pred_region
          _
        $region24: #{fused_bn_add_relu_conv_bn.5} parent=11 // pred_fallthru
          _
        // Predicated region
        $region25: #{fused_bn_add_relu_conv_bn.5} parent=11 // pred_check
          %p216 = pneg %p164
        $region26: #{fused_bn_add_relu_conv_bn.5} parent=11 // pred_check_branch
          %218 = sbr.rel (%p216) target = $region28
        $region27: #{fused_bn_add_relu_conv_bn.5} parent=11 // pred_region
          _
        $region28: #{fused_bn_add_relu_conv_bn.5} parent=11 // pred_fallthru
          _
      $region12: #{fused_bn_add_relu_conv_bn.5} parent=5 // pred_fallthru
        _
      %p219 = scmp.lt.s32.totalorder %s12, 2
      // Predicated region
      $region29: #{fused_bn_add_relu_conv_bn.5} parent=5 // pred_check
        %p220 = pneg %p219
      $region30: #{fused_bn_add_relu_conv_bn.5} parent=5 // pred_check_branch
        %222 = sbr.rel (%p220) target = $region32
      $region31: #{fused_bn_add_relu_conv_bn.5} parent=5 // pred_region
        // Predicated region
        $region33: #{fused_bn_add_relu_conv_bn.5} parent=31 // pred_check
          %p223 = pneg %p46
        $region34: #{fused_bn_add_relu_conv_bn.5} parent=31 // pred_check_branch
          %225 = sbr.rel (%p223) target = $region36
        $region35: #{fused_bn_add_relu_conv_bn.5} parent=31 // pred_region
          %s226 = sand.u32 %s36, 1
          %s227 = sand.u32 %s36, 1
          %s228 = smul.addr %s227, 512
          %s229 = scalar_lea.vmem [#allocation2], %s228
          %s230 = smul.u32 4, %s20
          %s231 = ssub.s32 7, %s230
          %p232 = scmp.lt.s32.totalorder %s231, 4
          %s233 = scalar_select %p232, %s231, 4
          %s234 = smul.u32 2048, %s233
          %p235 = scmp.ne.s32.totalorder 0, %s234
          %s236 = smul.addr %s19, 112
          %s237 = sadd.s32 %s230, %s236
          %s238 = smul.addr %s237, 8
          %s239 = scalar_lea.vmem %s0, %s238
          %s240 = smul.u32 %s233, 8
          // Predicated region
          $region37: #{fused_bn_add_relu_conv_bn.5} parent=35 // pred_check
            %p241 = pneg %p235
          $region38: #{fused_bn_add_relu_conv_bn.5} parent=35 // pred_check_branch
            %243 = sbr.rel (%p241) target = $region40
          $region39: #{fused_bn_add_relu_conv_bn.5} parent=35 // pred_region
            %p244 = scmp.lt.u32.totalorder %s240, 8
            %p245 = pneg %p244
            // Predicated region
            $region41: #{fused_bn_add_relu_conv_bn.5} parent=39 // pred_check
              _
            $region42: #{fused_bn_add_relu_conv_bn.5} parent=39 // pred_check_branch
              %247 = sbr.rel (%p244) target = $region44
            $region43: #{fused_bn_add_relu_conv_bn.5} parent=39 // pred_region
              %s293 = sand.u32 %s240, 7
              %p294 = scmp.eq.s32.totalorder %s293, 0
              // Predicated region
              $region56: #{fused_bn_add_relu_conv_bn.5} parent=43 // pred_check
                %p295 = pneg %p294
              $region57: #{fused_bn_add_relu_conv_bn.5} parent=43 // pred_check_branch
                %297 = sbr.rel (%p295) target = $region59
              $region58: #{fused_bn_add_relu_conv_bn.5} parent=43 // pred_region
                %s298 = sshrl.u32 %s240, 3
                %s299 = sshrl.u32 %s298, 2
                // While loop
                $region60: #{fused_bn_add_relu_conv_bn.5} parent=58 // loop_pre_header
                  _
                $region61: #{fused_bn_add_relu_conv_bn.5} parent=58 // loop_header
                  %s303 = sphi 0, %s305
                  %p304 = scmp.ge.s32.totalorder %s303, %s299
                  %s308 = sphi 0, %s441
                  %s309 = sphi %s239, %s444
                  %s310 = sphi %s229, %s445
                $region62: #{fused_bn_add_relu_conv_bn.5} parent=58 // loop_header_branch
                  %307 = sbr.rel (%p304) target = $region66
                $region63: #{fused_bn_add_relu_conv_bn.5} parent=58 // loop_body
                  %v311 = vld [vmem:[%s309] sm:$0xff]
                  %312 = vst [vmem:[%s310] sm:$0xff] %v311
                  %v313 = vld [vmem:[%s309 + $0x8] sm:$0xff]
                  %314 = vst [vmem:[%s310 + $0x8] sm:$0xff] %v313
                  %v315 = vld [vmem:[%s309 + $0x10] sm:$0xff]
                  %316 = vst [vmem:[%s310 + $0x10] sm:$0xff] %v315
                  %v317 = vld [vmem:[%s309 + $0x18] sm:$0xff]
                  %318 = vst [vmem:[%s310 + $0x18] sm:$0xff] %v317
                  %v319 = vld [vmem:[%s309 + $0x38] sm:$0xff]
                  %320 = vst [vmem:[%s310 + $0x20] sm:$0xff] %v319
                  %v321 = vld [vmem:[%s309 + $0x40] sm:$0xff]
                  %322 = vst [vmem:[%s310 + $0x28] sm:$0xff] %v321
                  %v323 = vld [vmem:[%s309 + $0x48] sm:$0xff]
                  %324 = vst [vmem:[%s310 + $0x30] sm:$0xff] %v323
                  %v325 = vld [vmem:[%s309 + $0x50] sm:$0xff]
                  %326 = vst [vmem:[%s310 + $0x38] sm:$0xff] %v325
                  %v327 = vld [vmem:[%s309 + $0x70] sm:$0xff]
                  %328 = vst [vmem:[%s310 + $0x40] sm:$0xff] %v327
                  %v329 = vld [vmem:[%s309 + $0x78] sm:$0xff]
                  %330 = vst [vmem:[%s310 + $0x48] sm:$0xff] %v329
                  %v331 = vld [vmem:[%s309 + $0x80] sm:$0xff]
                  %332 = vst [vmem:[%s310 + $0x50] sm:$0xff] %v331
                  %v333 = vld [vmem:[%s309 + $0x88] sm:$0xff]
                  %334 = vst [vmem:[%s310 + $0x58] sm:$0xff] %v333
                  %v335 = vld [vmem:[%s309 + $0xa8] sm:$0xff]
                  %336 = vst [vmem:[%s310 + $0x60] sm:$0xff] %v335
                  %v337 = vld [vmem:[%s309 + $0xb0] sm:$0xff]
                  %338 = vst [vmem:[%s310 + $0x68] sm:$0xff] %v337
                  %v339 = vld [vmem:[%s309 + $0xb8] sm:$0xff]
                  %340 = vst [vmem:[%s310 + $0x70] sm:$0xff] %v339
                  %v341 = vld [vmem:[%s309 + $0xc0] sm:$0xff]
                  %342 = vst [vmem:[%s310 + $0x78] sm:$0xff] %v341
                  %v343 = vld [vmem:[%s309 + $0xe0] sm:$0xff]
                  %344 = vst [vmem:[%s310 + $0x80] sm:$0xff] %v343
                  %v345 = vld [vmem:[%s309 + $0xe8] sm:$0xff]
                  %346 = vst [vmem:[%s310 + $0x88] sm:$0xff] %v345
                  %v347 = vld [vmem:[%s309 + $0xf0] sm:$0xff]
                  %348 = vst [vmem:[%s310 + $0x90] sm:$0xff] %v347
                  %v349 = vld [vmem:[%s309 + $0xf8] sm:$0xff]
                  %350 = vst [vmem:[%s310 + $0x98] sm:$0xff] %v349
                  %v351 = vld [vmem:[%s309 + $0x118] sm:$0xff]
                  %352 = vst [vmem:[%s310 + $0xa0] sm:$0xff] %v351
                  %v353 = vld [vmem:[%s309 + $0x120] sm:$0xff]
                  %354 = vst [vmem:[%s310 + $0xa8] sm:$0xff] %v353
                  %v355 = vld [vmem:[%s309 + $0x128] sm:$0xff]
                  %356 = vst [vmem:[%s310 + $0xb0] sm:$0xff] %v355
                  %v357 = vld [vmem:[%s309 + $0x130] sm:$0xff]
                  %358 = vst [vmem:[%s310 + $0xb8] sm:$0xff] %v357
                  %v359 = vld [vmem:[%s309 + $0x150] sm:$0xff]
                  %360 = vst [vmem:[%s310 + $0xc0] sm:$0xff] %v359
                  %v361 = vld [vmem:[%s309 + $0x158] sm:$0xff]
                  %362 = vst [vmem:[%s310 + $0xc8] sm:$0xff] %v361
                  %v363 = vld [vmem:[%s309 + $0x160] sm:$0xff]
                  %364 = vst [vmem:[%s310 + $0xd0] sm:$0xff] %v363
                  %v365 = vld [vmem:[%s309 + $0x168] sm:$0xff]
                  %366 = vst [vmem:[%s310 + $0xd8] sm:$0xff] %v365
                  %v367 = vld [vmem:[%s309 + $0x188] sm:$0xff]
                  %368 = vst [vmem:[%s310 + $0xe0] sm:$0xff] %v367
                  %v369 = vld [vmem:[%s309 + $0x190] sm:$0xff]
                  %370 = vst [vmem:[%s310 + $0xe8] sm:$0xff] %v369
                  %v371 = vld [vmem:[%s309 + $0x198] sm:$0xff]
                  %372 = vst [vmem:[%s310 + $0xf0] sm:$0xff] %v371
                  %v373 = vld [vmem:[%s309 + $0x1a0] sm:$0xff]
                  %374 = vst [vmem:[%s310 + $0xf8] sm:$0xff] %v373
                  %v375 = vld [vmem:[%s309 + $0x1c0] sm:$0xff]
                  %376 = vst [vmem:[%s310 + $0x100] sm:$0xff] %v375
                  %v377 = vld [vmem:[%s309 + $0x1c8] sm:$0xff]
                  %378 = vst [vmem:[%s310 + $0x108] sm:$0xff] %v377
                  %v379 = vld [vmem:[%s309 + $0x1d0] sm:$0xff]
                  %380 = vst [vmem:[%s310 + $0x110] sm:$0xff] %v379
                  %v381 = vld [vmem:[%s309 + $0x1d8] sm:$0xff]
                  %382 = vst [vmem:[%s310 + $0x118] sm:$0xff] %v381
                  %v383 = vld [vmem:[%s309 + $0x1f8] sm:$0xff]
                  %384 = vst [vmem:[%s310 + $0x120] sm:$0xff] %v383
                  %v385 = vld [vmem:[%s309 + $0x200] sm:$0xff]
                  %386 = vst [vmem:[%s310 + $0x128] sm:$0xff] %v385
                  %v387 = vld [vmem:[%s309 + $0x208] sm:$0xff]
                  %388 = vst [vmem:[%s310 + $0x130] sm:$0xff] %v387
                  %v389 = vld [vmem:[%s309 + $0x210] sm:$0xff]
                  %390 = vst [vmem:[%s310 + $0x138] sm:$0xff] %v389
                  %v391 = vld [vmem:[%s309 + $0x230] sm:$0xff]
                  %392 = vst [vmem:[%s310 + $0x140] sm:$0xff] %v391
                  %v393 = vld [vmem:[%s309 + $0x238] sm:$0xff]
                  %394 = vst [vmem:[%s310 + $0x148] sm:$0xff] %v393
                  %v395 = vld [vmem:[%s309 + $0x240] sm:$0xff]
                  %396 = vst [vmem:[%s310 + $0x150] sm:$0xff] %v395
                  %v397 = vld [vmem:[%s309 + $0x248] sm:$0xff]
                  %398 = vst [vmem:[%s310 + $0x158] sm:$0xff] %v397
                  %v399 = vld [vmem:[%s309 + $0x268] sm:$0xff]
                  %400 = vst [vmem:[%s310 + $0x160] sm:$0xff] %v399
                  %v401 = vld [vmem:[%s309 + $0x270] sm:$0xff]
                  %402 = vst [vmem:[%s310 + $0x168] sm:$0xff] %v401
                  %v403 = vld [vmem:[%s309 + $0x278] sm:$0xff]
                  %404 = vst [vmem:[%s310 + $0x170] sm:$0xff] %v403
                  %v405 = vld [vmem:[%s309 + $0x280] sm:$0xff]
                  %406 = vst [vmem:[%s310 + $0x178] sm:$0xff] %v405
                  %v407 = vld [vmem:[%s309 + $0x2a0] sm:$0xff]
                  %408 = vst [vmem:[%s310 + $0x180] sm:$0xff] %v407
                  %v409 = vld [vmem:[%s309 + $0x2a8] sm:$0xff]
                  %410 = vst [vmem:[%s310 + $0x188] sm:$0xff] %v409
                  %v411 = vld [vmem:[%s309 + $0x2b0] sm:$0xff]
                  %412 = vst [vmem:[%s310 + $0x190] sm:$0xff] %v411
                  %v413 = vld [vmem:[%s309 + $0x2b8] sm:$0xff]
                  %414 = vst [vmem:[%s310 + $0x198] sm:$0xff] %v413
                  %v415 = vld [vmem:[%s309 + $0x2d8] sm:$0xff]
                  %416 = vst [vmem:[%s310 + $0x1a0] sm:$0xff] %v415
                  %v417 = vld [vmem:[%s309 + $0x2e0] sm:$0xff]
                  %418 = vst [vmem:[%s310 + $0x1a8] sm:$0xff] %v417
                  %v419 = vld [vmem:[%s309 + $0x2e8] sm:$0xff]
                  %420 = vst [vmem:[%s310 + $0x1b0] sm:$0xff] %v419
                  %v421 = vld [vmem:[%s309 + $0x2f0] sm:$0xff]
                  %422 = vst [vmem:[%s310 + $0x1b8] sm:$0xff] %v421
                  %v423 = vld [vmem:[%s309 + $0x310] sm:$0xff]
                  %424 = vst [vmem:[%s310 + $0x1c0] sm:$0xff] %v423
                  %v425 = vld [vmem:[%s309 + $0x318] sm:$0xff]
                  %426 = vst [vmem:[%s310 + $0x1c8] sm:$0xff] %v425
                  %v427 = vld [vmem:[%s309 + $0x320] sm:$0xff]
                  %428 = vst [vmem:[%s310 + $0x1d0] sm:$0xff] %v427
                  %v429 = vld [vmem:[%s309 + $0x328] sm:$0xff]
                  %430 = vst [vmem:[%s310 + $0x1d8] sm:$0xff] %v429
                  %v431 = vld [vmem:[%s309 + $0x348] sm:$0xff]
                  %432 = vst [vmem:[%s310 + $0x1e0] sm:$0xff] %v431
                  %v433 = vld [vmem:[%s309 + $0x350] sm:$0xff]
                  %434 = vst [vmem:[%s310 + $0x1e8] sm:$0xff] %v433
                  %v435 = vld [vmem:[%s309 + $0x358] sm:$0xff]
                  %436 = vst [vmem:[%s310 + $0x1f0] sm:$0xff] %v435
                  %v437 = vld [vmem:[%s309 + $0x360] sm:$0xff]
                  %438 = vst [vmem:[%s310 + $0x1f8] sm:$0xff] %v437
                  %s439 = sadd.s32 1, %s308
                  %p440 = scmp.ge.s32.totalorder %s439, %s299
                  %s441 = scalar_select %p440, 0, %s439
                  %s442 = smul.u32 %s441, 32
                  %s443 = smul.u32 %s441, 32
                  %s444 = scalar_lea.vmem %s239, %s442
                  %s445 = scalar_lea.vmem %s229, %s443 [#allocation2]
                $region64: #{fused_bn_add_relu_conv_bn.5} parent=58 // loop_footer
                  %s305 = sadd.s32 %s303, 1
                $region65: #{fused_bn_add_relu_conv_bn.5} parent=58 // loop_footer_branch
                  %302 = sbr.rel target = $region61
                $region66: #{fused_bn_add_relu_conv_bn.5} parent=58 // loop_exit
                  _
                %s446 = sshrl.u32 %s298, 2
                %s447 = sand.u32 %s298, 3
                %s448 = smul.u32 %s446, 4
                %s449 = smul.u32 128, %s448
                %s450 = sshra.s32 %s449, 4
                %s451 = scalar_lea.vmem %s239, %s450
                %s452 = smul.u32 128, %s448
                %s453 = sshra.s32 %s452, 4
                %s454 = scalar_lea.vmem %s229, %s453 [#allocation2]
                // While loop
                $region67: #{fused_bn_add_relu_conv_bn.5} parent=58 // loop_pre_header
                  _
                $region68: #{fused_bn_add_relu_conv_bn.5} parent=58 // loop_header
                  %s458 = sphi 0, %s460
                  %p459 = scmp.ge.s32.totalorder %s458, %s447
                  %s463 = sphi 0, %s500
                  %s464 = sphi %s451, %s503
                  %s465 = sphi %s454, %s504
                $region69: #{fused_bn_add_relu_conv_bn.5} parent=58 // loop_header_branch
                  %462 = sbr.rel (%p459) target = $region73
                $region70: #{fused_bn_add_relu_conv_bn.5} parent=58 // loop_body
                  %v466 = vld [vmem:[%s464] sm:$0xff]
                  %467 = vst [vmem:[%s465] sm:$0xff] %v466
                  %v468 = vld [vmem:[%s464 + $0x38] sm:$0xff]
                  %469 = vst [vmem:[%s465 + $0x20] sm:$0xff] %v468
                  %v470 = vld [vmem:[%s464 + $0x70] sm:$0xff]
                  %471 = vst [vmem:[%s465 + $0x40] sm:$0xff] %v470
                  %v472 = vld [vmem:[%s464 + $0xa8] sm:$0xff]
                  %473 = vst [vmem:[%s465 + $0x60] sm:$0xff] %v472
                  %v474 = vld [vmem:[%s464 + $0xe0] sm:$0xff]
                  %475 = vst [vmem:[%s465 + $0x80] sm:$0xff] %v474
                  %v476 = vld [vmem:[%s464 + $0x118] sm:$0xff]
                  %477 = vst [vmem:[%s465 + $0xa0] sm:$0xff] %v476
                  %v478 = vld [vmem:[%s464 + $0x150] sm:$0xff]
                  %479 = vst [vmem:[%s465 + $0xc0] sm:$0xff] %v478
                  %v480 = vld [vmem:[%s464 + $0x188] sm:$0xff]
                  %481 = vst [vmem:[%s465 + $0xe0] sm:$0xff] %v480
                  %v482 = vld [vmem:[%s464 + $0x1c0] sm:$0xff]
                  %483 = vst [vmem:[%s465 + $0x100] sm:$0xff] %v482
                  %v484 = vld [vmem:[%s464 + $0x1f8] sm:$0xff]
                  %485 = vst [vmem:[%s465 + $0x120] sm:$0xff] %v484
                  %v486 = vld [vmem:[%s464 + $0x230] sm:$0xff]
                  %487 = vst [vmem:[%s465 + $0x140] sm:$0xff] %v486
                  %v488 = vld [vmem:[%s464 + $0x268] sm:$0xff]
                  %489 = vst [vmem:[%s465 + $0x160] sm:$0xff] %v488
                  %v490 = vld [vmem:[%s464 + $0x2a0] sm:$0xff]
                  %491 = vst [vmem:[%s465 + $0x180] sm:$0xff] %v490
                  %v492 = vld [vmem:[%s464 + $0x2d8] sm:$0xff]
                  %493 = vst [vmem:[%s465 + $0x1a0] sm:$0xff] %v492
                  %v494 = vld [vmem:[%s464 + $0x310] sm:$0xff]
                  %495 = vst [vmem:[%s465 + $0x1c0] sm:$0xff] %v494
                  %v496 = vld [vmem:[%s464 + $0x348] sm:$0xff]
                  %497 = vst [vmem:[%s465 + $0x1e0] sm:$0xff] %v496
                  %s498 = sadd.s32 1, %s463
                  %p499 = scmp.ge.s32.totalorder %s498, %s447
                  %s500 = scalar_select %p499, 0, %s498
                  %s501 = smul.u32 %s500, 8
                  %s502 = smul.u32 %s500, 8
                  %s503 = scalar_lea.vmem %s451, %s501
                  %s504 = scalar_lea.vmem %s454, %s502 [#allocation2]
                $region71: #{fused_bn_add_relu_conv_bn.5} parent=58 // loop_footer
                  %s460 = sadd.s32 %s458, 1
                $region72: #{fused_bn_add_relu_conv_bn.5} parent=58 // loop_footer_branch
                  %457 = sbr.rel target = $region68
                $region73: #{fused_bn_add_relu_conv_bn.5} parent=58 // loop_exit
                  _
              $region59: #{fused_bn_add_relu_conv_bn.5} parent=43 // pred_fallthru
                _
              %p505 = pneg %p294
              // Predicated region
              $region74: #{fused_bn_add_relu_conv_bn.5} parent=43 // pred_check
                _
              $region75: #{fused_bn_add_relu_conv_bn.5} parent=43 // pred_check_branch
                %507 = sbr.rel (%p294) target = $region77
              $region76: #{fused_bn_add_relu_conv_bn.5} parent=43 // pred_region
                %s508 = sand.u32 %s240, 7
                %s509 = ssub.s32 %s240, %s508
                %s510 = scalar_lea.vmem %s239, %s509
                %s511 = ssub.s32 %s240, %s508
                %s512 = scalar_lea.vmem %s229, %s511 [#allocation2]
                %s513 = sshrl.u32 %s240, 3
                %s514 = sshrl.u32 %s513, 2
                // While loop
                $region78: #{fused_bn_add_relu_conv_bn.5} parent=76 // loop_pre_header
                  _
                $region79: #{fused_bn_add_relu_conv_bn.5} parent=76 // loop_header
                  %s518 = sphi 0, %s520
                  %p519 = scmp.ge.s32.totalorder %s518, %s514
                  %s523 = sphi 0, %s656
                  %s524 = sphi %s239, %s659
                  %s525 = sphi %s229, %s660
                $region80: #{fused_bn_add_relu_conv_bn.5} parent=76 // loop_header_branch
                  %522 = sbr.rel (%p519) target = $region84
                $region81: #{fused_bn_add_relu_conv_bn.5} parent=76 // loop_body
                  %v526 = vld [vmem:[%s524] sm:$0xff]
                  %527 = vst [vmem:[%s525] sm:$0xff] %v526
                  %v528 = vld [vmem:[%s524 + $0x8] sm:$0xff]
                  %529 = vst [vmem:[%s525 + $0x8] sm:$0xff] %v528
                  %v530 = vld [vmem:[%s524 + $0x10] sm:$0xff]
                  %531 = vst [vmem:[%s525 + $0x10] sm:$0xff] %v530
                  %v532 = vld [vmem:[%s524 + $0x18] sm:$0xff]
                  %533 = vst [vmem:[%s525 + $0x18] sm:$0xff] %v532
                  %v534 = vld [vmem:[%s524 + $0x38] sm:$0xff]
                  %535 = vst [vmem:[%s525 + $0x20] sm:$0xff] %v534
                  %v536 = vld [vmem:[%s524 + $0x40] sm:$0xff]
                  %537 = vst [vmem:[%s525 + $0x28] sm:$0xff] %v536
                  %v538 = vld [vmem:[%s524 + $0x48] sm:$0xff]
                  %539 = vst [vmem:[%s525 + $0x30] sm:$0xff] %v538
                  %v540 = vld [vmem:[%s524 + $0x50] sm:$0xff]
                  %541 = vst [vmem:[%s525 + $0x38] sm:$0xff] %v540
                  %v542 = vld [vmem:[%s524 + $0x70] sm:$0xff]
                  %543 = vst [vmem:[%s525 + $0x40] sm:$0xff] %v542
                  %v544 = vld [vmem:[%s524 + $0x78] sm:$0xff]
                  %545 = vst [vmem:[%s525 + $0x48] sm:$0xff] %v544
                  %v546 = vld [vmem:[%s524 + $0x80] sm:$0xff]
                  %547 = vst [vmem:[%s525 + $0x50] sm:$0xff] %v546
                  %v548 = vld [vmem:[%s524 + $0x88] sm:$0xff]
                  %549 = vst [vmem:[%s525 + $0x58] sm:$0xff] %v548
                  %v550 = vld [vmem:[%s524 + $0xa8] sm:$0xff]
                  %551 = vst [vmem:[%s525 + $0x60] sm:$0xff] %v550
                  %v552 = vld [vmem:[%s524 + $0xb0] sm:$0xff]
                  %553 = vst [vmem:[%s525 + $0x68] sm:$0xff] %v552
                  %v554 = vld [vmem:[%s524 + $0xb8] sm:$0xff]
                  %555 = vst [vmem:[%s525 + $0x70] sm:$0xff] %v554
                  %v556 = vld [vmem:[%s524 + $0xc0] sm:$0xff]
                  %557 = vst [vmem:[%s525 + $0x78] sm:$0xff] %v556
                  %v558 = vld [vmem:[%s524 + $0xe0] sm:$0xff]
                  %559 = vst [vmem:[%s525 + $0x80] sm:$0xff] %v558
                  %v560 = vld [vmem:[%s524 + $0xe8] sm:$0xff]
                  %561 = vst [vmem:[%s525 + $0x88] sm:$0xff] %v560
                  %v562 = vld [vmem:[%s524 + $0xf0] sm:$0xff]
                  %563 = vst [vmem:[%s525 + $0x90] sm:$0xff] %v562
                  %v564 = vld [vmem:[%s524 + $0xf8] sm:$0xff]
                  %565 = vst [vmem:[%s525 + $0x98] sm:$0xff] %v564
                  %v566 = vld [vmem:[%s524 + $0x118] sm:$0xff]
                  %567 = vst [vmem:[%s525 + $0xa0] sm:$0xff] %v566
                  %v568 = vld [vmem:[%s524 + $0x120] sm:$0xff]
                  %569 = vst [vmem:[%s525 + $0xa8] sm:$0xff] %v568
                  %v570 = vld [vmem:[%s524 + $0x128] sm:$0xff]
                  %571 = vst [vmem:[%s525 + $0xb0] sm:$0xff] %v570
                  %v572 = vld [vmem:[%s524 + $0x130] sm:$0xff]
                  %573 = vst [vmem:[%s525 + $0xb8] sm:$0xff] %v572
                  %v574 = vld [vmem:[%s524 + $0x150] sm:$0xff]
                  %575 = vst [vmem:[%s525 + $0xc0] sm:$0xff] %v574
                  %v576 = vld [vmem:[%s524 + $0x158] sm:$0xff]
                  %577 = vst [vmem:[%s525 + $0xc8] sm:$0xff] %v576
                  %v578 = vld [vmem:[%s524 + $0x160] sm:$0xff]
                  %579 = vst [vmem:[%s525 + $0xd0] sm:$0xff] %v578
                  %v580 = vld [vmem:[%s524 + $0x168] sm:$0xff]
                  %581 = vst [vmem:[%s525 + $0xd8] sm:$0xff] %v580
                  %v582 = vld [vmem:[%s524 + $0x188] sm:$0xff]
                  %583 = vst [vmem:[%s525 + $0xe0] sm:$0xff] %v582
                  %v584 = vld [vmem:[%s524 + $0x190] sm:$0xff]
                  %585 = vst [vmem:[%s525 + $0xe8] sm:$0xff] %v584
                  %v586 = vld [vmem:[%s524 + $0x198] sm:$0xff]
                  %587 = vst [vmem:[%s525 + $0xf0] sm:$0xff] %v586
                  %v588 = vld [vmem:[%s524 + $0x1a0] sm:$0xff]
                  %589 = vst [vmem:[%s525 + $0xf8] sm:$0xff] %v588
                  %v590 = vld [vmem:[%s524 + $0x1c0] sm:$0xff]
                  %591 = vst [vmem:[%s525 + $0x100] sm:$0xff] %v590
                  %v592 = vld [vmem:[%s524 + $0x1c8] sm:$0xff]
                  %593 = vst [vmem:[%s525 + $0x108] sm:$0xff] %v592
                  %v594 = vld [vmem:[%s524 + $0x1d0] sm:$0xff]
                  %595 = vst [vmem:[%s525 + $0x110] sm:$0xff] %v594
                  %v596 = vld [vmem:[%s524 + $0x1d8] sm:$0xff]
                  %597 = vst [vmem:[%s525 + $0x118] sm:$0xff] %v596
                  %v598 = vld [vmem:[%s524 + $0x1f8] sm:$0xff]
                  %599 = vst [vmem:[%s525 + $0x120] sm:$0xff] %v598
                  %v600 = vld [vmem:[%s524 + $0x200] sm:$0xff]
                  %601 = vst [vmem:[%s525 + $0x128] sm:$0xff] %v600
                  %v602 = vld [vmem:[%s524 + $0x208] sm:$0xff]
                  %603 = vst [vmem:[%s525 + $0x130] sm:$0xff] %v602
                  %v604 = vld [vmem:[%s524 + $0x210] sm:$0xff]
                  %605 = vst [vmem:[%s525 + $0x138] sm:$0xff] %v604
                  %v606 = vld [vmem:[%s524 + $0x230] sm:$0xff]
                  %607 = vst [vmem:[%s525 + $0x140] sm:$0xff] %v606
                  %v608 = vld [vmem:[%s524 + $0x238] sm:$0xff]
                  %609 = vst [vmem:[%s525 + $0x148] sm:$0xff] %v608
                  %v610 = vld [vmem:[%s524 + $0x240] sm:$0xff]
                  %611 = vst [vmem:[%s525 + $0x150] sm:$0xff] %v610
                  %v612 = vld [vmem:[%s524 + $0x248] sm:$0xff]
                  %613 = vst [vmem:[%s525 + $0x158] sm:$0xff] %v612
                  %v614 = vld [vmem:[%s524 + $0x268] sm:$0xff]
                  %615 = vst [vmem:[%s525 + $0x160] sm:$0xff] %v614
                  %v616 = vld [vmem:[%s524 + $0x270] sm:$0xff]
                  %617 = vst [vmem:[%s525 + $0x168] sm:$0xff] %v616
                  %v618 = vld [vmem:[%s524 + $0x278] sm:$0xff]
                  %619 = vst [vmem:[%s525 + $0x170] sm:$0xff] %v618
                  %v620 = vld [vmem:[%s524 + $0x280] sm:$0xff]
                  %621 = vst [vmem:[%s525 + $0x178] sm:$0xff] %v620
                  %v622 = vld [vmem:[%s524 + $0x2a0] sm:$0xff]
                  %623 = vst [vmem:[%s525 + $0x180] sm:$0xff] %v622
                  %v624 = vld [vmem:[%s524 + $0x2a8] sm:$0xff]
                  %625 = vst [vmem:[%s525 + $0x188] sm:$0xff] %v624
                  %v626 = vld [vmem:[%s524 + $0x2b0] sm:$0xff]
                  %627 = vst [vmem:[%s525 + $0x190] sm:$0xff] %v626
                  %v628 = vld [vmem:[%s524 + $0x2b8] sm:$0xff]
                  %629 = vst [vmem:[%s525 + $0x198] sm:$0xff] %v628
                  %v630 = vld [vmem:[%s524 + $0x2d8] sm:$0xff]
                  %631 = vst [vmem:[%s525 + $0x1a0] sm:$0xff] %v630
                  %v632 = vld [vmem:[%s524 + $0x2e0] sm:$0xff]
                  %633 = vst [vmem:[%s525 + $0x1a8] sm:$0xff] %v632
                  %v634 = vld [vmem:[%s524 + $0x2e8] sm:$0xff]
                  %635 = vst [vmem:[%s525 + $0x1b0] sm:$0xff] %v634
                  %v636 = vld [vmem:[%s524 + $0x2f0] sm:$0xff]
                  %637 = vst [vmem:[%s525 + $0x1b8] sm:$0xff] %v636
                  %v638 = vld [vmem:[%s524 + $0x310] sm:$0xff]
                  %639 = vst [vmem:[%s525 + $0x1c0] sm:$0xff] %v638
                  %v640 = vld [vmem:[%s524 + $0x318] sm:$0xff]
                  %641 = vst [vmem:[%s525 + $0x1c8] sm:$0xff] %v640
                  %v642 = vld [vmem:[%s524 + $0x320] sm:$0xff]
                  %643 = vst [vmem:[%s525 + $0x1d0] sm:$0xff] %v642
                  %v644 = vld [vmem:[%s524 + $0x328] sm:$0xff]
                  %645 = vst [vmem:[%s525 + $0x1d8] sm:$0xff] %v644
                  %v646 = vld [vmem:[%s524 + $0x348] sm:$0xff]
                  %647 = vst [vmem:[%s525 + $0x1e0] sm:$0xff] %v646
                  %v648 = vld [vmem:[%s524 + $0x350] sm:$0xff]
                  %649 = vst [vmem:[%s525 + $0x1e8] sm:$0xff] %v648
                  %v650 = vld [vmem:[%s524 + $0x358] sm:$0xff]
                  %651 = vst [vmem:[%s525 + $0x1f0] sm:$0xff] %v650
                  %v652 = vld [vmem:[%s524 + $0x360] sm:$0xff]
                  %653 = vst [vmem:[%s525 + $0x1f8] sm:$0xff] %v652
                  %s654 = sadd.s32 1, %s523
                  %p655 = scmp.ge.s32.totalorder %s654, %s514
                  %s656 = scalar_select %p655, 0, %s654
                  %s657 = smul.u32 %s656, 32
                  %s658 = smul.u32 %s656, 32
                  %s659 = scalar_lea.vmem %s239, %s657
                  %s660 = scalar_lea.vmem %s229, %s658 [#allocation2]
                $region82: #{fused_bn_add_relu_conv_bn.5} parent=76 // loop_footer
                  %s520 = sadd.s32 %s518, 1
                $region83: #{fused_bn_add_relu_conv_bn.5} parent=76 // loop_footer_branch
                  %517 = sbr.rel target = $region79
                $region84: #{fused_bn_add_relu_conv_bn.5} parent=76 // loop_exit
                  _
                %s661 = sshrl.u32 %s513, 2
                %s662 = sand.u32 %s513, 3
                %s663 = smul.u32 %s661, 4
                %s664 = smul.u32 128, %s663
                %s665 = sshra.s32 %s664, 4
                %s666 = scalar_lea.vmem %s239, %s665
                %s667 = smul.u32 128, %s663
                %s668 = sshra.s32 %s667, 4
                %s669 = scalar_lea.vmem %s229, %s668 [#allocation2]
                // While loop
                $region85: #{fused_bn_add_relu_conv_bn.5} parent=76 // loop_pre_header
                  _
                $region86: #{fused_bn_add_relu_conv_bn.5} parent=76 // loop_header
                  %s673 = sphi 0, %s675
                  %p674 = scmp.ge.s32.totalorder %s673, %s662
                  %s678 = sphi 0, %s715
                  %s679 = sphi %s666, %s718
                  %s680 = sphi %s669, %s719
                $region87: #{fused_bn_add_relu_conv_bn.5} parent=76 // loop_header_branch
                  %677 = sbr.rel (%p674) target = $region91
                $region88: #{fused_bn_add_relu_conv_bn.5} parent=76 // loop_body
                  %v681 = vld [vmem:[%s679] sm:$0xff]
                  %682 = vst [vmem:[%s680] sm:$0xff] %v681
                  %v683 = vld [vmem:[%s679 + $0x38] sm:$0xff]
                  %684 = vst [vmem:[%s680 + $0x20] sm:$0xff] %v683
                  %v685 = vld [vmem:[%s679 + $0x70] sm:$0xff]
                  %686 = vst [vmem:[%s680 + $0x40] sm:$0xff] %v685
                  %v687 = vld [vmem:[%s679 + $0xa8] sm:$0xff]
                  %688 = vst [vmem:[%s680 + $0x60] sm:$0xff] %v687
                  %v689 = vld [vmem:[%s679 + $0xe0] sm:$0xff]
                  %690 = vst [vmem:[%s680 + $0x80] sm:$0xff] %v689
                  %v691 = vld [vmem:[%s679 + $0x118] sm:$0xff]
                  %692 = vst [vmem:[%s680 + $0xa0] sm:$0xff] %v691
                  %v693 = vld [vmem:[%s679 + $0x150] sm:$0xff]
                  %694 = vst [vmem:[%s680 + $0xc0] sm:$0xff] %v693
                  %v695 = vld [vmem:[%s679 + $0x188] sm:$0xff]
                  %696 = vst [vmem:[%s680 + $0xe0] sm:$0xff] %v695
                  %v697 = vld [vmem:[%s679 + $0x1c0] sm:$0xff]
                  %698 = vst [vmem:[%s680 + $0x100] sm:$0xff] %v697
                  %v699 = vld [vmem:[%s679 + $0x1f8] sm:$0xff]
                  %700 = vst [vmem:[%s680 + $0x120] sm:$0xff] %v699
                  %v701 = vld [vmem:[%s679 + $0x230] sm:$0xff]
                  %702 = vst [vmem:[%s680 + $0x140] sm:$0xff] %v701
                  %v703 = vld [vmem:[%s679 + $0x268] sm:$0xff]
                  %704 = vst [vmem:[%s680 + $0x160] sm:$0xff] %v703
                  %v705 = vld [vmem:[%s679 + $0x2a0] sm:$0xff]
                  %706 = vst [vmem:[%s680 + $0x180] sm:$0xff] %v705
                  %v707 = vld [vmem:[%s679 + $0x2d8] sm:$0xff]
                  %708 = vst [vmem:[%s680 + $0x1a0] sm:$0xff] %v707
                  %v709 = vld [vmem:[%s679 + $0x310] sm:$0xff]
                  %710 = vst [vmem:[%s680 + $0x1c0] sm:$0xff] %v709
                  %v711 = vld [vmem:[%s679 + $0x348] sm:$0xff]
                  %712 = vst [vmem:[%s680 + $0x1e0] sm:$0xff] %v711
                  %s713 = sadd.s32 1, %s678
                  %p714 = scmp.ge.s32.totalorder %s713, %s662
                  %s715 = scalar_select %p714, 0, %s713
                  %s716 = smul.u32 %s715, 8
                  %s717 = smul.u32 %s715, 8
                  %s718 = scalar_lea.vmem %s666, %s716
                  %s719 = scalar_lea.vmem %s669, %s717 [#allocation2]
                $region89: #{fused_bn_add_relu_conv_bn.5} parent=76 // loop_footer
                  %s675 = sadd.s32 %s673, 1
                $region90: #{fused_bn_add_relu_conv_bn.5} parent=76 // loop_footer_branch
                  %672 = sbr.rel target = $region86
                $region91: #{fused_bn_add_relu_conv_bn.5} parent=76 // loop_exit
                  _
                %s720 = sshll.u32 1, %s508
                %s721 = ssub.s32 %s720, 1
                loop: start=0, step=1, limit=1
                $region92: #{fused_bn_add_relu_conv_bn.5} parent=76 // loop_pre_header
                  _
                $region93: #{fused_bn_add_relu_conv_bn.5} parent=76 // loop_header
                  %s723 = sphi 0, %s727
                  %p724 = scmp.ge.s32.totalorder %s723, 1
                  %s728 = sphi %s510, %s510
                  %s729 = sphi %s512, %s512
                $region94: #{fused_bn_add_relu_conv_bn.5} parent=76 // loop_header_branch
                  %726 = sbr.rel (%p724) target = $region98
                $region95: #{fused_bn_add_relu_conv_bn.5} parent=76 // loop_body
                  %v730 = vld [vmem:[%s728] sm:%s721]
                  %731 = vst [vmem:[%s729] sm:%s721] %v730
                  %v732 = vld [vmem:[%s728 + $0x38] sm:%s721]
                  %733 = vst [vmem:[%s729 + $0x20] sm:%s721] %v732
                  %v734 = vld [vmem:[%s728 + $0x70] sm:%s721]
                  %735 = vst [vmem:[%s729 + $0x40] sm:%s721] %v734
                  %v736 = vld [vmem:[%s728 + $0xa8] sm:%s721]
                  %737 = vst [vmem:[%s729 + $0x60] sm:%s721] %v736
                  %v738 = vld [vmem:[%s728 + $0xe0] sm:%s721]
                  %739 = vst [vmem:[%s729 + $0x80] sm:%s721] %v738
                  %v740 = vld [vmem:[%s728 + $0x118] sm:%s721]
                  %741 = vst [vmem:[%s729 + $0xa0] sm:%s721] %v740
                  %v742 = vld [vmem:[%s728 + $0x150] sm:%s721]
                  %743 = vst [vmem:[%s729 + $0xc0] sm:%s721] %v742
                  %v744 = vld [vmem:[%s728 + $0x188] sm:%s721]
                  %745 = vst [vmem:[%s729 + $0xe0] sm:%s721] %v744
                  %v746 = vld [vmem:[%s728 + $0x1c0] sm:%s721]
                  %747 = vst [vmem:[%s729 + $0x100] sm:%s721] %v746
                  %v748 = vld [vmem:[%s728 + $0x1f8] sm:%s721]
                  %749 = vst [vmem:[%s729 + $0x120] sm:%s721] %v748
                  %v750 = vld [vmem:[%s728 + $0x230] sm:%s721]
                  %751 = vst [vmem:[%s729 + $0x140] sm:%s721] %v750
                  %v752 = vld [vmem:[%s728 + $0x268] sm:%s721]
                  %753 = vst [vmem:[%s729 + $0x160] sm:%s721] %v752
                  %v754 = vld [vmem:[%s728 + $0x2a0] sm:%s721]
                  %755 = vst [vmem:[%s729 + $0x180] sm:%s721] %v754
                  %v756 = vld [vmem:[%s728 + $0x2d8] sm:%s721]
                  %757 = vst [vmem:[%s729 + $0x1a0] sm:%s721] %v756
                  %v758 = vld [vmem:[%s728 + $0x310] sm:%s721]
                  %759 = vst [vmem:[%s729 + $0x1c0] sm:%s721] %v758
                  %v760 = vld [vmem:[%s728 + $0x348] sm:%s721]
                  %761 = vst [vmem:[%s729 + $0x1e0] sm:%s721] %v760
                $region96: #{fused_bn_add_relu_conv_bn.5} parent=76 // loop_footer
                  %s727 = sadd.s32 1, %s723
                $region97: #{fused_bn_add_relu_conv_bn.5} parent=76 // loop_footer_branch
                  %722 = sbr.rel target = $region93
                $region98: #{fused_bn_add_relu_conv_bn.5} parent=76 // loop_exit
                  _
              $region77: #{fused_bn_add_relu_conv_bn.5} parent=43 // pred_fallthru
                _
            $region44: #{fused_bn_add_relu_conv_bn.5} parent=39 // pred_fallthru
              _
            // Predicated region
            $region45: #{fused_bn_add_relu_conv_bn.5} parent=39 // pred_check
              %p248 = pneg %p244
            $region46: #{fused_bn_add_relu_conv_bn.5} parent=39 // pred_check_branch
              %250 = sbr.rel (%p248) target = $region48
            $region47: #{fused_bn_add_relu_conv_bn.5} parent=39 // pred_region
              %s251 = sshll.u32 1, %s240
              %s252 = ssub.s32 %s251, 1
              loop: start=0, step=1, limit=1
              $region49: #{fused_bn_add_relu_conv_bn.5} parent=47 // loop_pre_header
                _
              $region50: #{fused_bn_add_relu_conv_bn.5} parent=47 // loop_header
                %s254 = sphi 0, %s258
                %p255 = scmp.ge.s32.totalorder %s254, 1
                %s259 = sphi %s239, %s239
                %s260 = sphi %s229, %s229
              $region51: #{fused_bn_add_relu_conv_bn.5} parent=47 // loop_header_branch
                %257 = sbr.rel (%p255) target = $region55
              $region52: #{fused_bn_add_relu_conv_bn.5} parent=47 // loop_body
                %v261 = vld [vmem:[%s259] sm:%s252]
                %262 = vst [vmem:[%s260] sm:%s252] %v261
                %v263 = vld [vmem:[%s259 + $0x38] sm:%s252]
                %264 = vst [vmem:[%s260 + $0x20] sm:%s252] %v263
                %v265 = vld [vmem:[%s259 + $0x70] sm:%s252]
                %266 = vst [vmem:[%s260 + $0x40] sm:%s252] %v265
                %v267 = vld [vmem:[%s259 + $0xa8] sm:%s252]
                %268 = vst [vmem:[%s260 + $0x60] sm:%s252] %v267
                %v269 = vld [vmem:[%s259 + $0xe0] sm:%s252]
                %270 = vst [vmem:[%s260 + $0x80] sm:%s252] %v269
                %v271 = vld [vmem:[%s259 + $0x118] sm:%s252]
                %272 = vst [vmem:[%s260 + $0xa0] sm:%s252] %v271
                %v273 = vld [vmem:[%s259 + $0x150] sm:%s252]
                %274 = vst [vmem:[%s260 + $0xc0] sm:%s252] %v273
                %v275 = vld [vmem:[%s259 + $0x188] sm:%s252]
                %276 = vst [vmem:[%s260 + $0xe0] sm:%s252] %v275
                %v277 = vld [vmem:[%s259 + $0x1c0] sm:%s252]
                %278 = vst [vmem:[%s260 + $0x100] sm:%s252] %v277
                %v279 = vld [vmem:[%s259 + $0x1f8] sm:%s252]
                %280 = vst [vmem:[%s260 + $0x120] sm:%s252] %v279
                %v281 = vld [vmem:[%s259 + $0x230] sm:%s252]
                %282 = vst [vmem:[%s260 + $0x140] sm:%s252] %v281
                %v283 = vld [vmem:[%s259 + $0x268] sm:%s252]
                %284 = vst [vmem:[%s260 + $0x160] sm:%s252] %v283
                %v285 = vld [vmem:[%s259 + $0x2a0] sm:%s252]
                %286 = vst [vmem:[%s260 + $0x180] sm:%s252] %v285
                %v287 = vld [vmem:[%s259 + $0x2d8] sm:%s252]
                %288 = vst [vmem:[%s260 + $0x1a0] sm:%s252] %v287
                %v289 = vld [vmem:[%s259 + $0x310] sm:%s252]
                %290 = vst [vmem:[%s260 + $0x1c0] sm:%s252] %v289
                %v291 = vld [vmem:[%s259 + $0x348] sm:%s252]
                %292 = vst [vmem:[%s260 + $0x1e0] sm:%s252] %v291
              $region53: #{fused_bn_add_relu_conv_bn.5} parent=47 // loop_footer
                %s258 = sadd.s32 1, %s254
              $region54: #{fused_bn_add_relu_conv_bn.5} parent=47 // loop_footer_branch
                %253 = sbr.rel target = $region50
              $region55: #{fused_bn_add_relu_conv_bn.5} parent=47 // loop_exit
                _
            $region48: #{fused_bn_add_relu_conv_bn.5} parent=39 // pred_fallthru
              _
          $region40: #{fused_bn_add_relu_conv_bn.5} parent=35 // pred_fallthru
            _
          %762 = vnop
        $region36: #{fused_bn_add_relu_conv_bn.5} parent=31 // pred_fallthru
          _
        // Predicated region
        $region99: #{fused_bn_add_relu_conv_bn.5} parent=31 // pred_check
          %p763 = pneg %p74
        $region100: #{fused_bn_add_relu_conv_bn.5} parent=31 // pred_check_branch
          %765 = sbr.rel (%p763) target = $region102
        $region101: #{fused_bn_add_relu_conv_bn.5} parent=31 // pred_region
          %s766 = sand.u32 %s64, 1
          %s767 = sand.u32 %s64, 1
          %s768 = smul.addr %s767, 512
          %s769 = scalar_lea.vmem [#allocation3], %s768
          %s770 = smul.u32 4, %s20
          %s771 = ssub.s32 7, %s770
          %p772 = scmp.lt.s32.totalorder %s771, 4
          %s773 = scalar_select %p772, %s771, 4
          %s774 = smul.u32 2048, %s773
          %p775 = scmp.ne.s32.totalorder 0, %s774
          %s776 = smul.addr %s19, 112
          %s777 = sadd.s32 %s770, %s776
          %s778 = smul.addr %s777, 8
          %s779 = scalar_lea.vmem %s1, %s778
          %s780 = smul.u32 %s773, 8
          // Predicated region
          $region103: #{fused_bn_add_relu_conv_bn.5} parent=101 // pred_check
            %p781 = pneg %p775
          $region104: #{fused_bn_add_relu_conv_bn.5} parent=101 // pred_check_branch
            %783 = sbr.rel (%p781) target = $region106
          $region105: #{fused_bn_add_relu_conv_bn.5} parent=101 // pred_region
            %p784 = scmp.lt.u32.totalorder %s780, 8
            %p785 = pneg %p784
            // Predicated region
            $region107: #{fused_bn_add_relu_conv_bn.5} parent=105 // pred_check
              _
            $region108: #{fused_bn_add_relu_conv_bn.5} parent=105 // pred_check_branch
              %787 = sbr.rel (%p784) target = $region110
            $region109: #{fused_bn_add_relu_conv_bn.5} parent=105 // pred_region
              %s833 = sand.u32 %s780, 7
              %p834 = scmp.eq.s32.totalorder %s833, 0
              // Predicated region
              $region122: #{fused_bn_add_relu_conv_bn.5} parent=109 // pred_check
                %p835 = pneg %p834
              $region123: #{fused_bn_add_relu_conv_bn.5} parent=109 // pred_check_branch
                %837 = sbr.rel (%p835) target = $region125
              $region124: #{fused_bn_add_relu_conv_bn.5} parent=109 // pred_region
                %s838 = sshrl.u32 %s780, 3
                %s839 = sshrl.u32 %s838, 2
                // While loop
                $region126: #{fused_bn_add_relu_conv_bn.5} parent=124 // loop_pre_header
                  _
                $region127: #{fused_bn_add_relu_conv_bn.5} parent=124 // loop_header
                  %s843 = sphi 0, %s845
                  %p844 = scmp.ge.s32.totalorder %s843, %s839
                  %s848 = sphi 0, %s981
                  %s849 = sphi %s779, %s984
                  %s850 = sphi %s769, %s985
                $region128: #{fused_bn_add_relu_conv_bn.5} parent=124 // loop_header_branch
                  %847 = sbr.rel (%p844) target = $region132
                $region129: #{fused_bn_add_relu_conv_bn.5} parent=124 // loop_body
                  %v851 = vld [vmem:[%s849] sm:$0xff]
                  %852 = vst [vmem:[%s850] sm:$0xff] %v851
                  %v853 = vld [vmem:[%s849 + $0x8] sm:$0xff]
                  %854 = vst [vmem:[%s850 + $0x8] sm:$0xff] %v853
                  %v855 = vld [vmem:[%s849 + $0x10] sm:$0xff]
                  %856 = vst [vmem:[%s850 + $0x10] sm:$0xff] %v855
                  %v857 = vld [vmem:[%s849 + $0x18] sm:$0xff]
                  %858 = vst [vmem:[%s850 + $0x18] sm:$0xff] %v857
                  %v859 = vld [vmem:[%s849 + $0x38] sm:$0xff]
                  %860 = vst [vmem:[%s850 + $0x20] sm:$0xff] %v859
                  %v861 = vld [vmem:[%s849 + $0x40] sm:$0xff]
                  %862 = vst [vmem:[%s850 + $0x28] sm:$0xff] %v861
                  %v863 = vld [vmem:[%s849 + $0x48] sm:$0xff]
                  %864 = vst [vmem:[%s850 + $0x30] sm:$0xff] %v863
                  %v865 = vld [vmem:[%s849 + $0x50] sm:$0xff]
                  %866 = vst [vmem:[%s850 + $0x38] sm:$0xff] %v865
                  %v867 = vld [vmem:[%s849 + $0x70] sm:$0xff]
                  %868 = vst [vmem:[%s850 + $0x40] sm:$0xff] %v867
                  %v869 = vld [vmem:[%s849 + $0x78] sm:$0xff]
                  %870 = vst [vmem:[%s850 + $0x48] sm:$0xff] %v869
                  %v871 = vld [vmem:[%s849 + $0x80] sm:$0xff]
                  %872 = vst [vmem:[%s850 + $0x50] sm:$0xff] %v871
                  %v873 = vld [vmem:[%s849 + $0x88] sm:$0xff]
                  %874 = vst [vmem:[%s850 + $0x58] sm:$0xff] %v873
                  %v875 = vld [vmem:[%s849 + $0xa8] sm:$0xff]
                  %876 = vst [vmem:[%s850 + $0x60] sm:$0xff] %v875
                  %v877 = vld [vmem:[%s849 + $0xb0] sm:$0xff]
                  %878 = vst [vmem:[%s850 + $0x68] sm:$0xff] %v877
                  %v879 = vld [vmem:[%s849 + $0xb8] sm:$0xff]
                  %880 = vst [vmem:[%s850 + $0x70] sm:$0xff] %v879
                  %v881 = vld [vmem:[%s849 + $0xc0] sm:$0xff]
                  %882 = vst [vmem:[%s850 + $0x78] sm:$0xff] %v881
                  %v883 = vld [vmem:[%s849 + $0xe0] sm:$0xff]
                  %884 = vst [vmem:[%s850 + $0x80] sm:$0xff] %v883
                  %v885 = vld [vmem:[%s849 + $0xe8] sm:$0xff]
                  %886 = vst [vmem:[%s850 + $0x88] sm:$0xff] %v885
                  %v887 = vld [vmem:[%s849 + $0xf0] sm:$0xff]
                  %888 = vst [vmem:[%s850 + $0x90] sm:$0xff] %v887
                  %v889 = vld [vmem:[%s849 + $0xf8] sm:$0xff]
                  %890 = vst [vmem:[%s850 + $0x98] sm:$0xff] %v889
                  %v891 = vld [vmem:[%s849 + $0x118] sm:$0xff]
                  %892 = vst [vmem:[%s850 + $0xa0] sm:$0xff] %v891
                  %v893 = vld [vmem:[%s849 + $0x120] sm:$0xff]
                  %894 = vst [vmem:[%s850 + $0xa8] sm:$0xff] %v893
                  %v895 = vld [vmem:[%s849 + $0x128] sm:$0xff]
                  %896 = vst [vmem:[%s850 + $0xb0] sm:$0xff] %v895
                  %v897 = vld [vmem:[%s849 + $0x130] sm:$0xff]
                  %898 = vst [vmem:[%s850 + $0xb8] sm:$0xff] %v897
                  %v899 = vld [vmem:[%s849 + $0x150] sm:$0xff]
                  %900 = vst [vmem:[%s850 + $0xc0] sm:$0xff] %v899
                  %v901 = vld [vmem:[%s849 + $0x158] sm:$0xff]
                  %902 = vst [vmem:[%s850 + $0xc8] sm:$0xff] %v901
                  %v903 = vld [vmem:[%s849 + $0x160] sm:$0xff]
                  %904 = vst [vmem:[%s850 + $0xd0] sm:$0xff] %v903
                  %v905 = vld [vmem:[%s849 + $0x168] sm:$0xff]
                  %906 = vst [vmem:[%s850 + $0xd8] sm:$0xff] %v905
                  %v907 = vld [vmem:[%s849 + $0x188] sm:$0xff]
                  %908 = vst [vmem:[%s850 + $0xe0] sm:$0xff] %v907
                  %v909 = vld [vmem:[%s849 + $0x190] sm:$0xff]
                  %910 = vst [vmem:[%s850 + $0xe8] sm:$0xff] %v909
                  %v911 = vld [vmem:[%s849 + $0x198] sm:$0xff]
                  %912 = vst [vmem:[%s850 + $0xf0] sm:$0xff] %v911
                  %v913 = vld [vmem:[%s849 + $0x1a0] sm:$0xff]
                  %914 = vst [vmem:[%s850 + $0xf8] sm:$0xff] %v913
                  %v915 = vld [vmem:[%s849 + $0x1c0] sm:$0xff]
                  %916 = vst [vmem:[%s850 + $0x100] sm:$0xff] %v915
                  %v917 = vld [vmem:[%s849 + $0x1c8] sm:$0xff]
                  %918 = vst [vmem:[%s850 + $0x108] sm:$0xff] %v917
                  %v919 = vld [vmem:[%s849 + $0x1d0] sm:$0xff]
                  %920 = vst [vmem:[%s850 + $0x110] sm:$0xff] %v919
                  %v921 = vld [vmem:[%s849 + $0x1d8] sm:$0xff]
                  %922 = vst [vmem:[%s850 + $0x118] sm:$0xff] %v921
                  %v923 = vld [vmem:[%s849 + $0x1f8] sm:$0xff]
                  %924 = vst [vmem:[%s850 + $0x120] sm:$0xff] %v923
                  %v925 = vld [vmem:[%s849 + $0x200] sm:$0xff]
                  %926 = vst [vmem:[%s850 + $0x128] sm:$0xff] %v925
                  %v927 = vld [vmem:[%s849 + $0x208] sm:$0xff]
                  %928 = vst [vmem:[%s850 + $0x130] sm:$0xff] %v927
                  %v929 = vld [vmem:[%s849 + $0x210] sm:$0xff]
                  %930 = vst [vmem:[%s850 + $0x138] sm:$0xff] %v929
                  %v931 = vld [vmem:[%s849 + $0x230] sm:$0xff]
                  %932 = vst [vmem:[%s850 + $0x140] sm:$0xff] %v931
                  %v933 = vld [vmem:[%s849 + $0x238] sm:$0xff]
                  %934 = vst [vmem:[%s850 + $0x148] sm:$0xff] %v933
                  %v935 = vld [vmem:[%s849 + $0x240] sm:$0xff]
                  %936 = vst [vmem:[%s850 + $0x150] sm:$0xff] %v935
                  %v937 = vld [vmem:[%s849 + $0x248] sm:$0xff]
                  %938 = vst [vmem:[%s850 + $0x158] sm:$0xff] %v937
                  %v939 = vld [vmem:[%s849 + $0x268] sm:$0xff]
                  %940 = vst [vmem:[%s850 + $0x160] sm:$0xff] %v939
                  %v941 = vld [vmem:[%s849 + $0x270] sm:$0xff]
                  %942 = vst [vmem:[%s850 + $0x168] sm:$0xff] %v941
                  %v943 = vld [vmem:[%s849 + $0x278] sm:$0xff]
                  %944 = vst [vmem:[%s850 + $0x170] sm:$0xff] %v943
                  %v945 = vld [vmem:[%s849 + $0x280] sm:$0xff]
                  %946 = vst [vmem:[%s850 + $0x178] sm:$0xff] %v945
                  %v947 = vld [vmem:[%s849 + $0x2a0] sm:$0xff]
                  %948 = vst [vmem:[%s850 + $0x180] sm:$0xff] %v947
                  %v949 = vld [vmem:[%s849 + $0x2a8] sm:$0xff]
                  %950 = vst [vmem:[%s850 + $0x188] sm:$0xff] %v949
                  %v951 = vld [vmem:[%s849 + $0x2b0] sm:$0xff]
                  %952 = vst [vmem:[%s850 + $0x190] sm:$0xff] %v951
                  %v953 = vld [vmem:[%s849 + $0x2b8] sm:$0xff]
                  %954 = vst [vmem:[%s850 + $0x198] sm:$0xff] %v953
                  %v955 = vld [vmem:[%s849 + $0x2d8] sm:$0xff]
                  %956 = vst [vmem:[%s850 + $0x1a0] sm:$0xff] %v955
                  %v957 = vld [vmem:[%s849 + $0x2e0] sm:$0xff]
                  %958 = vst [vmem:[%s850 + $0x1a8] sm:$0xff] %v957
                  %v959 = vld [vmem:[%s849 + $0x2e8] sm:$0xff]
                  %960 = vst [vmem:[%s850 + $0x1b0] sm:$0xff] %v959
                  %v961 = vld [vmem:[%s849 + $0x2f0] sm:$0xff]
                  %962 = vst [vmem:[%s850 + $0x1b8] sm:$0xff] %v961
                  %v963 = vld [vmem:[%s849 + $0x310] sm:$0xff]
                  %964 = vst [vmem:[%s850 + $0x1c0] sm:$0xff] %v963
                  %v965 = vld [vmem:[%s849 + $0x318] sm:$0xff]
                  %966 = vst [vmem:[%s850 + $0x1c8] sm:$0xff] %v965
                  %v967 = vld [vmem:[%s849 + $0x320] sm:$0xff]
                  %968 = vst [vmem:[%s850 + $0x1d0] sm:$0xff] %v967
                  %v969 = vld [vmem:[%s849 + $0x328] sm:$0xff]
                  %970 = vst [vmem:[%s850 + $0x1d8] sm:$0xff] %v969
                  %v971 = vld [vmem:[%s849 + $0x348] sm:$0xff]
                  %972 = vst [vmem:[%s850 + $0x1e0] sm:$0xff] %v971
                  %v973 = vld [vmem:[%s849 + $0x350] sm:$0xff]
                  %974 = vst [vmem:[%s850 + $0x1e8] sm:$0xff] %v973
                  %v975 = vld [vmem:[%s849 + $0x358] sm:$0xff]
                  %976 = vst [vmem:[%s850 + $0x1f0] sm:$0xff] %v975
                  %v977 = vld [vmem:[%s849 + $0x360] sm:$0xff]
                  %978 = vst [vmem:[%s850 + $0x1f8] sm:$0xff] %v977
                  %s979 = sadd.s32 1, %s848
                  %p980 = scmp.ge.s32.totalorder %s979, %s839
                  %s981 = scalar_select %p980, 0, %s979
                  %s982 = smul.u32 %s981, 32
                  %s983 = smul.u32 %s981, 32
                  %s984 = scalar_lea.vmem %s779, %s982
                  %s985 = scalar_lea.vmem %s769, %s983 [#allocation3]
                $region130: #{fused_bn_add_relu_conv_bn.5} parent=124 // loop_footer
                  %s845 = sadd.s32 %s843, 1
                $region131: #{fused_bn_add_relu_conv_bn.5} parent=124 // loop_footer_branch
                  %842 = sbr.rel target = $region127
                $region132: #{fused_bn_add_relu_conv_bn.5} parent=124 // loop_exit
                  _
                %s986 = sshrl.u32 %s838, 2
                %s987 = sand.u32 %s838, 3
                %s988 = smul.u32 %s986, 4
                %s989 = smul.u32 128, %s988
                %s990 = sshra.s32 %s989, 4
                %s991 = scalar_lea.vmem %s779, %s990
                %s992 = smul.u32 128, %s988
                %s993 = sshra.s32 %s992, 4
                %s994 = scalar_lea.vmem %s769, %s993 [#allocation3]
                // While loop
                $region133: #{fused_bn_add_relu_conv_bn.5} parent=124 // loop_pre_header
                  _
                $region134: #{fused_bn_add_relu_conv_bn.5} parent=124 // loop_header
                  %s998 = sphi 0, %s1000
                  %p999 = scmp.ge.s32.totalorder %s998, %s987
                  %s1003 = sphi 0, %s1040
                  %s1004 = sphi %s991, %s1043
                  %s1005 = sphi %s994, %s1044
                $region135: #{fused_bn_add_relu_conv_bn.5} parent=124 // loop_header_branch
                  %1002 = sbr.rel (%p999) target = $region139
                $region136: #{fused_bn_add_relu_conv_bn.5} parent=124 // loop_body
                  %v1006 = vld [vmem:[%s1004] sm:$0xff]
                  %1007 = vst [vmem:[%s1005] sm:$0xff] %v1006
                  %v1008 = vld [vmem:[%s1004 + $0x38] sm:$0xff]
                  %1009 = vst [vmem:[%s1005 + $0x20] sm:$0xff] %v1008
                  %v1010 = vld [vmem:[%s1004 + $0x70] sm:$0xff]
                  %1011 = vst [vmem:[%s1005 + $0x40] sm:$0xff] %v1010
                  %v1012 = vld [vmem:[%s1004 + $0xa8] sm:$0xff]
                  %1013 = vst [vmem:[%s1005 + $0x60] sm:$0xff] %v1012
                  %v1014 = vld [vmem:[%s1004 + $0xe0] sm:$0xff]
                  %1015 = vst [vmem:[%s1005 + $0x80] sm:$0xff] %v1014
                  %v1016 = vld [vmem:[%s1004 + $0x118] sm:$0xff]
                  %1017 = vst [vmem:[%s1005 + $0xa0] sm:$0xff] %v1016
                  %v1018 = vld [vmem:[%s1004 + $0x150] sm:$0xff]
                  %1019 = vst [vmem:[%s1005 + $0xc0] sm:$0xff] %v1018
                  %v1020 = vld [vmem:[%s1004 + $0x188] sm:$0xff]
                  %1021 = vst [vmem:[%s1005 + $0xe0] sm:$0xff] %v1020
                  %v1022 = vld [vmem:[%s1004 + $0x1c0] sm:$0xff]
                  %1023 = vst [vmem:[%s1005 + $0x100] sm:$0xff] %v1022
                  %v1024 = vld [vmem:[%s1004 + $0x1f8] sm:$0xff]
                  %1025 = vst [vmem:[%s1005 + $0x120] sm:$0xff] %v1024
                  %v1026 = vld [vmem:[%s1004 + $0x230] sm:$0xff]
                  %1027 = vst [vmem:[%s1005 + $0x140] sm:$0xff] %v1026
                  %v1028 = vld [vmem:[%s1004 + $0x268] sm:$0xff]
                  %1029 = vst [vmem:[%s1005 + $0x160] sm:$0xff] %v1028
                  %v1030 = vld [vmem:[%s1004 + $0x2a0] sm:$0xff]
                  %1031 = vst [vmem:[%s1005 + $0x180] sm:$0xff] %v1030
                  %v1032 = vld [vmem:[%s1004 + $0x2d8] sm:$0xff]
                  %1033 = vst [vmem:[%s1005 + $0x1a0] sm:$0xff] %v1032
                  %v1034 = vld [vmem:[%s1004 + $0x310] sm:$0xff]
                  %1035 = vst [vmem:[%s1005 + $0x1c0] sm:$0xff] %v1034
                  %v1036 = vld [vmem:[%s1004 + $0x348] sm:$0xff]
                  %1037 = vst [vmem:[%s1005 + $0x1e0] sm:$0xff] %v1036
                  %s1038 = sadd.s32 1, %s1003
                  %p1039 = scmp.ge.s32.totalorder %s1038, %s987
                  %s1040 = scalar_select %p1039, 0, %s1038
                  %s1041 = smul.u32 %s1040, 8
                  %s1042 = smul.u32 %s1040, 8
                  %s1043 = scalar_lea.vmem %s991, %s1041
                  %s1044 = scalar_lea.vmem %s994, %s1042 [#allocation3]
                $region137: #{fused_bn_add_relu_conv_bn.5} parent=124 // loop_footer
                  %s1000 = sadd.s32 %s998, 1
                $region138: #{fused_bn_add_relu_conv_bn.5} parent=124 // loop_footer_branch
                  %997 = sbr.rel target = $region134
                $region139: #{fused_bn_add_relu_conv_bn.5} parent=124 // loop_exit
                  _
              $region125: #{fused_bn_add_relu_conv_bn.5} parent=109 // pred_fallthru
                _
              %p1045 = pneg %p834
              // Predicated region
              $region140: #{fused_bn_add_relu_conv_bn.5} parent=109 // pred_check
                _
              $region141: #{fused_bn_add_relu_conv_bn.5} parent=109 // pred_check_branch
                %1047 = sbr.rel (%p834) target = $region143
              $region142: #{fused_bn_add_relu_conv_bn.5} parent=109 // pred_region
                %s1048 = sand.u32 %s780, 7
                %s1049 = ssub.s32 %s780, %s1048
                %s1050 = scalar_lea.vmem %s779, %s1049
                %s1051 = ssub.s32 %s780, %s1048
                %s1052 = scalar_lea.vmem %s769, %s1051 [#allocation3]
                %s1053 = sshrl.u32 %s780, 3
                %s1054 = sshrl.u32 %s1053, 2
                // While loop
                $region144: #{fused_bn_add_relu_conv_bn.5} parent=142 // loop_pre_header
                  _
                $region145: #{fused_bn_add_relu_conv_bn.5} parent=142 // loop_header
                  %s1058 = sphi 0, %s1060
                  %p1059 = scmp.ge.s32.totalorder %s1058, %s1054
                  %s1063 = sphi 0, %s1196
                  %s1064 = sphi %s779, %s1199
                  %s1065 = sphi %s769, %s1200
                $region146: #{fused_bn_add_relu_conv_bn.5} parent=142 // loop_header_branch
                  %1062 = sbr.rel (%p1059) target = $region150
                $region147: #{fused_bn_add_relu_conv_bn.5} parent=142 // loop_body
                  %v1066 = vld [vmem:[%s1064] sm:$0xff]
                  %1067 = vst [vmem:[%s1065] sm:$0xff] %v1066
                  %v1068 = vld [vmem:[%s1064 + $0x8] sm:$0xff]
                  %1069 = vst [vmem:[%s1065 + $0x8] sm:$0xff] %v1068
                  %v1070 = vld [vmem:[%s1064 + $0x10] sm:$0xff]
                  %1071 = vst [vmem:[%s1065 + $0x10] sm:$0xff] %v1070
                  %v1072 = vld [vmem:[%s1064 + $0x18] sm:$0xff]
                  %1073 = vst [vmem:[%s1065 + $0x18] sm:$0xff] %v1072
                  %v1074 = vld [vmem:[%s1064 + $0x38] sm:$0xff]
                  %1075 = vst [vmem:[%s1065 + $0x20] sm:$0xff] %v1074
                  %v1076 = vld [vmem:[%s1064 + $0x40] sm:$0xff]
                  %1077 = vst [vmem:[%s1065 + $0x28] sm:$0xff] %v1076
                  %v1078 = vld [vmem:[%s1064 + $0x48] sm:$0xff]
                  %1079 = vst [vmem:[%s1065 + $0x30] sm:$0xff] %v1078
                  %v1080 = vld [vmem:[%s1064 + $0x50] sm:$0xff]
                  %1081 = vst [vmem:[%s1065 + $0x38] sm:$0xff] %v1080
                  %v1082 = vld [vmem:[%s1064 + $0x70] sm:$0xff]
                  %1083 = vst [vmem:[%s1065 + $0x40] sm:$0xff] %v1082
                  %v1084 = vld [vmem:[%s1064 + $0x78] sm:$0xff]
                  %1085 = vst [vmem:[%s1065 + $0x48] sm:$0xff] %v1084
                  %v1086 = vld [vmem:[%s1064 + $0x80] sm:$0xff]
                  %1087 = vst [vmem:[%s1065 + $0x50] sm:$0xff] %v1086
                  %v1088 = vld [vmem:[%s1064 + $0x88] sm:$0xff]
                  %1089 = vst [vmem:[%s1065 + $0x58] sm:$0xff] %v1088
                  %v1090 = vld [vmem:[%s1064 + $0xa8] sm:$0xff]
                  %1091 = vst [vmem:[%s1065 + $0x60] sm:$0xff] %v1090
                  %v1092 = vld [vmem:[%s1064 + $0xb0] sm:$0xff]
                  %1093 = vst [vmem:[%s1065 + $0x68] sm:$0xff] %v1092
                  %v1094 = vld [vmem:[%s1064 + $0xb8] sm:$0xff]
                  %1095 = vst [vmem:[%s1065 + $0x70] sm:$0xff] %v1094
                  %v1096 = vld [vmem:[%s1064 + $0xc0] sm:$0xff]
                  %1097 = vst [vmem:[%s1065 + $0x78] sm:$0xff] %v1096
                  %v1098 = vld [vmem:[%s1064 + $0xe0] sm:$0xff]
                  %1099 = vst [vmem:[%s1065 + $0x80] sm:$0xff] %v1098
                  %v1100 = vld [vmem:[%s1064 + $0xe8] sm:$0xff]
                  %1101 = vst [vmem:[%s1065 + $0x88] sm:$0xff] %v1100
                  %v1102 = vld [vmem:[%s1064 + $0xf0] sm:$0xff]
                  %1103 = vst [vmem:[%s1065 + $0x90] sm:$0xff] %v1102
                  %v1104 = vld [vmem:[%s1064 + $0xf8] sm:$0xff]
                  %1105 = vst [vmem:[%s1065 + $0x98] sm:$0xff] %v1104
                  %v1106 = vld [vmem:[%s1064 + $0x118] sm:$0xff]
                  %1107 = vst [vmem:[%s1065 + $0xa0] sm:$0xff] %v1106
                  %v1108 = vld [vmem:[%s1064 + $0x120] sm:$0xff]
                  %1109 = vst [vmem:[%s1065 + $0xa8] sm:$0xff] %v1108
                  %v1110 = vld [vmem:[%s1064 + $0x128] sm:$0xff]
                  %1111 = vst [vmem:[%s1065 + $0xb0] sm:$0xff] %v1110
                  %v1112 = vld [vmem:[%s1064 + $0x130] sm:$0xff]
                  %1113 = vst [vmem:[%s1065 + $0xb8] sm:$0xff] %v1112
                  %v1114 = vld [vmem:[%s1064 + $0x150] sm:$0xff]
                  %1115 = vst [vmem:[%s1065 + $0xc0] sm:$0xff] %v1114
                  %v1116 = vld [vmem:[%s1064 + $0x158] sm:$0xff]
                  %1117 = vst [vmem:[%s1065 + $0xc8] sm:$0xff] %v1116
                  %v1118 = vld [vmem:[%s1064 + $0x160] sm:$0xff]
                  %1119 = vst [vmem:[%s1065 + $0xd0] sm:$0xff] %v1118
                  %v1120 = vld [vmem:[%s1064 + $0x168] sm:$0xff]
                  %1121 = vst [vmem:[%s1065 + $0xd8] sm:$0xff] %v1120
                  %v1122 = vld [vmem:[%s1064 + $0x188] sm:$0xff]
                  %1123 = vst [vmem:[%s1065 + $0xe0] sm:$0xff] %v1122
                  %v1124 = vld [vmem:[%s1064 + $0x190] sm:$0xff]
                  %1125 = vst [vmem:[%s1065 + $0xe8] sm:$0xff] %v1124
                  %v1126 = vld [vmem:[%s1064 + $0x198] sm:$0xff]
                  %1127 = vst [vmem:[%s1065 + $0xf0] sm:$0xff] %v1126
                  %v1128 = vld [vmem:[%s1064 + $0x1a0] sm:$0xff]
                  %1129 = vst [vmem:[%s1065 + $0xf8] sm:$0xff] %v1128
                  %v1130 = vld [vmem:[%s1064 + $0x1c0] sm:$0xff]
                  %1131 = vst [vmem:[%s1065 + $0x100] sm:$0xff] %v1130
                  %v1132 = vld [vmem:[%s1064 + $0x1c8] sm:$0xff]
                  %1133 = vst [vmem:[%s1065 + $0x108] sm:$0xff] %v1132
                  %v1134 = vld [vmem:[%s1064 + $0x1d0] sm:$0xff]
                  %1135 = vst [vmem:[%s1065 + $0x110] sm:$0xff] %v1134
                  %v1136 = vld [vmem:[%s1064 + $0x1d8] sm:$0xff]
                  %1137 = vst [vmem:[%s1065 + $0x118] sm:$0xff] %v1136
                  %v1138 = vld [vmem:[%s1064 + $0x1f8] sm:$0xff]
                  %1139 = vst [vmem:[%s1065 + $0x120] sm:$0xff] %v1138
                  %v1140 = vld [vmem:[%s1064 + $0x200] sm:$0xff]
                  %1141 = vst [vmem:[%s1065 + $0x128] sm:$0xff] %v1140
                  %v1142 = vld [vmem:[%s1064 + $0x208] sm:$0xff]
                  %1143 = vst [vmem:[%s1065 + $0x130] sm:$0xff] %v1142
                  %v1144 = vld [vmem:[%s1064 + $0x210] sm:$0xff]
                  %1145 = vst [vmem:[%s1065 + $0x138] sm:$0xff] %v1144
                  %v1146 = vld [vmem:[%s1064 + $0x230] sm:$0xff]
                  %1147 = vst [vmem:[%s1065 + $0x140] sm:$0xff] %v1146
                  %v1148 = vld [vmem:[%s1064 + $0x238] sm:$0xff]
                  %1149 = vst [vmem:[%s1065 + $0x148] sm:$0xff] %v1148
                  %v1150 = vld [vmem:[%s1064 + $0x240] sm:$0xff]
                  %1151 = vst [vmem:[%s1065 + $0x150] sm:$0xff] %v1150
                  %v1152 = vld [vmem:[%s1064 + $0x248] sm:$0xff]
                  %1153 = vst [vmem:[%s1065 + $0x158] sm:$0xff] %v1152
                  %v1154 = vld [vmem:[%s1064 + $0x268] sm:$0xff]
                  %1155 = vst [vmem:[%s1065 + $0x160] sm:$0xff] %v1154
                  %v1156 = vld [vmem:[%s1064 + $0x270] sm:$0xff]
                  %1157 = vst [vmem:[%s1065 + $0x168] sm:$0xff] %v1156
                  %v1158 = vld [vmem:[%s1064 + $0x278] sm:$0xff]
                  %1159 = vst [vmem:[%s1065 + $0x170] sm:$0xff] %v1158
                  %v1160 = vld [vmem:[%s1064 + $0x280] sm:$0xff]
                  %1161 = vst [vmem:[%s1065 + $0x178] sm:$0xff] %v1160
                  %v1162 = vld [vmem:[%s1064 + $0x2a0] sm:$0xff]
                  %1163 = vst [vmem:[%s1065 + $0x180] sm:$0xff] %v1162
                  %v1164 = vld [vmem:[%s1064 + $0x2a8] sm:$0xff]
                  %1165 = vst [vmem:[%s1065 + $0x188] sm:$0xff] %v1164
                  %v1166 = vld [vmem:[%s1064 + $0x2b0] sm:$0xff]
                  %1167 = vst [vmem:[%s1065 + $0x190] sm:$0xff] %v1166
                  %v1168 = vld [vmem:[%s1064 + $0x2b8] sm:$0xff]
                  %1169 = vst [vmem:[%s1065 + $0x198] sm:$0xff] %v1168
                  %v1170 = vld [vmem:[%s1064 + $0x2d8] sm:$0xff]
                  %1171 = vst [vmem:[%s1065 + $0x1a0] sm:$0xff] %v1170
                  %v1172 = vld [vmem:[%s1064 + $0x2e0] sm:$0xff]
                  %1173 = vst [vmem:[%s1065 + $0x1a8] sm:$0xff] %v1172
                  %v1174 = vld [vmem:[%s1064 + $0x2e8] sm:$0xff]
                  %1175 = vst [vmem:[%s1065 + $0x1b0] sm:$0xff] %v1174
                  %v1176 = vld [vmem:[%s1064 + $0x2f0] sm:$0xff]
                  %1177 = vst [vmem:[%s1065 + $0x1b8] sm:$0xff] %v1176
                  %v1178 = vld [vmem:[%s1064 + $0x310] sm:$0xff]
                  %1179 = vst [vmem:[%s1065 + $0x1c0] sm:$0xff] %v1178
                  %v1180 = vld [vmem:[%s1064 + $0x318] sm:$0xff]
                  %1181 = vst [vmem:[%s1065 + $0x1c8] sm:$0xff] %v1180
                  %v1182 = vld [vmem:[%s1064 + $0x320] sm:$0xff]
                  %1183 = vst [vmem:[%s1065 + $0x1d0] sm:$0xff] %v1182
                  %v1184 = vld [vmem:[%s1064 + $0x328] sm:$0xff]
                  %1185 = vst [vmem:[%s1065 + $0x1d8] sm:$0xff] %v1184
                  %v1186 = vld [vmem:[%s1064 + $0x348] sm:$0xff]
                  %1187 = vst [vmem:[%s1065 + $0x1e0] sm:$0xff] %v1186
                  %v1188 = vld [vmem:[%s1064 + $0x350] sm:$0xff]
                  %1189 = vst [vmem:[%s1065 + $0x1e8] sm:$0xff] %v1188
                  %v1190 = vld [vmem:[%s1064 + $0x358] sm:$0xff]
                  %1191 = vst [vmem:[%s1065 + $0x1f0] sm:$0xff] %v1190
                  %v1192 = vld [vmem:[%s1064 + $0x360] sm:$0xff]
                  %1193 = vst [vmem:[%s1065 + $0x1f8] sm:$0xff] %v1192
                  %s1194 = sadd.s32 1, %s1063
                  %p1195 = scmp.ge.s32.totalorder %s1194, %s1054
                  %s1196 = scalar_select %p1195, 0, %s1194
                  %s1197 = smul.u32 %s1196, 32
                  %s1198 = smul.u32 %s1196, 32
                  %s1199 = scalar_lea.vmem %s779, %s1197
                  %s1200 = scalar_lea.vmem %s769, %s1198 [#allocation3]
                $region148: #{fused_bn_add_relu_conv_bn.5} parent=142 // loop_footer
                  %s1060 = sadd.s32 %s1058, 1
                $region149: #{fused_bn_add_relu_conv_bn.5} parent=142 // loop_footer_branch
                  %1057 = sbr.rel target = $region145
                $region150: #{fused_bn_add_relu_conv_bn.5} parent=142 // loop_exit
                  _
                %s1201 = sshrl.u32 %s1053, 2
                %s1202 = sand.u32 %s1053, 3
                %s1203 = smul.u32 %s1201, 4
                %s1204 = smul.u32 128, %s1203
                %s1205 = sshra.s32 %s1204, 4
                %s1206 = scalar_lea.vmem %s779, %s1205
                %s1207 = smul.u32 128, %s1203
                %s1208 = sshra.s32 %s1207, 4
                %s1209 = scalar_lea.vmem %s769, %s1208 [#allocation3]
                // While loop
                $region151: #{fused_bn_add_relu_conv_bn.5} parent=142 // loop_pre_header
                  _
                $region152: #{fused_bn_add_relu_conv_bn.5} parent=142 // loop_header
                  %s1213 = sphi 0, %s1215
                  %p1214 = scmp.ge.s32.totalorder %s1213, %s1202
                  %s1218 = sphi 0, %s1255
                  %s1219 = sphi %s1206, %s1258
                  %s1220 = sphi %s1209, %s1259
                $region153: #{fused_bn_add_relu_conv_bn.5} parent=142 // loop_header_branch
                  %1217 = sbr.rel (%p1214) target = $region157
                $region154: #{fused_bn_add_relu_conv_bn.5} parent=142 // loop_body
                  %v1221 = vld [vmem:[%s1219] sm:$0xff]
                  %1222 = vst [vmem:[%s1220] sm:$0xff] %v1221
                  %v1223 = vld [vmem:[%s1219 + $0x38] sm:$0xff]
                  %1224 = vst [vmem:[%s1220 + $0x20] sm:$0xff] %v1223
                  %v1225 = vld [vmem:[%s1219 + $0x70] sm:$0xff]
                  %1226 = vst [vmem:[%s1220 + $0x40] sm:$0xff] %v1225
                  %v1227 = vld [vmem:[%s1219 + $0xa8] sm:$0xff]
                  %1228 = vst [vmem:[%s1220 + $0x60] sm:$0xff] %v1227
                  %v1229 = vld [vmem:[%s1219 + $0xe0] sm:$0xff]
                  %1230 = vst [vmem:[%s1220 + $0x80] sm:$0xff] %v1229
                  %v1231 = vld [vmem:[%s1219 + $0x118] sm:$0xff]
                  %1232 = vst [vmem:[%s1220 + $0xa0] sm:$0xff] %v1231
                  %v1233 = vld [vmem:[%s1219 + $0x150] sm:$0xff]
                  %1234 = vst [vmem:[%s1220 + $0xc0] sm:$0xff] %v1233
                  %v1235 = vld [vmem:[%s1219 + $0x188] sm:$0xff]
                  %1236 = vst [vmem:[%s1220 + $0xe0] sm:$0xff] %v1235
                  %v1237 = vld [vmem:[%s1219 + $0x1c0] sm:$0xff]
                  %1238 = vst [vmem:[%s1220 + $0x100] sm:$0xff] %v1237
                  %v1239 = vld [vmem:[%s1219 + $0x1f8] sm:$0xff]
                  %1240 = vst [vmem:[%s1220 + $0x120] sm:$0xff] %v1239
                  %v1241 = vld [vmem:[%s1219 + $0x230] sm:$0xff]
                  %1242 = vst [vmem:[%s1220 + $0x140] sm:$0xff] %v1241
                  %v1243 = vld [vmem:[%s1219 + $0x268] sm:$0xff]
                  %1244 = vst [vmem:[%s1220 + $0x160] sm:$0xff] %v1243
                  %v1245 = vld [vmem:[%s1219 + $0x2a0] sm:$0xff]
                  %1246 = vst [vmem:[%s1220 + $0x180] sm:$0xff] %v1245
                  %v1247 = vld [vmem:[%s1219 + $0x2d8] sm:$0xff]
                  %1248 = vst [vmem:[%s1220 + $0x1a0] sm:$0xff] %v1247
                  %v1249 = vld [vmem:[%s1219 + $0x310] sm:$0xff]
                  %1250 = vst [vmem:[%s1220 + $0x1c0] sm:$0xff] %v1249
                  %v1251 = vld [vmem:[%s1219 + $0x348] sm:$0xff]
                  %1252 = vst [vmem:[%s1220 + $0x1e0] sm:$0xff] %v1251
                  %s1253 = sadd.s32 1, %s1218
                  %p1254 = scmp.ge.s32.totalorder %s1253, %s1202
                  %s1255 = scalar_select %p1254, 0, %s1253
                  %s1256 = smul.u32 %s1255, 8
                  %s1257 = smul.u32 %s1255, 8
                  %s1258 = scalar_lea.vmem %s1206, %s1256
                  %s1259 = scalar_lea.vmem %s1209, %s1257 [#allocation3]
                $region155: #{fused_bn_add_relu_conv_bn.5} parent=142 // loop_footer
                  %s1215 = sadd.s32 %s1213, 1
                $region156: #{fused_bn_add_relu_conv_bn.5} parent=142 // loop_footer_branch
                  %1212 = sbr.rel target = $region152
                $region157: #{fused_bn_add_relu_conv_bn.5} parent=142 // loop_exit
                  _
                %s1260 = sshll.u32 1, %s1048
                %s1261 = ssub.s32 %s1260, 1
                loop: start=0, step=1, limit=1
                $region158: #{fused_bn_add_relu_conv_bn.5} parent=142 // loop_pre_header
                  _
                $region159: #{fused_bn_add_relu_conv_bn.5} parent=142 // loop_header
                  %s1263 = sphi 0, %s1267
                  %p1264 = scmp.ge.s32.totalorder %s1263, 1
                  %s1268 = sphi %s1050, %s1050
                  %s1269 = sphi %s1052, %s1052
                $region160: #{fused_bn_add_relu_conv_bn.5} parent=142 // loop_header_branch
                  %1266 = sbr.rel (%p1264) target = $region164
                $region161: #{fused_bn_add_relu_conv_bn.5} parent=142 // loop_body
                  %v1270 = vld [vmem:[%s1268] sm:%s1261]
                  %1271 = vst [vmem:[%s1269] sm:%s1261] %v1270
                  %v1272 = vld [vmem:[%s1268 + $0x38] sm:%s1261]
                  %1273 = vst [vmem:[%s1269 + $0x20] sm:%s1261] %v1272
                  %v1274 = vld [vmem:[%s1268 + $0x70] sm:%s1261]
                  %1275 = vst [vmem:[%s1269 + $0x40] sm:%s1261] %v1274
                  %v1276 = vld [vmem:[%s1268 + $0xa8] sm:%s1261]
                  %1277 = vst [vmem:[%s1269 + $0x60] sm:%s1261] %v1276
                  %v1278 = vld [vmem:[%s1268 + $0xe0] sm:%s1261]
                  %1279 = vst [vmem:[%s1269 + $0x80] sm:%s1261] %v1278
                  %v1280 = vld [vmem:[%s1268 + $0x118] sm:%s1261]
                  %1281 = vst [vmem:[%s1269 + $0xa0] sm:%s1261] %v1280
                  %v1282 = vld [vmem:[%s1268 + $0x150] sm:%s1261]
                  %1283 = vst [vmem:[%s1269 + $0xc0] sm:%s1261] %v1282
                  %v1284 = vld [vmem:[%s1268 + $0x188] sm:%s1261]
                  %1285 = vst [vmem:[%s1269 + $0xe0] sm:%s1261] %v1284
                  %v1286 = vld [vmem:[%s1268 + $0x1c0] sm:%s1261]
                  %1287 = vst [vmem:[%s1269 + $0x100] sm:%s1261] %v1286
                  %v1288 = vld [vmem:[%s1268 + $0x1f8] sm:%s1261]
                  %1289 = vst [vmem:[%s1269 + $0x120] sm:%s1261] %v1288
                  %v1290 = vld [vmem:[%s1268 + $0x230] sm:%s1261]
                  %1291 = vst [vmem:[%s1269 + $0x140] sm:%s1261] %v1290
                  %v1292 = vld [vmem:[%s1268 + $0x268] sm:%s1261]
                  %1293 = vst [vmem:[%s1269 + $0x160] sm:%s1261] %v1292
                  %v1294 = vld [vmem:[%s1268 + $0x2a0] sm:%s1261]
                  %1295 = vst [vmem:[%s1269 + $0x180] sm:%s1261] %v1294
                  %v1296 = vld [vmem:[%s1268 + $0x2d8] sm:%s1261]
                  %1297 = vst [vmem:[%s1269 + $0x1a0] sm:%s1261] %v1296
                  %v1298 = vld [vmem:[%s1268 + $0x310] sm:%s1261]
                  %1299 = vst [vmem:[%s1269 + $0x1c0] sm:%s1261] %v1298
                  %v1300 = vld [vmem:[%s1268 + $0x348] sm:%s1261]
                  %1301 = vst [vmem:[%s1269 + $0x1e0] sm:%s1261] %v1300
                $region162: #{fused_bn_add_relu_conv_bn.5} parent=142 // loop_footer
                  %s1267 = sadd.s32 1, %s1263
                $region163: #{fused_bn_add_relu_conv_bn.5} parent=142 // loop_footer_branch
                  %1262 = sbr.rel target = $region159
                $region164: #{fused_bn_add_relu_conv_bn.5} parent=142 // loop_exit
                  _
              $region143: #{fused_bn_add_relu_conv_bn.5} parent=109 // pred_fallthru
                _
            $region110: #{fused_bn_add_relu_conv_bn.5} parent=105 // pred_fallthru
              _
            // Predicated region
            $region111: #{fused_bn_add_relu_conv_bn.5} parent=105 // pred_check
              %p788 = pneg %p784
            $region112: #{fused_bn_add_relu_conv_bn.5} parent=105 // pred_check_branch
              %790 = sbr.rel (%p788) target = $region114
            $region113: #{fused_bn_add_relu_conv_bn.5} parent=105 // pred_region
              %s791 = sshll.u32 1, %s780
              %s792 = ssub.s32 %s791, 1
              loop: start=0, step=1, limit=1
              $region115: #{fused_bn_add_relu_conv_bn.5} parent=113 // loop_pre_header
                _
              $region116: #{fused_bn_add_relu_conv_bn.5} parent=113 // loop_header
                %s794 = sphi 0, %s798
                %p795 = scmp.ge.s32.totalorder %s794, 1
                %s799 = sphi %s779, %s779
                %s800 = sphi %s769, %s769
              $region117: #{fused_bn_add_relu_conv_bn.5} parent=113 // loop_header_branch
                %797 = sbr.rel (%p795) target = $region121
              $region118: #{fused_bn_add_relu_conv_bn.5} parent=113 // loop_body
                %v801 = vld [vmem:[%s799] sm:%s792]
                %802 = vst [vmem:[%s800] sm:%s792] %v801
                %v803 = vld [vmem:[%s799 + $0x38] sm:%s792]
                %804 = vst [vmem:[%s800 + $0x20] sm:%s792] %v803
                %v805 = vld [vmem:[%s799 + $0x70] sm:%s792]
                %806 = vst [vmem:[%s800 + $0x40] sm:%s792] %v805
                %v807 = vld [vmem:[%s799 + $0xa8] sm:%s792]
                %808 = vst [vmem:[%s800 + $0x60] sm:%s792] %v807
                %v809 = vld [vmem:[%s799 + $0xe0] sm:%s792]
                %810 = vst [vmem:[%s800 + $0x80] sm:%s792] %v809
                %v811 = vld [vmem:[%s799 + $0x118] sm:%s792]
                %812 = vst [vmem:[%s800 + $0xa0] sm:%s792] %v811
                %v813 = vld [vmem:[%s799 + $0x150] sm:%s792]
                %814 = vst [vmem:[%s800 + $0xc0] sm:%s792] %v813
                %v815 = vld [vmem:[%s799 + $0x188] sm:%s792]
                %816 = vst [vmem:[%s800 + $0xe0] sm:%s792] %v815
                %v817 = vld [vmem:[%s799 + $0x1c0] sm:%s792]
                %818 = vst [vmem:[%s800 + $0x100] sm:%s792] %v817
                %v819 = vld [vmem:[%s799 + $0x1f8] sm:%s792]
                %820 = vst [vmem:[%s800 + $0x120] sm:%s792] %v819
                %v821 = vld [vmem:[%s799 + $0x230] sm:%s792]
                %822 = vst [vmem:[%s800 + $0x140] sm:%s792] %v821
                %v823 = vld [vmem:[%s799 + $0x268] sm:%s792]
                %824 = vst [vmem:[%s800 + $0x160] sm:%s792] %v823
                %v825 = vld [vmem:[%s799 + $0x2a0] sm:%s792]
                %826 = vst [vmem:[%s800 + $0x180] sm:%s792] %v825
                %v827 = vld [vmem:[%s799 + $0x2d8] sm:%s792]
                %828 = vst [vmem:[%s800 + $0x1a0] sm:%s792] %v827
                %v829 = vld [vmem:[%s799 + $0x310] sm:%s792]
                %830 = vst [vmem:[%s800 + $0x1c0] sm:%s792] %v829
                %v831 = vld [vmem:[%s799 + $0x348] sm:%s792]
                %832 = vst [vmem:[%s800 + $0x1e0] sm:%s792] %v831
              $region119: #{fused_bn_add_relu_conv_bn.5} parent=113 // loop_footer
                %s798 = sadd.s32 1, %s794
              $region120: #{fused_bn_add_relu_conv_bn.5} parent=113 // loop_footer_branch
                %793 = sbr.rel target = $region116
              $region121: #{fused_bn_add_relu_conv_bn.5} parent=113 // loop_exit
                _
            $region114: #{fused_bn_add_relu_conv_bn.5} parent=105 // pred_fallthru
              _
          $region106: #{fused_bn_add_relu_conv_bn.5} parent=101 // pred_fallthru
            _
          %1302 = vnop
        $region102: #{fused_bn_add_relu_conv_bn.5} parent=31 // pred_fallthru
          _
      $region32: #{fused_bn_add_relu_conv_bn.5} parent=5 // pred_fallthru
        _
      %p1303 = scmp.le.s32.totalorder 1, %s12
      %p1304 = scmp.lt.s32.totalorder %s12, 3
      %p1305 = pnand %p1303, %p1304
      %p1306 = pneg %p1305
      // Predicated region
      $region165: #{fused_bn_add_relu_conv_bn.5} parent=5 // pred_check
        _
      $region166: #{fused_bn_add_relu_conv_bn.5} parent=5 // pred_check_branch
        %1308 = sbr.rel (%p1305) target = $region168
      $region167: #{fused_bn_add_relu_conv_bn.5} parent=5 // pred_region
        %s1309 = ssub.s32 %s12, 1
        %s1310 = sand.u32 %s39, 1
        %s1311 = sand.u32 %s39, 1
        %s1312 = smul.addr %s1311, 512
        %s1313 = scalar_lea.vmem [#allocation2], %s1312
        // Predicated region
        $region169: #{fused_bn_add_relu_conv_bn.5} parent=167 // pred_check
          %p1314 = pneg %p52
        $region170: #{fused_bn_add_relu_conv_bn.5} parent=167 // pred_check_branch
          %1316 = sbr.rel (%p1314) target = $region172
        $region171: #{fused_bn_add_relu_conv_bn.5} parent=167 // pred_region
          _
        $region172: #{fused_bn_add_relu_conv_bn.5} parent=167 // pred_fallthru
          _
        %s1317 = sand.u32 %s67, 1
        %s1318 = sand.u32 %s67, 1
        %s1319 = smul.addr %s1318, 512
        %s1320 = scalar_lea.vmem [#allocation3], %s1319
        // Predicated region
        $region173: #{fused_bn_add_relu_conv_bn.5} parent=167 // pred_check
          %p1321 = pneg %p80
        $region174: #{fused_bn_add_relu_conv_bn.5} parent=167 // pred_check_branch
          %1323 = sbr.rel (%p1321) target = $region176
        $region175: #{fused_bn_add_relu_conv_bn.5} parent=167 // pred_region
          _
        $region176: #{fused_bn_add_relu_conv_bn.5} parent=167 // pred_fallthru
          _
        %s1324 = sand.u32 %s39, 1
        %s1325 = sand.u32 %s39, 1
        %s1326 = smul.addr %s1325, 512
        %s1327 = scalar_lea.vmem [#allocation2], %s1326
        %p1328 = pneg %p52
        %p1329 = pneg %p49
        %s1330 = sand.u32 %s67, 1
        %s1331 = sand.u32 %s67, 1
        %s1332 = smul.addr %s1331, 512
        %s1333 = scalar_lea.vmem [#allocation3], %s1332
        %p1334 = pneg %p80
        %p1335 = pneg %p77
        %p1336 = pneg %p101
        %p1337 = pneg %p98
        %p1338 = pneg %p122
        %p1339 = pneg %p119
        %p1340 = pneg %p143
        %p1341 = pneg %p140
        %p1342 = pneg %p164
        %p1343 = pneg %p161
        %p1344 = pneg %p192
        %p1345 = pneg %p189
        %s1346 = sand.u32 %s179, 1
        %s1347 = sand.u32 %s179, 1
        %s1348 = smul.addr %s1347, 512
        %s1349 = scalar_lea.vmem [#allocation4], %s1348
        %s1350 = smul.u32 4, %s22
        %s1351 = ssub.s32 7, %s1350
        %p1352 = scmp.lt.s32.totalorder %s1351, 4
        %s1353 = scalar_select %p1352, %s1351, 4
        %s1354 = smul.u32 2048, %s1353
        %s1355 = smul.u32 4, %s22
        %s1356 = ssub.s32 7, %s1355
        %p1357 = scmp.lt.s32.totalorder %s1356, 4
        %s1358 = scalar_select %p1357, %s1356, 4
        %s1359 = smul.u32 2048, %s1358
        %s1360 = smul.u32 4, %s22
        %s1361 = ssub.s32 7, %s1360
        %p1362 = scmp.lt.s32.totalorder %s1361, 4
        %s1363 = scalar_select %p1362, %s1361, 4
        %s1364 = smul.u32 2048, %s1363
        %v1365 = vld [vmem:[%s1313] sm:$0xff]
        %v1366 = vld [vmem:[%s1313 + $0x8] sm:$0xff]
        %v1367 = vld [vmem:[%s1313 + $0x10] sm:$0xff]
        %v1368 = vld [vmem:[%s1313 + $0x18] sm:$0xff]
        %v1369 = vld [vmem:[%s1313 + $0x20] sm:$0xff]
        %v1370 = vld [vmem:[%s1313 + $0x28] sm:$0xff]
        %v1371 = vld [vmem:[%s1313 + $0x30] sm:$0xff]
        %v1372 = vld [vmem:[%s1313 + $0x38] sm:$0xff]
        %v1373 = vld [vmem:[%s1313 + $0x40] sm:$0xff]
        %v1374 = vld [vmem:[%s1313 + $0x48] sm:$0xff]
        %v1375 = vld [vmem:[%s1313 + $0x50] sm:$0xff]
        %v1376 = vld [vmem:[%s1313 + $0x58] sm:$0xff]
        %v1377 = vld [vmem:[%s1313 + $0x60] sm:$0xff]
        %v1378 = vld [vmem:[%s1313 + $0x68] sm:$0xff]
        %v1379 = vld [vmem:[%s1313 + $0x70] sm:$0xff]
        %v1380 = vld [vmem:[%s1313 + $0x78] sm:$0xff]
        %v1381 = vld [vmem:[%s1313 + $0x80] sm:$0xff]
        %v1382 = vld [vmem:[%s1313 + $0x88] sm:$0xff]
        %v1383 = vld [vmem:[%s1313 + $0x90] sm:$0xff]
        %v1384 = vld [vmem:[%s1313 + $0x98] sm:$0xff]
        %v1385 = vld [vmem:[%s1313 + $0xa0] sm:$0xff]
        %v1386 = vld [vmem:[%s1313 + $0xa8] sm:$0xff]
        %v1387 = vld [vmem:[%s1313 + $0xb0] sm:$0xff]
        %v1388 = vld [vmem:[%s1313 + $0xb8] sm:$0xff]
        %v1389 = vld [vmem:[%s1313 + $0xc0] sm:$0xff]
        %v1390 = vld [vmem:[%s1313 + $0xc8] sm:$0xff]
        %v1391 = vld [vmem:[%s1313 + $0xd0] sm:$0xff]
        %v1392 = vld [vmem:[%s1313 + $0xd8] sm:$0xff]
        %v1393 = vld [vmem:[%s1313 + $0xe0] sm:$0xff]
        %v1394 = vld [vmem:[%s1313 + $0xe8] sm:$0xff]
        %v1395 = vld [vmem:[%s1313 + $0xf0] sm:$0xff]
        %v1396 = vld [vmem:[%s1313 + $0xf8] sm:$0xff]
        %v1397 = vld [vmem:[%s1313 + $0x100] sm:$0xff]
        %v1398 = vld [vmem:[%s1313 + $0x108] sm:$0xff]
        %v1399 = vld [vmem:[%s1313 + $0x110] sm:$0xff]
        %v1400 = vld [vmem:[%s1313 + $0x118] sm:$0xff]
        %v1401 = vld [vmem:[%s1313 + $0x120] sm:$0xff]
        %v1402 = vld [vmem:[%s1313 + $0x128] sm:$0xff]
        %v1403 = vld [vmem:[%s1313 + $0x130] sm:$0xff]
        %v1404 = vld [vmem:[%s1313 + $0x138] sm:$0xff]
        %v1405 = vld [vmem:[%s1313 + $0x140] sm:$0xff]
        %v1406 = vld [vmem:[%s1313 + $0x148] sm:$0xff]
        %v1407 = vld [vmem:[%s1313 + $0x150] sm:$0xff]
        %v1408 = vld [vmem:[%s1313 + $0x158] sm:$0xff]
        %v1409 = vld [vmem:[%s1313 + $0x160] sm:$0xff]
        %v1410 = vld [vmem:[%s1313 + $0x168] sm:$0xff]
        %v1411 = vld [vmem:[%s1313 + $0x170] sm:$0xff]
        %v1412 = vld [vmem:[%s1313 + $0x178] sm:$0xff]
        %v1413 = vld [vmem:[%s1313 + $0x180] sm:$0xff]
        %v1414 = vld [vmem:[%s1313 + $0x188] sm:$0xff]
        %v1415 = vld [vmem:[%s1313 + $0x190] sm:$0xff]
        %v1416 = vld [vmem:[%s1313 + $0x198] sm:$0xff]
        %v1417 = vld [vmem:[%s1313 + $0x1a0] sm:$0xff]
        %v1418 = vld [vmem:[%s1313 + $0x1a8] sm:$0xff]
        %v1419 = vld [vmem:[%s1313 + $0x1b0] sm:$0xff]
        %v1420 = vld [vmem:[%s1313 + $0x1b8] sm:$0xff]
        %v1421 = vld [vmem:[%s1313 + $0x1c0] sm:$0xff]
        %v1422 = vld [vmem:[%s1313 + $0x1c8] sm:$0xff]
        %v1423 = vld [vmem:[%s1313 + $0x1d0] sm:$0xff]
        %v1424 = vld [vmem:[%s1313 + $0x1d8] sm:$0xff]
        %v1425 = vld [vmem:[%s1313 + $0x1e0] sm:$0xff]
        %v1426 = vld [vmem:[%s1313 + $0x1e8] sm:$0xff]
        %v1427 = vld [vmem:[%s1313 + $0x1f0] sm:$0xff]
        %v1428 = vld [vmem:[%s1313 + $0x1f8] sm:$0xff]
        %v1429 = vld [vmem:[%s2] sm:$0xff]
        %v1430 = vld [vmem:[%s2 + $0x8] sm:$0xff]
        %v1431 = vld [vmem:[%s2 + $0x10] sm:$0xff]
        %v1432 = vld [vmem:[%s2 + $0x18] sm:$0xff]
        %v1433 = vld [vmem:[%s2 + $0x20] sm:$0xff]
        %v1434 = vld [vmem:[%s2 + $0x28] sm:$0xff]
        %v1435 = vld [vmem:[%s2 + $0x30] sm:$0xff]
        %v1436 = vld [vmem:[%s2 + $0x38] sm:$0xff]
        %v1437 = vld [vmem:[%s2 + $0x40] sm:$0xff]
        %v1438 = vld [vmem:[%s2 + $0x48] sm:$0xff]
        %v1439 = vld [vmem:[%s2 + $0x50] sm:$0xff]
        %v1440 = vld [vmem:[%s2 + $0x58] sm:$0xff]
        %v1441 = vld [vmem:[%s2 + $0x60] sm:$0xff]
        %v1442 = vld [vmem:[%s2 + $0x68] sm:$0xff]
        %v1443 = vld [vmem:[%s2 + $0x70] sm:$0xff]
        %v1444 = vld [vmem:[%s2 + $0x78] sm:$0xff]
        %1446 = vset.pattern.permute.xlu0 0
        %1447 = vperm.xlu0 %1446, %v1429
        %v1448 = vpop.permute.xlu0 %1447
        %1451 = vset.pattern.permute.xlu0 0
        %1452 = vperm.xlu0 %1451, %v1430
        %v1453 = vpop.permute.xlu0 %1452
        %1456 = vset.pattern.permute.xlu0 0
        %1457 = vperm.xlu0 %1456, %v1431
        %v1458 = vpop.permute.xlu0 %1457
        %1461 = vset.pattern.permute.xlu0 0
        %1462 = vperm.xlu0 %1461, %v1432
        %v1463 = vpop.permute.xlu0 %1462
        %1466 = vset.pattern.permute.xlu0 0
        %1467 = vperm.xlu0 %1466, %v1433
        %v1468 = vpop.permute.xlu0 %1467
        %1471 = vset.pattern.permute.xlu0 0
        %1472 = vperm.xlu0 %1471, %v1434
        %v1473 = vpop.permute.xlu0 %1472
        %1476 = vset.pattern.permute.xlu0 0
        %1477 = vperm.xlu0 %1476, %v1435
        %v1478 = vpop.permute.xlu0 %1477
        %1481 = vset.pattern.permute.xlu0 0
        %1482 = vperm.xlu0 %1481, %v1436
        %v1483 = vpop.permute.xlu0 %1482
        %1486 = vset.pattern.permute.xlu0 0
        %1487 = vperm.xlu0 %1486, %v1437
        %v1488 = vpop.permute.xlu0 %1487
        %1491 = vset.pattern.permute.xlu0 0
        %1492 = vperm.xlu0 %1491, %v1438
        %v1493 = vpop.permute.xlu0 %1492
        %1496 = vset.pattern.permute.xlu0 0
        %1497 = vperm.xlu0 %1496, %v1439
        %v1498 = vpop.permute.xlu0 %1497
        %1501 = vset.pattern.permute.xlu0 0
        %1502 = vperm.xlu0 %1501, %v1440
        %v1503 = vpop.permute.xlu0 %1502
        %1506 = vset.pattern.permute.xlu0 0
        %1507 = vperm.xlu0 %1506, %v1441
        %v1508 = vpop.permute.xlu0 %1507
        %1511 = vset.pattern.permute.xlu0 0
        %1512 = vperm.xlu0 %1511, %v1442
        %v1513 = vpop.permute.xlu0 %1512
        %1516 = vset.pattern.permute.xlu0 0
        %1517 = vperm.xlu0 %1516, %v1443
        %v1518 = vpop.permute.xlu0 %1517
        %1521 = vset.pattern.permute.xlu0 0
        %1522 = vperm.xlu0 %1521, %v1444
        %v1523 = vpop.permute.xlu0 %1522
        %v1525 = vmul.f32 %v1365, %v1448
        %v1526 = vmul.f32 %v1366, %v1448
        %v1527 = vmul.f32 %v1367, %v1448
        %v1528 = vmul.f32 %v1368, %v1448
        %v1529 = vmul.f32 %v1369, %v1453
        %v1530 = vmul.f32 %v1370, %v1453
        %v1531 = vmul.f32 %v1371, %v1453
        %v1532 = vmul.f32 %v1372, %v1453
        %v1533 = vmul.f32 %v1373, %v1458
        %v1534 = vmul.f32 %v1374, %v1458
        %v1535 = vmul.f32 %v1375, %v1458
        %v1536 = vmul.f32 %v1376, %v1458
        %v1537 = vmul.f32 %v1377, %v1463
        %v1538 = vmul.f32 %v1378, %v1463
        %v1539 = vmul.f32 %v1379, %v1463
        %v1540 = vmul.f32 %v1380, %v1463
        %v1541 = vmul.f32 %v1381, %v1468
        %v1542 = vmul.f32 %v1382, %v1468
        %v1543 = vmul.f32 %v1383, %v1468
        %v1544 = vmul.f32 %v1384, %v1468
        %v1545 = vmul.f32 %v1385, %v1473
        %v1546 = vmul.f32 %v1386, %v1473
        %v1547 = vmul.f32 %v1387, %v1473
        %v1548 = vmul.f32 %v1388, %v1473
        %v1549 = vmul.f32 %v1389, %v1478
        %v1550 = vmul.f32 %v1390, %v1478
        %v1551 = vmul.f32 %v1391, %v1478
        %v1552 = vmul.f32 %v1392, %v1478
        %v1553 = vmul.f32 %v1393, %v1483
        %v1554 = vmul.f32 %v1394, %v1483
        %v1555 = vmul.f32 %v1395, %v1483
        %v1556 = vmul.f32 %v1396, %v1483
        %v1557 = vmul.f32 %v1397, %v1488
        %v1558 = vmul.f32 %v1398, %v1488
        %v1559 = vmul.f32 %v1399, %v1488
        %v1560 = vmul.f32 %v1400, %v1488
        %v1561 = vmul.f32 %v1401, %v1493
        %v1562 = vmul.f32 %v1402, %v1493
        %v1563 = vmul.f32 %v1403, %v1493
        %v1564 = vmul.f32 %v1404, %v1493
        %v1565 = vmul.f32 %v1405, %v1498
        %v1566 = vmul.f32 %v1406, %v1498
        %v1567 = vmul.f32 %v1407, %v1498
        %v1568 = vmul.f32 %v1408, %v1498
        %v1569 = vmul.f32 %v1409, %v1503
        %v1570 = vmul.f32 %v1410, %v1503
        %v1571 = vmul.f32 %v1411, %v1503
        %v1572 = vmul.f32 %v1412, %v1503
        %v1573 = vmul.f32 %v1413, %v1508
        %v1574 = vmul.f32 %v1414, %v1508
        %v1575 = vmul.f32 %v1415, %v1508
        %v1576 = vmul.f32 %v1416, %v1508
        %v1577 = vmul.f32 %v1417, %v1513
        %v1578 = vmul.f32 %v1418, %v1513
        %v1579 = vmul.f32 %v1419, %v1513
        %v1580 = vmul.f32 %v1420, %v1513
        %v1581 = vmul.f32 %v1421, %v1518
        %v1582 = vmul.f32 %v1422, %v1518
        %v1583 = vmul.f32 %v1423, %v1518
        %v1584 = vmul.f32 %v1424, %v1518
        %v1585 = vmul.f32 %v1425, %v1523
        %v1586 = vmul.f32 %v1426, %v1523
        %v1587 = vmul.f32 %v1427, %v1523
        %v1588 = vmul.f32 %v1428, %v1523
        %v1589 = vld [vmem:[%s3] sm:$0xff]
        %v1590 = vld [vmem:[%s3 + $0x8] sm:$0xff]
        %v1591 = vld [vmem:[%s3 + $0x10] sm:$0xff]
        %v1592 = vld [vmem:[%s3 + $0x18] sm:$0xff]
        %v1593 = vld [vmem:[%s3 + $0x20] sm:$0xff]
        %v1594 = vld [vmem:[%s3 + $0x28] sm:$0xff]
        %v1595 = vld [vmem:[%s3 + $0x30] sm:$0xff]
        %v1596 = vld [vmem:[%s3 + $0x38] sm:$0xff]
        %v1597 = vld [vmem:[%s3 + $0x40] sm:$0xff]
        %v1598 = vld [vmem:[%s3 + $0x48] sm:$0xff]
        %v1599 = vld [vmem:[%s3 + $0x50] sm:$0xff]
        %v1600 = vld [vmem:[%s3 + $0x58] sm:$0xff]
        %v1601 = vld [vmem:[%s3 + $0x60] sm:$0xff]
        %v1602 = vld [vmem:[%s3 + $0x68] sm:$0xff]
        %v1603 = vld [vmem:[%s3 + $0x70] sm:$0xff]
        %v1604 = vld [vmem:[%s3 + $0x78] sm:$0xff]
        %1606 = vset.pattern.permute.xlu0 0
        %1607 = vperm.xlu0 %1606, %v1589
        %v1608 = vpop.permute.xlu0 %1607
        %1611 = vset.pattern.permute.xlu0 0
        %1612 = vperm.xlu0 %1611, %v1590
        %v1613 = vpop.permute.xlu0 %1612
        %1616 = vset.pattern.permute.xlu0 0
        %1617 = vperm.xlu0 %1616, %v1591
        %v1618 = vpop.permute.xlu0 %1617
        %1621 = vset.pattern.permute.xlu0 0
        %1622 = vperm.xlu0 %1621, %v1592
        %v1623 = vpop.permute.xlu0 %1622
        %1626 = vset.pattern.permute.xlu0 0
        %1627 = vperm.xlu0 %1626, %v1593
        %v1628 = vpop.permute.xlu0 %1627
        %1631 = vset.pattern.permute.xlu0 0
        %1632 = vperm.xlu0 %1631, %v1594
        %v1633 = vpop.permute.xlu0 %1632
        %1636 = vset.pattern.permute.xlu0 0
        %1637 = vperm.xlu0 %1636, %v1595
        %v1638 = vpop.permute.xlu0 %1637
        %1641 = vset.pattern.permute.xlu0 0
        %1642 = vperm.xlu0 %1641, %v1596
        %v1643 = vpop.permute.xlu0 %1642
        %1646 = vset.pattern.permute.xlu0 0
        %1647 = vperm.xlu0 %1646, %v1597
        %v1648 = vpop.permute.xlu0 %1647
        %1651 = vset.pattern.permute.xlu0 0
        %1652 = vperm.xlu0 %1651, %v1598
        %v1653 = vpop.permute.xlu0 %1652
        %1656 = vset.pattern.permute.xlu0 0
        %1657 = vperm.xlu0 %1656, %v1599
        %v1658 = vpop.permute.xlu0 %1657
        %1661 = vset.pattern.permute.xlu0 0
        %1662 = vperm.xlu0 %1661, %v1600
        %v1663 = vpop.permute.xlu0 %1662
        %1666 = vset.pattern.permute.xlu0 0
        %1667 = vperm.xlu0 %1666, %v1601
        %v1668 = vpop.permute.xlu0 %1667
        %1671 = vset.pattern.permute.xlu0 0
        %1672 = vperm.xlu0 %1671, %v1602
        %v1673 = vpop.permute.xlu0 %1672
        %1676 = vset.pattern.permute.xlu0 0
        %1677 = vperm.xlu0 %1676, %v1603
        %v1678 = vpop.permute.xlu0 %1677
        %1681 = vset.pattern.permute.xlu0 0
        %1682 = vperm.xlu0 %1681, %v1604
        %v1683 = vpop.permute.xlu0 %1682
        %v1685 = vadd.f32 %v1525, %v1608
        %v1686 = vadd.f32 %v1526, %v1608
        %v1687 = vadd.f32 %v1527, %v1608
        %v1688 = vadd.f32 %v1528, %v1608
        %v1689 = vadd.f32 %v1529, %v1613
        %v1690 = vadd.f32 %v1530, %v1613
        %v1691 = vadd.f32 %v1531, %v1613
        %v1692 = vadd.f32 %v1532, %v1613
        %v1693 = vadd.f32 %v1533, %v1618
        %v1694 = vadd.f32 %v1534, %v1618
        %v1695 = vadd.f32 %v1535, %v1618
        %v1696 = vadd.f32 %v1536, %v1618
        %v1697 = vadd.f32 %v1537, %v1623
        %v1698 = vadd.f32 %v1538, %v1623
        %v1699 = vadd.f32 %v1539, %v1623
        %v1700 = vadd.f32 %v1540, %v1623
        %v1701 = vadd.f32 %v1541, %v1628
        %v1702 = vadd.f32 %v1542, %v1628
        %v1703 = vadd.f32 %v1543, %v1628
        %v1704 = vadd.f32 %v1544, %v1628
        %v1705 = vadd.f32 %v1545, %v1633
        %v1706 = vadd.f32 %v1546, %v1633
        %v1707 = vadd.f32 %v1547, %v1633
        %v1708 = vadd.f32 %v1548, %v1633
        %v1709 = vadd.f32 %v1549, %v1638
        %v1710 = vadd.f32 %v1550, %v1638
        %v1711 = vadd.f32 %v1551, %v1638
        %v1712 = vadd.f32 %v1552, %v1638
        %v1713 = vadd.f32 %v1553, %v1643
        %v1714 = vadd.f32 %v1554, %v1643
        %v1715 = vadd.f32 %v1555, %v1643
        %v1716 = vadd.f32 %v1556, %v1643
        %v1717 = vadd.f32 %v1557, %v1648
        %v1718 = vadd.f32 %v1558, %v1648
        %v1719 = vadd.f32 %v1559, %v1648
        %v1720 = vadd.f32 %v1560, %v1648
        %v1721 = vadd.f32 %v1561, %v1653
        %v1722 = vadd.f32 %v1562, %v1653
        %v1723 = vadd.f32 %v1563, %v1653
        %v1724 = vadd.f32 %v1564, %v1653
        %v1725 = vadd.f32 %v1565, %v1658
        %v1726 = vadd.f32 %v1566, %v1658
        %v1727 = vadd.f32 %v1567, %v1658
        %v1728 = vadd.f32 %v1568, %v1658
        %v1729 = vadd.f32 %v1569, %v1663
        %v1730 = vadd.f32 %v1570, %v1663
        %v1731 = vadd.f32 %v1571, %v1663
        %v1732 = vadd.f32 %v1572, %v1663
        %v1733 = vadd.f32 %v1573, %v1668
        %v1734 = vadd.f32 %v1574, %v1668
        %v1735 = vadd.f32 %v1575, %v1668
        %v1736 = vadd.f32 %v1576, %v1668
        %v1737 = vadd.f32 %v1577, %v1673
        %v1738 = vadd.f32 %v1578, %v1673
        %v1739 = vadd.f32 %v1579, %v1673
        %v1740 = vadd.f32 %v1580, %v1673
        %v1741 = vadd.f32 %v1581, %v1678
        %v1742 = vadd.f32 %v1582, %v1678
        %v1743 = vadd.f32 %v1583, %v1678
        %v1744 = vadd.f32 %v1584, %v1678
        %v1745 = vadd.f32 %v1585, %v1683
        %v1746 = vadd.f32 %v1586, %v1683
        %v1747 = vadd.f32 %v1587, %v1683
        %v1748 = vadd.f32 %v1588, %v1683
        %v1749 = vld [vmem:[%s1320] sm:$0xff]
        %v1750 = vld [vmem:[%s1320 + $0x8] sm:$0xff]
        %v1751 = vld [vmem:[%s1320 + $0x10] sm:$0xff]
        %v1752 = vld [vmem:[%s1320 + $0x18] sm:$0xff]
        %v1753 = vld [vmem:[%s1320 + $0x20] sm:$0xff]
        %v1754 = vld [vmem:[%s1320 + $0x28] sm:$0xff]
        %v1755 = vld [vmem:[%s1320 + $0x30] sm:$0xff]
        %v1756 = vld [vmem:[%s1320 + $0x38] sm:$0xff]
        %v1757 = vld [vmem:[%s1320 + $0x40] sm:$0xff]
        %v1758 = vld [vmem:[%s1320 + $0x48] sm:$0xff]
        %v1759 = vld [vmem:[%s1320 + $0x50] sm:$0xff]
        %v1760 = vld [vmem:[%s1320 + $0x58] sm:$0xff]
        %v1761 = vld [vmem:[%s1320 + $0x60] sm:$0xff]
        %v1762 = vld [vmem:[%s1320 + $0x68] sm:$0xff]
        %v1763 = vld [vmem:[%s1320 + $0x70] sm:$0xff]
        %v1764 = vld [vmem:[%s1320 + $0x78] sm:$0xff]
        %v1765 = vld [vmem:[%s1320 + $0x80] sm:$0xff]
        %v1766 = vld [vmem:[%s1320 + $0x88] sm:$0xff]
        %v1767 = vld [vmem:[%s1320 + $0x90] sm:$0xff]
        %v1768 = vld [vmem:[%s1320 + $0x98] sm:$0xff]
        %v1769 = vld [vmem:[%s1320 + $0xa0] sm:$0xff]
        %v1770 = vld [vmem:[%s1320 + $0xa8] sm:$0xff]
        %v1771 = vld [vmem:[%s1320 + $0xb0] sm:$0xff]
        %v1772 = vld [vmem:[%s1320 + $0xb8] sm:$0xff]
        %v1773 = vld [vmem:[%s1320 + $0xc0] sm:$0xff]
        %v1774 = vld [vmem:[%s1320 + $0xc8] sm:$0xff]
        %v1775 = vld [vmem:[%s1320 + $0xd0] sm:$0xff]
        %v1776 = vld [vmem:[%s1320 + $0xd8] sm:$0xff]
        %v1777 = vld [vmem:[%s1320 + $0xe0] sm:$0xff]
        %v1778 = vld [vmem:[%s1320 + $0xe8] sm:$0xff]
        %v1779 = vld [vmem:[%s1320 + $0xf0] sm:$0xff]
        %v1780 = vld [vmem:[%s1320 + $0xf8] sm:$0xff]
        %v1781 = vld [vmem:[%s1320 + $0x100] sm:$0xff]
        %v1782 = vld [vmem:[%s1320 + $0x108] sm:$0xff]
        %v1783 = vld [vmem:[%s1320 + $0x110] sm:$0xff]
        %v1784 = vld [vmem:[%s1320 + $0x118] sm:$0xff]
        %v1785 = vld [vmem:[%s1320 + $0x120] sm:$0xff]
        %v1786 = vld [vmem:[%s1320 + $0x128] sm:$0xff]
        %v1787 = vld [vmem:[%s1320 + $0x130] sm:$0xff]
        %v1788 = vld [vmem:[%s1320 + $0x138] sm:$0xff]
        %v1789 = vld [vmem:[%s1320 + $0x140] sm:$0xff]
        %v1790 = vld [vmem:[%s1320 + $0x148] sm:$0xff]
        %v1791 = vld [vmem:[%s1320 + $0x150] sm:$0xff]
        %v1792 = vld [vmem:[%s1320 + $0x158] sm:$0xff]
        %v1793 = vld [vmem:[%s1320 + $0x160] sm:$0xff]
        %v1794 = vld [vmem:[%s1320 + $0x168] sm:$0xff]
        %v1795 = vld [vmem:[%s1320 + $0x170] sm:$0xff]
        %v1796 = vld [vmem:[%s1320 + $0x178] sm:$0xff]
        %v1797 = vld [vmem:[%s1320 + $0x180] sm:$0xff]
        %v1798 = vld [vmem:[%s1320 + $0x188] sm:$0xff]
        %v1799 = vld [vmem:[%s1320 + $0x190] sm:$0xff]
        %v1800 = vld [vmem:[%s1320 + $0x198] sm:$0xff]
        %v1801 = vld [vmem:[%s1320 + $0x1a0] sm:$0xff]
        %v1802 = vld [vmem:[%s1320 + $0x1a8] sm:$0xff]
        %v1803 = vld [vmem:[%s1320 + $0x1b0] sm:$0xff]
        %v1804 = vld [vmem:[%s1320 + $0x1b8] sm:$0xff]
        %v1805 = vld [vmem:[%s1320 + $0x1c0] sm:$0xff]
        %v1806 = vld [vmem:[%s1320 + $0x1c8] sm:$0xff]
        %v1807 = vld [vmem:[%s1320 + $0x1d0] sm:$0xff]
        %v1808 = vld [vmem:[%s1320 + $0x1d8] sm:$0xff]
        %v1809 = vld [vmem:[%s1320 + $0x1e0] sm:$0xff]
        %v1810 = vld [vmem:[%s1320 + $0x1e8] sm:$0xff]
        %v1811 = vld [vmem:[%s1320 + $0x1f0] sm:$0xff]
        %v1812 = vld [vmem:[%s1320 + $0x1f8] sm:$0xff]
        %v1813 = vadd.f32 %v1685, %v1749
        %v1814 = vadd.f32 %v1686, %v1750
        %v1815 = vadd.f32 %v1687, %v1751
        %v1816 = vadd.f32 %v1688, %v1752
        %v1817 = vadd.f32 %v1689, %v1753
        %v1818 = vadd.f32 %v1690, %v1754
        %v1819 = vadd.f32 %v1691, %v1755
        %v1820 = vadd.f32 %v1692, %v1756
        %v1821 = vadd.f32 %v1693, %v1757
        %v1822 = vadd.f32 %v1694, %v1758
        %v1823 = vadd.f32 %v1695, %v1759
        %v1824 = vadd.f32 %v1696, %v1760
        %v1825 = vadd.f32 %v1697, %v1761
        %v1826 = vadd.f32 %v1698, %v1762
        %v1827 = vadd.f32 %v1699, %v1763
        %v1828 = vadd.f32 %v1700, %v1764
        %v1829 = vadd.f32 %v1701, %v1765
        %v1830 = vadd.f32 %v1702, %v1766
        %v1831 = vadd.f32 %v1703, %v1767
        %v1832 = vadd.f32 %v1704, %v1768
        %v1833 = vadd.f32 %v1705, %v1769
        %v1834 = vadd.f32 %v1706, %v1770
        %v1835 = vadd.f32 %v1707, %v1771
        %v1836 = vadd.f32 %v1708, %v1772
        %v1837 = vadd.f32 %v1709, %v1773
        %v1838 = vadd.f32 %v1710, %v1774
        %v1839 = vadd.f32 %v1711, %v1775
        %v1840 = vadd.f32 %v1712, %v1776
        %v1841 = vadd.f32 %v1713, %v1777
        %v1842 = vadd.f32 %v1714, %v1778
        %v1843 = vadd.f32 %v1715, %v1779
        %v1844 = vadd.f32 %v1716, %v1780
        %v1845 = vadd.f32 %v1717, %v1781
        %v1846 = vadd.f32 %v1718, %v1782
        %v1847 = vadd.f32 %v1719, %v1783
        %v1848 = vadd.f32 %v1720, %v1784
        %v1849 = vadd.f32 %v1721, %v1785
        %v1850 = vadd.f32 %v1722, %v1786
        %v1851 = vadd.f32 %v1723, %v1787
        %v1852 = vadd.f32 %v1724, %v1788
        %v1853 = vadd.f32 %v1725, %v1789
        %v1854 = vadd.f32 %v1726, %v1790
        %v1855 = vadd.f32 %v1727, %v1791
        %v1856 = vadd.f32 %v1728, %v1792
        %v1857 = vadd.f32 %v1729, %v1793
        %v1858 = vadd.f32 %v1730, %v1794
        %v1859 = vadd.f32 %v1731, %v1795
        %v1860 = vadd.f32 %v1732, %v1796
        %v1861 = vadd.f32 %v1733, %v1797
        %v1862 = vadd.f32 %v1734, %v1798
        %v1863 = vadd.f32 %v1735, %v1799
        %v1864 = vadd.f32 %v1736, %v1800
        %v1865 = vadd.f32 %v1737, %v1801
        %v1866 = vadd.f32 %v1738, %v1802
        %v1867 = vadd.f32 %v1739, %v1803
        %v1868 = vadd.f32 %v1740, %v1804
        %v1869 = vadd.f32 %v1741, %v1805
        %v1870 = vadd.f32 %v1742, %v1806
        %v1871 = vadd.f32 %v1743, %v1807
        %v1872 = vadd.f32 %v1744, %v1808
        %v1873 = vadd.f32 %v1745, %v1809
        %v1874 = vadd.f32 %v1746, %v1810
        %v1875 = vadd.f32 %v1747, %v1811
        %v1876 = vadd.f32 %v1748, %v1812
        %v1877 = vmax.f32 %v1813, 0.0
        %v1878 = vmax.f32 %v1814, 0.0
        %v1879 = vmax.f32 %v1815, 0.0
        %v1880 = vmax.f32 %v1816, 0.0
        %v1881 = vmax.f32 %v1817, 0.0
        %v1882 = vmax.f32 %v1818, 0.0
        %v1883 = vmax.f32 %v1819, 0.0
        %v1884 = vmax.f32 %v1820, 0.0
        %v1885 = vmax.f32 %v1821, 0.0
        %v1886 = vmax.f32 %v1822, 0.0
        %v1887 = vmax.f32 %v1823, 0.0
        %v1888 = vmax.f32 %v1824, 0.0
        %v1889 = vmax.f32 %v1825, 0.0
        %v1890 = vmax.f32 %v1826, 0.0
        %v1891 = vmax.f32 %v1827, 0.0
        %v1892 = vmax.f32 %v1828, 0.0
        %v1893 = vmax.f32 %v1829, 0.0
        %v1894 = vmax.f32 %v1830, 0.0
        %v1895 = vmax.f32 %v1831, 0.0
        %v1896 = vmax.f32 %v1832, 0.0
        %v1897 = vmax.f32 %v1833, 0.0
        %v1898 = vmax.f32 %v1834, 0.0
        %v1899 = vmax.f32 %v1835, 0.0
        %v1900 = vmax.f32 %v1836, 0.0
        %v1901 = vmax.f32 %v1837, 0.0
        %v1902 = vmax.f32 %v1838, 0.0
        %v1903 = vmax.f32 %v1839, 0.0
        %v1904 = vmax.f32 %v1840, 0.0
        %v1905 = vmax.f32 %v1841, 0.0
        %v1906 = vmax.f32 %v1842, 0.0
        %v1907 = vmax.f32 %v1843, 0.0
        %v1908 = vmax.f32 %v1844, 0.0
        %v1909 = vmax.f32 %v1845, 0.0
        %v1910 = vmax.f32 %v1846, 0.0
        %v1911 = vmax.f32 %v1847, 0.0
        %v1912 = vmax.f32 %v1848, 0.0
        %v1913 = vmax.f32 %v1849, 0.0
        %v1914 = vmax.f32 %v1850, 0.0
        %v1915 = vmax.f32 %v1851, 0.0
        %v1916 = vmax.f32 %v1852, 0.0
        %v1917 = vmax.f32 %v1853, 0.0
        %v1918 = vmax.f32 %v1854, 0.0
        %v1919 = vmax.f32 %v1855, 0.0
        %v1920 = vmax.f32 %v1856, 0.0
        %v1921 = vmax.f32 %v1857, 0.0
        %v1922 = vmax.f32 %v1858, 0.0
        %v1923 = vmax.f32 %v1859, 0.0
        %v1924 = vmax.f32 %v1860, 0.0
        %v1925 = vmax.f32 %v1861, 0.0
        %v1926 = vmax.f32 %v1862, 0.0
        %v1927 = vmax.f32 %v1863, 0.0
        %v1928 = vmax.f32 %v1864, 0.0
        %v1929 = vmax.f32 %v1865, 0.0
        %v1930 = vmax.f32 %v1866, 0.0
        %v1931 = vmax.f32 %v1867, 0.0
        %v1932 = vmax.f32 %v1868, 0.0
        %v1933 = vmax.f32 %v1869, 0.0
        %v1934 = vmax.f32 %v1870, 0.0
        %v1935 = vmax.f32 %v1871, 0.0
        %v1936 = vmax.f32 %v1872, 0.0
        %v1937 = vmax.f32 %v1873, 0.0
        %v1938 = vmax.f32 %v1874, 0.0
        %v1939 = vmax.f32 %v1875, 0.0
        %v1940 = vmax.f32 %v1876, 0.0
        %v1941 = vld [vmem:[%s4] sm:$0xff]
        %v1942 = vld [vmem:[%s4 + $0x8] sm:$0xff]
        %v1943 = vld [vmem:[%s4 + $0x10] sm:$0xff]
        %v1944 = vld [vmem:[%s4 + $0x18] sm:$0xff]
        %v1945 = vld [vmem:[%s4 + $0x20] sm:$0xff]
        %v1946 = vld [vmem:[%s4 + $0x28] sm:$0xff]
        %v1947 = vld [vmem:[%s4 + $0x30] sm:$0xff]
        %v1948 = vld [vmem:[%s4 + $0x38] sm:$0xff]
        %v1949 = vld [vmem:[%s4 + $0x40] sm:$0xff]
        %v1950 = vld [vmem:[%s4 + $0x48] sm:$0xff]
        %v1951 = vld [vmem:[%s4 + $0x50] sm:$0xff]
        %v1952 = vld [vmem:[%s4 + $0x58] sm:$0xff]
        %v1953 = vld [vmem:[%s4 + $0x60] sm:$0xff]
        %v1954 = vld [vmem:[%s4 + $0x68] sm:$0xff]
        %v1955 = vld [vmem:[%s4 + $0x70] sm:$0xff]
        %v1956 = vld [vmem:[%s4 + $0x78] sm:$0xff]
        %v1957 = vld [vmem:[%s5] sm:$0xff]
        %v1958 = vld [vmem:[%s5 + $0x8] sm:$0xff]
        %v1959 = vld [vmem:[%s5 + $0x10] sm:$0xff]
        %v1960 = vld [vmem:[%s5 + $0x18] sm:$0xff]
        %v1961 = vld [vmem:[%s5 + $0x20] sm:$0xff]
        %v1962 = vld [vmem:[%s5 + $0x28] sm:$0xff]
        %v1963 = vld [vmem:[%s5 + $0x30] sm:$0xff]
        %v1964 = vld [vmem:[%s5 + $0x38] sm:$0xff]
        %v1965 = vld [vmem:[%s5 + $0x40] sm:$0xff]
        %v1966 = vld [vmem:[%s5 + $0x48] sm:$0xff]
        %v1967 = vld [vmem:[%s5 + $0x50] sm:$0xff]
        %v1968 = vld [vmem:[%s5 + $0x58] sm:$0xff]
        %v1969 = vld [vmem:[%s5 + $0x60] sm:$0xff]
        %v1970 = vld [vmem:[%s5 + $0x68] sm:$0xff]
        %v1971 = vld [vmem:[%s5 + $0x70] sm:$0xff]
        %v1972 = vld [vmem:[%s5 + $0x78] sm:$0xff]
        %1974 = vset.pattern.permute.xlu0 0
        %1975 = vperm.xlu0 %1974, %v1957
        %v1976 = vpop.permute.xlu0 %1975
        %1979 = vset.pattern.permute.xlu0 0
        %1980 = vperm.xlu0 %1979, %v1958
        %v1981 = vpop.permute.xlu0 %1980
        %1984 = vset.pattern.permute.xlu0 0
        %1985 = vperm.xlu0 %1984, %v1959
        %v1986 = vpop.permute.xlu0 %1985
        %1989 = vset.pattern.permute.xlu0 0
        %1990 = vperm.xlu0 %1989, %v1960
        %v1991 = vpop.permute.xlu0 %1990
        %1994 = vset.pattern.permute.xlu0 0
        %1995 = vperm.xlu0 %1994, %v1961
        %v1996 = vpop.permute.xlu0 %1995
        %1999 = vset.pattern.permute.xlu0 0
        %2000 = vperm.xlu0 %1999, %v1962
        %v2001 = vpop.permute.xlu0 %2000
        %2004 = vset.pattern.permute.xlu0 0
        %2005 = vperm.xlu0 %2004, %v1963
        %v2006 = vpop.permute.xlu0 %2005
        %2009 = vset.pattern.permute.xlu0 0
        %2010 = vperm.xlu0 %2009, %v1964
        %v2011 = vpop.permute.xlu0 %2010
        %2014 = vset.pattern.permute.xlu0 0
        %2015 = vperm.xlu0 %2014, %v1965
        %v2016 = vpop.permute.xlu0 %2015
        %2019 = vset.pattern.permute.xlu0 0
        %2020 = vperm.xlu0 %2019, %v1966
        %v2021 = vpop.permute.xlu0 %2020
        %2024 = vset.pattern.permute.xlu0 0
        %2025 = vperm.xlu0 %2024, %v1967
        %v2026 = vpop.permute.xlu0 %2025
        %2029 = vset.pattern.permute.xlu0 0
        %2030 = vperm.xlu0 %2029, %v1968
        %v2031 = vpop.permute.xlu0 %2030
        %2034 = vset.pattern.permute.xlu0 0
        %2035 = vperm.xlu0 %2034, %v1969
        %v2036 = vpop.permute.xlu0 %2035
        %2039 = vset.pattern.permute.xlu0 0
        %2040 = vperm.xlu0 %2039, %v1970
        %v2041 = vpop.permute.xlu0 %2040
        %2044 = vset.pattern.permute.xlu0 0
        %2045 = vperm.xlu0 %2044, %v1971
        %v2046 = vpop.permute.xlu0 %2045
        %2049 = vset.pattern.permute.xlu0 0
        %2050 = vperm.xlu0 %2049, %v1972
        %v2051 = vpop.permute.xlu0 %2050
        %2053 = vmatprep.subr.mxu0 %v1938
        %2054 = vmatpush1.msra.mxu0 %v1937
        %2055 = vmatprep.subr.mxu0 %v1934
        %2056 = vmatpush1.msra.mxu0 %v1933
        %2057 = vmatprep.subr.mxu0 %v1930
        %2058 = vmatpush1.msra.mxu0 %v1929
        %2059 = vmatprep.subr.mxu0 %v1926
        %2060 = vmatpush1.msra.mxu0 %v1925
        %2061 = vmatprep.subr.mxu0 %v1922
        %2062 = vmatpush1.msra.mxu0 %v1921
        %2063 = vmatprep.subr.mxu0 %v1918
        %2064 = vmatpush1.msra.mxu0 %v1917
        %2065 = vmatprep.subr.mxu0 %v1914
        %2066 = vmatpush1.msra.mxu0 %v1913
        %2067 = vmatprep.subr.mxu0 %v1910
        %2068 = vmatpush1.msra.mxu0 %v1909
        %2069 = vmatprep.subr.mxu0 %v1906
        %2070 = vmatpush1.msra.mxu0 %v1905
        %2071 = vmatprep.subr.mxu0 %v1902
        %2072 = vmatpush1.msra.mxu0 %v1901
        %2073 = vmatprep.subr.mxu0 %v1898
        %2074 = vmatpush1.msra.mxu0 %v1897
        %2075 = vmatprep.subr.mxu0 %v1894
        %2076 = vmatpush1.msra.mxu0 %v1893
        %2077 = vmatprep.subr.mxu0 %v1890
        %2078 = vmatpush1.msra.mxu0 %v1889
        %2079 = vmatprep.subr.mxu0 %v1886
        %2080 = vmatpush1.msra.mxu0 %v1885
        %2081 = vmatprep.subr.mxu0 %v1882
        %2082 = vmatpush1.msra.mxu0 %v1881
        %2083 = vmatprep.subr.mxu0 %v1878
        %2084 = vmatpush1.msra.mxu0 %v1877
        %2085 = vmatprep.subr.mxu0 0.0
        %2086 = vmatpush2.msra.mxu0 0.0
        %2087 = vmatprep.subr.mxu0 0.0
        %2088 = vmatpush2.msra.mxu0 0.0
        %2089 = vmatprep.subr.mxu0 0.0
        %2090 = vmatpush2.msra.mxu0 0.0
        %2091 = vmatprep.subr.mxu0 0.0
        %2092 = vmatpush2.msra.mxu0 0.0
        %2093 = vmatprep.subr.mxu0 0.0
        %2094 = vmatpush2.msra.mxu0 0.0
        %2095 = vmatprep.subr.mxu0 0.0
        %2096 = vmatpush2.msra.mxu0 0.0
        %2097 = vmatprep.subr.mxu0 0.0
        %2098 = vmatpush2.msra.mxu0 0.0
        %2099 = vmatprep.subr.mxu0 0.0
        %2100 = vmatpush2.msra.mxu0 0.0
        %2101 = vmatprep.subr.mxu0 0.0
        %2102 = vmatpush2.msra.mxu0 0.0
        %2103 = vmatprep.subr.mxu0 0.0
        %2104 = vmatpush2.msra.mxu0 0.0
        %2105 = vmatprep.subr.mxu0 0.0
        %2106 = vmatpush2.msra.mxu0 0.0
        %2107 = vmatprep.subr.mxu0 0.0
        %2108 = vmatpush2.msra.mxu0 0.0
        %2109 = vmatprep.subr.mxu0 0.0
        %2110 = vmatpush2.msra.mxu0 0.0
        %2111 = vmatprep.subr.mxu0 0.0
        %2112 = vmatpush2.msra.mxu0 0.0
        %2113 = vmatprep.subr.mxu0 0.0
        %2114 = vmatpush2.msra.mxu0 0.0
        %2115 = vmatprep.subr.mxu0 0.0
        %2116 = vmatpush2.msra.mxu0 0.0
        %2117 = vmatprep.mubr.f32.mxu0 0.0
        %2118 = vmatmul.mubr.f32.gmra.mxu0 %v1941
        %v2119 = vpop.f32.mrf.mxu0
        %v2120 = vadd.f32 %v1976, %v2119
        %v2121 = vpop.f32.mrf.mxu0
        %v2122 = vadd.f32 %v1976, %v2121
        %2123 = vmatprep.mubr.f32.mxu0 0.0
        %2124 = vmatmul.mubr.f32.gmra.mxu0 %v1942
        %v2125 = vpop.f32.mrf.mxu0
        %v2126 = vadd.f32 %v1981, %v2125
        %v2127 = vpop.f32.mrf.mxu0
        %v2128 = vadd.f32 %v1981, %v2127
        %2129 = vmatprep.mubr.f32.mxu0 0.0
        %2130 = vmatmul.mubr.f32.gmra.mxu0 %v1943
        %v2131 = vpop.f32.mrf.mxu0
        %v2132 = vadd.f32 %v1986, %v2131
        %v2133 = vpop.f32.mrf.mxu0
        %v2134 = vadd.f32 %v1986, %v2133
        %2135 = vmatprep.mubr.f32.mxu0 0.0
        %2136 = vmatmul.mubr.f32.gmra.mxu0 %v1944
        %v2137 = vpop.f32.mrf.mxu0
        %v2138 = vadd.f32 %v1991, %v2137
        %v2139 = vpop.f32.mrf.mxu0
        %v2140 = vadd.f32 %v1991, %v2139
        %2141 = vmatprep.mubr.f32.mxu0 0.0
        %2142 = vmatmul.mubr.f32.gmra.mxu0 %v1945
        %v2143 = vpop.f32.mrf.mxu0
        %v2144 = vadd.f32 %v1996, %v2143
        %v2145 = vpop.f32.mrf.mxu0
        %v2146 = vadd.f32 %v1996, %v2145
        %2147 = vmatprep.mubr.f32.mxu0 0.0
        %2148 = vmatmul.mubr.f32.gmra.mxu0 %v1946
        %v2149 = vpop.f32.mrf.mxu0
        %v2150 = vadd.f32 %v2001, %v2149
        %v2151 = vpop.f32.mrf.mxu0
        %v2152 = vadd.f32 %v2001, %v2151
        %2153 = vmatprep.mubr.f32.mxu0 0.0
        %2154 = vmatmul.mubr.f32.gmra.mxu0 %v1947
        %v2155 = vpop.f32.mrf.mxu0
        %v2156 = vadd.f32 %v2006, %v2155
        %v2157 = vpop.f32.mrf.mxu0
        %v2158 = vadd.f32 %v2006, %v2157
        %2159 = vmatprep.mubr.f32.mxu0 0.0
        %2160 = vmatmul.mubr.f32.gmra.mxu0 %v1948
        %v2161 = vpop.f32.mrf.mxu0
        %v2162 = vadd.f32 %v2011, %v2161
        %v2163 = vpop.f32.mrf.mxu0
        %v2164 = vadd.f32 %v2011, %v2163
        %2165 = vmatprep.mubr.f32.mxu0 0.0
        %2166 = vmatmul.mubr.f32.gmra.mxu0 %v1949
        %v2167 = vpop.f32.mrf.mxu0
        %v2168 = vadd.f32 %v2016, %v2167
        %v2169 = vpop.f32.mrf.mxu0
        %v2170 = vadd.f32 %v2016, %v2169
        %2171 = vmatprep.mubr.f32.mxu0 0.0
        %2172 = vmatmul.mubr.f32.gmra.mxu0 %v1950
        %v2173 = vpop.f32.mrf.mxu0
        %v2174 = vadd.f32 %v2021, %v2173
        %v2175 = vpop.f32.mrf.mxu0
        %v2176 = vadd.f32 %v2021, %v2175
        %2177 = vmatprep.mubr.f32.mxu0 0.0
        %2178 = vmatmul.mubr.f32.gmra.mxu0 %v1951
        %v2179 = vpop.f32.mrf.mxu0
        %v2180 = vadd.f32 %v2026, %v2179
        %v2181 = vpop.f32.mrf.mxu0
        %v2182 = vadd.f32 %v2026, %v2181
        %2183 = vmatprep.mubr.f32.mxu0 0.0
        %2184 = vmatmul.mubr.f32.gmra.mxu0 %v1952
        %v2185 = vpop.f32.mrf.mxu0
        %v2186 = vadd.f32 %v2031, %v2185
        %v2187 = vpop.f32.mrf.mxu0
        %v2188 = vadd.f32 %v2031, %v2187
        %2189 = vmatprep.mubr.f32.mxu0 0.0
        %2190 = vmatmul.mubr.f32.gmra.mxu0 %v1953
        %v2191 = vpop.f32.mrf.mxu0
        %v2192 = vadd.f32 %v2036, %v2191
        %v2193 = vpop.f32.mrf.mxu0
        %v2194 = vadd.f32 %v2036, %v2193
        %2195 = vmatprep.mubr.f32.mxu0 0.0
        %2196 = vmatmul.mubr.f32.gmra.mxu0 %v1954
        %v2197 = vpop.f32.mrf.mxu0
        %v2198 = vadd.f32 %v2041, %v2197
        %v2199 = vpop.f32.mrf.mxu0
        %v2200 = vadd.f32 %v2041, %v2199
        %2201 = vmatprep.mubr.f32.mxu0 0.0
        %2202 = vmatmul.mubr.f32.gmra.mxu0 %v1955
        %v2203 = vpop.f32.mrf.mxu0
        %v2204 = vadd.f32 %v2046, %v2203
        %v2205 = vpop.f32.mrf.mxu0
        %v2206 = vadd.f32 %v2046, %v2205
        %2207 = vmatprep.mubr.f32.mxu0 0.0
        %2208 = vmatmul.mubr.f32.gmra.mxu0 %v1956
        %v2209 = vpop.f32.mrf.mxu0
        %v2210 = vadd.f32 %v2051, %v2209
        %v2211 = vpop.f32.mrf.mxu0
        %v2212 = vadd.f32 %v2051, %v2211
        %2213 = vdwg.mxu0
        %2214 = vmatprep.subr.mxu0 %v1940
        %2215 = vmatpush1.msra.mxu0 %v1939
        %2216 = vmatprep.subr.mxu0 %v1936
        %2217 = vmatpush1.msra.mxu0 %v1935
        %2218 = vmatprep.subr.mxu0 %v1932
        %2219 = vmatpush1.msra.mxu0 %v1931
        %2220 = vmatprep.subr.mxu0 %v1928
        %2221 = vmatpush1.msra.mxu0 %v1927
        %2222 = vmatprep.subr.mxu0 %v1924
        %2223 = vmatpush1.msra.mxu0 %v1923
        %2224 = vmatprep.subr.mxu0 %v1920
        %2225 = vmatpush1.msra.mxu0 %v1919
        %2226 = vmatprep.subr.mxu0 %v1916
        %2227 = vmatpush1.msra.mxu0 %v1915
        %2228 = vmatprep.subr.mxu0 %v1912
        %2229 = vmatpush1.msra.mxu0 %v1911
        %2230 = vmatprep.subr.mxu0 %v1908
        %2231 = vmatpush1.msra.mxu0 %v1907
        %2232 = vmatprep.subr.mxu0 %v1904
        %2233 = vmatpush1.msra.mxu0 %v1903
        %2234 = vmatprep.subr.mxu0 %v1900
        %2235 = vmatpush1.msra.mxu0 %v1899
        %2236 = vmatprep.subr.mxu0 %v1896
        %2237 = vmatpush1.msra.mxu0 %v1895
        %2238 = vmatprep.subr.mxu0 %v1892
        %2239 = vmatpush1.msra.mxu0 %v1891
        %2240 = vmatprep.subr.mxu0 %v1888
        %2241 = vmatpush1.msra.mxu0 %v1887
        %2242 = vmatprep.subr.mxu0 %v1884
        %2243 = vmatpush1.msra.mxu0 %v1883
        %2244 = vmatprep.subr.mxu0 %v1880
        %2245 = vmatpush1.msra.mxu0 %v1879
        %2246 = vmatprep.subr.mxu0 0.0
        %2247 = vmatpush2.msra.mxu0 0.0
        %2248 = vmatprep.subr.mxu0 0.0
        %2249 = vmatpush2.msra.mxu0 0.0
        %2250 = vmatprep.subr.mxu0 0.0
        %2251 = vmatpush2.msra.mxu0 0.0
        %2252 = vmatprep.subr.mxu0 0.0
        %2253 = vmatpush2.msra.mxu0 0.0
        %2254 = vmatprep.subr.mxu0 0.0
        %2255 = vmatpush2.msra.mxu0 0.0
        %2256 = vmatprep.subr.mxu0 0.0
        %2257 = vmatpush2.msra.mxu0 0.0
        %2258 = vmatprep.subr.mxu0 0.0
        %2259 = vmatpush2.msra.mxu0 0.0
        %2260 = vmatprep.subr.mxu0 0.0
        %2261 = vmatpush2.msra.mxu0 0.0
        %2262 = vmatprep.subr.mxu0 0.0
        %2263 = vmatpush2.msra.mxu0 0.0
        %2264 = vmatprep.subr.mxu0 0.0
        %2265 = vmatpush2.msra.mxu0 0.0
        %2266 = vmatprep.subr.mxu0 0.0
        %2267 = vmatpush2.msra.mxu0 0.0
        %2268 = vmatprep.subr.mxu0 0.0
        %2269 = vmatpush2.msra.mxu0 0.0
        %2270 = vmatprep.subr.mxu0 0.0
        %2271 = vmatpush2.msra.mxu0 0.0
        %2272 = vmatprep.subr.mxu0 0.0
        %2273 = vmatpush2.msra.mxu0 0.0
        %2274 = vmatprep.subr.mxu0 0.0
        %2275 = vmatpush2.msra.mxu0 0.0
        %2276 = vmatprep.subr.mxu0 0.0
        %2277 = vmatpush2.msra.mxu0 0.0
        %2278 = vmatprep.mubr.f32.mxu0 0.0
        %2279 = vmatmul.mubr.f32.gmra.mxu0 %v1941
        %v2280 = vpop.f32.mrf.mxu0
        %v2281 = vadd.f32 %v1976, %v2280
        %v2282 = vpop.f32.mrf.mxu0
        %v2283 = vadd.f32 %v1976, %v2282
        %2284 = vmatprep.mubr.f32.mxu0 0.0
        %2285 = vmatmul.mubr.f32.gmra.mxu0 %v1942
        %v2286 = vpop.f32.mrf.mxu0
        %v2287 = vadd.f32 %v1981, %v2286
        %v2288 = vpop.f32.mrf.mxu0
        %v2289 = vadd.f32 %v1981, %v2288
        %2290 = vmatprep.mubr.f32.mxu0 0.0
        %2291 = vmatmul.mubr.f32.gmra.mxu0 %v1943
        %v2292 = vpop.f32.mrf.mxu0
        %v2293 = vadd.f32 %v1986, %v2292
        %v2294 = vpop.f32.mrf.mxu0
        %v2295 = vadd.f32 %v1986, %v2294
        %2296 = vmatprep.mubr.f32.mxu0 0.0
        %2297 = vmatmul.mubr.f32.gmra.mxu0 %v1944
        %v2298 = vpop.f32.mrf.mxu0
        %v2299 = vadd.f32 %v1991, %v2298
        %v2300 = vpop.f32.mrf.mxu0
        %v2301 = vadd.f32 %v1991, %v2300
        %2302 = vmatprep.mubr.f32.mxu0 0.0
        %2303 = vmatmul.mubr.f32.gmra.mxu0 %v1945
        %v2304 = vpop.f32.mrf.mxu0
        %v2305 = vadd.f32 %v1996, %v2304
        %v2306 = vpop.f32.mrf.mxu0
        %v2307 = vadd.f32 %v1996, %v2306
        %2308 = vmatprep.mubr.f32.mxu0 0.0
        %2309 = vmatmul.mubr.f32.gmra.mxu0 %v1946
        %v2310 = vpop.f32.mrf.mxu0
        %v2311 = vadd.f32 %v2001, %v2310
        %v2312 = vpop.f32.mrf.mxu0
        %v2313 = vadd.f32 %v2001, %v2312
        %2314 = vmatprep.mubr.f32.mxu0 0.0
        %2315 = vmatmul.mubr.f32.gmra.mxu0 %v1947
        %v2316 = vpop.f32.mrf.mxu0
        %v2317 = vadd.f32 %v2006, %v2316
        %v2318 = vpop.f32.mrf.mxu0
        %v2319 = vadd.f32 %v2006, %v2318
        %2320 = vmatprep.mubr.f32.mxu0 0.0
        %2321 = vmatmul.mubr.f32.gmra.mxu0 %v1948
        %v2322 = vpop.f32.mrf.mxu0
        %v2323 = vadd.f32 %v2011, %v2322
        %v2324 = vpop.f32.mrf.mxu0
        %v2325 = vadd.f32 %v2011, %v2324
        %2326 = vmatprep.mubr.f32.mxu0 0.0
        %2327 = vmatmul.mubr.f32.gmra.mxu0 %v1949
        %v2328 = vpop.f32.mrf.mxu0
        %v2329 = vadd.f32 %v2016, %v2328
        %v2330 = vpop.f32.mrf.mxu0
        %v2331 = vadd.f32 %v2016, %v2330
        %2332 = vmatprep.mubr.f32.mxu0 0.0
        %2333 = vmatmul.mubr.f32.gmra.mxu0 %v1950
        %v2334 = vpop.f32.mrf.mxu0
        %v2335 = vadd.f32 %v2021, %v2334
        %v2336 = vpop.f32.mrf.mxu0
        %v2337 = vadd.f32 %v2021, %v2336
        %2338 = vmatprep.mubr.f32.mxu0 0.0
        %2339 = vmatmul.mubr.f32.gmra.mxu0 %v1951
        %v2340 = vpop.f32.mrf.mxu0
        %v2341 = vadd.f32 %v2026, %v2340
        %v2342 = vpop.f32.mrf.mxu0
        %v2343 = vadd.f32 %v2026, %v2342
        %2344 = vmatprep.mubr.f32.mxu0 0.0
        %2345 = vmatmul.mubr.f32.gmra.mxu0 %v1952
        %v2346 = vpop.f32.mrf.mxu0
        %v2347 = vadd.f32 %v2031, %v2346
        %v2348 = vpop.f32.mrf.mxu0
        %v2349 = vadd.f32 %v2031, %v2348
        %2350 = vmatprep.mubr.f32.mxu0 0.0
        %2351 = vmatmul.mubr.f32.gmra.mxu0 %v1953
        %v2352 = vpop.f32.mrf.mxu0
        %v2353 = vadd.f32 %v2036, %v2352
        %v2354 = vpop.f32.mrf.mxu0
        %v2355 = vadd.f32 %v2036, %v2354
        %2356 = vmatprep.mubr.f32.mxu0 0.0
        %2357 = vmatmul.mubr.f32.gmra.mxu0 %v1954
        %v2358 = vpop.f32.mrf.mxu0
        %v2359 = vadd.f32 %v2041, %v2358
        %v2360 = vpop.f32.mrf.mxu0
        %v2361 = vadd.f32 %v2041, %v2360
        %2362 = vmatprep.mubr.f32.mxu0 0.0
        %2363 = vmatmul.mubr.f32.gmra.mxu0 %v1955
        %v2364 = vpop.f32.mrf.mxu0
        %v2365 = vadd.f32 %v2046, %v2364
        %v2366 = vpop.f32.mrf.mxu0
        %v2367 = vadd.f32 %v2046, %v2366
        %2368 = vmatprep.mubr.f32.mxu0 0.0
        %2369 = vmatmul.mubr.f32.gmra.mxu0 %v1956
        %v2370 = vpop.f32.mrf.mxu0
        %v2371 = vadd.f32 %v2051, %v2370
        %v2372 = vpop.f32.mrf.mxu0
        %v2373 = vadd.f32 %v2051, %v2372
        %2374 = vdwg.mxu0
        %2375 = vst [vmem:[%s1349] sm:$0xff] %v2120
        %2376 = vst [vmem:[%s1349 + $0x8] sm:$0xff] %v2122
        %2377 = vst [vmem:[%s1349 + $0x10] sm:$0xff] %v2281
        %2378 = vst [vmem:[%s1349 + $0x18] sm:$0xff] %v2283
        %2379 = vst [vmem:[%s1349 + $0x20] sm:$0xff] %v2126
        %2380 = vst [vmem:[%s1349 + $0x28] sm:$0xff] %v2128
        %2381 = vst [vmem:[%s1349 + $0x30] sm:$0xff] %v2287
        %2382 = vst [vmem:[%s1349 + $0x38] sm:$0xff] %v2289
        %2383 = vst [vmem:[%s1349 + $0x40] sm:$0xff] %v2132
        %2384 = vst [vmem:[%s1349 + $0x48] sm:$0xff] %v2134
        %2385 = vst [vmem:[%s1349 + $0x50] sm:$0xff] %v2293
        %2386 = vst [vmem:[%s1349 + $0x58] sm:$0xff] %v2295
        %2387 = vst [vmem:[%s1349 + $0x60] sm:$0xff] %v2138
        %2388 = vst [vmem:[%s1349 + $0x68] sm:$0xff] %v2140
        %2389 = vst [vmem:[%s1349 + $0x70] sm:$0xff] %v2299
        %2390 = vst [vmem:[%s1349 + $0x78] sm:$0xff] %v2301
        %2391 = vst [vmem:[%s1349 + $0x80] sm:$0xff] %v2144
        %2392 = vst [vmem:[%s1349 + $0x88] sm:$0xff] %v2146
        %2393 = vst [vmem:[%s1349 + $0x90] sm:$0xff] %v2305
        %2394 = vst [vmem:[%s1349 + $0x98] sm:$0xff] %v2307
        %2395 = vst [vmem:[%s1349 + $0xa0] sm:$0xff] %v2150
        %2396 = vst [vmem:[%s1349 + $0xa8] sm:$0xff] %v2152
        %2397 = vst [vmem:[%s1349 + $0xb0] sm:$0xff] %v2311
        %2398 = vst [vmem:[%s1349 + $0xb8] sm:$0xff] %v2313
        %2399 = vst [vmem:[%s1349 + $0xc0] sm:$0xff] %v2156
        %2400 = vst [vmem:[%s1349 + $0xc8] sm:$0xff] %v2158
        %2401 = vst [vmem:[%s1349 + $0xd0] sm:$0xff] %v2317
        %2402 = vst [vmem:[%s1349 + $0xd8] sm:$0xff] %v2319
        %2403 = vst [vmem:[%s1349 + $0xe0] sm:$0xff] %v2162
        %2404 = vst [vmem:[%s1349 + $0xe8] sm:$0xff] %v2164
        %2405 = vst [vmem:[%s1349 + $0xf0] sm:$0xff] %v2323
        %2406 = vst [vmem:[%s1349 + $0xf8] sm:$0xff] %v2325
        %2407 = vst [vmem:[%s1349 + $0x100] sm:$0xff] %v2168
        %2408 = vst [vmem:[%s1349 + $0x108] sm:$0xff] %v2170
        %2409 = vst [vmem:[%s1349 + $0x110] sm:$0xff] %v2329
        %2410 = vst [vmem:[%s1349 + $0x118] sm:$0xff] %v2331
        %2411 = vst [vmem:[%s1349 + $0x120] sm:$0xff] %v2174
        %2412 = vst [vmem:[%s1349 + $0x128] sm:$0xff] %v2176
        %2413 = vst [vmem:[%s1349 + $0x130] sm:$0xff] %v2335
        %2414 = vst [vmem:[%s1349 + $0x138] sm:$0xff] %v2337
        %2415 = vst [vmem:[%s1349 + $0x140] sm:$0xff] %v2180
        %2416 = vst [vmem:[%s1349 + $0x148] sm:$0xff] %v2182
        %2417 = vst [vmem:[%s1349 + $0x150] sm:$0xff] %v2341
        %2418 = vst [vmem:[%s1349 + $0x158] sm:$0xff] %v2343
        %2419 = vst [vmem:[%s1349 + $0x160] sm:$0xff] %v2186
        %2420 = vst [vmem:[%s1349 + $0x168] sm:$0xff] %v2188
        %2421 = vst [vmem:[%s1349 + $0x170] sm:$0xff] %v2347
        %2422 = vst [vmem:[%s1349 + $0x178] sm:$0xff] %v2349
        %2423 = vst [vmem:[%s1349 + $0x180] sm:$0xff] %v2192
        %2424 = vst [vmem:[%s1349 + $0x188] sm:$0xff] %v2194
        %2425 = vst [vmem:[%s1349 + $0x190] sm:$0xff] %v2353
        %2426 = vst [vmem:[%s1349 + $0x198] sm:$0xff] %v2355
        %2427 = vst [vmem:[%s1349 + $0x1a0] sm:$0xff] %v2198
        %2428 = vst [vmem:[%s1349 + $0x1a8] sm:$0xff] %v2200
        %2429 = vst [vmem:[%s1349 + $0x1b0] sm:$0xff] %v2359
        %2430 = vst [vmem:[%s1349 + $0x1b8] sm:$0xff] %v2361
        %2431 = vst [vmem:[%s1349 + $0x1c0] sm:$0xff] %v2204
        %2432 = vst [vmem:[%s1349 + $0x1c8] sm:$0xff] %v2206
        %2433 = vst [vmem:[%s1349 + $0x1d0] sm:$0xff] %v2365
        %2434 = vst [vmem:[%s1349 + $0x1d8] sm:$0xff] %v2367
        %2435 = vst [vmem:[%s1349 + $0x1e0] sm:$0xff] %v2210
        %2436 = vst [vmem:[%s1349 + $0x1e8] sm:$0xff] %v2212
        %2437 = vst [vmem:[%s1349 + $0x1f0] sm:$0xff] %v2371
        %2438 = vst [vmem:[%s1349 + $0x1f8] sm:$0xff] %v2373
        %s2439 = sand.u32 %s179, 1
        %s2440 = sand.u32 %s179, 1
        %s2441 = smul.addr %s2440, 512
        %s2442 = scalar_lea.vmem [#allocation4], %s2441
        // Predicated region
        $region177: #{fused_bn_add_relu_conv_bn.5} parent=167 // pred_check
          %p2443 = pneg %p189
        $region178: #{fused_bn_add_relu_conv_bn.5} parent=167 // pred_check_branch
          %2445 = sbr.rel (%p2443) target = $region180
        $region179: #{fused_bn_add_relu_conv_bn.5} parent=167 // pred_region
          %s2446 = smul.u32 4, %s22
          %s2447 = ssub.s32 7, %s2446
          %p2448 = scmp.lt.s32.totalorder %s2447, 4
          %s2449 = scalar_select %p2448, %s2447, 4
          %s2450 = smul.u32 2048, %s2449
          %p2451 = scmp.ne.s32.totalorder 0, %s2450
          %s2452 = smul.addr %s21, 112
          %s2453 = sadd.s32 %s2446, %s2452
          %s2454 = smul.addr %s2453, 8
          %s2455 = scalar_lea.vmem %s6, %s2454
          %s2456 = smul.u32 %s2449, 8
          // Predicated region
          $region181: #{fused_bn_add_relu_conv_bn.5} parent=179 // pred_check
            %p2457 = pneg %p2451
          $region182: #{fused_bn_add_relu_conv_bn.5} parent=179 // pred_check_branch
            %2459 = sbr.rel (%p2457) target = $region184
          $region183: #{fused_bn_add_relu_conv_bn.5} parent=179 // pred_region
            %p2460 = scmp.lt.u32.totalorder %s2456, 8
            %p2461 = pneg %p2460
            // Predicated region
            $region185: #{fused_bn_add_relu_conv_bn.5} parent=183 // pred_check
              _
            $region186: #{fused_bn_add_relu_conv_bn.5} parent=183 // pred_check_branch
              %2463 = sbr.rel (%p2460) target = $region188
            $region187: #{fused_bn_add_relu_conv_bn.5} parent=183 // pred_region
              %s2509 = sand.u32 %s2456, 7
              %p2510 = scmp.eq.s32.totalorder %s2509, 0
              // Predicated region
              $region200: #{fused_bn_add_relu_conv_bn.5} parent=187 // pred_check
                %p2511 = pneg %p2510
              $region201: #{fused_bn_add_relu_conv_bn.5} parent=187 // pred_check_branch
                %2513 = sbr.rel (%p2511) target = $region203
              $region202: #{fused_bn_add_relu_conv_bn.5} parent=187 // pred_region
                %s2514 = sshrl.u32 %s2456, 3
                %s2515 = sshrl.u32 %s2514, 2
                // While loop
                $region204: #{fused_bn_add_relu_conv_bn.5} parent=202 // loop_pre_header
                  _
                $region205: #{fused_bn_add_relu_conv_bn.5} parent=202 // loop_header
                  %s2519 = sphi 0, %s2521
                  %p2520 = scmp.ge.s32.totalorder %s2519, %s2515
                  %s2524 = sphi 0, %s2657
                  %s2525 = sphi %s2442, %s2660
                  %s2526 = sphi %s2455, %s2661
                $region206: #{fused_bn_add_relu_conv_bn.5} parent=202 // loop_header_branch
                  %2523 = sbr.rel (%p2520) target = $region210
                $region207: #{fused_bn_add_relu_conv_bn.5} parent=202 // loop_body
                  %v2527 = vld [vmem:[%s2525] sm:$0xff]
                  %2528 = vst [vmem:[%s2526] sm:$0xff] %v2527
                  %v2529 = vld [vmem:[%s2525 + $0x8] sm:$0xff]
                  %2530 = vst [vmem:[%s2526 + $0x8] sm:$0xff] %v2529
                  %v2531 = vld [vmem:[%s2525 + $0x10] sm:$0xff]
                  %2532 = vst [vmem:[%s2526 + $0x10] sm:$0xff] %v2531
                  %v2533 = vld [vmem:[%s2525 + $0x18] sm:$0xff]
                  %2534 = vst [vmem:[%s2526 + $0x18] sm:$0xff] %v2533
                  %v2535 = vld [vmem:[%s2525 + $0x20] sm:$0xff]
                  %2536 = vst [vmem:[%s2526 + $0x38] sm:$0xff] %v2535
                  %v2537 = vld [vmem:[%s2525 + $0x28] sm:$0xff]
                  %2538 = vst [vmem:[%s2526 + $0x40] sm:$0xff] %v2537
                  %v2539 = vld [vmem:[%s2525 + $0x30] sm:$0xff]
                  %2540 = vst [vmem:[%s2526 + $0x48] sm:$0xff] %v2539
                  %v2541 = vld [vmem:[%s2525 + $0x38] sm:$0xff]
                  %2542 = vst [vmem:[%s2526 + $0x50] sm:$0xff] %v2541
                  %v2543 = vld [vmem:[%s2525 + $0x40] sm:$0xff]
                  %2544 = vst [vmem:[%s2526 + $0x70] sm:$0xff] %v2543
                  %v2545 = vld [vmem:[%s2525 + $0x48] sm:$0xff]
                  %2546 = vst [vmem:[%s2526 + $0x78] sm:$0xff] %v2545
                  %v2547 = vld [vmem:[%s2525 + $0x50] sm:$0xff]
                  %2548 = vst [vmem:[%s2526 + $0x80] sm:$0xff] %v2547
                  %v2549 = vld [vmem:[%s2525 + $0x58] sm:$0xff]
                  %2550 = vst [vmem:[%s2526 + $0x88] sm:$0xff] %v2549
                  %v2551 = vld [vmem:[%s2525 + $0x60] sm:$0xff]
                  %2552 = vst [vmem:[%s2526 + $0xa8] sm:$0xff] %v2551
                  %v2553 = vld [vmem:[%s2525 + $0x68] sm:$0xff]
                  %2554 = vst [vmem:[%s2526 + $0xb0] sm:$0xff] %v2553
                  %v2555 = vld [vmem:[%s2525 + $0x70] sm:$0xff]
                  %2556 = vst [vmem:[%s2526 + $0xb8] sm:$0xff] %v2555
                  %v2557 = vld [vmem:[%s2525 + $0x78] sm:$0xff]
                  %2558 = vst [vmem:[%s2526 + $0xc0] sm:$0xff] %v2557
                  %v2559 = vld [vmem:[%s2525 + $0x80] sm:$0xff]
                  %2560 = vst [vmem:[%s2526 + $0xe0] sm:$0xff] %v2559
                  %v2561 = vld [vmem:[%s2525 + $0x88] sm:$0xff]
                  %2562 = vst [vmem:[%s2526 + $0xe8] sm:$0xff] %v2561
                  %v2563 = vld [vmem:[%s2525 + $0x90] sm:$0xff]
                  %2564 = vst [vmem:[%s2526 + $0xf0] sm:$0xff] %v2563
                  %v2565 = vld [vmem:[%s2525 + $0x98] sm:$0xff]
                  %2566 = vst [vmem:[%s2526 + $0xf8] sm:$0xff] %v2565
                  %v2567 = vld [vmem:[%s2525 + $0xa0] sm:$0xff]
                  %2568 = vst [vmem:[%s2526 + $0x118] sm:$0xff] %v2567
                  %v2569 = vld [vmem:[%s2525 + $0xa8] sm:$0xff]
                  %2570 = vst [vmem:[%s2526 + $0x120] sm:$0xff] %v2569
                  %v2571 = vld [vmem:[%s2525 + $0xb0] sm:$0xff]
                  %2572 = vst [vmem:[%s2526 + $0x128] sm:$0xff] %v2571
                  %v2573 = vld [vmem:[%s2525 + $0xb8] sm:$0xff]
                  %2574 = vst [vmem:[%s2526 + $0x130] sm:$0xff] %v2573
                  %v2575 = vld [vmem:[%s2525 + $0xc0] sm:$0xff]
                  %2576 = vst [vmem:[%s2526 + $0x150] sm:$0xff] %v2575
                  %v2577 = vld [vmem:[%s2525 + $0xc8] sm:$0xff]
                  %2578 = vst [vmem:[%s2526 + $0x158] sm:$0xff] %v2577
                  %v2579 = vld [vmem:[%s2525 + $0xd0] sm:$0xff]
                  %2580 = vst [vmem:[%s2526 + $0x160] sm:$0xff] %v2579
                  %v2581 = vld [vmem:[%s2525 + $0xd8] sm:$0xff]
                  %2582 = vst [vmem:[%s2526 + $0x168] sm:$0xff] %v2581
                  %v2583 = vld [vmem:[%s2525 + $0xe0] sm:$0xff]
                  %2584 = vst [vmem:[%s2526 + $0x188] sm:$0xff] %v2583
                  %v2585 = vld [vmem:[%s2525 + $0xe8] sm:$0xff]
                  %2586 = vst [vmem:[%s2526 + $0x190] sm:$0xff] %v2585
                  %v2587 = vld [vmem:[%s2525 + $0xf0] sm:$0xff]
                  %2588 = vst [vmem:[%s2526 + $0x198] sm:$0xff] %v2587
                  %v2589 = vld [vmem:[%s2525 + $0xf8] sm:$0xff]
                  %2590 = vst [vmem:[%s2526 + $0x1a0] sm:$0xff] %v2589
                  %v2591 = vld [vmem:[%s2525 + $0x100] sm:$0xff]
                  %2592 = vst [vmem:[%s2526 + $0x1c0] sm:$0xff] %v2591
                  %v2593 = vld [vmem:[%s2525 + $0x108] sm:$0xff]
                  %2594 = vst [vmem:[%s2526 + $0x1c8] sm:$0xff] %v2593
                  %v2595 = vld [vmem:[%s2525 + $0x110] sm:$0xff]
                  %2596 = vst [vmem:[%s2526 + $0x1d0] sm:$0xff] %v2595
                  %v2597 = vld [vmem:[%s2525 + $0x118] sm:$0xff]
                  %2598 = vst [vmem:[%s2526 + $0x1d8] sm:$0xff] %v2597
                  %v2599 = vld [vmem:[%s2525 + $0x120] sm:$0xff]
                  %2600 = vst [vmem:[%s2526 + $0x1f8] sm:$0xff] %v2599
                  %v2601 = vld [vmem:[%s2525 + $0x128] sm:$0xff]
                  %2602 = vst [vmem:[%s2526 + $0x200] sm:$0xff] %v2601
                  %v2603 = vld [vmem:[%s2525 + $0x130] sm:$0xff]
                  %2604 = vst [vmem:[%s2526 + $0x208] sm:$0xff] %v2603
                  %v2605 = vld [vmem:[%s2525 + $0x138] sm:$0xff]
                  %2606 = vst [vmem:[%s2526 + $0x210] sm:$0xff] %v2605
                  %v2607 = vld [vmem:[%s2525 + $0x140] sm:$0xff]
                  %2608 = vst [vmem:[%s2526 + $0x230] sm:$0xff] %v2607
                  %v2609 = vld [vmem:[%s2525 + $0x148] sm:$0xff]
                  %2610 = vst [vmem:[%s2526 + $0x238] sm:$0xff] %v2609
                  %v2611 = vld [vmem:[%s2525 + $0x150] sm:$0xff]
                  %2612 = vst [vmem:[%s2526 + $0x240] sm:$0xff] %v2611
                  %v2613 = vld [vmem:[%s2525 + $0x158] sm:$0xff]
                  %2614 = vst [vmem:[%s2526 + $0x248] sm:$0xff] %v2613
                  %v2615 = vld [vmem:[%s2525 + $0x160] sm:$0xff]
                  %2616 = vst [vmem:[%s2526 + $0x268] sm:$0xff] %v2615
                  %v2617 = vld [vmem:[%s2525 + $0x168] sm:$0xff]
                  %2618 = vst [vmem:[%s2526 + $0x270] sm:$0xff] %v2617
                  %v2619 = vld [vmem:[%s2525 + $0x170] sm:$0xff]
                  %2620 = vst [vmem:[%s2526 + $0x278] sm:$0xff] %v2619
                  %v2621 = vld [vmem:[%s2525 + $0x178] sm:$0xff]
                  %2622 = vst [vmem:[%s2526 + $0x280] sm:$0xff] %v2621
                  %v2623 = vld [vmem:[%s2525 + $0x180] sm:$0xff]
                  %2624 = vst [vmem:[%s2526 + $0x2a0] sm:$0xff] %v2623
                  %v2625 = vld [vmem:[%s2525 + $0x188] sm:$0xff]
                  %2626 = vst [vmem:[%s2526 + $0x2a8] sm:$0xff] %v2625
                  %v2627 = vld [vmem:[%s2525 + $0x190] sm:$0xff]
                  %2628 = vst [vmem:[%s2526 + $0x2b0] sm:$0xff] %v2627
                  %v2629 = vld [vmem:[%s2525 + $0x198] sm:$0xff]
                  %2630 = vst [vmem:[%s2526 + $0x2b8] sm:$0xff] %v2629
                  %v2631 = vld [vmem:[%s2525 + $0x1a0] sm:$0xff]
                  %2632 = vst [vmem:[%s2526 + $0x2d8] sm:$0xff] %v2631
                  %v2633 = vld [vmem:[%s2525 + $0x1a8] sm:$0xff]
                  %2634 = vst [vmem:[%s2526 + $0x2e0] sm:$0xff] %v2633
                  %v2635 = vld [vmem:[%s2525 + $0x1b0] sm:$0xff]
                  %2636 = vst [vmem:[%s2526 + $0x2e8] sm:$0xff] %v2635
                  %v2637 = vld [vmem:[%s2525 + $0x1b8] sm:$0xff]
                  %2638 = vst [vmem:[%s2526 + $0x2f0] sm:$0xff] %v2637
                  %v2639 = vld [vmem:[%s2525 + $0x1c0] sm:$0xff]
                  %2640 = vst [vmem:[%s2526 + $0x310] sm:$0xff] %v2639
                  %v2641 = vld [vmem:[%s2525 + $0x1c8] sm:$0xff]
                  %2642 = vst [vmem:[%s2526 + $0x318] sm:$0xff] %v2641
                  %v2643 = vld [vmem:[%s2525 + $0x1d0] sm:$0xff]
                  %2644 = vst [vmem:[%s2526 + $0x320] sm:$0xff] %v2643
                  %v2645 = vld [vmem:[%s2525 + $0x1d8] sm:$0xff]
                  %2646 = vst [vmem:[%s2526 + $0x328] sm:$0xff] %v2645
                  %v2647 = vld [vmem:[%s2525 + $0x1e0] sm:$0xff]
                  %2648 = vst [vmem:[%s2526 + $0x348] sm:$0xff] %v2647
                  %v2649 = vld [vmem:[%s2525 + $0x1e8] sm:$0xff]
                  %2650 = vst [vmem:[%s2526 + $0x350] sm:$0xff] %v2649
                  %v2651 = vld [vmem:[%s2525 + $0x1f0] sm:$0xff]
                  %2652 = vst [vmem:[%s2526 + $0x358] sm:$0xff] %v2651
                  %v2653 = vld [vmem:[%s2525 + $0x1f8] sm:$0xff]
                  %2654 = vst [vmem:[%s2526 + $0x360] sm:$0xff] %v2653
                  %s2655 = sadd.s32 1, %s2524
                  %p2656 = scmp.ge.s32.totalorder %s2655, %s2515
                  %s2657 = scalar_select %p2656, 0, %s2655
                  %s2658 = smul.u32 %s2657, 32
                  %s2659 = smul.u32 %s2657, 32
                  %s2660 = scalar_lea.vmem %s2442, %s2658 [#allocation4]
                  %s2661 = scalar_lea.vmem %s2455, %s2659
                $region208: #{fused_bn_add_relu_conv_bn.5} parent=202 // loop_footer
                  %s2521 = sadd.s32 %s2519, 1
                $region209: #{fused_bn_add_relu_conv_bn.5} parent=202 // loop_footer_branch
                  %2518 = sbr.rel target = $region205
                $region210: #{fused_bn_add_relu_conv_bn.5} parent=202 // loop_exit
                  _
                %s2662 = sshrl.u32 %s2514, 2
                %s2663 = sand.u32 %s2514, 3
                %s2664 = smul.u32 %s2662, 4
                %s2665 = smul.u32 128, %s2664
                %s2666 = sshra.s32 %s2665, 4
                %s2667 = scalar_lea.vmem %s2442, %s2666 [#allocation4]
                %s2668 = smul.u32 128, %s2664
                %s2669 = sshra.s32 %s2668, 4
                %s2670 = scalar_lea.vmem %s2455, %s2669
                // While loop
                $region211: #{fused_bn_add_relu_conv_bn.5} parent=202 // loop_pre_header
                  _
                $region212: #{fused_bn_add_relu_conv_bn.5} parent=202 // loop_header
                  %s2674 = sphi 0, %s2676
                  %p2675 = scmp.ge.s32.totalorder %s2674, %s2663
                  %s2679 = sphi 0, %s2716
                  %s2680 = sphi %s2667, %s2719
                  %s2681 = sphi %s2670, %s2720
                $region213: #{fused_bn_add_relu_conv_bn.5} parent=202 // loop_header_branch
                  %2678 = sbr.rel (%p2675) target = $region217
                $region214: #{fused_bn_add_relu_conv_bn.5} parent=202 // loop_body
                  %v2682 = vld [vmem:[%s2680] sm:$0xff]
                  %2683 = vst [vmem:[%s2681] sm:$0xff] %v2682
                  %v2684 = vld [vmem:[%s2680 + $0x20] sm:$0xff]
                  %2685 = vst [vmem:[%s2681 + $0x38] sm:$0xff] %v2684
                  %v2686 = vld [vmem:[%s2680 + $0x40] sm:$0xff]
                  %2687 = vst [vmem:[%s2681 + $0x70] sm:$0xff] %v2686
                  %v2688 = vld [vmem:[%s2680 + $0x60] sm:$0xff]
                  %2689 = vst [vmem:[%s2681 + $0xa8] sm:$0xff] %v2688
                  %v2690 = vld [vmem:[%s2680 + $0x80] sm:$0xff]
                  %2691 = vst [vmem:[%s2681 + $0xe0] sm:$0xff] %v2690
                  %v2692 = vld [vmem:[%s2680 + $0xa0] sm:$0xff]
                  %2693 = vst [vmem:[%s2681 + $0x118] sm:$0xff] %v2692
                  %v2694 = vld [vmem:[%s2680 + $0xc0] sm:$0xff]
                  %2695 = vst [vmem:[%s2681 + $0x150] sm:$0xff] %v2694
                  %v2696 = vld [vmem:[%s2680 + $0xe0] sm:$0xff]
                  %2697 = vst [vmem:[%s2681 + $0x188] sm:$0xff] %v2696
                  %v2698 = vld [vmem:[%s2680 + $0x100] sm:$0xff]
                  %2699 = vst [vmem:[%s2681 + $0x1c0] sm:$0xff] %v2698
                  %v2700 = vld [vmem:[%s2680 + $0x120] sm:$0xff]
                  %2701 = vst [vmem:[%s2681 + $0x1f8] sm:$0xff] %v2700
                  %v2702 = vld [vmem:[%s2680 + $0x140] sm:$0xff]
                  %2703 = vst [vmem:[%s2681 + $0x230] sm:$0xff] %v2702
                  %v2704 = vld [vmem:[%s2680 + $0x160] sm:$0xff]
                  %2705 = vst [vmem:[%s2681 + $0x268] sm:$0xff] %v2704
                  %v2706 = vld [vmem:[%s2680 + $0x180] sm:$0xff]
                  %2707 = vst [vmem:[%s2681 + $0x2a0] sm:$0xff] %v2706
                  %v2708 = vld [vmem:[%s2680 + $0x1a0] sm:$0xff]
                  %2709 = vst [vmem:[%s2681 + $0x2d8] sm:$0xff] %v2708
                  %v2710 = vld [vmem:[%s2680 + $0x1c0] sm:$0xff]
                  %2711 = vst [vmem:[%s2681 + $0x310] sm:$0xff] %v2710
                  %v2712 = vld [vmem:[%s2680 + $0x1e0] sm:$0xff]
                  %2713 = vst [vmem:[%s2681 + $0x348] sm:$0xff] %v2712
                  %s2714 = sadd.s32 1, %s2679
                  %p2715 = scmp.ge.s32.totalorder %s2714, %s2663
                  %s2716 = scalar_select %p2715, 0, %s2714
                  %s2717 = smul.u32 %s2716, 8
                  %s2718 = smul.u32 %s2716, 8
                  %s2719 = scalar_lea.vmem %s2667, %s2717 [#allocation4]
                  %s2720 = scalar_lea.vmem %s2670, %s2718
                $region215: #{fused_bn_add_relu_conv_bn.5} parent=202 // loop_footer
                  %s2676 = sadd.s32 %s2674, 1
                $region216: #{fused_bn_add_relu_conv_bn.5} parent=202 // loop_footer_branch
                  %2673 = sbr.rel target = $region212
                $region217: #{fused_bn_add_relu_conv_bn.5} parent=202 // loop_exit
                  _
              $region203: #{fused_bn_add_relu_conv_bn.5} parent=187 // pred_fallthru
                _
              %p2721 = pneg %p2510
              // Predicated region
              $region218: #{fused_bn_add_relu_conv_bn.5} parent=187 // pred_check
                _
              $region219: #{fused_bn_add_relu_conv_bn.5} parent=187 // pred_check_branch
                %2723 = sbr.rel (%p2510) target = $region221
              $region220: #{fused_bn_add_relu_conv_bn.5} parent=187 // pred_region
                %s2724 = sand.u32 %s2456, 7
                %s2725 = ssub.s32 %s2456, %s2724
                %s2726 = scalar_lea.vmem %s2442, %s2725 [#allocation4]
                %s2727 = ssub.s32 %s2456, %s2724
                %s2728 = scalar_lea.vmem %s2455, %s2727
                %s2729 = sshrl.u32 %s2456, 3
                %s2730 = sshrl.u32 %s2729, 2
                // While loop
                $region222: #{fused_bn_add_relu_conv_bn.5} parent=220 // loop_pre_header
                  _
                $region223: #{fused_bn_add_relu_conv_bn.5} parent=220 // loop_header
                  %s2734 = sphi 0, %s2736
                  %p2735 = scmp.ge.s32.totalorder %s2734, %s2730
                  %s2739 = sphi 0, %s2872
                  %s2740 = sphi %s2442, %s2875
                  %s2741 = sphi %s2455, %s2876
                $region224: #{fused_bn_add_relu_conv_bn.5} parent=220 // loop_header_branch
                  %2738 = sbr.rel (%p2735) target = $region228
                $region225: #{fused_bn_add_relu_conv_bn.5} parent=220 // loop_body
                  %v2742 = vld [vmem:[%s2740] sm:$0xff]
                  %2743 = vst [vmem:[%s2741] sm:$0xff] %v2742
                  %v2744 = vld [vmem:[%s2740 + $0x8] sm:$0xff]
                  %2745 = vst [vmem:[%s2741 + $0x8] sm:$0xff] %v2744
                  %v2746 = vld [vmem:[%s2740 + $0x10] sm:$0xff]
                  %2747 = vst [vmem:[%s2741 + $0x10] sm:$0xff] %v2746
                  %v2748 = vld [vmem:[%s2740 + $0x18] sm:$0xff]
                  %2749 = vst [vmem:[%s2741 + $0x18] sm:$0xff] %v2748
                  %v2750 = vld [vmem:[%s2740 + $0x20] sm:$0xff]
                  %2751 = vst [vmem:[%s2741 + $0x38] sm:$0xff] %v2750
                  %v2752 = vld [vmem:[%s2740 + $0x28] sm:$0xff]
                  %2753 = vst [vmem:[%s2741 + $0x40] sm:$0xff] %v2752
                  %v2754 = vld [vmem:[%s2740 + $0x30] sm:$0xff]
                  %2755 = vst [vmem:[%s2741 + $0x48] sm:$0xff] %v2754
                  %v2756 = vld [vmem:[%s2740 + $0x38] sm:$0xff]
                  %2757 = vst [vmem:[%s2741 + $0x50] sm:$0xff] %v2756
                  %v2758 = vld [vmem:[%s2740 + $0x40] sm:$0xff]
                  %2759 = vst [vmem:[%s2741 + $0x70] sm:$0xff] %v2758
                  %v2760 = vld [vmem:[%s2740 + $0x48] sm:$0xff]
                  %2761 = vst [vmem:[%s2741 + $0x78] sm:$0xff] %v2760
                  %v2762 = vld [vmem:[%s2740 + $0x50] sm:$0xff]
                  %2763 = vst [vmem:[%s2741 + $0x80] sm:$0xff] %v2762
                  %v2764 = vld [vmem:[%s2740 + $0x58] sm:$0xff]
                  %2765 = vst [vmem:[%s2741 + $0x88] sm:$0xff] %v2764
                  %v2766 = vld [vmem:[%s2740 + $0x60] sm:$0xff]
                  %2767 = vst [vmem:[%s2741 + $0xa8] sm:$0xff] %v2766
                  %v2768 = vld [vmem:[%s2740 + $0x68] sm:$0xff]
                  %2769 = vst [vmem:[%s2741 + $0xb0] sm:$0xff] %v2768
                  %v2770 = vld [vmem:[%s2740 + $0x70] sm:$0xff]
                  %2771 = vst [vmem:[%s2741 + $0xb8] sm:$0xff] %v2770
                  %v2772 = vld [vmem:[%s2740 + $0x78] sm:$0xff]
                  %2773 = vst [vmem:[%s2741 + $0xc0] sm:$0xff] %v2772
                  %v2774 = vld [vmem:[%s2740 + $0x80] sm:$0xff]
                  %2775 = vst [vmem:[%s2741 + $0xe0] sm:$0xff] %v2774
                  %v2776 = vld [vmem:[%s2740 + $0x88] sm:$0xff]
                  %2777 = vst [vmem:[%s2741 + $0xe8] sm:$0xff] %v2776
                  %v2778 = vld [vmem:[%s2740 + $0x90] sm:$0xff]
                  %2779 = vst [vmem:[%s2741 + $0xf0] sm:$0xff] %v2778
                  %v2780 = vld [vmem:[%s2740 + $0x98] sm:$0xff]
                  %2781 = vst [vmem:[%s2741 + $0xf8] sm:$0xff] %v2780
                  %v2782 = vld [vmem:[%s2740 + $0xa0] sm:$0xff]
                  %2783 = vst [vmem:[%s2741 + $0x118] sm:$0xff] %v2782
                  %v2784 = vld [vmem:[%s2740 + $0xa8] sm:$0xff]
                  %2785 = vst [vmem:[%s2741 + $0x120] sm:$0xff] %v2784
                  %v2786 = vld [vmem:[%s2740 + $0xb0] sm:$0xff]
                  %2787 = vst [vmem:[%s2741 + $0x128] sm:$0xff] %v2786
                  %v2788 = vld [vmem:[%s2740 + $0xb8] sm:$0xff]
                  %2789 = vst [vmem:[%s2741 + $0x130] sm:$0xff] %v2788
                  %v2790 = vld [vmem:[%s2740 + $0xc0] sm:$0xff]
                  %2791 = vst [vmem:[%s2741 + $0x150] sm:$0xff] %v2790
                  %v2792 = vld [vmem:[%s2740 + $0xc8] sm:$0xff]
                  %2793 = vst [vmem:[%s2741 + $0x158] sm:$0xff] %v2792
                  %v2794 = vld [vmem:[%s2740 + $0xd0] sm:$0xff]
                  %2795 = vst [vmem:[%s2741 + $0x160] sm:$0xff] %v2794
                  %v2796 = vld [vmem:[%s2740 + $0xd8] sm:$0xff]
                  %2797 = vst [vmem:[%s2741 + $0x168] sm:$0xff] %v2796
                  %v2798 = vld [vmem:[%s2740 + $0xe0] sm:$0xff]
                  %2799 = vst [vmem:[%s2741 + $0x188] sm:$0xff] %v2798
                  %v2800 = vld [vmem:[%s2740 + $0xe8] sm:$0xff]
                  %2801 = vst [vmem:[%s2741 + $0x190] sm:$0xff] %v2800
                  %v2802 = vld [vmem:[%s2740 + $0xf0] sm:$0xff]
                  %2803 = vst [vmem:[%s2741 + $0x198] sm:$0xff] %v2802
                  %v2804 = vld [vmem:[%s2740 + $0xf8] sm:$0xff]
                  %2805 = vst [vmem:[%s2741 + $0x1a0] sm:$0xff] %v2804
                  %v2806 = vld [vmem:[%s2740 + $0x100] sm:$0xff]
                  %2807 = vst [vmem:[%s2741 + $0x1c0] sm:$0xff] %v2806
                  %v2808 = vld [vmem:[%s2740 + $0x108] sm:$0xff]
                  %2809 = vst [vmem:[%s2741 + $0x1c8] sm:$0xff] %v2808
                  %v2810 = vld [vmem:[%s2740 + $0x110] sm:$0xff]
                  %2811 = vst [vmem:[%s2741 + $0x1d0] sm:$0xff] %v2810
                  %v2812 = vld [vmem:[%s2740 + $0x118] sm:$0xff]
                  %2813 = vst [vmem:[%s2741 + $0x1d8] sm:$0xff] %v2812
                  %v2814 = vld [vmem:[%s2740 + $0x120] sm:$0xff]
                  %2815 = vst [vmem:[%s2741 + $0x1f8] sm:$0xff] %v2814
                  %v2816 = vld [vmem:[%s2740 + $0x128] sm:$0xff]
                  %2817 = vst [vmem:[%s2741 + $0x200] sm:$0xff] %v2816
                  %v2818 = vld [vmem:[%s2740 + $0x130] sm:$0xff]
                  %2819 = vst [vmem:[%s2741 + $0x208] sm:$0xff] %v2818
                  %v2820 = vld [vmem:[%s2740 + $0x138] sm:$0xff]
                  %2821 = vst [vmem:[%s2741 + $0x210] sm:$0xff] %v2820
                  %v2822 = vld [vmem:[%s2740 + $0x140] sm:$0xff]
                  %2823 = vst [vmem:[%s2741 + $0x230] sm:$0xff] %v2822
                  %v2824 = vld [vmem:[%s2740 + $0x148] sm:$0xff]
                  %2825 = vst [vmem:[%s2741 + $0x238] sm:$0xff] %v2824
                  %v2826 = vld [vmem:[%s2740 + $0x150] sm:$0xff]
                  %2827 = vst [vmem:[%s2741 + $0x240] sm:$0xff] %v2826
                  %v2828 = vld [vmem:[%s2740 + $0x158] sm:$0xff]
                  %2829 = vst [vmem:[%s2741 + $0x248] sm:$0xff] %v2828
                  %v2830 = vld [vmem:[%s2740 + $0x160] sm:$0xff]
                  %2831 = vst [vmem:[%s2741 + $0x268] sm:$0xff] %v2830
                  %v2832 = vld [vmem:[%s2740 + $0x168] sm:$0xff]
                  %2833 = vst [vmem:[%s2741 + $0x270] sm:$0xff] %v2832
                  %v2834 = vld [vmem:[%s2740 + $0x170] sm:$0xff]
                  %2835 = vst [vmem:[%s2741 + $0x278] sm:$0xff] %v2834
                  %v2836 = vld [vmem:[%s2740 + $0x178] sm:$0xff]
                  %2837 = vst [vmem:[%s2741 + $0x280] sm:$0xff] %v2836
                  %v2838 = vld [vmem:[%s2740 + $0x180] sm:$0xff]
                  %2839 = vst [vmem:[%s2741 + $0x2a0] sm:$0xff] %v2838
                  %v2840 = vld [vmem:[%s2740 + $0x188] sm:$0xff]
                  %2841 = vst [vmem:[%s2741 + $0x2a8] sm:$0xff] %v2840
                  %v2842 = vld [vmem:[%s2740 + $0x190] sm:$0xff]
                  %2843 = vst [vmem:[%s2741 + $0x2b0] sm:$0xff] %v2842
                  %v2844 = vld [vmem:[%s2740 + $0x198] sm:$0xff]
                  %2845 = vst [vmem:[%s2741 + $0x2b8] sm:$0xff] %v2844
                  %v2846 = vld [vmem:[%s2740 + $0x1a0] sm:$0xff]
                  %2847 = vst [vmem:[%s2741 + $0x2d8] sm:$0xff] %v2846
                  %v2848 = vld [vmem:[%s2740 + $0x1a8] sm:$0xff]
                  %2849 = vst [vmem:[%s2741 + $0x2e0] sm:$0xff] %v2848
                  %v2850 = vld [vmem:[%s2740 + $0x1b0] sm:$0xff]
                  %2851 = vst [vmem:[%s2741 + $0x2e8] sm:$0xff] %v2850
                  %v2852 = vld [vmem:[%s2740 + $0x1b8] sm:$0xff]
                  %2853 = vst [vmem:[%s2741 + $0x2f0] sm:$0xff] %v2852
                  %v2854 = vld [vmem:[%s2740 + $0x1c0] sm:$0xff]
                  %2855 = vst [vmem:[%s2741 + $0x310] sm:$0xff] %v2854
                  %v2856 = vld [vmem:[%s2740 + $0x1c8] sm:$0xff]
                  %2857 = vst [vmem:[%s2741 + $0x318] sm:$0xff] %v2856
                  %v2858 = vld [vmem:[%s2740 + $0x1d0] sm:$0xff]
                  %2859 = vst [vmem:[%s2741 + $0x320] sm:$0xff] %v2858
                  %v2860 = vld [vmem:[%s2740 + $0x1d8] sm:$0xff]
                  %2861 = vst [vmem:[%s2741 + $0x328] sm:$0xff] %v2860
                  %v2862 = vld [vmem:[%s2740 + $0x1e0] sm:$0xff]
                  %2863 = vst [vmem:[%s2741 + $0x348] sm:$0xff] %v2862
                  %v2864 = vld [vmem:[%s2740 + $0x1e8] sm:$0xff]
                  %2865 = vst [vmem:[%s2741 + $0x350] sm:$0xff] %v2864
                  %v2866 = vld [vmem:[%s2740 + $0x1f0] sm:$0xff]
                  %2867 = vst [vmem:[%s2741 + $0x358] sm:$0xff] %v2866
                  %v2868 = vld [vmem:[%s2740 + $0x1f8] sm:$0xff]
                  %2869 = vst [vmem:[%s2741 + $0x360] sm:$0xff] %v2868
                  %s2870 = sadd.s32 1, %s2739
                  %p2871 = scmp.ge.s32.totalorder %s2870, %s2730
                  %s2872 = scalar_select %p2871, 0, %s2870
                  %s2873 = smul.u32 %s2872, 32
                  %s2874 = smul.u32 %s2872, 32
                  %s2875 = scalar_lea.vmem %s2442, %s2873 [#allocation4]
                  %s2876 = scalar_lea.vmem %s2455, %s2874
                $region226: #{fused_bn_add_relu_conv_bn.5} parent=220 // loop_footer
                  %s2736 = sadd.s32 %s2734, 1
                $region227: #{fused_bn_add_relu_conv_bn.5} parent=220 // loop_footer_branch
                  %2733 = sbr.rel target = $region223
                $region228: #{fused_bn_add_relu_conv_bn.5} parent=220 // loop_exit
                  _
                %s2877 = sshrl.u32 %s2729, 2
                %s2878 = sand.u32 %s2729, 3
                %s2879 = smul.u32 %s2877, 4
                %s2880 = smul.u32 128, %s2879
                %s2881 = sshra.s32 %s2880, 4
                %s2882 = scalar_lea.vmem %s2442, %s2881 [#allocation4]
                %s2883 = smul.u32 128, %s2879
                %s2884 = sshra.s32 %s2883, 4
                %s2885 = scalar_lea.vmem %s2455, %s2884
                // While loop
                $region229: #{fused_bn_add_relu_conv_bn.5} parent=220 // loop_pre_header
                  _
                $region230: #{fused_bn_add_relu_conv_bn.5} parent=220 // loop_header
                  %s2889 = sphi 0, %s2891
                  %p2890 = scmp.ge.s32.totalorder %s2889, %s2878
                  %s2894 = sphi 0, %s2931
                  %s2895 = sphi %s2882, %s2934
                  %s2896 = sphi %s2885, %s2935
                $region231: #{fused_bn_add_relu_conv_bn.5} parent=220 // loop_header_branch
                  %2893 = sbr.rel (%p2890) target = $region235
                $region232: #{fused_bn_add_relu_conv_bn.5} parent=220 // loop_body
                  %v2897 = vld [vmem:[%s2895] sm:$0xff]
                  %2898 = vst [vmem:[%s2896] sm:$0xff] %v2897
                  %v2899 = vld [vmem:[%s2895 + $0x20] sm:$0xff]
                  %2900 = vst [vmem:[%s2896 + $0x38] sm:$0xff] %v2899
                  %v2901 = vld [vmem:[%s2895 + $0x40] sm:$0xff]
                  %2902 = vst [vmem:[%s2896 + $0x70] sm:$0xff] %v2901
                  %v2903 = vld [vmem:[%s2895 + $0x60] sm:$0xff]
                  %2904 = vst [vmem:[%s2896 + $0xa8] sm:$0xff] %v2903
                  %v2905 = vld [vmem:[%s2895 + $0x80] sm:$0xff]
                  %2906 = vst [vmem:[%s2896 + $0xe0] sm:$0xff] %v2905
                  %v2907 = vld [vmem:[%s2895 + $0xa0] sm:$0xff]
                  %2908 = vst [vmem:[%s2896 + $0x118] sm:$0xff] %v2907
                  %v2909 = vld [vmem:[%s2895 + $0xc0] sm:$0xff]
                  %2910 = vst [vmem:[%s2896 + $0x150] sm:$0xff] %v2909
                  %v2911 = vld [vmem:[%s2895 + $0xe0] sm:$0xff]
                  %2912 = vst [vmem:[%s2896 + $0x188] sm:$0xff] %v2911
                  %v2913 = vld [vmem:[%s2895 + $0x100] sm:$0xff]
                  %2914 = vst [vmem:[%s2896 + $0x1c0] sm:$0xff] %v2913
                  %v2915 = vld [vmem:[%s2895 + $0x120] sm:$0xff]
                  %2916 = vst [vmem:[%s2896 + $0x1f8] sm:$0xff] %v2915
                  %v2917 = vld [vmem:[%s2895 + $0x140] sm:$0xff]
                  %2918 = vst [vmem:[%s2896 + $0x230] sm:$0xff] %v2917
                  %v2919 = vld [vmem:[%s2895 + $0x160] sm:$0xff]
                  %2920 = vst [vmem:[%s2896 + $0x268] sm:$0xff] %v2919
                  %v2921 = vld [vmem:[%s2895 + $0x180] sm:$0xff]
                  %2922 = vst [vmem:[%s2896 + $0x2a0] sm:$0xff] %v2921
                  %v2923 = vld [vmem:[%s2895 + $0x1a0] sm:$0xff]
                  %2924 = vst [vmem:[%s2896 + $0x2d8] sm:$0xff] %v2923
                  %v2925 = vld [vmem:[%s2895 + $0x1c0] sm:$0xff]
                  %2926 = vst [vmem:[%s2896 + $0x310] sm:$0xff] %v2925
                  %v2927 = vld [vmem:[%s2895 + $0x1e0] sm:$0xff]
                  %2928 = vst [vmem:[%s2896 + $0x348] sm:$0xff] %v2927
                  %s2929 = sadd.s32 1, %s2894
                  %p2930 = scmp.ge.s32.totalorder %s2929, %s2878
                  %s2931 = scalar_select %p2930, 0, %s2929
                  %s2932 = smul.u32 %s2931, 8
                  %s2933 = smul.u32 %s2931, 8
                  %s2934 = scalar_lea.vmem %s2882, %s2932 [#allocation4]
                  %s2935 = scalar_lea.vmem %s2885, %s2933
                $region233: #{fused_bn_add_relu_conv_bn.5} parent=220 // loop_footer
                  %s2891 = sadd.s32 %s2889, 1
                $region234: #{fused_bn_add_relu_conv_bn.5} parent=220 // loop_footer_branch
                  %2888 = sbr.rel target = $region230
                $region235: #{fused_bn_add_relu_conv_bn.5} parent=220 // loop_exit
                  _
                %s2936 = sshll.u32 1, %s2724
                %s2937 = ssub.s32 %s2936, 1
                loop: start=0, step=1, limit=1
                $region236: #{fused_bn_add_relu_conv_bn.5} parent=220 // loop_pre_header
                  _
                $region237: #{fused_bn_add_relu_conv_bn.5} parent=220 // loop_header
                  %s2939 = sphi 0, %s2943
                  %p2940 = scmp.ge.s32.totalorder %s2939, 1
                  %s2944 = sphi %s2726, %s2726
                  %s2945 = sphi %s2728, %s2728
                $region238: #{fused_bn_add_relu_conv_bn.5} parent=220 // loop_header_branch
                  %2942 = sbr.rel (%p2940) target = $region242
                $region239: #{fused_bn_add_relu_conv_bn.5} parent=220 // loop_body
                  %v2946 = vld [vmem:[%s2944] sm:%s2937]
                  %2947 = vst [vmem:[%s2945] sm:%s2937] %v2946
                  %v2948 = vld [vmem:[%s2944 + $0x20] sm:%s2937]
                  %2949 = vst [vmem:[%s2945 + $0x38] sm:%s2937] %v2948
                  %v2950 = vld [vmem:[%s2944 + $0x40] sm:%s2937]
                  %2951 = vst [vmem:[%s2945 + $0x70] sm:%s2937] %v2950
                  %v2952 = vld [vmem:[%s2944 + $0x60] sm:%s2937]
                  %2953 = vst [vmem:[%s2945 + $0xa8] sm:%s2937] %v2952
                  %v2954 = vld [vmem:[%s2944 + $0x80] sm:%s2937]
                  %2955 = vst [vmem:[%s2945 + $0xe0] sm:%s2937] %v2954
                  %v2956 = vld [vmem:[%s2944 + $0xa0] sm:%s2937]
                  %2957 = vst [vmem:[%s2945 + $0x118] sm:%s2937] %v2956
                  %v2958 = vld [vmem:[%s2944 + $0xc0] sm:%s2937]
                  %2959 = vst [vmem:[%s2945 + $0x150] sm:%s2937] %v2958
                  %v2960 = vld [vmem:[%s2944 + $0xe0] sm:%s2937]
                  %2961 = vst [vmem:[%s2945 + $0x188] sm:%s2937] %v2960
                  %v2962 = vld [vmem:[%s2944 + $0x100] sm:%s2937]
                  %2963 = vst [vmem:[%s2945 + $0x1c0] sm:%s2937] %v2962
                  %v2964 = vld [vmem:[%s2944 + $0x120] sm:%s2937]
                  %2965 = vst [vmem:[%s2945 + $0x1f8] sm:%s2937] %v2964
                  %v2966 = vld [vmem:[%s2944 + $0x140] sm:%s2937]
                  %2967 = vst [vmem:[%s2945 + $0x230] sm:%s2937] %v2966
                  %v2968 = vld [vmem:[%s2944 + $0x160] sm:%s2937]
                  %2969 = vst [vmem:[%s2945 + $0x268] sm:%s2937] %v2968
                  %v2970 = vld [vmem:[%s2944 + $0x180] sm:%s2937]
                  %2971 = vst [vmem:[%s2945 + $0x2a0] sm:%s2937] %v2970
                  %v2972 = vld [vmem:[%s2944 + $0x1a0] sm:%s2937]
                  %2973 = vst [vmem:[%s2945 + $0x2d8] sm:%s2937] %v2972
                  %v2974 = vld [vmem:[%s2944 + $0x1c0] sm:%s2937]
                  %2975 = vst [vmem:[%s2945 + $0x310] sm:%s2937] %v2974
                  %v2976 = vld [vmem:[%s2944 + $0x1e0] sm:%s2937]
                  %2977 = vst [vmem:[%s2945 + $0x348] sm:%s2937] %v2976
                $region240: #{fused_bn_add_relu_conv_bn.5} parent=220 // loop_footer
                  %s2943 = sadd.s32 1, %s2939
                $region241: #{fused_bn_add_relu_conv_bn.5} parent=220 // loop_footer_branch
                  %2938 = sbr.rel target = $region237
                $region242: #{fused_bn_add_relu_conv_bn.5} parent=220 // loop_exit
                  _
              $region221: #{fused_bn_add_relu_conv_bn.5} parent=187 // pred_fallthru
                _
            $region188: #{fused_bn_add_relu_conv_bn.5} parent=183 // pred_fallthru
              _
            // Predicated region
            $region189: #{fused_bn_add_relu_conv_bn.5} parent=183 // pred_check
              %p2464 = pneg %p2460
            $region190: #{fused_bn_add_relu_conv_bn.5} parent=183 // pred_check_branch
              %2466 = sbr.rel (%p2464) target = $region192
            $region191: #{fused_bn_add_relu_conv_bn.5} parent=183 // pred_region
              %s2467 = sshll.u32 1, %s2456
              %s2468 = ssub.s32 %s2467, 1
              loop: start=0, step=1, limit=1
              $region193: #{fused_bn_add_relu_conv_bn.5} parent=191 // loop_pre_header
                _
              $region194: #{fused_bn_add_relu_conv_bn.5} parent=191 // loop_header
                %s2470 = sphi 0, %s2474
                %p2471 = scmp.ge.s32.totalorder %s2470, 1
                %s2475 = sphi %s2442, %s2442
                %s2476 = sphi %s2455, %s2455
              $region195: #{fused_bn_add_relu_conv_bn.5} parent=191 // loop_header_branch
                %2473 = sbr.rel (%p2471) target = $region199
              $region196: #{fused_bn_add_relu_conv_bn.5} parent=191 // loop_body
                %v2477 = vld [vmem:[%s2475] sm:%s2468]
                %2478 = vst [vmem:[%s2476] sm:%s2468] %v2477
                %v2479 = vld [vmem:[%s2475 + $0x20] sm:%s2468]
                %2480 = vst [vmem:[%s2476 + $0x38] sm:%s2468] %v2479
                %v2481 = vld [vmem:[%s2475 + $0x40] sm:%s2468]
                %2482 = vst [vmem:[%s2476 + $0x70] sm:%s2468] %v2481
                %v2483 = vld [vmem:[%s2475 + $0x60] sm:%s2468]
                %2484 = vst [vmem:[%s2476 + $0xa8] sm:%s2468] %v2483
                %v2485 = vld [vmem:[%s2475 + $0x80] sm:%s2468]
                %2486 = vst [vmem:[%s2476 + $0xe0] sm:%s2468] %v2485
                %v2487 = vld [vmem:[%s2475 + $0xa0] sm:%s2468]
                %2488 = vst [vmem:[%s2476 + $0x118] sm:%s2468] %v2487
                %v2489 = vld [vmem:[%s2475 + $0xc0] sm:%s2468]
                %2490 = vst [vmem:[%s2476 + $0x150] sm:%s2468] %v2489
                %v2491 = vld [vmem:[%s2475 + $0xe0] sm:%s2468]
                %2492 = vst [vmem:[%s2476 + $0x188] sm:%s2468] %v2491
                %v2493 = vld [vmem:[%s2475 + $0x100] sm:%s2468]
                %2494 = vst [vmem:[%s2476 + $0x1c0] sm:%s2468] %v2493
                %v2495 = vld [vmem:[%s2475 + $0x120] sm:%s2468]
                %2496 = vst [vmem:[%s2476 + $0x1f8] sm:%s2468] %v2495
                %v2497 = vld [vmem:[%s2475 + $0x140] sm:%s2468]
                %2498 = vst [vmem:[%s2476 + $0x230] sm:%s2468] %v2497
                %v2499 = vld [vmem:[%s2475 + $0x160] sm:%s2468]
                %2500 = vst [vmem:[%s2476 + $0x268] sm:%s2468] %v2499
                %v2501 = vld [vmem:[%s2475 + $0x180] sm:%s2468]
                %2502 = vst [vmem:[%s2476 + $0x2a0] sm:%s2468] %v2501
                %v2503 = vld [vmem:[%s2475 + $0x1a0] sm:%s2468]
                %2504 = vst [vmem:[%s2476 + $0x2d8] sm:%s2468] %v2503
                %v2505 = vld [vmem:[%s2475 + $0x1c0] sm:%s2468]
                %2506 = vst [vmem:[%s2476 + $0x310] sm:%s2468] %v2505
                %v2507 = vld [vmem:[%s2475 + $0x1e0] sm:%s2468]
                %2508 = vst [vmem:[%s2476 + $0x348] sm:%s2468] %v2507
              $region197: #{fused_bn_add_relu_conv_bn.5} parent=191 // loop_footer
                %s2474 = sadd.s32 1, %s2470
              $region198: #{fused_bn_add_relu_conv_bn.5} parent=191 // loop_footer_branch
                %2469 = sbr.rel target = $region194
              $region199: #{fused_bn_add_relu_conv_bn.5} parent=191 // loop_exit
                _
            $region192: #{fused_bn_add_relu_conv_bn.5} parent=183 // pred_fallthru
              _
          $region184: #{fused_bn_add_relu_conv_bn.5} parent=179 // pred_fallthru
            _
          %2978 = vnop
        $region180: #{fused_bn_add_relu_conv_bn.5} parent=167 // pred_fallthru
          _
      $region168: #{fused_bn_add_relu_conv_bn.5} parent=5 // pred_fallthru
        _
      %p2979 = scmp.le.s32.totalorder 2, %s12
      // Predicated region
      $region243: #{fused_bn_add_relu_conv_bn.5} parent=5 // pred_check
        %p2980 = pneg %p2979
      $region244: #{fused_bn_add_relu_conv_bn.5} parent=5 // pred_check_branch
        %2982 = sbr.rel (%p2980) target = $region246
      $region245: #{fused_bn_add_relu_conv_bn.5} parent=5 // pred_region
        %s2983 = ssub.s32 %s12, 2
        // Predicated region
        $region247: #{fused_bn_add_relu_conv_bn.5} parent=245 // pred_check
          %p2984 = pneg %p195
        $region248: #{fused_bn_add_relu_conv_bn.5} parent=245 // pred_check_branch
          %2986 = sbr.rel (%p2984) target = $region250
        $region249: #{fused_bn_add_relu_conv_bn.5} parent=245 // pred_region
          %s2987 = sand.u32 %s180, 1
          %s2988 = sand.u32 %s180, 1
          %s2989 = smul.addr %s2988, 512
          %s2990 = scalar_lea.vmem [#allocation4], %s2989
        $region250: #{fused_bn_add_relu_conv_bn.5} parent=245 // pred_fallthru
          _
      $region246: #{fused_bn_add_relu_conv_bn.5} parent=5 // pred_fallthru
        _
    $region6: #{fused_bn_add_relu_conv_bn.5} parent=1 // loop_footer
      %s16 = sadd.s32 1, %s12
    $region7: #{fused_bn_add_relu_conv_bn.5} parent=1 // loop_footer_branch
      %11 = sbr.rel target = $region3
    $region8: #{fused_bn_add_relu_conv_bn.5} parent=1 // loop_exit
      _

</llo_original>
